<compile_context>
chip_gen: v7x
topology: tpu7x:2x2x1
jax: 0.10.0
libtpu: 0.0.40
codegen_flags: <defaults>
</compile_context>

<pallas_src>
import math

import jax
import jax.numpy as jnp
from jax.experimental import pallas as pl
from jax.experimental.pallas import tpu as pltpu

# Constants hard-coded in the PyTorch module
d_model = 512
d_k = d_v = 64
n_heads = 8
LN_EPS = 1e-5  # nn.LayerNorm default


def mha_kernel(xq_ref, xk_ref, xv_ref, bias_ref,
               wq_ref, wk_ref, wv_ref, wo_ref, gamma_ref, beta_ref,
               out_ref, attn_ref):
    """Bt batch elements per grid step; all matmuls / softmax / layernorm in-kernel."""
    Bt, L, D = xq_ref.shape
    M = Bt * L

    xq = xq_ref[...]                               # (Bt, L, D) f32 -- also the residual
    xq_flat = xq.reshape(M, D)
    xk_flat = xk_ref[...].reshape(M, D)
    xv_flat = xv_ref[...].reshape(M, D)

    # Projections: bf16 operands on the MXU, f32 accumulation, M = Bt*L rows.
    q = jnp.dot(xq_flat.astype(jnp.bfloat16), wq_ref[...],
                preferred_element_type=jnp.float32)            # (M, H*d_k)
    k = jnp.dot(xk_flat.astype(jnp.bfloat16), wk_ref[...],
                preferred_element_type=jnp.float32)            # (M, H*d_k)
    v = jnp.dot(xv_flat.astype(jnp.bfloat16), wv_ref[...],
                preferred_element_type=jnp.float32)            # (M, H*d_v)

    qb = q.astype(jnp.bfloat16).reshape(Bt, L, n_heads * d_k)
    kb = k.astype(jnp.bfloat16).reshape(Bt, L, n_heads * d_k)
    vb = v.astype(jnp.bfloat16).reshape(Bt, L, n_heads * d_v)

    bias = bias_ref[...]                           # (Bt, L, L) f32 additive (0 / -1e9)
    wo = wo_ref[...]                               # (H*d_v, D) bf16
    scale = 1.0 / math.sqrt(d_k)

    # Accumulate fc(context) + residual head-by-head (no concat of heads).
    out_acc = xq_flat                              # start from the residual (f32)

    for h in range(n_heads):                       # static unroll, n_heads = 8
        qh = qb[:, :, h * d_k:(h + 1) * d_k]       # (Bt, L, d_k)
        kh = kb[:, :, h * d_k:(h + 1) * d_k]       # (Bt, L, d_k)
        vh = vb[:, :, h * d_v:(h + 1) * d_v]       # (Bt, L, d_v)

        # Batched QK^T with no explicit transpose (contract last dims on the MXU).
        scores = jnp.einsum('bqd,bkd->bqk', qh, kh,
                            preferred_element_type=jnp.float32) * scale + bias
        m = jnp.max(scores, axis=-1, keepdims=True)
        e = jnp.exp(scores - m)
        denom = jnp.sum(e, axis=-1, keepdims=True)
        attn_h = e * pl.reciprocal(denom, approx=True)         # softmax(dim=-1)
        attn_ref[:, h, :, :] = attn_h

        ctx = jnp.einsum('bqk,bkd->bqd', attn_h.astype(jnp.bfloat16), vh,
                         preferred_element_type=jnp.float32)   # (Bt, L, d_v)
        # Head contribution to the output projection: ctx_h @ wo[h*d_v:(h+1)*d_v, :]
        out_acc = out_acc + jnp.dot(ctx.reshape(M, d_v).astype(jnp.bfloat16),
                                    wo[h * d_v:(h + 1) * d_v, :],
                                    preferred_element_type=jnp.float32)

    # LayerNorm(d_model) in f32 over the residual-added output.
    mean = jnp.mean(out_acc, axis=-1, keepdims=True)
    var = jnp.mean((out_acc - mean) ** 2, axis=-1, keepdims=True)
    normed = (out_acc - mean) * jax.lax.rsqrt(var + LN_EPS)
    out_ref[...] = (normed * gamma_ref[...] + beta_ref[...]).reshape(Bt, L, D)


def _pick_block_batch(B, L, max_rows=256):
    """Largest batch-block divisor whose Bt*L fits a 256-row MXU target, preferring
    a grid extent >= 2 (megacore / pipelining) when possible."""
    divisors = [c for c in range(1, B + 1) if B % c == 0 and c * L <= max_rows]
    if not divisors:
        return 1
    multi = [c for c in divisors if B // c >= 2]
    pool = multi if multi else divisors
    return max(pool)


def multi_head_attention(input_Q, input_K, input_V, attn_mask,
                         wq, wk, wv, wo, gamma, beta, block_batch=None):
    B, L, D = input_Q.shape
    assert D == d_model
    Bt = _pick_block_batch(B, L) if block_batch is None else block_batch
    assert B % Bt == 0
    grid = (B // Bt,)

    # Additive mask bias precomputed once (hoists compare/select out of the kernel).
    bias = jnp.where(attn_mask, jnp.float32(-1.0e9), jnp.float32(0.0))

    # bf16 weights: MXU-native operands, half the weight DMA. Activations stay f32 in HBM.
    wq_b = wq.astype(jnp.bfloat16)
    wk_b = wk.astype(jnp.bfloat16)
    wv_b = wv.astype(jnp.bfloat16)
    wo_b = wo.astype(jnp.bfloat16)

    out_shape = (
        jax.ShapeDtypeStruct((B, L, D), jnp.float32),
        jax.ShapeDtypeStruct((B, n_heads, L, L), jnp.float32),
    )
    in_specs = [
        pl.BlockSpec((Bt, L, D), lambda b: (b, 0, 0)),            # input_Q
        pl.BlockSpec((Bt, L, D), lambda b: (b, 0, 0)),            # input_K
        pl.BlockSpec((Bt, L, D), lambda b: (b, 0, 0)),            # input_V
        pl.BlockSpec((Bt, L, L), lambda b: (b, 0, 0)),            # additive mask bias
        pl.BlockSpec((D, n_heads * d_k), lambda b: (0, 0)),       # W_Q^T (bf16)
        pl.BlockSpec((D, n_heads * d_k), lambda b: (0, 0)),       # W_K^T (bf16)
        pl.BlockSpec((D, n_heads * d_v), lambda b: (0, 0)),       # W_V^T (bf16)
        pl.BlockSpec((n_heads * d_v, D), lambda b: (0, 0)),       # fc^T  (bf16)
        pl.BlockSpec((1, D), lambda b: (0, 0)),                   # LN gamma
        pl.BlockSpec((1, D), lambda b: (0, 0)),                   # LN beta
    ]
    out_specs = (
        pl.BlockSpec((Bt, L, D), lambda b: (b, 0, 0)),
        pl.BlockSpec((Bt, n_heads, L, L), lambda b: (b, 0, 0, 0)),
    )
    # TODO(synk): for large L, tile seq_q/seq_k flash-style and drop/stream the full
    # (B, H, L, L) attention-probability output to stay within VMEM (esp. v7x 64 MiB).
    return pl.pallas_call(
        mha_kernel,
        out_shape=out_shape,
        grid=grid,
        in_specs=in_specs,
        out_specs=out_specs,
        compiler_params=pltpu.CompilerParams(dimension_semantics=("parallel",)),
    )(input_Q, input_K, input_V, bias, wq_b, wk_b, wv_b, wo_b, gamma, beta)


def reference_mha(input_Q, input_K, input_V, attn_mask, wq, wk, wv, wo, gamma, beta):
    """Pure-JAX reference mirroring the PyTorch forward exactly (f32 everywhere)."""
    B, L, _ = input_Q.shape
    Q = (input_Q @ wq).reshape(B, L, n_heads, d_k).transpose(0, 2, 1, 3)
    K = (input_K @ wk).reshape(B, L, n_heads, d_k).transpose(0, 2, 1, 3)
    V = (input_V @ wv).reshape(B, L, n_heads, d_v).transpose(0, 2, 1, 3)
    mask = attn_mask[:, None, :, :]
    scores = jnp.einsum('bhqd,bhkd->bhqk', Q, K) / math.sqrt(d_k)
    scores = jnp.where(mask, -1.0e9, scores)
    attn = jax.nn.softmax(scores, axis=-1)
    context = jnp.einsum('bhqk,bhkd->bhqd', attn, V)
    context = context.transpose(0, 2, 1, 3).reshape(B, L, n_heads * d_v)
    output = context @ wo + input_Q
    mean = jnp.mean(output, axis=-1, keepdims=True)
    var = jnp.mean((output - mean) ** 2, axis=-1, keepdims=True)
    out = (output - mean) / jnp.sqrt(var + LN_EPS) * gamma[0] + beta[0]
    return out, attn


if __name__ == "__main__":
    B, L = 4, 8  # small batch / seq; d_model fixed at 512 by the module

    key = jax.random.PRNGKey(0)
    k1, k2, k3, k4, k5, k6, k7 = jax.random.split(key, 7)

    # Deterministic parameter init (nn.Linear weights, stored transposed as (in, out))
    wq = 0.02 * jax.random.normal(k1, (d_model, n_heads * d_k), jnp.float32)
    wk = 0.02 * jax.random.normal(k2, (d_model, n_heads * d_k), jnp.float32)
    wv = 0.02 * jax.random.normal(k3, (d_model, n_heads * d_v), jnp.float32)
    wo = 0.02 * jax.random.normal(k4, (n_heads * d_v, d_model), jnp.float32)
    gamma = jnp.ones((1, d_model), jnp.float32)   # LayerNorm default weight
    beta = jnp.zeros((1, d_model), jnp.float32)   # LayerNorm default bias

    input_Q = jax.random.normal(k5, (B, L, d_model), jnp.float32)
    input_K = jax.random.normal(k6, (B, L, d_model), jnp.float32)
    input_V = jax.random.normal(k7, (B, L, d_model), jnp.float32)

    # Padding-style mask: per-batch number of masked trailing key positions.
    pad_counts = [0, 2, 3, 1]
    key_pad = jnp.array([[False] * (L - p) + [True] * p for p in pad_counts])  # (B, L)
    attn_mask = jnp.broadcast_to(key_pad[:, None, :], (B, L, L))               # (B, Lq, Lk)

    out, attn = multi_head_attention(input_Q, input_K, input_V, attn_mask,
                                     wq, wk, wv, wo, gamma, beta)
    jax.block_until_ready((out, attn))

    ref_out, ref_attn = reference_mha(input_Q, input_K, input_V, attn_mask,
                                      wq, wk, wv, wo, gamma, beta)
    # bf16 MXU operands + approx reciprocal => looser tolerance than pure-f32.
    assert jnp.allclose(out, ref_out, rtol=2e-2, atol=2e-2)
    assert jnp.allclose(attn, ref_attn, rtol=2e-2, atol=2e-2)
    print("KERNEL_OK")
</pallas_src>

<mosaic_0001>
module attributes {stable_mosaic.version = 11 : i64} {
  func.func @mha_kernel(%arg0: i32, %arg1: memref<2x8x512xf32, #tpu.memory_space<vmem>>, %arg2: memref<2x8x512xf32, #tpu.memory_space<vmem>>, %arg3: memref<2x8x512xf32, #tpu.memory_space<vmem>>, %arg4: memref<2x8x8xf32, #tpu.memory_space<vmem>>, %arg5: memref<512x512xbf16, #tpu.memory_space<vmem>>, %arg6: memref<512x512xbf16, #tpu.memory_space<vmem>>, %arg7: memref<512x512xbf16, #tpu.memory_space<vmem>>, %arg8: memref<512x512xbf16, #tpu.memory_space<vmem>>, %arg9: memref<1x512xf32, #tpu.memory_space<vmem>>, %arg10: memref<1x512xf32, #tpu.memory_space<vmem>>, %arg11: memref<2x8x512xf32, #tpu.memory_space<vmem>>, %arg12: memref<2x8x8x8xf32, #tpu.memory_space<vmem>>) attributes {dimension_semantics = [#tpu.dimension_semantics<parallel>], iteration_bounds = array<i64: 2>, scalar_prefetch = 0 : i64, scratch_operands = 0 : i64, tpu.core_type = #tpu.core_type<tc>, window_params = [{transform_indices = @transform_0, window_bounds = array<i64: 2, 8, 512>}, {transform_indices = @transform_1, window_bounds = array<i64: 2, 8, 512>}, {transform_indices = @transform_2, window_bounds = array<i64: 2, 8, 512>}, {transform_indices = @transform_3, window_bounds = array<i64: 2, 8, 8>}, {pipeline_mode = #tpu.pipeline_mode<synchronous>, transform_indices = @transform_4, window_bounds = array<i64: 512, 512>}, {pipeline_mode = #tpu.pipeline_mode<synchronous>, transform_indices = @transform_5, window_bounds = array<i64: 512, 512>}, {pipeline_mode = #tpu.pipeline_mode<synchronous>, transform_indices = @transform_6, window_bounds = array<i64: 512, 512>}, {pipeline_mode = #tpu.pipeline_mode<synchronous>, transform_indices = @transform_7, window_bounds = array<i64: 512, 512>}, {pipeline_mode = #tpu.pipeline_mode<synchronous>, transform_indices = @transform_8, window_bounds = array<i64: 1, 512>}, {pipeline_mode = #tpu.pipeline_mode<synchronous>, transform_indices = @transform_9, window_bounds = array<i64: 1, 512>}, {transform_indices = @transform_10, window_bounds = array<i64: 2, 8, 512>}, {transform_indices = @transform_11, window_bounds = array<i64: 2, 8, 8, 8>}]} {
    %c0 = arith.constant 0 : index
    %c0_0 = arith.constant 0 : index
    %c0_1 = arith.constant 0 : index
    %0 = vector.load %arg1[%c0, %c0_0, %c0_1] : memref<2x8x512xf32, #tpu.memory_space<vmem>>, vector<2x8x512xf32>
    %1 = vector.shape_cast %0 : vector<2x8x512xf32> to vector<16x512xf32>
    %c0_2 = arith.constant 0 : index
    %c0_3 = arith.constant 0 : index
    %c0_4 = arith.constant 0 : index
    %2 = vector.load %arg2[%c0_2, %c0_3, %c0_4] : memref<2x8x512xf32, #tpu.memory_space<vmem>>, vector<2x8x512xf32>
    %3 = vector.shape_cast %2 : vector<2x8x512xf32> to vector<16x512xf32>
    %c0_5 = arith.constant 0 : index
    %c0_6 = arith.constant 0 : index
    %c0_7 = arith.constant 0 : index
    %4 = vector.load %arg3[%c0_5, %c0_6, %c0_7] : memref<2x8x512xf32, #tpu.memory_space<vmem>>, vector<2x8x512xf32>
    %5 = vector.shape_cast %4 : vector<2x8x512xf32> to vector<16x512xf32>
    %6 = arith.truncf %1 : vector<16x512xf32> to vector<16x512xbf16>
    %c0_8 = arith.constant 0 : index
    %c0_9 = arith.constant 0 : index
    %7 = vector.load %arg5[%c0_8, %c0_9] : memref<512x512xbf16, #tpu.memory_space<vmem>>, vector<512x512xbf16>
    %cst = arith.constant dense<0.000000e+00> : vector<16x512xf32>
    %8 = tpu.matmul %6, %7, %cst {dimension_numbers = #tpu.dot_dimension_numbers<[1], [0], [0], [1], [0, 0, 1, 1], [], []>} : vector<16x512xbf16>, vector<512x512xbf16>, vector<16x512xf32> -> vector<16x512xf32>
    %9 = arith.truncf %3 : vector<16x512xf32> to vector<16x512xbf16>
    %c0_10 = arith.constant 0 : index
    %c0_11 = arith.constant 0 : index
    %10 = vector.load %arg6[%c0_10, %c0_11] : memref<512x512xbf16, #tpu.memory_space<vmem>>, vector<512x512xbf16>
    %cst_12 = arith.constant dense<0.000000e+00> : vector<16x512xf32>
    %11 = tpu.matmul %9, %10, %cst_12 {dimension_numbers = #tpu.dot_dimension_numbers<[1], [0], [0], [1], [0, 0, 1, 1], [], []>} : vector<16x512xbf16>, vector<512x512xbf16>, vector<16x512xf32> -> vector<16x512xf32>
    %12 = arith.truncf %5 : vector<16x512xf32> to vector<16x512xbf16>
    %c0_13 = arith.constant 0 : index
    %c0_14 = arith.constant 0 : index
    %13 = vector.load %arg7[%c0_13, %c0_14] : memref<512x512xbf16, #tpu.memory_space<vmem>>, vector<512x512xbf16>
    %cst_15 = arith.constant dense<0.000000e+00> : vector<16x512xf32>
    %14 = tpu.matmul %12, %13, %cst_15 {dimension_numbers = #tpu.dot_dimension_numbers<[1], [0], [0], [1], [0, 0, 1, 1], [], []>} : vector<16x512xbf16>, vector<512x512xbf16>, vector<16x512xf32> -> vector<16x512xf32>
    %15 = arith.truncf %8 : vector<16x512xf32> to vector<16x512xbf16>
    %16 = vector.shape_cast %15 : vector<16x512xbf16> to vector<2x8x512xbf16>
    %17 = arith.truncf %11 : vector<16x512xf32> to vector<16x512xbf16>
    %18 = vector.shape_cast %17 : vector<16x512xbf16> to vector<2x8x512xbf16>
    %19 = arith.truncf %14 : vector<16x512xf32> to vector<16x512xbf16>
    %20 = vector.shape_cast %19 : vector<16x512xbf16> to vector<2x8x512xbf16>
    %c0_16 = arith.constant 0 : index
    %c0_17 = arith.constant 0 : index
    %c0_18 = arith.constant 0 : index
    %21 = vector.load %arg4[%c0_16, %c0_17, %c0_18] : memref<2x8x8xf32, #tpu.memory_space<vmem>>, vector<2x8x8xf32>
    %c0_19 = arith.constant 0 : index
    %c0_20 = arith.constant 0 : index
    %22 = vector.load %arg8[%c0_19, %c0_20] : memref<512x512xbf16, #tpu.memory_space<vmem>>, vector<512x512xbf16>
    %23 = vector.extract_strided_slice %16 {offsets = [0, 0, 0], sizes = [2, 8, 64], strides = [1, 1, 1]} : vector<2x8x512xbf16> to vector<2x8x64xbf16>
    %24 = vector.extract_strided_slice %18 {offsets = [0, 0, 0], sizes = [2, 8, 64], strides = [1, 1, 1]} : vector<2x8x512xbf16> to vector<2x8x64xbf16>
    %25 = vector.extract_strided_slice %20 {offsets = [0, 0, 0], sizes = [2, 8, 64], strides = [1, 1, 1]} : vector<2x8x512xbf16> to vector<2x8x64xbf16>
    "tpu.trace_start"() <{level = 10 : i32, message = "bqd,bkd->bqk"}> : () -> ()
    %cst_21 = arith.constant dense<0.000000e+00> : vector<2x8x8xf32>
    %26 = tpu.matmul %23, %24, %cst_21 {dimension_numbers = #tpu.dot_dimension_numbers<[2], [2], [1], [1], [0, 0, 0, 1, 1, 1], [0], [0]>} : vector<2x8x64xbf16>, vector<2x8x64xbf16>, vector<2x8x8xf32> -> vector<2x8x8xf32>
    "tpu.trace_stop"() : () -> ()
    %cst_22 = arith.constant 1.250000e-01 : f32
    %27 = vector.broadcast %cst_22 : f32 to vector<2x8x8xf32>
    %28 = arith.mulf %26, %27 : vector<2x8x8xf32>
    %29 = arith.addf %28, %21 : vector<2x8x8xf32>
    %cst_23 = arith.constant dense<0xFF800000> : vector<2x8xf32>
    %30 = vector.multi_reduction <maximumf>, %29, %cst_23 [2] : vector<2x8x8xf32> to vector<2x8xf32>
    %31 = vector.shape_cast %30 : vector<2x8xf32> to vector<2x8x1xf32>
    %32 = vector.broadcast %31 : vector<2x8x1xf32> to vector<2x8x8xf32>
    %33 = arith.subf %29, %32 : vector<2x8x8xf32>
    %34 = math.exp %33 : vector<2x8x8xf32>
    %cst_24 = arith.constant dense<0.000000e+00> : vector<2x8xf32>
    %35 = vector.multi_reduction <add>, %34, %cst_24 [2] : vector<2x8x8xf32> to vector<2x8xf32>
    %36 = vector.shape_cast %35 : vector<2x8xf32> to vector<2x8x1xf32>
    %37 = tpu.reciprocal %36 {approx = true} : vector<2x8x1xf32> -> vector<2x8x1xf32>
    %38 = vector.broadcast %37 : vector<2x8x1xf32> to vector<2x8x8xf32>
    %39 = arith.mulf %34, %38 : vector<2x8x8xf32>
    %c0_25 = arith.constant 0 : index
    %c0_26 = arith.constant 0 : index
    %c0_27 = arith.constant 0 : index
    %c0_28 = arith.constant 0 : index
    %40 = vector.load %arg12[%c0_25, %c0_26, %c0_27, %c0_28] : memref<2x8x8x8xf32, #tpu.memory_space<vmem>>, vector<2x1x8x8xf32>
    %41 = vector.shape_cast %40 : vector<2x1x8x8xf32> to vector<2x8x8xf32>
    %42 = vector.shape_cast %39 : vector<2x8x8xf32> to vector<2x1x8x8xf32>
    tpu.vector_store %arg12[%c0_25, %c0_26, %c0_27, %c0_28], %42 {strides = array<i32>} : memref<2x8x8x8xf32, #tpu.memory_space<vmem>>, vector<2x1x8x8xf32>,
    %43 = arith.truncf %39 : vector<2x8x8xf32> to vector<2x8x8xbf16>
    "tpu.trace_start"() <{level = 10 : i32, message = "bqk,bkd->bqd"}> : () -> ()
    %cst_29 = arith.constant dense<0.000000e+00> : vector<2x8x64xf32>
    %44 = tpu.matmul %43, %25, %cst_29 {dimension_numbers = #tpu.dot_dimension_numbers<[2], [1], [1], [2], [0, 0, 0, 1, 1, 2], [0], [0]>} : vector<2x8x8xbf16>, vector<2x8x64xbf16>, vector<2x8x64xf32> -> vector<2x8x64xf32>
    "tpu.trace_stop"() : () -> ()
    %45 = vector.shape_cast %44 : vector<2x8x64xf32> to vector<16x64xf32>
    %46 = arith.truncf %45 : vector<16x64xf32> to vector<16x64xbf16>
    %47 = vector.extract_strided_slice %22 {offsets = [0, 0], sizes = [64, 512], strides = [1, 1]} : vector<512x512xbf16> to vector<64x512xbf16>
    %cst_30 = arith.constant dense<0.000000e+00> : vector<16x512xf32>
    %48 = tpu.matmul %46, %47, %cst_30 {dimension_numbers = #tpu.dot_dimension_numbers<[1], [0], [0], [1], [0, 0, 1, 1], [], []>} : vector<16x64xbf16>, vector<64x512xbf16>, vector<16x512xf32> -> vector<16x512xf32>
    %49 = arith.addf %1, %48 : vector<16x512xf32>
    %50 = vector.extract_strided_slice %16 {offsets = [0, 0, 64], sizes = [2, 8, 64], strides = [1, 1, 1]} : vector<2x8x512xbf16> to vector<2x8x64xbf16>
    %51 = vector.extract_strided_slice %18 {offsets = [0, 0, 64], sizes = [2, 8, 64], strides = [1, 1, 1]} : vector<2x8x512xbf16> to vector<2x8x64xbf16>
    %52 = vector.extract_strided_slice %20 {offsets = [0, 0, 64], sizes = [2, 8, 64], strides = [1, 1, 1]} : vector<2x8x512xbf16> to vector<2x8x64xbf16>
    "tpu.trace_start"() <{level = 10 : i32, message = "bqd,bkd->bqk"}> : () -> ()
    %cst_31 = arith.constant dense<0.000000e+00> : vector<2x8x8xf32>
    %53 = tpu.matmul %50, %51, %cst_31 {dimension_numbers = #tpu.dot_dimension_numbers<[2], [2], [1], [1], [0, 0, 0, 1, 1, 1], [0], [0]>} : vector<2x8x64xbf16>, vector<2x8x64xbf16>, vector<2x8x8xf32> -> vector<2x8x8xf32>
    "tpu.trace_stop"() : () -> ()
    %cst_32 = arith.constant 1.250000e-01 : f32
    %54 = vector.broadcast %cst_32 : f32 to vector<2x8x8xf32>
    %55 = arith.mulf %53, %54 : vector<2x8x8xf32>
    %56 = arith.addf %55, %21 : vector<2x8x8xf32>
    %cst_33 = arith.constant dense<0xFF800000> : vector<2x8xf32>
    %57 = vector.multi_reduction <maximumf>, %56, %cst_33 [2] : vector<2x8x8xf32> to vector<2x8xf32>
    %58 = vector.shape_cast %57 : vector<2x8xf32> to vector<2x8x1xf32>
    %59 = vector.broadcast %58 : vector<2x8x1xf32> to vector<2x8x8xf32>
    %60 = arith.subf %56, %59 : vector<2x8x8xf32>
    %61 = math.exp %60 : vector<2x8x8xf32>
    %cst_34 = arith.constant dense<0.000000e+00> : vector<2x8xf32>
    %62 = vector.multi_reduction <add>, %61, %cst_34 [2] : vector<2x8x8xf32> to vector<2x8xf32>
    %63 = vector.shape_cast %62 : vector<2x8xf32> to vector<2x8x1xf32>
    %64 = tpu.reciprocal %63 {approx = true} : vector<2x8x1xf32> -> vector<2x8x1xf32>
    %65 = vector.broadcast %64 : vector<2x8x1xf32> to vector<2x8x8xf32>
    %66 = arith.mulf %61, %65 : vector<2x8x8xf32>
    %c0_35 = arith.constant 0 : index
    %c1 = arith.constant 1 : index
    %c0_36 = arith.constant 0 : index
    %c0_37 = arith.constant 0 : index
    %67 = vector.load %arg12[%c0_35, %c1, %c0_36, %c0_37] : memref<2x8x8x8xf32, #tpu.memory_space<vmem>>, vector<2x1x8x8xf32>
    %68 = vector.shape_cast %67 : vector<2x1x8x8xf32> to vector<2x8x8xf32>
    %69 = vector.shape_cast %66 : vector<2x8x8xf32> to vector<2x1x8x8xf32>
    tpu.vector_store %arg12[%c0_35, %c1, %c0_36, %c0_37], %69 {strides = array<i32>} : memref<2x8x8x8xf32, #tpu.memory_space<vmem>>, vector<2x1x8x8xf32>,
    %70 = arith.truncf %66 : vector<2x8x8xf32> to vector<2x8x8xbf16>
    "tpu.trace_start"() <{level = 10 : i32, message = "bqk,bkd->bqd"}> : () -> ()
    %cst_38 = arith.constant dense<0.000000e+00> : vector<2x8x64xf32>
    %71 = tpu.matmul %70, %52, %cst_38 {dimension_numbers = #tpu.dot_dimension_numbers<[2], [1], [1], [2], [0, 0, 0, 1, 1, 2], [0], [0]>} : vector<2x8x8xbf16>, vector<2x8x64xbf16>, vector<2x8x64xf32> -> vector<2x8x64xf32>
    "tpu.trace_stop"() : () -> ()
    %72 = vector.shape_cast %71 : vector<2x8x64xf32> to vector<16x64xf32>
    %73 = arith.truncf %72 : vector<16x64xf32> to vector<16x64xbf16>
    %74 = vector.extract_strided_slice %22 {offsets = [64, 0], sizes = [64, 512], strides = [1, 1]} : vector<512x512xbf16> to vector<64x512xbf16>
    %cst_39 = arith.constant dense<0.000000e+00> : vector<16x512xf32>
    %75 = tpu.matmul %73, %74, %cst_39 {dimension_numbers = #tpu.dot_dimension_numbers<[1], [0], [0], [1], [0, 0, 1, 1], [], []>} : vector<16x64xbf16>, vector<64x512xbf16>, vector<16x512xf32> -> vector<16x512xf32>
    %76 = arith.addf %49, %75 : vector<16x512xf32>
    %77 = vector.extract_strided_slice %16 {offsets = [0, 0, 128], sizes = [2, 8, 64], strides = [1, 1, 1]} : vector<2x8x512xbf16> to vector<2x8x64xbf16>
    %78 = vector.extract_strided_slice %18 {offsets = [0, 0, 128], sizes = [2, 8, 64], strides = [1, 1, 1]} : vector<2x8x512xbf16> to vector<2x8x64xbf16>
    %79 = vector.extract_strided_slice %20 {offsets = [0, 0, 128], sizes = [2, 8, 64], strides = [1, 1, 1]} : vector<2x8x512xbf16> to vector<2x8x64xbf16>
    "tpu.trace_start"() <{level = 10 : i32, message = "bqd,bkd->bqk"}> : () -> ()
    %cst_40 = arith.constant dense<0.000000e+00> : vector<2x8x8xf32>
    %80 = tpu.matmul %77, %78, %cst_40 {dimension_numbers = #tpu.dot_dimension_numbers<[2], [2], [1], [1], [0, 0, 0, 1, 1, 1], [0], [0]>} : vector<2x8x64xbf16>, vector<2x8x64xbf16>, vector<2x8x8xf32> -> vector<2x8x8xf32>
    "tpu.trace_stop"() : () -> ()
    %cst_41 = arith.constant 1.250000e-01 : f32
    %81 = vector.broadcast %cst_41 : f32 to vector<2x8x8xf32>
    %82 = arith.mulf %80, %81 : vector<2x8x8xf32>
    %83 = arith.addf %82, %21 : vector<2x8x8xf32>
    %cst_42 = arith.constant dense<0xFF800000> : vector<2x8xf32>
    %84 = vector.multi_reduction <maximumf>, %83, %cst_42 [2] : vector<2x8x8xf32> to vector<2x8xf32>
    %85 = vector.shape_cast %84 : vector<2x8xf32> to vector<2x8x1xf32>
    %86 = vector.broadcast %85 : vector<2x8x1xf32> to vector<2x8x8xf32>
    %87 = arith.subf %83, %86 : vector<2x8x8xf32>
    %88 = math.exp %87 : vector<2x8x8xf32>
    %cst_43 = arith.constant dense<0.000000e+00> : vector<2x8xf32>
    %89 = vector.multi_reduction <add>, %88, %cst_43 [2] : vector<2x8x8xf32> to vector<2x8xf32>
    %90 = vector.shape_cast %89 : vector<2x8xf32> to vector<2x8x1xf32>
    %91 = tpu.reciprocal %90 {approx = true} : vector<2x8x1xf32> -> vector<2x8x1xf32>
    %92 = vector.broadcast %91 : vector<2x8x1xf32> to vector<2x8x8xf32>
    %93 = arith.mulf %88, %92 : vector<2x8x8xf32>
    %c0_44 = arith.constant 0 : index
    %c2 = arith.constant 2 : index
    %c0_45 = arith.constant 0 : index
    %c0_46 = arith.constant 0 : index
    %94 = vector.load %arg12[%c0_44, %c2, %c0_45, %c0_46] : memref<2x8x8x8xf32, #tpu.memory_space<vmem>>, vector<2x1x8x8xf32>
    %95 = vector.shape_cast %94 : vector<2x1x8x8xf32> to vector<2x8x8xf32>
    %96 = vector.shape_cast %93 : vector<2x8x8xf32> to vector<2x1x8x8xf32>
    tpu.vector_store %arg12[%c0_44, %c2, %c0_45, %c0_46], %96 {strides = array<i32>} : memref<2x8x8x8xf32, #tpu.memory_space<vmem>>, vector<2x1x8x8xf32>,
    %97 = arith.truncf %93 : vector<2x8x8xf32> to vector<2x8x8xbf16>
    "tpu.trace_start"() <{level = 10 : i32, message = "bqk,bkd->bqd"}> : () -> ()
    %cst_47 = arith.constant dense<0.000000e+00> : vector<2x8x64xf32>
    %98 = tpu.matmul %97, %79, %cst_47 {dimension_numbers = #tpu.dot_dimension_numbers<[2], [1], [1], [2], [0, 0, 0, 1, 1, 2], [0], [0]>} : vector<2x8x8xbf16>, vector<2x8x64xbf16>, vector<2x8x64xf32> -> vector<2x8x64xf32>
    "tpu.trace_stop"() : () -> ()
    %99 = vector.shape_cast %98 : vector<2x8x64xf32> to vector<16x64xf32>
    %100 = arith.truncf %99 : vector<16x64xf32> to vector<16x64xbf16>
    %101 = vector.extract_strided_slice %22 {offsets = [128, 0], sizes = [64, 512], strides = [1, 1]} : vector<512x512xbf16> to vector<64x512xbf16>
    %cst_48 = arith.constant dense<0.000000e+00> : vector<16x512xf32>
    %102 = tpu.matmul %100, %101, %cst_48 {dimension_numbers = #tpu.dot_dimension_numbers<[1], [0], [0], [1], [0, 0, 1, 1], [], []>} : vector<16x64xbf16>, vector<64x512xbf16>, vector<16x512xf32> -> vector<16x512xf32>
    %103 = arith.addf %76, %102 : vector<16x512xf32>
    %104 = vector.extract_strided_slice %16 {offsets = [0, 0, 192], sizes = [2, 8, 64], strides = [1, 1, 1]} : vector<2x8x512xbf16> to vector<2x8x64xbf16>
    %105 = vector.extract_strided_slice %18 {offsets = [0, 0, 192], sizes = [2, 8, 64], strides = [1, 1, 1]} : vector<2x8x512xbf16> to vector<2x8x64xbf16>
    %106 = vector.extract_strided_slice %20 {offsets = [0, 0, 192], sizes = [2, 8, 64], strides = [1, 1, 1]} : vector<2x8x512xbf16> to vector<2x8x64xbf16>
    "tpu.trace_start"() <{level = 10 : i32, message = "bqd,bkd->bqk"}> : () -> ()
    %cst_49 = arith.constant dense<0.000000e+00> : vector<2x8x8xf32>
    %107 = tpu.matmul %104, %105, %cst_49 {dimension_numbers = #tpu.dot_dimension_numbers<[2], [2], [1], [1], [0, 0, 0, 1, 1, 1], [0], [0]>} : vector<2x8x64xbf16>, vector<2x8x64xbf16>, vector<2x8x8xf32> -> vector<2x8x8xf32>
    "tpu.trace_stop"() : () -> ()
    %cst_50 = arith.constant 1.250000e-01 : f32
    %108 = vector.broadcast %cst_50 : f32 to vector<2x8x8xf32>
    %109 = arith.mulf %107, %108 : vector<2x8x8xf32>
    %110 = arith.addf %109, %21 : vector<2x8x8xf32>
    %cst_51 = arith.constant dense<0xFF800000> : vector<2x8xf32>
    %111 = vector.multi_reduction <maximumf>, %110, %cst_51 [2] : vector<2x8x8xf32> to vector<2x8xf32>
    %112 = vector.shape_cast %111 : vector<2x8xf32> to vector<2x8x1xf32>
    %113 = vector.broadcast %112 : vector<2x8x1xf32> to vector<2x8x8xf32>
    %114 = arith.subf %110, %113 : vector<2x8x8xf32>
    %115 = math.exp %114 : vector<2x8x8xf32>
    %cst_52 = arith.constant dense<0.000000e+00> : vector<2x8xf32>
    %116 = vector.multi_reduction <add>, %115, %cst_52 [2] : vector<2x8x8xf32> to vector<2x8xf32>
    %117 = vector.shape_cast %116 : vector<2x8xf32> to vector<2x8x1xf32>
    %118 = tpu.reciprocal %117 {approx = true} : vector<2x8x1xf32> -> vector<2x8x1xf32>
    %119 = vector.broadcast %118 : vector<2x8x1xf32> to vector<2x8x8xf32>
    %120 = arith.mulf %115, %119 : vector<2x8x8xf32>
    %c0_53 = arith.constant 0 : index
    %c3 = arith.constant 3 : index
    %c0_54 = arith.constant 0 : index
    %c0_55 = arith.constant 0 : index
    %121 = vector.load %arg12[%c0_53, %c3, %c0_54, %c0_55] : memref<2x8x8x8xf32, #tpu.memory_space<vmem>>, vector<2x1x8x8xf32>
    %122 = vector.shape_cast %121 : vector<2x1x8x8xf32> to vector<2x8x8xf32>
    %123 = vector.shape_cast %120 : vector<2x8x8xf32> to vector<2x1x8x8xf32>
    tpu.vector_store %arg12[%c0_53, %c3, %c0_54, %c0_55], %123 {strides = array<i32>} : memref<2x8x8x8xf32, #tpu.memory_space<vmem>>, vector<2x1x8x8xf32>,
    %124 = arith.truncf %120 : vector<2x8x8xf32> to vector<2x8x8xbf16>
    "tpu.trace_start"() <{level = 10 : i32, message = "bqk,bkd->bqd"}> : () -> ()
    %cst_56 = arith.constant dense<0.000000e+00> : vector<2x8x64xf32>
    %125 = tpu.matmul %124, %106, %cst_56 {dimension_numbers = #tpu.dot_dimension_numbers<[2], [1], [1], [2], [0, 0, 0, 1, 1, 2], [0], [0]>} : vector<2x8x8xbf16>, vector<2x8x64xbf16>, vector<2x8x64xf32> -> vector<2x8x64xf32>
    "tpu.trace_stop"() : () -> ()
    %126 = vector.shape_cast %125 : vector<2x8x64xf32> to vector<16x64xf32>
    %127 = arith.truncf %126 : vector<16x64xf32> to vector<16x64xbf16>
    %128 = vector.extract_strided_slice %22 {offsets = [192, 0], sizes = [64, 512], strides = [1, 1]} : vector<512x512xbf16> to vector<64x512xbf16>
    %cst_57 = arith.constant dense<0.000000e+00> : vector<16x512xf32>
    %129 = tpu.matmul %127, %128, %cst_57 {dimension_numbers = #tpu.dot_dimension_numbers<[1], [0], [0], [1], [0, 0, 1, 1], [], []>} : vector<16x64xbf16>, vector<64x512xbf16>, vector<16x512xf32> -> vector<16x512xf32>
    %130 = arith.addf %103, %129 : vector<16x512xf32>
    %131 = vector.extract_strided_slice %16 {offsets = [0, 0, 256], sizes = [2, 8, 64], strides = [1, 1, 1]} : vector<2x8x512xbf16> to vector<2x8x64xbf16>
    %132 = vector.extract_strided_slice %18 {offsets = [0, 0, 256], sizes = [2, 8, 64], strides = [1, 1, 1]} : vector<2x8x512xbf16> to vector<2x8x64xbf16>
    %133 = vector.extract_strided_slice %20 {offsets = [0, 0, 256], sizes = [2, 8, 64], strides = [1, 1, 1]} : vector<2x8x512xbf16> to vector<2x8x64xbf16>
    "tpu.trace_start"() <{level = 10 : i32, message = "bqd,bkd->bqk"}> : () -> ()
    %cst_58 = arith.constant dense<0.000000e+00> : vector<2x8x8xf32>
    %134 = tpu.matmul %131, %132, %cst_58 {dimension_numbers = #tpu.dot_dimension_numbers<[2], [2], [1], [1], [0, 0, 0, 1, 1, 1], [0], [0]>} : vector<2x8x64xbf16>, vector<2x8x64xbf16>, vector<2x8x8xf32> -> vector<2x8x8xf32>
    "tpu.trace_stop"() : () -> ()
    %cst_59 = arith.constant 1.250000e-01 : f32
    %135 = vector.broadcast %cst_59 : f32 to vector<2x8x8xf32>
    %136 = arith.mulf %134, %135 : vector<2x8x8xf32>
    %137 = arith.addf %136, %21 : vector<2x8x8xf32>
    %cst_60 = arith.constant dense<0xFF800000> : vector<2x8xf32>
    %138 = vector.multi_reduction <maximumf>, %137, %cst_60 [2] : vector<2x8x8xf32> to vector<2x8xf32>
    %139 = vector.shape_cast %138 : vector<2x8xf32> to vector<2x8x1xf32>
    %140 = vector.broadcast %139 : vector<2x8x1xf32> to vector<2x8x8xf32>
    %141 = arith.subf %137, %140 : vector<2x8x8xf32>
    %142 = math.exp %141 : vector<2x8x8xf32>
    %cst_61 = arith.constant dense<0.000000e+00> : vector<2x8xf32>
    %143 = vector.multi_reduction <add>, %142, %cst_61 [2] : vector<2x8x8xf32> to vector<2x8xf32>
    %144 = vector.shape_cast %143 : vector<2x8xf32> to vector<2x8x1xf32>
    %145 = tpu.reciprocal %144 {approx = true} : vector<2x8x1xf32> -> vector<2x8x1xf32>
    %146 = vector.broadcast %145 : vector<2x8x1xf32> to vector<2x8x8xf32>
    %147 = arith.mulf %142, %146 : vector<2x8x8xf32>
    %c0_62 = arith.constant 0 : index
    %c4 = arith.constant 4 : index
    %c0_63 = arith.constant 0 : index
    %c0_64 = arith.constant 0 : index
    %148 = vector.load %arg12[%c0_62, %c4, %c0_63, %c0_64] : memref<2x8x8x8xf32, #tpu.memory_space<vmem>>, vector<2x1x8x8xf32>
    %149 = vector.shape_cast %148 : vector<2x1x8x8xf32> to vector<2x8x8xf32>
    %150 = vector.shape_cast %147 : vector<2x8x8xf32> to vector<2x1x8x8xf32>
    tpu.vector_store %arg12[%c0_62, %c4, %c0_63, %c0_64], %150 {strides = array<i32>} : memref<2x8x8x8xf32, #tpu.memory_space<vmem>>, vector<2x1x8x8xf32>,
    %151 = arith.truncf %147 : vector<2x8x8xf32> to vector<2x8x8xbf16>
    "tpu.trace_start"() <{level = 10 : i32, message = "bqk,bkd->bqd"}> : () -> ()
    %cst_65 = arith.constant dense<0.000000e+00> : vector<2x8x64xf32>
    %152 = tpu.matmul %151, %133, %cst_65 {dimension_numbers = #tpu.dot_dimension_numbers<[2], [1], [1], [2], [0, 0, 0, 1, 1, 2], [0], [0]>} : vector<2x8x8xbf16>, vector<2x8x64xbf16>, vector<2x8x64xf32> -> vector<2x8x64xf32>
    "tpu.trace_stop"() : () -> ()
    %153 = vector.shape_cast %152 : vector<2x8x64xf32> to vector<16x64xf32>
    %154 = arith.truncf %153 : vector<16x64xf32> to vector<16x64xbf16>
    %155 = vector.extract_strided_slice %22 {offsets = [256, 0], sizes = [64, 512], strides = [1, 1]} : vector<512x512xbf16> to vector<64x512xbf16>
    %cst_66 = arith.constant dense<0.000000e+00> : vector<16x512xf32>
    %156 = tpu.matmul %154, %155, %cst_66 {dimension_numbers = #tpu.dot_dimension_numbers<[1], [0], [0], [1], [0, 0, 1, 1], [], []>} : vector<16x64xbf16>, vector<64x512xbf16>, vector<16x512xf32> -> vector<16x512xf32>
    %157 = arith.addf %130, %156 : vector<16x512xf32>
    %158 = vector.extract_strided_slice %16 {offsets = [0, 0, 320], sizes = [2, 8, 64], strides = [1, 1, 1]} : vector<2x8x512xbf16> to vector<2x8x64xbf16>
    %159 = vector.extract_strided_slice %18 {offsets = [0, 0, 320], sizes = [2, 8, 64], strides = [1, 1, 1]} : vector<2x8x512xbf16> to vector<2x8x64xbf16>
    %160 = vector.extract_strided_slice %20 {offsets = [0, 0, 320], sizes = [2, 8, 64], strides = [1, 1, 1]} : vector<2x8x512xbf16> to vector<2x8x64xbf16>
    "tpu.trace_start"() <{level = 10 : i32, message = "bqd,bkd->bqk"}> : () -> ()
    %cst_67 = arith.constant dense<0.000000e+00> : vector<2x8x8xf32>
    %161 = tpu.matmul %158, %159, %cst_67 {dimension_numbers = #tpu.dot_dimension_numbers<[2], [2], [1], [1], [0, 0, 0, 1, 1, 1], [0], [0]>} : vector<2x8x64xbf16>, vector<2x8x64xbf16>, vector<2x8x8xf32> -> vector<2x8x8xf32>
    "tpu.trace_stop"() : () -> ()
    %cst_68 = arith.constant 1.250000e-01 : f32
    %162 = vector.broadcast %cst_68 : f32 to vector<2x8x8xf32>
    %163 = arith.mulf %161, %162 : vector<2x8x8xf32>
    %164 = arith.addf %163, %21 : vector<2x8x8xf32>
    %cst_69 = arith.constant dense<0xFF800000> : vector<2x8xf32>
    %165 = vector.multi_reduction <maximumf>, %164, %cst_69 [2] : vector<2x8x8xf32> to vector<2x8xf32>
    %166 = vector.shape_cast %165 : vector<2x8xf32> to vector<2x8x1xf32>
    %167 = vector.broadcast %166 : vector<2x8x1xf32> to vector<2x8x8xf32>
    %168 = arith.subf %164, %167 : vector<2x8x8xf32>
    %169 = math.exp %168 : vector<2x8x8xf32>
    %cst_70 = arith.constant dense<0.000000e+00> : vector<2x8xf32>
    %170 = vector.multi_reduction <add>, %169, %cst_70 [2] : vector<2x8x8xf32> to vector<2x8xf32>
    %171 = vector.shape_cast %170 : vector<2x8xf32> to vector<2x8x1xf32>
    %172 = tpu.reciprocal %171 {approx = true} : vector<2x8x1xf32> -> vector<2x8x1xf32>
    %173 = vector.broadcast %172 : vector<2x8x1xf32> to vector<2x8x8xf32>
    %174 = arith.mulf %169, %173 : vector<2x8x8xf32>
    %c0_71 = arith.constant 0 : index
    %c5 = arith.constant 5 : index
    %c0_72 = arith.constant 0 : index
    %c0_73 = arith.constant 0 : index
    %175 = vector.load %arg12[%c0_71, %c5, %c0_72, %c0_73] : memref<2x8x8x8xf32, #tpu.memory_space<vmem>>, vector<2x1x8x8xf32>
    %176 = vector.shape_cast %175 : vector<2x1x8x8xf32> to vector<2x8x8xf32>
    %177 = vector.shape_cast %174 : vector<2x8x8xf32> to vector<2x1x8x8xf32>
    tpu.vector_store %arg12[%c0_71, %c5, %c0_72, %c0_73], %177 {strides = array<i32>} : memref<2x8x8x8xf32, #tpu.memory_space<vmem>>, vector<2x1x8x8xf32>,
    %178 = arith.truncf %174 : vector<2x8x8xf32> to vector<2x8x8xbf16>
    "tpu.trace_start"() <{level = 10 : i32, message = "bqk,bkd->bqd"}> : () -> ()
    %cst_74 = arith.constant dense<0.000000e+00> : vector<2x8x64xf32>
    %179 = tpu.matmul %178, %160, %cst_74 {dimension_numbers = #tpu.dot_dimension_numbers<[2], [1], [1], [2], [0, 0, 0, 1, 1, 2], [0], [0]>} : vector<2x8x8xbf16>, vector<2x8x64xbf16>, vector<2x8x64xf32> -> vector<2x8x64xf32>
    "tpu.trace_stop"() : () -> ()
    %180 = vector.shape_cast %179 : vector<2x8x64xf32> to vector<16x64xf32>
    %181 = arith.truncf %180 : vector<16x64xf32> to vector<16x64xbf16>
    %182 = vector.extract_strided_slice %22 {offsets = [320, 0], sizes = [64, 512], strides = [1, 1]} : vector<512x512xbf16> to vector<64x512xbf16>
    %cst_75 = arith.constant dense<0.000000e+00> : vector<16x512xf32>
    %183 = tpu.matmul %181, %182, %cst_75 {dimension_numbers = #tpu.dot_dimension_numbers<[1], [0], [0], [1], [0, 0, 1, 1], [], []>} : vector<16x64xbf16>, vector<64x512xbf16>, vector<16x512xf32> -> vector<16x512xf32>
    %184 = arith.addf %157, %183 : vector<16x512xf32>
    %185 = vector.extract_strided_slice %16 {offsets = [0, 0, 384], sizes = [2, 8, 64], strides = [1, 1, 1]} : vector<2x8x512xbf16> to vector<2x8x64xbf16>
    %186 = vector.extract_strided_slice %18 {offsets = [0, 0, 384], sizes = [2, 8, 64], strides = [1, 1, 1]} : vector<2x8x512xbf16> to vector<2x8x64xbf16>
    %187 = vector.extract_strided_slice %20 {offsets = [0, 0, 384], sizes = [2, 8, 64], strides = [1, 1, 1]} : vector<2x8x512xbf16> to vector<2x8x64xbf16>
    "tpu.trace_start"() <{level = 10 : i32, message = "bqd,bkd->bqk"}> : () -> ()
    %cst_76 = arith.constant dense<0.000000e+00> : vector<2x8x8xf32>
    %188 = tpu.matmul %185, %186, %cst_76 {dimension_numbers = #tpu.dot_dimension_numbers<[2], [2], [1], [1], [0, 0, 0, 1, 1, 1], [0], [0]>} : vector<2x8x64xbf16>, vector<2x8x64xbf16>, vector<2x8x8xf32> -> vector<2x8x8xf32>
    "tpu.trace_stop"() : () -> ()
    %cst_77 = arith.constant 1.250000e-01 : f32
    %189 = vector.broadcast %cst_77 : f32 to vector<2x8x8xf32>
    %190 = arith.mulf %188, %189 : vector<2x8x8xf32>
    %191 = arith.addf %190, %21 : vector<2x8x8xf32>
    %cst_78 = arith.constant dense<0xFF800000> : vector<2x8xf32>
    %192 = vector.multi_reduction <maximumf>, %191, %cst_78 [2] : vector<2x8x8xf32> to vector<2x8xf32>
    %193 = vector.shape_cast %192 : vector<2x8xf32> to vector<2x8x1xf32>
    %194 = vector.broadcast %193 : vector<2x8x1xf32> to vector<2x8x8xf32>
    %195 = arith.subf %191, %194 : vector<2x8x8xf32>
    %196 = math.exp %195 : vector<2x8x8xf32>
    %cst_79 = arith.constant dense<0.000000e+00> : vector<2x8xf32>
    %197 = vector.multi_reduction <add>, %196, %cst_79 [2] : vector<2x8x8xf32> to vector<2x8xf32>
    %198 = vector.shape_cast %197 : vector<2x8xf32> to vector<2x8x1xf32>
    %199 = tpu.reciprocal %198 {approx = true} : vector<2x8x1xf32> -> vector<2x8x1xf32>
    %200 = vector.broadcast %199 : vector<2x8x1xf32> to vector<2x8x8xf32>
    %201 = arith.mulf %196, %200 : vector<2x8x8xf32>
    %c0_80 = arith.constant 0 : index
    %c6 = arith.constant 6 : index
    %c0_81 = arith.constant 0 : index
    %c0_82 = arith.constant 0 : index
    %202 = vector.load %arg12[%c0_80, %c6, %c0_81, %c0_82] : memref<2x8x8x8xf32, #tpu.memory_space<vmem>>, vector<2x1x8x8xf32>
    %203 = vector.shape_cast %202 : vector<2x1x8x8xf32> to vector<2x8x8xf32>
    %204 = vector.shape_cast %201 : vector<2x8x8xf32> to vector<2x1x8x8xf32>
    tpu.vector_store %arg12[%c0_80, %c6, %c0_81, %c0_82], %204 {strides = array<i32>} : memref<2x8x8x8xf32, #tpu.memory_space<vmem>>, vector<2x1x8x8xf32>,
    %205 = arith.truncf %201 : vector<2x8x8xf32> to vector<2x8x8xbf16>
    "tpu.trace_start"() <{level = 10 : i32, message = "bqk,bkd->bqd"}> : () -> ()
    %cst_83 = arith.constant dense<0.000000e+00> : vector<2x8x64xf32>
    %206 = tpu.matmul %205, %187, %cst_83 {dimension_numbers = #tpu.dot_dimension_numbers<[2], [1], [1], [2], [0, 0, 0, 1, 1, 2], [0], [0]>} : vector<2x8x8xbf16>, vector<2x8x64xbf16>, vector<2x8x64xf32> -> vector<2x8x64xf32>
    "tpu.trace_stop"() : () -> ()
    %207 = vector.shape_cast %206 : vector<2x8x64xf32> to vector<16x64xf32>
    %208 = arith.truncf %207 : vector<16x64xf32> to vector<16x64xbf16>
    %209 = vector.extract_strided_slice %22 {offsets = [384, 0], sizes = [64, 512], strides = [1, 1]} : vector<512x512xbf16> to vector<64x512xbf16>
    %cst_84 = arith.constant dense<0.000000e+00> : vector<16x512xf32>
    %210 = tpu.matmul %208, %209, %cst_84 {dimension_numbers = #tpu.dot_dimension_numbers<[1], [0], [0], [1], [0, 0, 1, 1], [], []>} : vector<16x64xbf16>, vector<64x512xbf16>, vector<16x512xf32> -> vector<16x512xf32>
    %211 = arith.addf %184, %210 : vector<16x512xf32>
    %212 = vector.extract_strided_slice %16 {offsets = [0, 0, 448], sizes = [2, 8, 64], strides = [1, 1, 1]} : vector<2x8x512xbf16> to vector<2x8x64xbf16>
    %213 = vector.extract_strided_slice %18 {offsets = [0, 0, 448], sizes = [2, 8, 64], strides = [1, 1, 1]} : vector<2x8x512xbf16> to vector<2x8x64xbf16>
    %214 = vector.extract_strided_slice %20 {offsets = [0, 0, 448], sizes = [2, 8, 64], strides = [1, 1, 1]} : vector<2x8x512xbf16> to vector<2x8x64xbf16>
    "tpu.trace_start"() <{level = 10 : i32, message = "bqd,bkd->bqk"}> : () -> ()
    %cst_85 = arith.constant dense<0.000000e+00> : vector<2x8x8xf32>
    %215 = tpu.matmul %212, %213, %cst_85 {dimension_numbers = #tpu.dot_dimension_numbers<[2], [2], [1], [1], [0, 0, 0, 1, 1, 1], [0], [0]>} : vector<2x8x64xbf16>, vector<2x8x64xbf16>, vector<2x8x8xf32> -> vector<2x8x8xf32>
    "tpu.trace_stop"() : () -> ()
    %cst_86 = arith.constant 1.250000e-01 : f32
    %216 = vector.broadcast %cst_86 : f32 to vector<2x8x8xf32>
    %217 = arith.mulf %215, %216 : vector<2x8x8xf32>
    %218 = arith.addf %217, %21 : vector<2x8x8xf32>
    %cst_87 = arith.constant dense<0xFF800000> : vector<2x8xf32>
    %219 = vector.multi_reduction <maximumf>, %218, %cst_87 [2] : vector<2x8x8xf32> to vector<2x8xf32>
    %220 = vector.shape_cast %219 : vector<2x8xf32> to vector<2x8x1xf32>
    %221 = vector.broadcast %220 : vector<2x8x1xf32> to vector<2x8x8xf32>
    %222 = arith.subf %218, %221 : vector<2x8x8xf32>
    %223 = math.exp %222 : vector<2x8x8xf32>
    %cst_88 = arith.constant dense<0.000000e+00> : vector<2x8xf32>
    %224 = vector.multi_reduction <add>, %223, %cst_88 [2] : vector<2x8x8xf32> to vector<2x8xf32>
    %225 = vector.shape_cast %224 : vector<2x8xf32> to vector<2x8x1xf32>
    %226 = tpu.reciprocal %225 {approx = true} : vector<2x8x1xf32> -> vector<2x8x1xf32>
    %227 = vector.broadcast %226 : vector<2x8x1xf32> to vector<2x8x8xf32>
    %228 = arith.mulf %223, %227 : vector<2x8x8xf32>
    %c0_89 = arith.constant 0 : index
    %c7 = arith.constant 7 : index
    %c0_90 = arith.constant 0 : index
    %c0_91 = arith.constant 0 : index
    %229 = vector.load %arg12[%c0_89, %c7, %c0_90, %c0_91] : memref<2x8x8x8xf32, #tpu.memory_space<vmem>>, vector<2x1x8x8xf32>
    %230 = vector.shape_cast %229 : vector<2x1x8x8xf32> to vector<2x8x8xf32>
    %231 = vector.shape_cast %228 : vector<2x8x8xf32> to vector<2x1x8x8xf32>
    tpu.vector_store %arg12[%c0_89, %c7, %c0_90, %c0_91], %231 {strides = array<i32>} : memref<2x8x8x8xf32, #tpu.memory_space<vmem>>, vector<2x1x8x8xf32>,
    %232 = arith.truncf %228 : vector<2x8x8xf32> to vector<2x8x8xbf16>
    "tpu.trace_start"() <{level = 10 : i32, message = "bqk,bkd->bqd"}> : () -> ()
    %cst_92 = arith.constant dense<0.000000e+00> : vector<2x8x64xf32>
    %233 = tpu.matmul %232, %214, %cst_92 {dimension_numbers = #tpu.dot_dimension_numbers<[2], [1], [1], [2], [0, 0, 0, 1, 1, 2], [0], [0]>} : vector<2x8x8xbf16>, vector<2x8x64xbf16>, vector<2x8x64xf32> -> vector<2x8x64xf32>
    "tpu.trace_stop"() : () -> ()
    %234 = vector.shape_cast %233 : vector<2x8x64xf32> to vector<16x64xf32>
    %235 = arith.truncf %234 : vector<16x64xf32> to vector<16x64xbf16>
    %236 = vector.extract_strided_slice %22 {offsets = [448, 0], sizes = [64, 512], strides = [1, 1]} : vector<512x512xbf16> to vector<64x512xbf16>
    %cst_93 = arith.constant dense<0.000000e+00> : vector<16x512xf32>
    %237 = tpu.matmul %235, %236, %cst_93 {dimension_numbers = #tpu.dot_dimension_numbers<[1], [0], [0], [1], [0, 0, 1, 1], [], []>} : vector<16x64xbf16>, vector<64x512xbf16>, vector<16x512xf32> -> vector<16x512xf32>
    %238 = arith.addf %211, %237 : vector<16x512xf32>
    %cst_94 = arith.constant dense<0.000000e+00> : vector<16xf32>
    %239 = vector.multi_reduction <add>, %238, %cst_94 [1] : vector<16x512xf32> to vector<16xf32>
    %240 = vector.shape_cast %239 : vector<16xf32> to vector<16x1xf32>
    %cst_95 = arith.constant 5.120000e+02 : f32
    %241 = vector.broadcast %cst_95 : f32 to vector<16x1xf32>
    %242 = arith.divf %240, %241 : vector<16x1xf32>
    %243 = vector.broadcast %242 : vector<16x1xf32> to vector<16x512xf32>
    %244 = arith.subf %238, %243 : vector<16x512xf32>
    %245 = arith.mulf %244, %244 : vector<16x512xf32>
    %cst_96 = arith.constant dense<0.000000e+00> : vector<16xf32>
    %246 = vector.multi_reduction <add>, %245, %cst_96 [1] : vector<16x512xf32> to vector<16xf32>
    %247 = vector.shape_cast %246 : vector<16xf32> to vector<16x1xf32>
    %cst_97 = arith.constant 5.120000e+02 : f32
    %248 = vector.broadcast %cst_97 : f32 to vector<16x1xf32>
    %249 = arith.divf %247, %248 : vector<16x1xf32>
    %250 = vector.broadcast %242 : vector<16x1xf32> to vector<16x512xf32>
    %251 = arith.subf %238, %250 : vector<16x512xf32>
    %cst_98 = arith.constant 9.99999974E-6 : f32
    %252 = vector.broadcast %cst_98 : f32 to vector<16x1xf32>
    %253 = arith.addf %249, %252 : vector<16x1xf32>
    %254 = math.rsqrt %253 : vector<16x1xf32>
    %255 = vector.broadcast %254 : vector<16x1xf32> to vector<16x512xf32>
    %256 = arith.mulf %251, %255 : vector<16x512xf32>
    %c0_99 = arith.constant 0 : index
    %c0_100 = arith.constant 0 : index
    %257 = vector.load %arg9[%c0_99, %c0_100] : memref<1x512xf32, #tpu.memory_space<vmem>>, vector<1x512xf32>
    %258 = vector.broadcast %257 : vector<1x512xf32> to vector<16x512xf32>
    %259 = arith.mulf %256, %258 : vector<16x512xf32>
    %c0_101 = arith.constant 0 : index
    %c0_102 = arith.constant 0 : index
    %260 = vector.load %arg10[%c0_101, %c0_102] : memref<1x512xf32, #tpu.memory_space<vmem>>, vector<1x512xf32>
    %261 = vector.broadcast %260 : vector<1x512xf32> to vector<16x512xf32>
    %262 = arith.addf %259, %261 : vector<16x512xf32>
    %263 = vector.shape_cast %262 : vector<16x512xf32> to vector<2x8x512xf32>
    %c0_103 = arith.constant 0 : index
    %c0_104 = arith.constant 0 : index
    %c0_105 = arith.constant 0 : index
    %264 = vector.load %arg11[%c0_103, %c0_104, %c0_105] : memref<2x8x512xf32, #tpu.memory_space<vmem>>, vector<2x8x512xf32>
    tpu.vector_store %arg11[%c0_103, %c0_104, %c0_105], %263 {strides = array<i32>} : memref<2x8x512xf32, #tpu.memory_space<vmem>>, vector<2x8x512xf32>,
    return
  }
  func.func @transform_0(%arg0: i32) -> (i32, i32, i32) {
    %c0_i32 = arith.constant 0 : i32
    %c0_i32_0 = arith.constant 0 : i32
    %c0_i32_1 = arith.constant 0 : i32
    return %arg0, %c0_i32, %c0_i32_0 : i32, i32, i32
  }
  func.func @transform_1(%arg0: i32) -> (i32, i32, i32) {
    %c0_i32 = arith.constant 0 : i32
    %c0_i32_0 = arith.constant 0 : i32
    %c0_i32_1 = arith.constant 0 : i32
    return %arg0, %c0_i32, %c0_i32_0 : i32, i32, i32
  }
  func.func @transform_2(%arg0: i32) -> (i32, i32, i32) {
    %c0_i32 = arith.constant 0 : i32
    %c0_i32_0 = arith.constant 0 : i32
    %c0_i32_1 = arith.constant 0 : i32
    return %arg0, %c0_i32, %c0_i32_0 : i32, i32, i32
  }
  func.func @transform_3(%arg0: i32) -> (i32, i32, i32) {
    %c0_i32 = arith.constant 0 : i32
    %c0_i32_0 = arith.constant 0 : i32
    %c0_i32_1 = arith.constant 0 : i32
    return %arg0, %c0_i32, %c0_i32_0 : i32, i32, i32
  }
  func.func @transform_4(%arg0: i32) -> (i32, i32) {
    %c0_i32 = arith.constant 0 : i32
    %c0_i32_0 = arith.constant 0 : i32
    %c0_i32_1 = arith.constant 0 : i32
    return %c0_i32, %c0_i32_0 : i32, i32
  }
  func.func @transform_5(%arg0: i32) -> (i32, i32) {
    %c0_i32 = arith.constant 0 : i32
    %c0_i32_0 = arith.constant 0 : i32
    %c0_i32_1 = arith.constant 0 : i32
    return %c0_i32, %c0_i32_0 : i32, i32
  }
  func.func @transform_6(%arg0: i32) -> (i32, i32) {
    %c0_i32 = arith.constant 0 : i32
    %c0_i32_0 = arith.constant 0 : i32
    %c0_i32_1 = arith.constant 0 : i32
    return %c0_i32, %c0_i32_0 : i32, i32
  }
  func.func @transform_7(%arg0: i32) -> (i32, i32) {
    %c0_i32 = arith.constant 0 : i32
    %c0_i32_0 = arith.constant 0 : i32
    %c0_i32_1 = arith.constant 0 : i32
    return %c0_i32, %c0_i32_0 : i32, i32
  }
  func.func @transform_8(%arg0: i32) -> (i32, i32) {
    %c0_i32 = arith.constant 0 : i32
    %c0_i32_0 = arith.constant 0 : i32
    %c0_i32_1 = arith.constant 0 : i32
    return %c0_i32, %c0_i32_0 : i32, i32
  }
  func.func @transform_9(%arg0: i32) -> (i32, i32) {
    %c0_i32 = arith.constant 0 : i32
    %c0_i32_0 = arith.constant 0 : i32
    %c0_i32_1 = arith.constant 0 : i32
    return %c0_i32, %c0_i32_0 : i32, i32
  }
  func.func @transform_10(%arg0: i32) -> (i32, i32, i32) {
    %c0_i32 = arith.constant 0 : i32
    %c0_i32_0 = arith.constant 0 : i32
    %c0_i32_1 = arith.constant 0 : i32
    return %arg0, %c0_i32, %c0_i32_0 : i32, i32, i32
  }
  func.func @transform_11(%arg0: i32) -> (i32, i32, i32, i32) {
    %c0_i32 = arith.constant 0 : i32
    %c0_i32_0 = arith.constant 0 : i32
    %c0_i32_1 = arith.constant 0 : i32
    %c0_i32_2 = arith.constant 0 : i32
    return %arg0, %c0_i32, %c0_i32_0, %c0_i32_1 : i32, i32, i32, i32
  }
}

</mosaic_0001>

<llo_original>
// kernel: tpu_custom_call.1
$region0: #{tpu_custom_call.1}
  #allocation0 [shape = 'u32[]', space=smem, size = 0x4, offset = 0x4, fixed_abs, tag = 'smem constant byte address 0x4 - core index']
  #allocation1 [shape = 'u32[144,128]{1,0:T(1,128)}', space=vmem, size = 0x12000, scoped, tag = 'internal scratch']
  %s0 = inlined_call_operand.hbm [shape: f32[4,8,512], index: 0, kind: input, shape index: {}]
  %s1 = inlined_call_operand.hbm [shape: f32[4,8,512], index: 1, kind: input, shape index: {}]
  %s2 = inlined_call_operand.hbm [shape: f32[4,8,512], index: 2, kind: input, shape index: {}]
  %s3 = inlined_call_operand.hbm [shape: f32[4,8,8], index: 3, kind: input, shape index: {}]
  %s4 = inlined_call_operand.hbm [shape: bf16[512,512], index: 4, kind: input, shape index: {}]
  %s5 = inlined_call_operand.hbm [shape: bf16[512,512], index: 5, kind: input, shape index: {}]
  %s6 = inlined_call_operand.hbm [shape: bf16[512,512], index: 6, kind: input, shape index: {}]
  %s7 = inlined_call_operand.hbm [shape: bf16[512,512], index: 7, kind: input, shape index: {}]
  %s8 = inlined_call_operand.vmem [shape: f32[1,512], index: 8, kind: input, shape index: {}]
  %s9 = inlined_call_operand.vmem [shape: f32[1,512], index: 9, kind: input, shape index: {}]
  %s10 = inlined_call_operand.hbm [shape: f32[4,8,512], index: 10, kind: output, shape index: {0}]
  %s11 = inlined_call_operand.hbm [shape: f32[4,8,8,8], index: 11, kind: output, shape index: {1}]
  %12 = xla_tuple %s10, %s11
  %s13 = sld [smem:[#allocation0]]
  $region113: #{tpu_custom_call.1} parent=0
    _
  %s15 = ssub.s32 1, %s13
  %s16 = scalar_select 0, %s15, %s13
  $region1: #{tpu_custom_call.1} parent=0
    #allocation2 [shape = 'u8[65536]{0}', space=vmem, size = 0x10000, scoped, tag = 'input window, operand 0']
    #allocation3 [shape = 's32[2]{0}', space=sflag, size = 0x8, scoped, tag = 'scoped memory for tpu_custom_call.1']
    #allocation4 [shape = 's32[2]{0}', space=sflag, size = 0x8, scoped, tag = 'scoped memory for tpu_custom_call.1']
    #allocation5 [shape = 'u8[65536]{0}', space=vmem, size = 0x10000, scoped, tag = 'input window, operand 1']
    #allocation6 [shape = 's32[2]{0}', space=sflag, size = 0x8, scoped, tag = 'scoped memory for tpu_custom_call.1']
    #allocation7 [shape = 'u8[65536]{0}', space=vmem, size = 0x10000, scoped, tag = 'input window, operand 2']
    #allocation8 [shape = 'u8[16384]{0}', space=vmem, size = 0x4000, scoped, tag = 'input window, operand 3']
    #allocation9 [shape = 's32[2]{0}', space=sflag, size = 0x8, scoped, tag = 'scoped memory for tpu_custom_call.1']
    #allocation10 [shape = 'u8[524288]{0}', space=vmem, size = 0x80000, scoped, tag = 'input window, operand 4, single buffered']
    #allocation11 [shape = 'u8[524288]{0}', space=vmem, size = 0x80000, scoped, tag = 'input window, operand 5, single buffered']
    #allocation12 [shape = 's32[1]{0}', space=sflag, size = 0x4, scoped, tag = 'scoped memory for tpu_custom_call.1']
    #allocation13 [shape = 'u8[524288]{0}', space=vmem, size = 0x80000, scoped, tag = 'input window, operand 6, single buffered']
    #allocation14 [shape = 'u8[524288]{0}', space=vmem, size = 0x80000, scoped, tag = 'input window, operand 7, single buffered']
    #allocation15 [shape = 's32[1]{0}', space=sflag, size = 0x4, scoped, tag = 'scoped memory for tpu_custom_call.1']
    #allocation16 [shape = 'u8[65536]{0}', space=vmem, size = 0x10000, scoped, tag = 'output window, operand 0']
    #allocation17 [shape = 'u8[131072]{0}', space=vmem, size = 0x20000, scoped, tag = 'output window, operand 1']
    #allocation18 [shape = 's32[2]{0}', space=sflag, size = 0x8, scoped, tag = 'scoped memory for tpu_custom_call.1']
    %17 = vsyncpa [#allocation3], 0
    %s18 = scalar_lea.sflag [#allocation3], 1
    %19 = vsyncpa %s18, 0
    %20 = vsyncpa [#allocation6], 0
    %s21 = scalar_lea.sflag [#allocation6], 1
    %22 = vsyncpa %s21, 0
    %23 = vsyncpa [#allocation9], 0
    %s24 = scalar_lea.sflag [#allocation9], 1
    %25 = vsyncpa %s24, 0
    %26 = vsyncpa [#allocation12], 0
    %27 = vsyncpa [#allocation15], 0
    %28 = vsyncpa [#allocation4], 0
    %s29 = scalar_lea.sflag [#allocation4], 1
    %30 = vsyncpa %s29, 0
    %31 = vsyncpa [#allocation18], 0
    %s32 = scalar_lea.sflag [#allocation18], 1
    %33 = vsyncpa %s32, 0
    loop: start=0, step=1, limit=4
    $region2: #{tpu_custom_call.1} parent=1 // loop_pre_header
      _
    $region3: #{tpu_custom_call.1} parent=1 // loop_header
      %s35 = sphi 0, %s39
      %p36 = scmp.ge.s32.totalorder %s35, 4
      %s45 = sphi 0, %s47
      %s48 = sphi 0, %s45
      %s49 = sphi 0, %s48
      %s65 = sphi 0, %s49
      %s71 = sphi 0, %s73
      %s74 = sphi 0, %s71
      %s75 = sphi 0, %s74
      %s91 = sphi 0, %s75
      %s97 = sphi 0, %s99
      %s100 = sphi 0, %s97
      %s101 = sphi 0, %s100
      %s117 = sphi 0, %s101
      %s123 = sphi 0, %s125
      %s126 = sphi 0, %s123
      %s127 = sphi 0, %s126
      %s143 = sphi 0, %s127
      %s147 = sphi 0, %s147
      %s149 = sphi 0, %s147
      %s150 = sphi 0, %s149
      %s164 = sphi 0, %s150
      %s168 = sphi 0, %s168
      %s170 = sphi 0, %s168
      %s171 = sphi 0, %s170
      %s185 = sphi 0, %s171
      %s189 = sphi 0, %s189
      %s191 = sphi 0, %s189
      %s192 = sphi 0, %s191
      %s206 = sphi 0, %s192
      %s210 = sphi 0, %s210
      %s212 = sphi 0, %s210
      %s213 = sphi 0, %s212
      %s227 = sphi 0, %s213
      %s231 = sphi 0, %s231
      %s233 = sphi 0, %s231
      %s234 = sphi 0, %s233
      %s248 = sphi 0, %s234
      %s252 = sphi 0, %s252
      %s254 = sphi 0, %s252
      %s255 = sphi 0, %s254
      %s269 = sphi 0, %s255
      %s275 = sphi 0, %s277
      %s278 = sphi 0, %s275
      %s279 = sphi 0, %s278
      %s295 = sphi 0, %s279
      %s301 = sphi 0, %s303
      %s304 = sphi 0, %s301
      %s305 = sphi 0, %s304
      %s321 = sphi 0, %s305
    $region4: #{tpu_custom_call.1} parent=1 // loop_header_branch
      %38 = sbr.rel (%p36) target = $region8
    $region5: #{tpu_custom_call.1} parent=1 // loop_body
      %s40 = ssub.s32 %s35, 1
      %s41 = ssub.s32 %s35, 2
      %s42 = sadd.s32 %s35, 1
      %s43 = ssub.s32 %s35, %s42
      %p44 = scmp.eq.s32.totalorder %s43, 0
      %s46 = sadd.s32 %s45, 1
      %s47 = scalar_select %p44, %s45, %s46
      %p50 = pneg %p44
      %p51 = scmp.eq.s32.totalorder %s35, 1
      %p52 = por %p50, %p51
      %p53 = scmp.ne.s32.totalorder %s45, %s48
      %p54 = scmp.eq.s32.totalorder %s35, 0
      %p55 = por %p53, %p54
      %p56 = scmp.ne.s32.totalorder %s45, %s48
      %p57 = scmp.eq.s32.totalorder %s40, 1
      %p58 = por %p56, %p57
      %p59 = scmp.ne.s32.totalorder %s48, %s49
      %p60 = scmp.eq.s32.totalorder %s40, 0
      %p61 = por %p59, %p60
      %p62 = scmp.ne.s32.totalorder %s48, %s49
      %p63 = scmp.eq.s32.totalorder %s41, 1
      %p64 = por %p62, %p63
      %p66 = scmp.ne.s32.totalorder %s49, %s65
      %p67 = scmp.eq.s32.totalorder %s41, 0
      %p68 = por %p66, %p67
      %s69 = ssub.s32 %s35, %s42
      %p70 = scmp.eq.s32.totalorder %s69, 0
      %s72 = sadd.s32 %s71, 1
      %s73 = scalar_select %p70, %s71, %s72
      %p76 = pneg %p70
      %p77 = scmp.eq.s32.totalorder %s35, 1
      %p78 = por %p76, %p77
      %p79 = scmp.ne.s32.totalorder %s71, %s74
      %p80 = scmp.eq.s32.totalorder %s35, 0
      %p81 = por %p79, %p80
      %p82 = scmp.ne.s32.totalorder %s71, %s74
      %p83 = scmp.eq.s32.totalorder %s40, 1
      %p84 = por %p82, %p83
      %p85 = scmp.ne.s32.totalorder %s74, %s75
      %p86 = scmp.eq.s32.totalorder %s40, 0
      %p87 = por %p85, %p86
      %p88 = scmp.ne.s32.totalorder %s74, %s75
      %p89 = scmp.eq.s32.totalorder %s41, 1
      %p90 = por %p88, %p89
      %p92 = scmp.ne.s32.totalorder %s75, %s91
      %p93 = scmp.eq.s32.totalorder %s41, 0
      %p94 = por %p92, %p93
      %s95 = ssub.s32 %s35, %s42
      %p96 = scmp.eq.s32.totalorder %s95, 0
      %s98 = sadd.s32 %s97, 1
      %s99 = scalar_select %p96, %s97, %s98
      %p102 = pneg %p96
      %p103 = scmp.eq.s32.totalorder %s35, 1
      %p104 = por %p102, %p103
      %p105 = scmp.ne.s32.totalorder %s97, %s100
      %p106 = scmp.eq.s32.totalorder %s35, 0
      %p107 = por %p105, %p106
      %p108 = scmp.ne.s32.totalorder %s97, %s100
      %p109 = scmp.eq.s32.totalorder %s40, 1
      %p110 = por %p108, %p109
      %p111 = scmp.ne.s32.totalorder %s100, %s101
      %p112 = scmp.eq.s32.totalorder %s40, 0
      %p113 = por %p111, %p112
      %p114 = scmp.ne.s32.totalorder %s100, %s101
      %p115 = scmp.eq.s32.totalorder %s41, 1
      %p116 = por %p114, %p115
      %p118 = scmp.ne.s32.totalorder %s101, %s117
      %p119 = scmp.eq.s32.totalorder %s41, 0
      %p120 = por %p118, %p119
      %s121 = ssub.s32 %s35, %s42
      %p122 = scmp.eq.s32.totalorder %s121, 0
      %s124 = sadd.s32 %s123, 1
      %s125 = scalar_select %p122, %s123, %s124
      %p128 = pneg %p122
      %p129 = scmp.eq.s32.totalorder %s35, 1
      %p130 = por %p128, %p129
      %p131 = scmp.ne.s32.totalorder %s123, %s126
      %p132 = scmp.eq.s32.totalorder %s35, 0
      %p133 = por %p131, %p132
      %p134 = scmp.ne.s32.totalorder %s123, %s126
      %p135 = scmp.eq.s32.totalorder %s40, 1
      %p136 = por %p134, %p135
      %p137 = scmp.ne.s32.totalorder %s126, %s127
      %p138 = scmp.eq.s32.totalorder %s40, 0
      %p139 = por %p137, %p138
      %p140 = scmp.ne.s32.totalorder %s126, %s127
      %p141 = scmp.eq.s32.totalorder %s41, 1
      %p142 = por %p140, %p141
      %p144 = scmp.ne.s32.totalorder %s127, %s143
      %p145 = scmp.eq.s32.totalorder %s41, 0
      %p146 = por %p144, %p145
      %s148 = sadd.s32 %s147, 1
      %p151 = scmp.eq.s32.totalorder %s35, 1
      %p152 = scmp.ne.s32.totalorder %s147, %s149
      %p153 = scmp.eq.s32.totalorder %s35, 0
      %p154 = por %p152, %p153
      %p155 = scmp.ne.s32.totalorder %s147, %s149
      %p156 = scmp.eq.s32.totalorder %s40, 1
      %p157 = por %p155, %p156
      %p158 = scmp.ne.s32.totalorder %s149, %s150
      %p159 = scmp.eq.s32.totalorder %s40, 0
      %p160 = por %p158, %p159
      %p161 = scmp.ne.s32.totalorder %s149, %s150
      %p162 = scmp.eq.s32.totalorder %s41, 1
      %p163 = por %p161, %p162
      %p165 = scmp.ne.s32.totalorder %s150, %s164
      %p166 = scmp.eq.s32.totalorder %s41, 0
      %p167 = por %p165, %p166
      %s169 = sadd.s32 %s168, 1
      %p172 = scmp.eq.s32.totalorder %s35, 1
      %p173 = scmp.ne.s32.totalorder %s168, %s170
      %p174 = scmp.eq.s32.totalorder %s35, 0
      %p175 = por %p173, %p174
      %p176 = scmp.ne.s32.totalorder %s168, %s170
      %p177 = scmp.eq.s32.totalorder %s40, 1
      %p178 = por %p176, %p177
      %p179 = scmp.ne.s32.totalorder %s170, %s171
      %p180 = scmp.eq.s32.totalorder %s40, 0
      %p181 = por %p179, %p180
      %p182 = scmp.ne.s32.totalorder %s170, %s171
      %p183 = scmp.eq.s32.totalorder %s41, 1
      %p184 = por %p182, %p183
      %p186 = scmp.ne.s32.totalorder %s171, %s185
      %p187 = scmp.eq.s32.totalorder %s41, 0
      %p188 = por %p186, %p187
      %s190 = sadd.s32 %s189, 1
      %p193 = scmp.eq.s32.totalorder %s35, 1
      %p194 = scmp.ne.s32.totalorder %s189, %s191
      %p195 = scmp.eq.s32.totalorder %s35, 0
      %p196 = por %p194, %p195
      %p197 = scmp.ne.s32.totalorder %s189, %s191
      %p198 = scmp.eq.s32.totalorder %s40, 1
      %p199 = por %p197, %p198
      %p200 = scmp.ne.s32.totalorder %s191, %s192
      %p201 = scmp.eq.s32.totalorder %s40, 0
      %p202 = por %p200, %p201
      %p203 = scmp.ne.s32.totalorder %s191, %s192
      %p204 = scmp.eq.s32.totalorder %s41, 1
      %p205 = por %p203, %p204
      %p207 = scmp.ne.s32.totalorder %s192, %s206
      %p208 = scmp.eq.s32.totalorder %s41, 0
      %p209 = por %p207, %p208
      %s211 = sadd.s32 %s210, 1
      %p214 = scmp.eq.s32.totalorder %s35, 1
      %p215 = scmp.ne.s32.totalorder %s210, %s212
      %p216 = scmp.eq.s32.totalorder %s35, 0
      %p217 = por %p215, %p216
      %p218 = scmp.ne.s32.totalorder %s210, %s212
      %p219 = scmp.eq.s32.totalorder %s40, 1
      %p220 = por %p218, %p219
      %p221 = scmp.ne.s32.totalorder %s212, %s213
      %p222 = scmp.eq.s32.totalorder %s40, 0
      %p223 = por %p221, %p222
      %p224 = scmp.ne.s32.totalorder %s212, %s213
      %p225 = scmp.eq.s32.totalorder %s41, 1
      %p226 = por %p224, %p225
      %p228 = scmp.ne.s32.totalorder %s213, %s227
      %p229 = scmp.eq.s32.totalorder %s41, 0
      %p230 = por %p228, %p229
      %s232 = sadd.s32 %s231, 1
      %p235 = scmp.eq.s32.totalorder %s35, 1
      %p236 = scmp.ne.s32.totalorder %s231, %s233
      %p237 = scmp.eq.s32.totalorder %s35, 0
      %p238 = por %p236, %p237
      %p239 = scmp.ne.s32.totalorder %s231, %s233
      %p240 = scmp.eq.s32.totalorder %s40, 1
      %p241 = por %p239, %p240
      %p242 = scmp.ne.s32.totalorder %s233, %s234
      %p243 = scmp.eq.s32.totalorder %s40, 0
      %p244 = por %p242, %p243
      %p245 = scmp.ne.s32.totalorder %s233, %s234
      %p246 = scmp.eq.s32.totalorder %s41, 1
      %p247 = por %p245, %p246
      %p249 = scmp.ne.s32.totalorder %s234, %s248
      %p250 = scmp.eq.s32.totalorder %s41, 0
      %p251 = por %p249, %p250
      %s253 = sadd.s32 %s252, 1
      %p256 = scmp.eq.s32.totalorder %s35, 1
      %p257 = scmp.ne.s32.totalorder %s252, %s254
      %p258 = scmp.eq.s32.totalorder %s35, 0
      %p259 = por %p257, %p258
      %p260 = scmp.ne.s32.totalorder %s252, %s254
      %p261 = scmp.eq.s32.totalorder %s40, 1
      %p262 = por %p260, %p261
      %p263 = scmp.ne.s32.totalorder %s254, %s255
      %p264 = scmp.eq.s32.totalorder %s40, 0
      %p265 = por %p263, %p264
      %p266 = scmp.ne.s32.totalorder %s254, %s255
      %p267 = scmp.eq.s32.totalorder %s41, 1
      %p268 = por %p266, %p267
      %p270 = scmp.ne.s32.totalorder %s255, %s269
      %p271 = scmp.eq.s32.totalorder %s41, 0
      %p272 = por %p270, %p271
      %s273 = ssub.s32 %s35, %s42
      %p274 = scmp.eq.s32.totalorder %s273, 0
      %s276 = sadd.s32 %s275, 1
      %s277 = scalar_select %p274, %s275, %s276
      %p280 = pneg %p274
      %p281 = scmp.eq.s32.totalorder %s35, 1
      %p282 = por %p280, %p281
      %p283 = scmp.ne.s32.totalorder %s275, %s278
      %p284 = scmp.eq.s32.totalorder %s35, 0
      %p285 = por %p283, %p284
      %p286 = scmp.ne.s32.totalorder %s275, %s278
      %p287 = scmp.eq.s32.totalorder %s40, 1
      %p288 = por %p286, %p287
      %p289 = scmp.ne.s32.totalorder %s278, %s279
      %p290 = scmp.eq.s32.totalorder %s40, 0
      %p291 = por %p289, %p290
      %p292 = scmp.ne.s32.totalorder %s278, %s279
      %p293 = scmp.eq.s32.totalorder %s41, 1
      %p294 = por %p292, %p293
      %p296 = scmp.ne.s32.totalorder %s279, %s295
      %p297 = scmp.eq.s32.totalorder %s41, 0
      %p298 = por %p296, %p297
      %s299 = ssub.s32 %s35, %s42
      %p300 = scmp.eq.s32.totalorder %s299, 0
      %s302 = sadd.s32 %s301, 1
      %s303 = scalar_select %p300, %s301, %s302
      %p306 = pneg %p300
      %p307 = scmp.eq.s32.totalorder %s35, 1
      %p308 = por %p306, %p307
      %p309 = scmp.ne.s32.totalorder %s301, %s304
      %p310 = scmp.eq.s32.totalorder %s35, 0
      %p311 = por %p309, %p310
      %p312 = scmp.ne.s32.totalorder %s301, %s304
      %p313 = scmp.eq.s32.totalorder %s40, 1
      %p314 = por %p312, %p313
      %p315 = scmp.ne.s32.totalorder %s304, %s305
      %p316 = scmp.eq.s32.totalorder %s40, 0
      %p317 = por %p315, %p316
      %p318 = scmp.ne.s32.totalorder %s304, %s305
      %p319 = scmp.eq.s32.totalorder %s41, 1
      %p320 = por %p318, %p319
      %p322 = scmp.ne.s32.totalorder %s305, %s321
      %p323 = scmp.eq.s32.totalorder %s41, 0
      %p324 = por %p322, %p323
      %p325 = scmp.le.s32.totalorder 1, %s35
      %p326 = scmp.lt.s32.totalorder %s35, 3
      %p327 = pnand %p325, %p326
      %p328 = pneg %p327
      // Predicated region
      $region9: #{tpu_custom_call.1} parent=5 // pred_check
        _
      $region10: #{tpu_custom_call.1} parent=5 // pred_check_branch
        %330 = sbr.rel (%p327) target = $region12
      $region11: #{tpu_custom_call.1} parent=5 // pred_region
        %s331 = ssub.s32 %s35, 1
        // Predicated region
        $region13: #{tpu_custom_call.1} parent=11 // pred_check
          %p332 = pneg %p160
        $region14: #{tpu_custom_call.1} parent=11 // pred_check_branch
          %334 = sbr.rel (%p332) target = $region16
        $region15: #{tpu_custom_call.1} parent=11 // pred_region
          %s336 = ssub.s32 16384, 16384
          %337 = vsyncadd [#allocation9], %s336
          %s338 = sshll.u32 [#allocation10], 4
          %s339 = int_to_ptr.vmem [resolvable:$true] %s338
          %344 = dma.hbm_to_vmem [thread:$0]  %s4, 16384, %s339, [#allocation9], 256, 256, 16
        $region16: #{tpu_custom_call.1} parent=11 // pred_fallthru
          _
        // Predicated region
        $region17: #{tpu_custom_call.1} parent=11 // pred_check
          %p345 = pneg %p181
        $region18: #{tpu_custom_call.1} parent=11 // pred_check_branch
          %347 = sbr.rel (%p345) target = $region20
        $region19: #{tpu_custom_call.1} parent=11 // pred_region
          %s349 = ssub.s32 16384, 16384
          %350 = vsyncadd [#allocation12], %s349
          %s351 = sshll.u32 [#allocation11], 4
          %s352 = int_to_ptr.vmem [resolvable:$true] %s351
          %357 = dma.hbm_to_vmem [thread:$0]  %s5, 16384, %s352, [#allocation12], 256, 256, 16
        $region20: #{tpu_custom_call.1} parent=11 // pred_fallthru
          _
        // Predicated region
        $region21: #{tpu_custom_call.1} parent=11 // pred_check
          %p358 = pneg %p202
        $region22: #{tpu_custom_call.1} parent=11 // pred_check_branch
          %360 = sbr.rel (%p358) target = $region24
        $region23: #{tpu_custom_call.1} parent=11 // pred_region
          %s362 = ssub.s32 16384, 16384
          %363 = vsyncadd [#allocation12], %s362
          %s364 = sshll.u32 [#allocation13], 4
          %s365 = int_to_ptr.vmem [resolvable:$true] %s364
          %370 = dma.hbm_to_vmem [thread:$0]  %s6, 16384, %s365, [#allocation12], 256, 256, 16
        $region24: #{tpu_custom_call.1} parent=11 // pred_fallthru
          _
        // Predicated region
        $region25: #{tpu_custom_call.1} parent=11 // pred_check
          %p371 = pneg %p223
        $region26: #{tpu_custom_call.1} parent=11 // pred_check_branch
          %373 = sbr.rel (%p371) target = $region28
        $region27: #{tpu_custom_call.1} parent=11 // pred_region
          %s375 = ssub.s32 16384, 16384
          %376 = vsyncadd [#allocation15], %s375
          %s377 = sshll.u32 [#allocation14], 4
          %s378 = int_to_ptr.vmem [resolvable:$true] %s377
          %383 = dma.hbm_to_vmem [thread:$0]  %s7, 16384, %s378, [#allocation15], 256, 256, 16
        $region28: #{tpu_custom_call.1} parent=11 // pred_fallthru
          _
        // Predicated region
        $region29: #{tpu_custom_call.1} parent=11 // pred_check
          %p384 = pneg %p244
        $region30: #{tpu_custom_call.1} parent=11 // pred_check_branch
          %386 = sbr.rel (%p384) target = $region32
        $region31: #{tpu_custom_call.1} parent=11 // pred_region
          _
        $region32: #{tpu_custom_call.1} parent=11 // pred_fallthru
          _
        // Predicated region
        $region33: #{tpu_custom_call.1} parent=11 // pred_check
          %p387 = pneg %p265
        $region34: #{tpu_custom_call.1} parent=11 // pred_check_branch
          %389 = sbr.rel (%p387) target = $region36
        $region35: #{tpu_custom_call.1} parent=11 // pred_region
          _
        $region36: #{tpu_custom_call.1} parent=11 // pred_fallthru
          _
      $region12: #{tpu_custom_call.1} parent=5 // pred_fallthru
        _
      %p390 = scmp.lt.s32.totalorder %s35, 2
      // Predicated region
      $region37: #{tpu_custom_call.1} parent=5 // pred_check
        %p391 = pneg %p390
      $region38: #{tpu_custom_call.1} parent=5 // pred_check_branch
        %393 = sbr.rel (%p391) target = $region40
      $region39: #{tpu_custom_call.1} parent=5 // pred_region
        // Predicated region
        $region41: #{tpu_custom_call.1} parent=39 // pred_check
          %p394 = pneg %p55
        $region42: #{tpu_custom_call.1} parent=39 // pred_check_branch
          %396 = sbr.rel (%p394) target = $region44
        $region43: #{tpu_custom_call.1} parent=39 // pred_region
          %s397 = sand.u32 %s45, 1
          %s398 = scalar_lea.sflag [#allocation3], %s397
          %s399 = sand.u32 %s45, 1
          %s400 = smul.addr %s399, 64
          %s401 = scalar_lea.vmem [#allocation2], %s400
          %s402 = smul.u32 2, %s35
          %s404 = ssub.s32 1024, 1024
          %405 = vsyncadd %s398, %s404
          %s406 = smul.addr %s402, 4
          %s407 = smul.addr %s406, 128
          %s408 = scalar_lea.hbm %s0, %s407
          %s409 = sshll.u32 %s401, 4
          %s410 = int_to_ptr.vmem [resolvable:$true] %s409
          %415 = dma.hbm_to_vmem [thread:$0]  %s408, 1024, %s410, %s398, 512, 512, 32
        $region44: #{tpu_custom_call.1} parent=39 // pred_fallthru
          _
        // Predicated region
        $region45: #{tpu_custom_call.1} parent=39 // pred_check
          %p416 = pneg %p81
        $region46: #{tpu_custom_call.1} parent=39 // pred_check_branch
          %418 = sbr.rel (%p416) target = $region48
        $region47: #{tpu_custom_call.1} parent=39 // pred_region
          %s419 = sand.u32 %s35, 1
          %s420 = scalar_lea.sflag [#allocation6], %s419
          %s421 = sand.u32 %s71, 1
          %s422 = smul.addr %s421, 64
          %s423 = scalar_lea.vmem [#allocation5], %s422
          %s424 = smul.u32 2, %s35
          %s426 = ssub.s32 1024, 1024
          %427 = vsyncadd %s420, %s426
          %s428 = smul.addr %s424, 4
          %s429 = smul.addr %s428, 128
          %s430 = scalar_lea.hbm %s1, %s429
          %s431 = sshll.u32 %s423, 4
          %s432 = int_to_ptr.vmem [resolvable:$true] %s431
          %437 = dma.hbm_to_vmem [thread:$0]  %s430, 1024, %s432, %s420, 512, 512, 32
        $region48: #{tpu_custom_call.1} parent=39 // pred_fallthru
          _
        // Predicated region
        $region49: #{tpu_custom_call.1} parent=39 // pred_check
          %p438 = pneg %p107
        $region50: #{tpu_custom_call.1} parent=39 // pred_check_branch
          %440 = sbr.rel (%p438) target = $region52
        $region51: #{tpu_custom_call.1} parent=39 // pred_region
          %s441 = sand.u32 %s35, 1
          %s442 = scalar_lea.sflag [#allocation6], %s441
          %s443 = sand.u32 %s97, 1
          %s444 = smul.addr %s443, 64
          %s445 = scalar_lea.vmem [#allocation7], %s444
          %s446 = smul.u32 2, %s35
          %s448 = ssub.s32 1024, 1024
          %449 = vsyncadd %s442, %s448
          %s450 = smul.addr %s446, 4
          %s451 = smul.addr %s450, 128
          %s452 = scalar_lea.hbm %s2, %s451
          %s453 = sshll.u32 %s445, 4
          %s454 = int_to_ptr.vmem [resolvable:$true] %s453
          %459 = dma.hbm_to_vmem [thread:$0]  %s452, 1024, %s454, %s442, 512, 512, 32
        $region52: #{tpu_custom_call.1} parent=39 // pred_fallthru
          _
        // Predicated region
        $region53: #{tpu_custom_call.1} parent=39 // pred_check
          %p460 = pneg %p133
        $region54: #{tpu_custom_call.1} parent=39 // pred_check_branch
          %462 = sbr.rel (%p460) target = $region56
        $region55: #{tpu_custom_call.1} parent=39 // pred_region
          %s463 = sand.u32 %s35, 1
          %s464 = scalar_lea.sflag [#allocation9], %s463
          %s465 = sand.u32 %s123, 1
          %s466 = smul.addr %s465, 16
          %s467 = scalar_lea.vmem [#allocation8], %s466
          %s468 = smul.u32 2, %s35
          %s470 = ssub.s32 256, 256
          %471 = vsyncadd %s464, %s470
          %s472 = smul.addr %s468, 128
          %s473 = scalar_lea.hbm %s3, %s472
          %s474 = sshll.u32 %s467, 4
          %s475 = int_to_ptr.vmem [resolvable:$true] %s474
          %480 = dma.hbm_to_vmem [thread:$0]  %s473, 256, %s475, %s464, 128, 128, 8
        $region56: #{tpu_custom_call.1} parent=39 // pred_fallthru
          _
      $region40: #{tpu_custom_call.1} parent=5 // pred_fallthru
        _
      %p481 = scmp.le.s32.totalorder 1, %s35
      %p482 = scmp.lt.s32.totalorder %s35, 3
      %p483 = pnand %p481, %p482
      %p484 = pneg %p483
      // Predicated region
      $region57: #{tpu_custom_call.1} parent=5 // pred_check
        _
      $region58: #{tpu_custom_call.1} parent=5 // pred_check_branch
        %486 = sbr.rel (%p483) target = $region60
      $region59: #{tpu_custom_call.1} parent=5 // pred_region
        %s487 = ssub.s32 %s35, 1
        %s488 = sand.u32 %s48, 1
        %s489 = scalar_lea.sflag [#allocation3], %s488
        %s490 = sand.u32 %s48, 1
        %s491 = smul.addr %s490, 64
        %s492 = scalar_lea.vmem [#allocation2], %s491
        // Predicated region
        $region61: #{tpu_custom_call.1} parent=59 // pred_check
          %p493 = pneg %p61
        $region62: #{tpu_custom_call.1} parent=59 // pred_check_branch
          %495 = sbr.rel (%p493) target = $region64
        $region63: #{tpu_custom_call.1} parent=59 // pred_region
          %496 = dma.done %s489, 1024
        $region64: #{tpu_custom_call.1} parent=59 // pred_fallthru
          _
        %s497 = sand.u32 %s40, 1
        %s498 = scalar_lea.sflag [#allocation6], %s497
        %s499 = sand.u32 %s74, 1
        %s500 = smul.addr %s499, 64
        %s501 = scalar_lea.vmem [#allocation5], %s500
        // Predicated region
        $region65: #{tpu_custom_call.1} parent=59 // pred_check
          %p502 = pneg %p87
        $region66: #{tpu_custom_call.1} parent=59 // pred_check_branch
          %504 = sbr.rel (%p502) target = $region68
        $region67: #{tpu_custom_call.1} parent=59 // pred_region
          %505 = dma.done %s498, 1024
        $region68: #{tpu_custom_call.1} parent=59 // pred_fallthru
          _
        %s506 = sand.u32 %s40, 1
        %s507 = scalar_lea.sflag [#allocation6], %s506
        %s508 = sand.u32 %s100, 1
        %s509 = smul.addr %s508, 64
        %s510 = scalar_lea.vmem [#allocation7], %s509
        // Predicated region
        $region69: #{tpu_custom_call.1} parent=59 // pred_check
          %p511 = pneg %p113
        $region70: #{tpu_custom_call.1} parent=59 // pred_check_branch
          %513 = sbr.rel (%p511) target = $region72
        $region71: #{tpu_custom_call.1} parent=59 // pred_region
          %514 = dma.done %s507, 1024
        $region72: #{tpu_custom_call.1} parent=59 // pred_fallthru
          _
        %s515 = sand.u32 %s40, 1
        %s516 = scalar_lea.sflag [#allocation9], %s515
        %s517 = sand.u32 %s126, 1
        %s518 = smul.addr %s517, 16
        %s519 = scalar_lea.vmem [#allocation8], %s518
        // Predicated region
        $region73: #{tpu_custom_call.1} parent=59 // pred_check
          %p520 = pneg %p139
        $region74: #{tpu_custom_call.1} parent=59 // pred_check_branch
          %522 = sbr.rel (%p520) target = $region76
        $region75: #{tpu_custom_call.1} parent=59 // pred_region
          %523 = dma.done %s516, 256
        $region76: #{tpu_custom_call.1} parent=59 // pred_fallthru
          _
        // Predicated region
        $region77: #{tpu_custom_call.1} parent=59 // pred_check
          %p524 = pneg %p160
        $region78: #{tpu_custom_call.1} parent=59 // pred_check_branch
          %526 = sbr.rel (%p524) target = $region80
        $region79: #{tpu_custom_call.1} parent=59 // pred_region
          %527 = dma.done [#allocation9], 16384
        $region80: #{tpu_custom_call.1} parent=59 // pred_fallthru
          _
        // Predicated region
        $region81: #{tpu_custom_call.1} parent=59 // pred_check
          %p528 = pneg %p181
        $region82: #{tpu_custom_call.1} parent=59 // pred_check_branch
          %530 = sbr.rel (%p528) target = $region84
        $region83: #{tpu_custom_call.1} parent=59 // pred_region
          %531 = dma.done [#allocation12], 16384
        $region84: #{tpu_custom_call.1} parent=59 // pred_fallthru
          _
        // Predicated region
        $region85: #{tpu_custom_call.1} parent=59 // pred_check
          %p532 = pneg %p202
        $region86: #{tpu_custom_call.1} parent=59 // pred_check_branch
          %534 = sbr.rel (%p532) target = $region88
        $region87: #{tpu_custom_call.1} parent=59 // pred_region
          %535 = dma.done [#allocation12], 16384
        $region88: #{tpu_custom_call.1} parent=59 // pred_fallthru
          _
        // Predicated region
        $region89: #{tpu_custom_call.1} parent=59 // pred_check
          %p536 = pneg %p223
        $region90: #{tpu_custom_call.1} parent=59 // pred_check_branch
          %538 = sbr.rel (%p536) target = $region92
        $region91: #{tpu_custom_call.1} parent=59 // pred_region
          %539 = dma.done [#allocation15], 16384
        $region92: #{tpu_custom_call.1} parent=59 // pred_fallthru
          _
        %s540 = sand.u32 %s48, 1
        %s541 = scalar_lea.sflag [#allocation3], %s540
        %s542 = sand.u32 %s48, 1
        %s543 = smul.addr %s542, 64
        %s544 = scalar_lea.vmem [#allocation2], %s543
        %p545 = pneg %p61
        %p546 = pneg %p58
        %s547 = sand.u32 %s40, 1
        %s548 = scalar_lea.sflag [#allocation6], %s547
        %s549 = sand.u32 %s74, 1
        %s550 = smul.addr %s549, 64
        %s551 = scalar_lea.vmem [#allocation5], %s550
        %p552 = pneg %p87
        %p553 = pneg %p84
        %s554 = sand.u32 %s40, 1
        %s555 = scalar_lea.sflag [#allocation6], %s554
        %s556 = sand.u32 %s100, 1
        %s557 = smul.addr %s556, 64
        %s558 = scalar_lea.vmem [#allocation7], %s557
        %p559 = pneg %p113
        %p560 = pneg %p110
        %s561 = sand.u32 %s40, 1
        %s562 = scalar_lea.sflag [#allocation9], %s561
        %s563 = sand.u32 %s126, 1
        %s564 = smul.addr %s563, 16
        %s565 = scalar_lea.vmem [#allocation8], %s564
        %p566 = pneg %p139
        %p567 = pneg %p136
        %p568 = pneg %p160
        %p569 = pneg %p157
        %p570 = pneg %p181
        %p571 = pneg %p178
        %p572 = pneg %p202
        %p573 = pneg %p199
        %p574 = pneg %p223
        %p575 = pneg %p220
        %p576 = pneg %p244
        %p577 = pneg %p241
        %p578 = pneg %p265
        %p579 = pneg %p262
        %p580 = pneg %p291
        %p581 = pneg %p288
        %s582 = sand.u32 %s278, 1
        %s583 = scalar_lea.sflag [#allocation4], %s582
        %s584 = sand.u32 %s278, 1
        %s585 = smul.addr %s584, 64
        %s586 = scalar_lea.vmem [#allocation16], %s585
        %p587 = pneg %p317
        %p588 = pneg %p314
        %s589 = sand.u32 %s304, 1
        %s590 = scalar_lea.sflag [#allocation18], %s589
        %s591 = sand.u32 %s304, 1
        %s592 = smul.addr %s591, 128
        %s593 = scalar_lea.vmem [#allocation17], %s592
        %s594 = smul.u32 2, %s40
        %s595 = smul.u32 2, %s40
        %s596 = smul.u32 2, %s40
        %s597 = smul.u32 2, %s40
        %s598 = smul.u32 2, %s40
        %s599 = smul.u32 2, %s40
        %v601 = vld [vmem:[%s492] sm:$0xff]
        %v602 = vld [vmem:[%s492 + $0x8] sm:$0xff]
        %v603 = vld [vmem:[%s492 + $0x10] sm:$0xff]
        %v604 = vld [vmem:[%s492 + $0x18] sm:$0xff]
        %v605 = vld [vmem:[%s492 + $0x20] sm:$0xff]
        %v606 = vld [vmem:[%s492 + $0x28] sm:$0xff]
        %v607 = vld [vmem:[%s492 + $0x30] sm:$0xff]
        %v608 = vld [vmem:[%s492 + $0x38] sm:$0xff]
        %v609 = vld [vmem:[%s501] sm:$0xff]
        %v610 = vld [vmem:[%s501 + $0x8] sm:$0xff]
        %v611 = vld [vmem:[%s501 + $0x10] sm:$0xff]
        %v612 = vld [vmem:[%s501 + $0x18] sm:$0xff]
        %v613 = vld [vmem:[%s501 + $0x20] sm:$0xff]
        %v614 = vld [vmem:[%s501 + $0x28] sm:$0xff]
        %v615 = vld [vmem:[%s501 + $0x30] sm:$0xff]
        %v616 = vld [vmem:[%s501 + $0x38] sm:$0xff]
        %v617 = vld [vmem:[%s510] sm:$0xff]
        %v618 = vld [vmem:[%s510 + $0x8] sm:$0xff]
        %v619 = vld [vmem:[%s510 + $0x10] sm:$0xff]
        %v620 = vld [vmem:[%s510 + $0x18] sm:$0xff]
        %v621 = vld [vmem:[%s510 + $0x20] sm:$0xff]
        %v622 = vld [vmem:[%s510 + $0x28] sm:$0xff]
        %v623 = vld [vmem:[%s510 + $0x30] sm:$0xff]
        %v624 = vld [vmem:[%s510 + $0x38] sm:$0xff]
        %v625 = vpack.c.bf16 %v605, %v601
        %v626 = vpack.c.bf16 %v606, %v602
        %v627 = vpack.c.bf16 %v607, %v603
        %v628 = vpack.c.bf16 %v608, %v604
        %v629 = vld [vmem:[#allocation10] sm:$0xff]
        %v630 = vld [vmem:[#allocation10 + $0x8] sm:$0xff]
        %v631 = vld [vmem:[#allocation10 + $0x10] sm:$0xff]
        %v632 = vld [vmem:[#allocation10 + $0x18] sm:$0xff]
        %v633 = vld [vmem:[#allocation10 + $0x20] sm:$0xff]
        %v634 = vld [vmem:[#allocation10 + $0x28] sm:$0xff]
        %v635 = vld [vmem:[#allocation10 + $0x30] sm:$0xff]
        %v636 = vld [vmem:[#allocation10 + $0x38] sm:$0xff]
        %v637 = vld [vmem:[#allocation10 + $0x40] sm:$0xff]
        %v638 = vld [vmem:[#allocation10 + $0x48] sm:$0xff]
        %v639 = vld [vmem:[#allocation10 + $0x50] sm:$0xff]
        %v640 = vld [vmem:[#allocation10 + $0x58] sm:$0xff]
        %v641 = vld [vmem:[#allocation10 + $0x60] sm:$0xff]
        %v642 = vld [vmem:[#allocation10 + $0x68] sm:$0xff]
        %v643 = vld [vmem:[#allocation10 + $0x70] sm:$0xff]
        %v644 = vld [vmem:[#allocation10 + $0x78] sm:$0xff]
        %v645 = vld [vmem:[#allocation10 + $0x80] sm:$0xff]
        %v646 = vld [vmem:[#allocation10 + $0x88] sm:$0xff]
        %v647 = vld [vmem:[#allocation10 + $0x90] sm:$0xff]
        %v648 = vld [vmem:[#allocation10 + $0x98] sm:$0xff]
        %v649 = vld [vmem:[#allocation10 + $0xa0] sm:$0xff]
        %v650 = vld [vmem:[#allocation10 + $0xa8] sm:$0xff]
        %v651 = vld [vmem:[#allocation10 + $0xb0] sm:$0xff]
        %v652 = vld [vmem:[#allocation10 + $0xb8] sm:$0xff]
        %v653 = vld [vmem:[#allocation10 + $0xc0] sm:$0xff]
        %v654 = vld [vmem:[#allocation10 + $0xc8] sm:$0xff]
        %v655 = vld [vmem:[#allocation10 + $0xd0] sm:$0xff]
        %v656 = vld [vmem:[#allocation10 + $0xd8] sm:$0xff]
        %v657 = vld [vmem:[#allocation10 + $0xe0] sm:$0xff]
        %v658 = vld [vmem:[#allocation10 + $0xe8] sm:$0xff]
        %v659 = vld [vmem:[#allocation10 + $0xf0] sm:$0xff]
        %v660 = vld [vmem:[#allocation10 + $0xf8] sm:$0xff]
        %v661 = vld [vmem:[#allocation10 + $0x100] sm:$0xff]
        %v662 = vld [vmem:[#allocation10 + $0x108] sm:$0xff]
        %v663 = vld [vmem:[#allocation10 + $0x110] sm:$0xff]
        %v664 = vld [vmem:[#allocation10 + $0x118] sm:$0xff]
        %v665 = vld [vmem:[#allocation10 + $0x120] sm:$0xff]
        %v666 = vld [vmem:[#allocation10 + $0x128] sm:$0xff]
        %v667 = vld [vmem:[#allocation10 + $0x130] sm:$0xff]
        %v668 = vld [vmem:[#allocation10 + $0x138] sm:$0xff]
        %v669 = vld [vmem:[#allocation10 + $0x140] sm:$0xff]
        %v670 = vld [vmem:[#allocation10 + $0x148] sm:$0xff]
        %v671 = vld [vmem:[#allocation10 + $0x150] sm:$0xff]
        %v672 = vld [vmem:[#allocation10 + $0x158] sm:$0xff]
        %v673 = vld [vmem:[#allocation10 + $0x160] sm:$0xff]
        %v674 = vld [vmem:[#allocation10 + $0x168] sm:$0xff]
        %v675 = vld [vmem:[#allocation10 + $0x170] sm:$0xff]
        %v676 = vld [vmem:[#allocation10 + $0x178] sm:$0xff]
        %v677 = vld [vmem:[#allocation10 + $0x180] sm:$0xff]
        %v678 = vld [vmem:[#allocation10 + $0x188] sm:$0xff]
        %v679 = vld [vmem:[#allocation10 + $0x190] sm:$0xff]
        %v680 = vld [vmem:[#allocation10 + $0x198] sm:$0xff]
        %v681 = vld [vmem:[#allocation10 + $0x1a0] sm:$0xff]
        %v682 = vld [vmem:[#allocation10 + $0x1a8] sm:$0xff]
        %v683 = vld [vmem:[#allocation10 + $0x1b0] sm:$0xff]
        %v684 = vld [vmem:[#allocation10 + $0x1b8] sm:$0xff]
        %v685 = vld [vmem:[#allocation10 + $0x1c0] sm:$0xff]
        %v686 = vld [vmem:[#allocation10 + $0x1c8] sm:$0xff]
        %v687 = vld [vmem:[#allocation10 + $0x1d0] sm:$0xff]
        %v688 = vld [vmem:[#allocation10 + $0x1d8] sm:$0xff]
        %v689 = vld [vmem:[#allocation10 + $0x1e0] sm:$0xff]
        %v690 = vld [vmem:[#allocation10 + $0x1e8] sm:$0xff]
        %v691 = vld [vmem:[#allocation10 + $0x1f0] sm:$0xff]
        %v692 = vld [vmem:[#allocation10 + $0x1f8] sm:$0xff]
        %v693 = vld [vmem:[#allocation10 + $0x200] sm:$0xff]
        %v694 = vld [vmem:[#allocation10 + $0x208] sm:$0xff]
        %v695 = vld [vmem:[#allocation10 + $0x210] sm:$0xff]
        %v696 = vld [vmem:[#allocation10 + $0x218] sm:$0xff]
        %v697 = vld [vmem:[#allocation10 + $0x220] sm:$0xff]
        %v698 = vld [vmem:[#allocation10 + $0x228] sm:$0xff]
        %v699 = vld [vmem:[#allocation10 + $0x230] sm:$0xff]
        %v700 = vld [vmem:[#allocation10 + $0x238] sm:$0xff]
        %v701 = vld [vmem:[#allocation10 + $0x240] sm:$0xff]
        %v702 = vld [vmem:[#allocation10 + $0x248] sm:$0xff]
        %v703 = vld [vmem:[#allocation10 + $0x250] sm:$0xff]
        %v704 = vld [vmem:[#allocation10 + $0x258] sm:$0xff]
        %v705 = vld [vmem:[#allocation10 + $0x260] sm:$0xff]
        %v706 = vld [vmem:[#allocation10 + $0x268] sm:$0xff]
        %v707 = vld [vmem:[#allocation10 + $0x270] sm:$0xff]
        %v708 = vld [vmem:[#allocation10 + $0x278] sm:$0xff]
        %v709 = vld [vmem:[#allocation10 + $0x280] sm:$0xff]
        %v710 = vld [vmem:[#allocation10 + $0x288] sm:$0xff]
        %v711 = vld [vmem:[#allocation10 + $0x290] sm:$0xff]
        %v712 = vld [vmem:[#allocation10 + $0x298] sm:$0xff]
        %v713 = vld [vmem:[#allocation10 + $0x2a0] sm:$0xff]
        %v714 = vld [vmem:[#allocation10 + $0x2a8] sm:$0xff]
        %v715 = vld [vmem:[#allocation10 + $0x2b0] sm:$0xff]
        %v716 = vld [vmem:[#allocation10 + $0x2b8] sm:$0xff]
        %v717 = vld [vmem:[#allocation10 + $0x2c0] sm:$0xff]
        %v718 = vld [vmem:[#allocation10 + $0x2c8] sm:$0xff]
        %v719 = vld [vmem:[#allocation10 + $0x2d0] sm:$0xff]
        %v720 = vld [vmem:[#allocation10 + $0x2d8] sm:$0xff]
        %v721 = vld [vmem:[#allocation10 + $0x2e0] sm:$0xff]
        %v722 = vld [vmem:[#allocation10 + $0x2e8] sm:$0xff]
        %v723 = vld [vmem:[#allocation10 + $0x2f0] sm:$0xff]
        %v724 = vld [vmem:[#allocation10 + $0x2f8] sm:$0xff]
        %v725 = vld [vmem:[#allocation10 + $0x300] sm:$0xff]
        %v726 = vld [vmem:[#allocation10 + $0x308] sm:$0xff]
        %v727 = vld [vmem:[#allocation10 + $0x310] sm:$0xff]
        %v728 = vld [vmem:[#allocation10 + $0x318] sm:$0xff]
        %v729 = vld [vmem:[#allocation10 + $0x320] sm:$0xff]
        %v730 = vld [vmem:[#allocation10 + $0x328] sm:$0xff]
        %v731 = vld [vmem:[#allocation10 + $0x330] sm:$0xff]
        %v732 = vld [vmem:[#allocation10 + $0x338] sm:$0xff]
        %v733 = vld [vmem:[#allocation10 + $0x340] sm:$0xff]
        %v734 = vld [vmem:[#allocation10 + $0x348] sm:$0xff]
        %v735 = vld [vmem:[#allocation10 + $0x350] sm:$0xff]
        %v736 = vld [vmem:[#allocation10 + $0x358] sm:$0xff]
        %v737 = vld [vmem:[#allocation10 + $0x360] sm:$0xff]
        %v738 = vld [vmem:[#allocation10 + $0x368] sm:$0xff]
        %v739 = vld [vmem:[#allocation10 + $0x370] sm:$0xff]
        %v740 = vld [vmem:[#allocation10 + $0x378] sm:$0xff]
        %v741 = vld [vmem:[#allocation10 + $0x380] sm:$0xff]
        %v742 = vld [vmem:[#allocation10 + $0x388] sm:$0xff]
        %v743 = vld [vmem:[#allocation10 + $0x390] sm:$0xff]
        %v744 = vld [vmem:[#allocation10 + $0x398] sm:$0xff]
        %v745 = vld [vmem:[#allocation10 + $0x3a0] sm:$0xff]
        %v746 = vld [vmem:[#allocation10 + $0x3a8] sm:$0xff]
        %v747 = vld [vmem:[#allocation10 + $0x3b0] sm:$0xff]
        %v748 = vld [vmem:[#allocation10 + $0x3b8] sm:$0xff]
        %v749 = vld [vmem:[#allocation10 + $0x3c0] sm:$0xff]
        %v750 = vld [vmem:[#allocation10 + $0x3c8] sm:$0xff]
        %v751 = vld [vmem:[#allocation10 + $0x3d0] sm:$0xff]
        %v752 = vld [vmem:[#allocation10 + $0x3d8] sm:$0xff]
        %v753 = vld [vmem:[#allocation10 + $0x3e0] sm:$0xff]
        %v754 = vld [vmem:[#allocation10 + $0x3e8] sm:$0xff]
        %v755 = vld [vmem:[#allocation10 + $0x3f0] sm:$0xff]
        %v756 = vld [vmem:[#allocation10 + $0x3f8] sm:$0xff]
        %v885 = vunpack.c.l.b16 %v629
        %v886 = vunpack.c.h.b16 %v629
        %v887 = vunpack.c.l.b16 %v630
        %v888 = vunpack.c.h.b16 %v630
        %v889 = vunpack.c.l.b16 %v631
        %v890 = vunpack.c.h.b16 %v631
        %v891 = vunpack.c.l.b16 %v632
        %v892 = vunpack.c.h.b16 %v632
        %v893 = vunpack.c.l.b16 %v633
        %v894 = vunpack.c.h.b16 %v633
        %v895 = vunpack.c.l.b16 %v634
        %v896 = vunpack.c.h.b16 %v634
        %v897 = vunpack.c.l.b16 %v635
        %v898 = vunpack.c.h.b16 %v635
        %v899 = vunpack.c.l.b16 %v636
        %v900 = vunpack.c.h.b16 %v636
        %v901 = vunpack.c.l.b16 %v637
        %v902 = vunpack.c.h.b16 %v637
        %v903 = vunpack.c.l.b16 %v638
        %v904 = vunpack.c.h.b16 %v638
        %v905 = vunpack.c.l.b16 %v639
        %v906 = vunpack.c.h.b16 %v639
        %v907 = vunpack.c.l.b16 %v640
        %v908 = vunpack.c.h.b16 %v640
        %v909 = vunpack.c.l.b16 %v641
        %v910 = vunpack.c.h.b16 %v641
        %v911 = vunpack.c.l.b16 %v642
        %v912 = vunpack.c.h.b16 %v642
        %v913 = vunpack.c.l.b16 %v643
        %v914 = vunpack.c.h.b16 %v643
        %v915 = vunpack.c.l.b16 %v644
        %v916 = vunpack.c.h.b16 %v644
        %v917 = vunpack.c.l.b16 %v645
        %v918 = vunpack.c.h.b16 %v645
        %v919 = vunpack.c.l.b16 %v646
        %v920 = vunpack.c.h.b16 %v646
        %v921 = vunpack.c.l.b16 %v647
        %v922 = vunpack.c.h.b16 %v647
        %v923 = vunpack.c.l.b16 %v648
        %v924 = vunpack.c.h.b16 %v648
        %v925 = vunpack.c.l.b16 %v649
        %v926 = vunpack.c.h.b16 %v649
        %v927 = vunpack.c.l.b16 %v650
        %v928 = vunpack.c.h.b16 %v650
        %v929 = vunpack.c.l.b16 %v651
        %v930 = vunpack.c.h.b16 %v651
        %v931 = vunpack.c.l.b16 %v652
        %v932 = vunpack.c.h.b16 %v652
        %v933 = vunpack.c.l.b16 %v653
        %v934 = vunpack.c.h.b16 %v653
        %v935 = vunpack.c.l.b16 %v654
        %v936 = vunpack.c.h.b16 %v654
        %v937 = vunpack.c.l.b16 %v655
        %v938 = vunpack.c.h.b16 %v655
        %v939 = vunpack.c.l.b16 %v656
        %v940 = vunpack.c.h.b16 %v656
        %v941 = vunpack.c.l.b16 %v657
        %v942 = vunpack.c.h.b16 %v657
        %v943 = vunpack.c.l.b16 %v658
        %v944 = vunpack.c.h.b16 %v658
        %v945 = vunpack.c.l.b16 %v659
        %v946 = vunpack.c.h.b16 %v659
        %v947 = vunpack.c.l.b16 %v660
        %v948 = vunpack.c.h.b16 %v660
        %v949 = vunpack.c.l.b16 %v661
        %v950 = vunpack.c.h.b16 %v661
        %v951 = vunpack.c.l.b16 %v662
        %v952 = vunpack.c.h.b16 %v662
        %v953 = vunpack.c.l.b16 %v663
        %v954 = vunpack.c.h.b16 %v663
        %v955 = vunpack.c.l.b16 %v664
        %v956 = vunpack.c.h.b16 %v664
        %v957 = vunpack.c.l.b16 %v665
        %v958 = vunpack.c.h.b16 %v665
        %v959 = vunpack.c.l.b16 %v666
        %v960 = vunpack.c.h.b16 %v666
        %v961 = vunpack.c.l.b16 %v667
        %v962 = vunpack.c.h.b16 %v667
        %v963 = vunpack.c.l.b16 %v668
        %v964 = vunpack.c.h.b16 %v668
        %v965 = vunpack.c.l.b16 %v669
        %v966 = vunpack.c.h.b16 %v669
        %v967 = vunpack.c.l.b16 %v670
        %v968 = vunpack.c.h.b16 %v670
        %v969 = vunpack.c.l.b16 %v671
        %v970 = vunpack.c.h.b16 %v671
        %v971 = vunpack.c.l.b16 %v672
        %v972 = vunpack.c.h.b16 %v672
        %v973 = vunpack.c.l.b16 %v673
        %v974 = vunpack.c.h.b16 %v673
        %v975 = vunpack.c.l.b16 %v674
        %v976 = vunpack.c.h.b16 %v674
        %v977 = vunpack.c.l.b16 %v675
        %v978 = vunpack.c.h.b16 %v675
        %v979 = vunpack.c.l.b16 %v676
        %v980 = vunpack.c.h.b16 %v676
        %v981 = vunpack.c.l.b16 %v677
        %v982 = vunpack.c.h.b16 %v677
        %v983 = vunpack.c.l.b16 %v678
        %v984 = vunpack.c.h.b16 %v678
        %v985 = vunpack.c.l.b16 %v679
        %v986 = vunpack.c.h.b16 %v679
        %v987 = vunpack.c.l.b16 %v680
        %v988 = vunpack.c.h.b16 %v680
        %v989 = vunpack.c.l.b16 %v681
        %v990 = vunpack.c.h.b16 %v681
        %v991 = vunpack.c.l.b16 %v682
        %v992 = vunpack.c.h.b16 %v682
        %v993 = vunpack.c.l.b16 %v683
        %v994 = vunpack.c.h.b16 %v683
        %v995 = vunpack.c.l.b16 %v684
        %v996 = vunpack.c.h.b16 %v684
        %v997 = vunpack.c.l.b16 %v685
        %v998 = vunpack.c.h.b16 %v685
        %v999 = vunpack.c.l.b16 %v686
        %v1000 = vunpack.c.h.b16 %v686
        %v1001 = vunpack.c.l.b16 %v687
        %v1002 = vunpack.c.h.b16 %v687
        %v1003 = vunpack.c.l.b16 %v688
        %v1004 = vunpack.c.h.b16 %v688
        %v1005 = vunpack.c.l.b16 %v689
        %v1006 = vunpack.c.h.b16 %v689
        %v1007 = vunpack.c.l.b16 %v690
        %v1008 = vunpack.c.h.b16 %v690
        %v1009 = vunpack.c.l.b16 %v691
        %v1010 = vunpack.c.h.b16 %v691
        %v1011 = vunpack.c.l.b16 %v692
        %v1012 = vunpack.c.h.b16 %v692
        %v1013 = vunpack.c.l.b16 %v693
        %v1014 = vunpack.c.h.b16 %v693
        %v1015 = vunpack.c.l.b16 %v694
        %v1016 = vunpack.c.h.b16 %v694
        %v1017 = vunpack.c.l.b16 %v695
        %v1018 = vunpack.c.h.b16 %v695
        %v1019 = vunpack.c.l.b16 %v696
        %v1020 = vunpack.c.h.b16 %v696
        %v1021 = vunpack.c.l.b16 %v697
        %v1022 = vunpack.c.h.b16 %v697
        %v1023 = vunpack.c.l.b16 %v698
        %v1024 = vunpack.c.h.b16 %v698
        %v1025 = vunpack.c.l.b16 %v699
        %v1026 = vunpack.c.h.b16 %v699
        %v1027 = vunpack.c.l.b16 %v700
        %v1028 = vunpack.c.h.b16 %v700
        %v1029 = vunpack.c.l.b16 %v701
        %v1030 = vunpack.c.h.b16 %v701
        %v1031 = vunpack.c.l.b16 %v702
        %v1032 = vunpack.c.h.b16 %v702
        %v1033 = vunpack.c.l.b16 %v703
        %v1034 = vunpack.c.h.b16 %v703
        %v1035 = vunpack.c.l.b16 %v704
        %v1036 = vunpack.c.h.b16 %v704
        %v1037 = vunpack.c.l.b16 %v705
        %v1038 = vunpack.c.h.b16 %v705
        %v1039 = vunpack.c.l.b16 %v706
        %v1040 = vunpack.c.h.b16 %v706
        %v1041 = vunpack.c.l.b16 %v707
        %v1042 = vunpack.c.h.b16 %v707
        %v1043 = vunpack.c.l.b16 %v708
        %v1044 = vunpack.c.h.b16 %v708
        %v1045 = vunpack.c.l.b16 %v709
        %v1046 = vunpack.c.h.b16 %v709
        %v1047 = vunpack.c.l.b16 %v710
        %v1048 = vunpack.c.h.b16 %v710
        %v1049 = vunpack.c.l.b16 %v711
        %v1050 = vunpack.c.h.b16 %v711
        %v1051 = vunpack.c.l.b16 %v712
        %v1052 = vunpack.c.h.b16 %v712
        %v1053 = vunpack.c.l.b16 %v713
        %v1054 = vunpack.c.h.b16 %v713
        %v1055 = vunpack.c.l.b16 %v714
        %v1056 = vunpack.c.h.b16 %v714
        %v1057 = vunpack.c.l.b16 %v715
        %v1058 = vunpack.c.h.b16 %v715
        %v1059 = vunpack.c.l.b16 %v716
        %v1060 = vunpack.c.h.b16 %v716
        %v1061 = vunpack.c.l.b16 %v717
        %v1062 = vunpack.c.h.b16 %v717
        %v1063 = vunpack.c.l.b16 %v718
        %v1064 = vunpack.c.h.b16 %v718
        %v1065 = vunpack.c.l.b16 %v719
        %v1066 = vunpack.c.h.b16 %v719
        %v1067 = vunpack.c.l.b16 %v720
        %v1068 = vunpack.c.h.b16 %v720
        %v1069 = vunpack.c.l.b16 %v721
        %v1070 = vunpack.c.h.b16 %v721
        %v1071 = vunpack.c.l.b16 %v722
        %v1072 = vunpack.c.h.b16 %v722
        %v1073 = vunpack.c.l.b16 %v723
        %v1074 = vunpack.c.h.b16 %v723
        %v1075 = vunpack.c.l.b16 %v724
        %v1076 = vunpack.c.h.b16 %v724
        %v1077 = vunpack.c.l.b16 %v725
        %v1078 = vunpack.c.h.b16 %v725
        %v1079 = vunpack.c.l.b16 %v726
        %v1080 = vunpack.c.h.b16 %v726
        %v1081 = vunpack.c.l.b16 %v727
        %v1082 = vunpack.c.h.b16 %v727
        %v1083 = vunpack.c.l.b16 %v728
        %v1084 = vunpack.c.h.b16 %v728
        %v1085 = vunpack.c.l.b16 %v729
        %v1086 = vunpack.c.h.b16 %v729
        %v1087 = vunpack.c.l.b16 %v730
        %v1088 = vunpack.c.h.b16 %v730
        %v1089 = vunpack.c.l.b16 %v731
        %v1090 = vunpack.c.h.b16 %v731
        %v1091 = vunpack.c.l.b16 %v732
        %v1092 = vunpack.c.h.b16 %v732
        %v1093 = vunpack.c.l.b16 %v733
        %v1094 = vunpack.c.h.b16 %v733
        %v1095 = vunpack.c.l.b16 %v734
        %v1096 = vunpack.c.h.b16 %v734
        %v1097 = vunpack.c.l.b16 %v735
        %v1098 = vunpack.c.h.b16 %v735
        %v1099 = vunpack.c.l.b16 %v736
        %v1100 = vunpack.c.h.b16 %v736
        %v1101 = vunpack.c.l.b16 %v737
        %v1102 = vunpack.c.h.b16 %v737
        %v1103 = vunpack.c.l.b16 %v738
        %v1104 = vunpack.c.h.b16 %v738
        %v1105 = vunpack.c.l.b16 %v739
        %v1106 = vunpack.c.h.b16 %v739
        %v1107 = vunpack.c.l.b16 %v740
        %v1108 = vunpack.c.h.b16 %v740
        %v1109 = vunpack.c.l.b16 %v741
        %v1110 = vunpack.c.h.b16 %v741
        %v1111 = vunpack.c.l.b16 %v742
        %v1112 = vunpack.c.h.b16 %v742
        %v1113 = vunpack.c.l.b16 %v743
        %v1114 = vunpack.c.h.b16 %v743
        %v1115 = vunpack.c.l.b16 %v744
        %v1116 = vunpack.c.h.b16 %v744
        %v1117 = vunpack.c.l.b16 %v745
        %v1118 = vunpack.c.h.b16 %v745
        %v1119 = vunpack.c.l.b16 %v746
        %v1120 = vunpack.c.h.b16 %v746
        %v1121 = vunpack.c.l.b16 %v747
        %v1122 = vunpack.c.h.b16 %v747
        %v1123 = vunpack.c.l.b16 %v748
        %v1124 = vunpack.c.h.b16 %v748
        %v1125 = vunpack.c.l.b16 %v749
        %v1126 = vunpack.c.h.b16 %v749
        %v1127 = vunpack.c.l.b16 %v750
        %v1128 = vunpack.c.h.b16 %v750
        %v1129 = vunpack.c.l.b16 %v751
        %v1130 = vunpack.c.h.b16 %v751
        %v1131 = vunpack.c.l.b16 %v752
        %v1132 = vunpack.c.h.b16 %v752
        %v1133 = vunpack.c.l.b16 %v753
        %v1134 = vunpack.c.h.b16 %v753
        %v1135 = vunpack.c.l.b16 %v754
        %v1136 = vunpack.c.h.b16 %v754
        %v1137 = vunpack.c.l.b16 %v755
        %v1138 = vunpack.c.h.b16 %v755
        %v1139 = vunpack.c.l.b16 %v756
        %v1140 = vunpack.c.h.b16 %v756
        %v1141 = vpack.c.b16 %v889, %v885
        %v1142 = vpack.c.b16 %v890, %v886
        %v1143 = vpack.c.b16 %v891, %v887
        %v1144 = vpack.c.b16 %v892, %v888
        %v1145 = vpack.c.b16 %v897, %v893
        %v1146 = vpack.c.b16 %v898, %v894
        %v1147 = vpack.c.b16 %v899, %v895
        %v1148 = vpack.c.b16 %v900, %v896
        %v1149 = vpack.c.b16 %v905, %v901
        %v1150 = vpack.c.b16 %v906, %v902
        %v1151 = vpack.c.b16 %v907, %v903
        %v1152 = vpack.c.b16 %v908, %v904
        %v1153 = vpack.c.b16 %v913, %v909
        %v1154 = vpack.c.b16 %v914, %v910
        %v1155 = vpack.c.b16 %v915, %v911
        %v1156 = vpack.c.b16 %v916, %v912
        %v1157 = vpack.c.b16 %v921, %v917
        %v1158 = vpack.c.b16 %v922, %v918
        %v1159 = vpack.c.b16 %v923, %v919
        %v1160 = vpack.c.b16 %v924, %v920
        %v1161 = vpack.c.b16 %v929, %v925
        %v1162 = vpack.c.b16 %v930, %v926
        %v1163 = vpack.c.b16 %v931, %v927
        %v1164 = vpack.c.b16 %v932, %v928
        %v1165 = vpack.c.b16 %v937, %v933
        %v1166 = vpack.c.b16 %v938, %v934
        %v1167 = vpack.c.b16 %v939, %v935
        %v1168 = vpack.c.b16 %v940, %v936
        %v1169 = vpack.c.b16 %v945, %v941
        %v1170 = vpack.c.b16 %v946, %v942
        %v1171 = vpack.c.b16 %v947, %v943
        %v1172 = vpack.c.b16 %v948, %v944
        %v1173 = vpack.c.b16 %v953, %v949
        %v1174 = vpack.c.b16 %v954, %v950
        %v1175 = vpack.c.b16 %v955, %v951
        %v1176 = vpack.c.b16 %v956, %v952
        %v1177 = vpack.c.b16 %v961, %v957
        %v1178 = vpack.c.b16 %v962, %v958
        %v1179 = vpack.c.b16 %v963, %v959
        %v1180 = vpack.c.b16 %v964, %v960
        %v1181 = vpack.c.b16 %v969, %v965
        %v1182 = vpack.c.b16 %v970, %v966
        %v1183 = vpack.c.b16 %v971, %v967
        %v1184 = vpack.c.b16 %v972, %v968
        %v1185 = vpack.c.b16 %v977, %v973
        %v1186 = vpack.c.b16 %v978, %v974
        %v1187 = vpack.c.b16 %v979, %v975
        %v1188 = vpack.c.b16 %v980, %v976
        %v1189 = vpack.c.b16 %v985, %v981
        %v1190 = vpack.c.b16 %v986, %v982
        %v1191 = vpack.c.b16 %v987, %v983
        %v1192 = vpack.c.b16 %v988, %v984
        %v1193 = vpack.c.b16 %v993, %v989
        %v1194 = vpack.c.b16 %v994, %v990
        %v1195 = vpack.c.b16 %v995, %v991
        %v1196 = vpack.c.b16 %v996, %v992
        %v1197 = vpack.c.b16 %v1001, %v997
        %v1198 = vpack.c.b16 %v1002, %v998
        %v1199 = vpack.c.b16 %v1003, %v999
        %v1200 = vpack.c.b16 %v1004, %v1000
        %v1201 = vpack.c.b16 %v1009, %v1005
        %v1202 = vpack.c.b16 %v1010, %v1006
        %v1203 = vpack.c.b16 %v1011, %v1007
        %v1204 = vpack.c.b16 %v1012, %v1008
        %v1205 = vpack.c.b16 %v1017, %v1013
        %v1206 = vpack.c.b16 %v1018, %v1014
        %v1207 = vpack.c.b16 %v1019, %v1015
        %v1208 = vpack.c.b16 %v1020, %v1016
        %v1209 = vpack.c.b16 %v1025, %v1021
        %v1210 = vpack.c.b16 %v1026, %v1022
        %v1211 = vpack.c.b16 %v1027, %v1023
        %v1212 = vpack.c.b16 %v1028, %v1024
        %v1213 = vpack.c.b16 %v1033, %v1029
        %v1214 = vpack.c.b16 %v1034, %v1030
        %v1215 = vpack.c.b16 %v1035, %v1031
        %v1216 = vpack.c.b16 %v1036, %v1032
        %v1217 = vpack.c.b16 %v1041, %v1037
        %v1218 = vpack.c.b16 %v1042, %v1038
        %v1219 = vpack.c.b16 %v1043, %v1039
        %v1220 = vpack.c.b16 %v1044, %v1040
        %v1221 = vpack.c.b16 %v1049, %v1045
        %v1222 = vpack.c.b16 %v1050, %v1046
        %v1223 = vpack.c.b16 %v1051, %v1047
        %v1224 = vpack.c.b16 %v1052, %v1048
        %v1225 = vpack.c.b16 %v1057, %v1053
        %v1226 = vpack.c.b16 %v1058, %v1054
        %v1227 = vpack.c.b16 %v1059, %v1055
        %v1228 = vpack.c.b16 %v1060, %v1056
        %v1229 = vpack.c.b16 %v1065, %v1061
        %v1230 = vpack.c.b16 %v1066, %v1062
        %v1231 = vpack.c.b16 %v1067, %v1063
        %v1232 = vpack.c.b16 %v1068, %v1064
        %v1233 = vpack.c.b16 %v1073, %v1069
        %v1234 = vpack.c.b16 %v1074, %v1070
        %v1235 = vpack.c.b16 %v1075, %v1071
        %v1236 = vpack.c.b16 %v1076, %v1072
        %v1237 = vpack.c.b16 %v1081, %v1077
        %v1238 = vpack.c.b16 %v1082, %v1078
        %v1239 = vpack.c.b16 %v1083, %v1079
        %v1240 = vpack.c.b16 %v1084, %v1080
        %v1241 = vpack.c.b16 %v1089, %v1085
        %v1242 = vpack.c.b16 %v1090, %v1086
        %v1243 = vpack.c.b16 %v1091, %v1087
        %v1244 = vpack.c.b16 %v1092, %v1088
        %v1245 = vpack.c.b16 %v1097, %v1093
        %v1246 = vpack.c.b16 %v1098, %v1094
        %v1247 = vpack.c.b16 %v1099, %v1095
        %v1248 = vpack.c.b16 %v1100, %v1096
        %v1249 = vpack.c.b16 %v1105, %v1101
        %v1250 = vpack.c.b16 %v1106, %v1102
        %v1251 = vpack.c.b16 %v1107, %v1103
        %v1252 = vpack.c.b16 %v1108, %v1104
        %v1253 = vpack.c.b16 %v1113, %v1109
        %v1254 = vpack.c.b16 %v1114, %v1110
        %v1255 = vpack.c.b16 %v1115, %v1111
        %v1256 = vpack.c.b16 %v1116, %v1112
        %v1257 = vpack.c.b16 %v1121, %v1117
        %v1258 = vpack.c.b16 %v1122, %v1118
        %v1259 = vpack.c.b16 %v1123, %v1119
        %v1260 = vpack.c.b16 %v1124, %v1120
        %v1261 = vpack.c.b16 %v1129, %v1125
        %v1262 = vpack.c.b16 %v1130, %v1126
        %v1263 = vpack.c.b16 %v1131, %v1127
        %v1264 = vpack.c.b16 %v1132, %v1128
        %v1265 = vpack.c.b16 %v1137, %v1133
        %v1266 = vpack.c.b16 %v1138, %v1134
        %v1267 = vpack.c.b16 %v1139, %v1135
        %v1268 = vpack.c.b16 %v1140, %v1136
        %1397 = vmatprep.subr.bf16.mxu0 %v1142
        %1398 = vmatpush1.bf16.msra.mxu0 %v1141
        %1399 = vmatprep.subr.bf16.mxu0 %v1146
        %1400 = vmatpush1.bf16.msra.mxu0 %v1145
        %1401 = vmatprep.subr.bf16.mxu0 %v1150
        %1402 = vmatpush1.bf16.msra.mxu0 %v1149
        %1403 = vmatprep.subr.bf16.mxu0 %v1154
        %1404 = vmatpush1.bf16.msra.mxu0 %v1153
        %1405 = vmatprep.subr.bf16.mxu0 %v1158
        %1406 = vmatpush1.bf16.msra.mxu0 %v1157
        %1407 = vmatprep.subr.bf16.mxu0 %v1162
        %1408 = vmatpush1.bf16.msra.mxu0 %v1161
        %1409 = vmatprep.subr.bf16.mxu0 %v1166
        %1410 = vmatpush1.bf16.msra.mxu0 %v1165
        %1411 = vmatprep.subr.bf16.mxu0 %v1170
        %1412 = vmatpush1.bf16.msra.mxu0 %v1169
        %1413 = vmatprep.subr.bf16.mxu0 %v1174
        %1414 = vmatpush1.bf16.msra.mxu0 %v1173
        %1415 = vmatprep.subr.bf16.mxu0 %v1178
        %1416 = vmatpush1.bf16.msra.mxu0 %v1177
        %1417 = vmatprep.subr.bf16.mxu0 %v1182
        %1418 = vmatpush1.bf16.msra.mxu0 %v1181
        %1419 = vmatprep.subr.bf16.mxu0 %v1186
        %1420 = vmatpush1.bf16.msra.mxu0 %v1185
        %1421 = vmatprep.subr.bf16.mxu0 %v1190
        %1422 = vmatpush1.bf16.msra.mxu0 %v1189
        %1423 = vmatprep.subr.bf16.mxu0 %v1194
        %1424 = vmatpush1.bf16.msra.mxu0 %v1193
        %1425 = vmatprep.subr.bf16.mxu0 %v1198
        %1426 = vmatpush1.bf16.msra.mxu0 %v1197
        %1427 = vmatprep.subr.bf16.mxu0 %v1202
        %1428 = vmatpush1.bf16.msra.mxu0 %v1201
        %1429 = vmatprep.mubr.bf16.mxu0 %v626
        %1430 = vmatmul.mubr.bf16.gmra.mrb[0].mxu0 %v625
        %v1431 = vpop.f32.mrb[0].mxu0
        %v1432 = vadd.f32 0.0, %v1431
        %v1433 = vpop.f32.mrb[0].mxu0
        %v1434 = vadd.f32 0.0, %v1433
        %v1435 = vpop.f32.mrb[0].mxu0
        %v1436 = vadd.f32 0.0, %v1435
        %v1437 = vpop.f32.mrb[0].mxu0
        %v1438 = vadd.f32 0.0, %v1437
        %1439 = vdwg.mxu0
        %1440 = vmatprep.subr.bf16.mxu0 %v1206
        %1441 = vmatpush1.bf16.msra.mxu0 %v1205
        %1442 = vmatprep.subr.bf16.mxu0 %v1210
        %1443 = vmatpush1.bf16.msra.mxu0 %v1209
        %1444 = vmatprep.subr.bf16.mxu0 %v1214
        %1445 = vmatpush1.bf16.msra.mxu0 %v1213
        %1446 = vmatprep.subr.bf16.mxu0 %v1218
        %1447 = vmatpush1.bf16.msra.mxu0 %v1217
        %1448 = vmatprep.subr.bf16.mxu0 %v1222
        %1449 = vmatpush1.bf16.msra.mxu0 %v1221
        %1450 = vmatprep.subr.bf16.mxu0 %v1226
        %1451 = vmatpush1.bf16.msra.mxu0 %v1225
        %1452 = vmatprep.subr.bf16.mxu0 %v1230
        %1453 = vmatpush1.bf16.msra.mxu0 %v1229
        %1454 = vmatprep.subr.bf16.mxu0 %v1234
        %1455 = vmatpush1.bf16.msra.mxu0 %v1233
        %1456 = vmatprep.subr.bf16.mxu0 %v1238
        %1457 = vmatpush1.bf16.msra.mxu0 %v1237
        %1458 = vmatprep.subr.bf16.mxu0 %v1242
        %1459 = vmatpush1.bf16.msra.mxu0 %v1241
        %1460 = vmatprep.subr.bf16.mxu0 %v1246
        %1461 = vmatpush1.bf16.msra.mxu0 %v1245
        %1462 = vmatprep.subr.bf16.mxu0 %v1250
        %1463 = vmatpush1.bf16.msra.mxu0 %v1249
        %1464 = vmatprep.subr.bf16.mxu0 %v1254
        %1465 = vmatpush1.bf16.msra.mxu0 %v1253
        %1466 = vmatprep.subr.bf16.mxu0 %v1258
        %1467 = vmatpush1.bf16.msra.mxu0 %v1257
        %1468 = vmatprep.subr.bf16.mxu0 %v1262
        %1469 = vmatpush1.bf16.msra.mxu0 %v1261
        %1470 = vmatprep.subr.bf16.mxu0 %v1266
        %1471 = vmatpush1.bf16.msra.mxu0 %v1265
        %1472 = vmatprep.mubr.bf16.mxu0 %v628
        %1473 = vmatmul.mubr.bf16.gmra.mrb[0].mxu0 %v627
        %v1474 = vpop.f32.mrb[0].mxu0
        %v1475 = vadd.f32 %v1432, %v1474
        %v1476 = vpop.f32.mrb[0].mxu0
        %v1477 = vadd.f32 %v1434, %v1476
        %v1478 = vpop.f32.mrb[0].mxu0
        %v1479 = vadd.f32 %v1436, %v1478
        %v1480 = vpop.f32.mrb[0].mxu0
        %v1481 = vadd.f32 %v1438, %v1480
        %1482 = vdwg.mxu0
        %1483 = vmatprep.subr.bf16.mxu0 %v1144
        %1484 = vmatpush1.bf16.msra.mxu0 %v1143
        %1485 = vmatprep.subr.bf16.mxu0 %v1148
        %1486 = vmatpush1.bf16.msra.mxu0 %v1147
        %1487 = vmatprep.subr.bf16.mxu0 %v1152
        %1488 = vmatpush1.bf16.msra.mxu0 %v1151
        %1489 = vmatprep.subr.bf16.mxu0 %v1156
        %1490 = vmatpush1.bf16.msra.mxu0 %v1155
        %1491 = vmatprep.subr.bf16.mxu0 %v1160
        %1492 = vmatpush1.bf16.msra.mxu0 %v1159
        %1493 = vmatprep.subr.bf16.mxu0 %v1164
        %1494 = vmatpush1.bf16.msra.mxu0 %v1163
        %1495 = vmatprep.subr.bf16.mxu0 %v1168
        %1496 = vmatpush1.bf16.msra.mxu0 %v1167
        %1497 = vmatprep.subr.bf16.mxu0 %v1172
        %1498 = vmatpush1.bf16.msra.mxu0 %v1171
        %1499 = vmatprep.subr.bf16.mxu0 %v1176
        %1500 = vmatpush1.bf16.msra.mxu0 %v1175
        %1501 = vmatprep.subr.bf16.mxu0 %v1180
        %1502 = vmatpush1.bf16.msra.mxu0 %v1179
        %1503 = vmatprep.subr.bf16.mxu0 %v1184
        %1504 = vmatpush1.bf16.msra.mxu0 %v1183
        %1505 = vmatprep.subr.bf16.mxu0 %v1188
        %1506 = vmatpush1.bf16.msra.mxu0 %v1187
        %1507 = vmatprep.subr.bf16.mxu0 %v1192
        %1508 = vmatpush1.bf16.msra.mxu0 %v1191
        %1509 = vmatprep.subr.bf16.mxu0 %v1196
        %1510 = vmatpush1.bf16.msra.mxu0 %v1195
        %1511 = vmatprep.subr.bf16.mxu0 %v1200
        %1512 = vmatpush1.bf16.msra.mxu0 %v1199
        %1513 = vmatprep.subr.bf16.mxu0 %v1204
        %1514 = vmatpush1.bf16.msra.mxu0 %v1203
        %1515 = vmatprep.mubr.bf16.mxu0 %v626
        %1516 = vmatmul.mubr.bf16.gmra.mrb[0].mxu0 %v625
        %v1517 = vpop.f32.mrb[0].mxu0
        %v1518 = vadd.f32 0.0, %v1517
        %v1519 = vpop.f32.mrb[0].mxu0
        %v1520 = vadd.f32 0.0, %v1519
        %v1521 = vpop.f32.mrb[0].mxu0
        %v1522 = vadd.f32 0.0, %v1521
        %v1523 = vpop.f32.mrb[0].mxu0
        %v1524 = vadd.f32 0.0, %v1523
        %1525 = vdwg.mxu0
        %1526 = vmatprep.subr.bf16.mxu0 %v1208
        %1527 = vmatpush1.bf16.msra.mxu0 %v1207
        %1528 = vmatprep.subr.bf16.mxu0 %v1212
        %1529 = vmatpush1.bf16.msra.mxu0 %v1211
        %1530 = vmatprep.subr.bf16.mxu0 %v1216
        %1531 = vmatpush1.bf16.msra.mxu0 %v1215
        %1532 = vmatprep.subr.bf16.mxu0 %v1220
        %1533 = vmatpush1.bf16.msra.mxu0 %v1219
        %1534 = vmatprep.subr.bf16.mxu0 %v1224
        %1535 = vmatpush1.bf16.msra.mxu0 %v1223
        %1536 = vmatprep.subr.bf16.mxu0 %v1228
        %1537 = vmatpush1.bf16.msra.mxu0 %v1227
        %1538 = vmatprep.subr.bf16.mxu0 %v1232
        %1539 = vmatpush1.bf16.msra.mxu0 %v1231
        %1540 = vmatprep.subr.bf16.mxu0 %v1236
        %1541 = vmatpush1.bf16.msra.mxu0 %v1235
        %1542 = vmatprep.subr.bf16.mxu0 %v1240
        %1543 = vmatpush1.bf16.msra.mxu0 %v1239
        %1544 = vmatprep.subr.bf16.mxu0 %v1244
        %1545 = vmatpush1.bf16.msra.mxu0 %v1243
        %1546 = vmatprep.subr.bf16.mxu0 %v1248
        %1547 = vmatpush1.bf16.msra.mxu0 %v1247
        %1548 = vmatprep.subr.bf16.mxu0 %v1252
        %1549 = vmatpush1.bf16.msra.mxu0 %v1251
        %1550 = vmatprep.subr.bf16.mxu0 %v1256
        %1551 = vmatpush1.bf16.msra.mxu0 %v1255
        %1552 = vmatprep.subr.bf16.mxu0 %v1260
        %1553 = vmatpush1.bf16.msra.mxu0 %v1259
        %1554 = vmatprep.subr.bf16.mxu0 %v1264
        %1555 = vmatpush1.bf16.msra.mxu0 %v1263
        %1556 = vmatprep.subr.bf16.mxu0 %v1268
        %1557 = vmatpush1.bf16.msra.mxu0 %v1267
        %1558 = vmatprep.mubr.bf16.mxu0 %v628
        %1559 = vmatmul.mubr.bf16.gmra.mrb[0].mxu0 %v627
        %v1560 = vpop.f32.mrb[0].mxu0
        %v1561 = vadd.f32 %v1518, %v1560
        %v1562 = vpop.f32.mrb[0].mxu0
        %v1563 = vadd.f32 %v1520, %v1562
        %v1564 = vpop.f32.mrb[0].mxu0
        %v1565 = vadd.f32 %v1522, %v1564
        %v1566 = vpop.f32.mrb[0].mxu0
        %v1567 = vadd.f32 %v1524, %v1566
        %1568 = vdwg.mxu0
        %v1569 = vpack.c.bf16 %v613, %v609
        %v1570 = vpack.c.bf16 %v614, %v610
        %v1571 = vpack.c.bf16 %v615, %v611
        %v1572 = vpack.c.bf16 %v616, %v612
        %v1573 = vld [vmem:[#allocation11] sm:$0xff]
        %v1574 = vld [vmem:[#allocation11 + $0x8] sm:$0xff]
        %v1575 = vld [vmem:[#allocation11 + $0x10] sm:$0xff]
        %v1576 = vld [vmem:[#allocation11 + $0x18] sm:$0xff]
        %v1577 = vld [vmem:[#allocation11 + $0x20] sm:$0xff]
        %v1578 = vld [vmem:[#allocation11 + $0x28] sm:$0xff]
        %v1579 = vld [vmem:[#allocation11 + $0x30] sm:$0xff]
        %v1580 = vld [vmem:[#allocation11 + $0x38] sm:$0xff]
        %v1581 = vld [vmem:[#allocation11 + $0x40] sm:$0xff]
        %v1582 = vld [vmem:[#allocation11 + $0x48] sm:$0xff]
        %v1583 = vld [vmem:[#allocation11 + $0x50] sm:$0xff]
        %v1584 = vld [vmem:[#allocation11 + $0x58] sm:$0xff]
        %v1585 = vld [vmem:[#allocation11 + $0x60] sm:$0xff]
        %v1586 = vld [vmem:[#allocation11 + $0x68] sm:$0xff]
        %v1587 = vld [vmem:[#allocation11 + $0x70] sm:$0xff]
        %v1588 = vld [vmem:[#allocation11 + $0x78] sm:$0xff]
        %v1589 = vld [vmem:[#allocation11 + $0x80] sm:$0xff]
        %v1590 = vld [vmem:[#allocation11 + $0x88] sm:$0xff]
        %v1591 = vld [vmem:[#allocation11 + $0x90] sm:$0xff]
        %v1592 = vld [vmem:[#allocation11 + $0x98] sm:$0xff]
        %v1593 = vld [vmem:[#allocation11 + $0xa0] sm:$0xff]
        %v1594 = vld [vmem:[#allocation11 + $0xa8] sm:$0xff]
        %v1595 = vld [vmem:[#allocation11 + $0xb0] sm:$0xff]
        %v1596 = vld [vmem:[#allocation11 + $0xb8] sm:$0xff]
        %v1597 = vld [vmem:[#allocation11 + $0xc0] sm:$0xff]
        %v1598 = vld [vmem:[#allocation11 + $0xc8] sm:$0xff]
        %v1599 = vld [vmem:[#allocation11 + $0xd0] sm:$0xff]
        %v1600 = vld [vmem:[#allocation11 + $0xd8] sm:$0xff]
        %v1601 = vld [vmem:[#allocation11 + $0xe0] sm:$0xff]
        %v1602 = vld [vmem:[#allocation11 + $0xe8] sm:$0xff]
        %v1603 = vld [vmem:[#allocation11 + $0xf0] sm:$0xff]
        %v1604 = vld [vmem:[#allocation11 + $0xf8] sm:$0xff]
        %v1605 = vld [vmem:[#allocation11 + $0x100] sm:$0xff]
        %v1606 = vld [vmem:[#allocation11 + $0x108] sm:$0xff]
        %v1607 = vld [vmem:[#allocation11 + $0x110] sm:$0xff]
        %v1608 = vld [vmem:[#allocation11 + $0x118] sm:$0xff]
        %v1609 = vld [vmem:[#allocation11 + $0x120] sm:$0xff]
        %v1610 = vld [vmem:[#allocation11 + $0x128] sm:$0xff]
        %v1611 = vld [vmem:[#allocation11 + $0x130] sm:$0xff]
        %v1612 = vld [vmem:[#allocation11 + $0x138] sm:$0xff]
        %v1613 = vld [vmem:[#allocation11 + $0x140] sm:$0xff]
        %v1614 = vld [vmem:[#allocation11 + $0x148] sm:$0xff]
        %v1615 = vld [vmem:[#allocation11 + $0x150] sm:$0xff]
        %v1616 = vld [vmem:[#allocation11 + $0x158] sm:$0xff]
        %v1617 = vld [vmem:[#allocation11 + $0x160] sm:$0xff]
        %v1618 = vld [vmem:[#allocation11 + $0x168] sm:$0xff]
        %v1619 = vld [vmem:[#allocation11 + $0x170] sm:$0xff]
        %v1620 = vld [vmem:[#allocation11 + $0x178] sm:$0xff]
        %v1621 = vld [vmem:[#allocation11 + $0x180] sm:$0xff]
        %v1622 = vld [vmem:[#allocation11 + $0x188] sm:$0xff]
        %v1623 = vld [vmem:[#allocation11 + $0x190] sm:$0xff]
        %v1624 = vld [vmem:[#allocation11 + $0x198] sm:$0xff]
        %v1625 = vld [vmem:[#allocation11 + $0x1a0] sm:$0xff]
        %v1626 = vld [vmem:[#allocation11 + $0x1a8] sm:$0xff]
        %v1627 = vld [vmem:[#allocation11 + $0x1b0] sm:$0xff]
        %v1628 = vld [vmem:[#allocation11 + $0x1b8] sm:$0xff]
        %v1629 = vld [vmem:[#allocation11 + $0x1c0] sm:$0xff]
        %v1630 = vld [vmem:[#allocation11 + $0x1c8] sm:$0xff]
        %v1631 = vld [vmem:[#allocation11 + $0x1d0] sm:$0xff]
        %v1632 = vld [vmem:[#allocation11 + $0x1d8] sm:$0xff]
        %v1633 = vld [vmem:[#allocation11 + $0x1e0] sm:$0xff]
        %v1634 = vld [vmem:[#allocation11 + $0x1e8] sm:$0xff]
        %v1635 = vld [vmem:[#allocation11 + $0x1f0] sm:$0xff]
        %v1636 = vld [vmem:[#allocation11 + $0x1f8] sm:$0xff]
        %v1637 = vld [vmem:[#allocation11 + $0x200] sm:$0xff]
        %v1638 = vld [vmem:[#allocation11 + $0x208] sm:$0xff]
        %v1639 = vld [vmem:[#allocation11 + $0x210] sm:$0xff]
        %v1640 = vld [vmem:[#allocation11 + $0x218] sm:$0xff]
        %v1641 = vld [vmem:[#allocation11 + $0x220] sm:$0xff]
        %v1642 = vld [vmem:[#allocation11 + $0x228] sm:$0xff]
        %v1643 = vld [vmem:[#allocation11 + $0x230] sm:$0xff]
        %v1644 = vld [vmem:[#allocation11 + $0x238] sm:$0xff]
        %v1645 = vld [vmem:[#allocation11 + $0x240] sm:$0xff]
        %v1646 = vld [vmem:[#allocation11 + $0x248] sm:$0xff]
        %v1647 = vld [vmem:[#allocation11 + $0x250] sm:$0xff]
        %v1648 = vld [vmem:[#allocation11 + $0x258] sm:$0xff]
        %v1649 = vld [vmem:[#allocation11 + $0x260] sm:$0xff]
        %v1650 = vld [vmem:[#allocation11 + $0x268] sm:$0xff]
        %v1651 = vld [vmem:[#allocation11 + $0x270] sm:$0xff]
        %v1652 = vld [vmem:[#allocation11 + $0x278] sm:$0xff]
        %v1653 = vld [vmem:[#allocation11 + $0x280] sm:$0xff]
        %v1654 = vld [vmem:[#allocation11 + $0x288] sm:$0xff]
        %v1655 = vld [vmem:[#allocation11 + $0x290] sm:$0xff]
        %v1656 = vld [vmem:[#allocation11 + $0x298] sm:$0xff]
        %v1657 = vld [vmem:[#allocation11 + $0x2a0] sm:$0xff]
        %v1658 = vld [vmem:[#allocation11 + $0x2a8] sm:$0xff]
        %v1659 = vld [vmem:[#allocation11 + $0x2b0] sm:$0xff]
        %v1660 = vld [vmem:[#allocation11 + $0x2b8] sm:$0xff]
        %v1661 = vld [vmem:[#allocation11 + $0x2c0] sm:$0xff]
        %v1662 = vld [vmem:[#allocation11 + $0x2c8] sm:$0xff]
        %v1663 = vld [vmem:[#allocation11 + $0x2d0] sm:$0xff]
        %v1664 = vld [vmem:[#allocation11 + $0x2d8] sm:$0xff]
        %v1665 = vld [vmem:[#allocation11 + $0x2e0] sm:$0xff]
        %v1666 = vld [vmem:[#allocation11 + $0x2e8] sm:$0xff]
        %v1667 = vld [vmem:[#allocation11 + $0x2f0] sm:$0xff]
        %v1668 = vld [vmem:[#allocation11 + $0x2f8] sm:$0xff]
        %v1669 = vld [vmem:[#allocation11 + $0x300] sm:$0xff]
        %v1670 = vld [vmem:[#allocation11 + $0x308] sm:$0xff]
        %v1671 = vld [vmem:[#allocation11 + $0x310] sm:$0xff]
        %v1672 = vld [vmem:[#allocation11 + $0x318] sm:$0xff]
        %v1673 = vld [vmem:[#allocation11 + $0x320] sm:$0xff]
        %v1674 = vld [vmem:[#allocation11 + $0x328] sm:$0xff]
        %v1675 = vld [vmem:[#allocation11 + $0x330] sm:$0xff]
        %v1676 = vld [vmem:[#allocation11 + $0x338] sm:$0xff]
        %v1677 = vld [vmem:[#allocation11 + $0x340] sm:$0xff]
        %v1678 = vld [vmem:[#allocation11 + $0x348] sm:$0xff]
        %v1679 = vld [vmem:[#allocation11 + $0x350] sm:$0xff]
        %v1680 = vld [vmem:[#allocation11 + $0x358] sm:$0xff]
        %v1681 = vld [vmem:[#allocation11 + $0x360] sm:$0xff]
        %v1682 = vld [vmem:[#allocation11 + $0x368] sm:$0xff]
        %v1683 = vld [vmem:[#allocation11 + $0x370] sm:$0xff]
        %v1684 = vld [vmem:[#allocation11 + $0x378] sm:$0xff]
        %v1685 = vld [vmem:[#allocation11 + $0x380] sm:$0xff]
        %v1686 = vld [vmem:[#allocation11 + $0x388] sm:$0xff]
        %v1687 = vld [vmem:[#allocation11 + $0x390] sm:$0xff]
        %v1688 = vld [vmem:[#allocation11 + $0x398] sm:$0xff]
        %v1689 = vld [vmem:[#allocation11 + $0x3a0] sm:$0xff]
        %v1690 = vld [vmem:[#allocation11 + $0x3a8] sm:$0xff]
        %v1691 = vld [vmem:[#allocation11 + $0x3b0] sm:$0xff]
        %v1692 = vld [vmem:[#allocation11 + $0x3b8] sm:$0xff]
        %v1693 = vld [vmem:[#allocation11 + $0x3c0] sm:$0xff]
        %v1694 = vld [vmem:[#allocation11 + $0x3c8] sm:$0xff]
        %v1695 = vld [vmem:[#allocation11 + $0x3d0] sm:$0xff]
        %v1696 = vld [vmem:[#allocation11 + $0x3d8] sm:$0xff]
        %v1697 = vld [vmem:[#allocation11 + $0x3e0] sm:$0xff]
        %v1698 = vld [vmem:[#allocation11 + $0x3e8] sm:$0xff]
        %v1699 = vld [vmem:[#allocation11 + $0x3f0] sm:$0xff]
        %v1700 = vld [vmem:[#allocation11 + $0x3f8] sm:$0xff]
        %v1829 = vunpack.c.l.b16 %v1573
        %v1830 = vunpack.c.h.b16 %v1573
        %v1831 = vunpack.c.l.b16 %v1574
        %v1832 = vunpack.c.h.b16 %v1574
        %v1833 = vunpack.c.l.b16 %v1575
        %v1834 = vunpack.c.h.b16 %v1575
        %v1835 = vunpack.c.l.b16 %v1576
        %v1836 = vunpack.c.h.b16 %v1576
        %v1837 = vunpack.c.l.b16 %v1577
        %v1838 = vunpack.c.h.b16 %v1577
        %v1839 = vunpack.c.l.b16 %v1578
        %v1840 = vunpack.c.h.b16 %v1578
        %v1841 = vunpack.c.l.b16 %v1579
        %v1842 = vunpack.c.h.b16 %v1579
        %v1843 = vunpack.c.l.b16 %v1580
        %v1844 = vunpack.c.h.b16 %v1580
        %v1845 = vunpack.c.l.b16 %v1581
        %v1846 = vunpack.c.h.b16 %v1581
        %v1847 = vunpack.c.l.b16 %v1582
        %v1848 = vunpack.c.h.b16 %v1582
        %v1849 = vunpack.c.l.b16 %v1583
        %v1850 = vunpack.c.h.b16 %v1583
        %v1851 = vunpack.c.l.b16 %v1584
        %v1852 = vunpack.c.h.b16 %v1584
        %v1853 = vunpack.c.l.b16 %v1585
        %v1854 = vunpack.c.h.b16 %v1585
        %v1855 = vunpack.c.l.b16 %v1586
        %v1856 = vunpack.c.h.b16 %v1586
        %v1857 = vunpack.c.l.b16 %v1587
        %v1858 = vunpack.c.h.b16 %v1587
        %v1859 = vunpack.c.l.b16 %v1588
        %v1860 = vunpack.c.h.b16 %v1588
        %v1861 = vunpack.c.l.b16 %v1589
        %v1862 = vunpack.c.h.b16 %v1589
        %v1863 = vunpack.c.l.b16 %v1590
        %v1864 = vunpack.c.h.b16 %v1590
        %v1865 = vunpack.c.l.b16 %v1591
        %v1866 = vunpack.c.h.b16 %v1591
        %v1867 = vunpack.c.l.b16 %v1592
        %v1868 = vunpack.c.h.b16 %v1592
        %v1869 = vunpack.c.l.b16 %v1593
        %v1870 = vunpack.c.h.b16 %v1593
        %v1871 = vunpack.c.l.b16 %v1594
        %v1872 = vunpack.c.h.b16 %v1594
        %v1873 = vunpack.c.l.b16 %v1595
        %v1874 = vunpack.c.h.b16 %v1595
        %v1875 = vunpack.c.l.b16 %v1596
        %v1876 = vunpack.c.h.b16 %v1596
        %v1877 = vunpack.c.l.b16 %v1597
        %v1878 = vunpack.c.h.b16 %v1597
        %v1879 = vunpack.c.l.b16 %v1598
        %v1880 = vunpack.c.h.b16 %v1598
        %v1881 = vunpack.c.l.b16 %v1599
        %v1882 = vunpack.c.h.b16 %v1599
        %v1883 = vunpack.c.l.b16 %v1600
        %v1884 = vunpack.c.h.b16 %v1600
        %v1885 = vunpack.c.l.b16 %v1601
        %v1886 = vunpack.c.h.b16 %v1601
        %v1887 = vunpack.c.l.b16 %v1602
        %v1888 = vunpack.c.h.b16 %v1602
        %v1889 = vunpack.c.l.b16 %v1603
        %v1890 = vunpack.c.h.b16 %v1603
        %v1891 = vunpack.c.l.b16 %v1604
        %v1892 = vunpack.c.h.b16 %v1604
        %v1893 = vunpack.c.l.b16 %v1605
        %v1894 = vunpack.c.h.b16 %v1605
        %v1895 = vunpack.c.l.b16 %v1606
        %v1896 = vunpack.c.h.b16 %v1606
        %v1897 = vunpack.c.l.b16 %v1607
        %v1898 = vunpack.c.h.b16 %v1607
        %v1899 = vunpack.c.l.b16 %v1608
        %v1900 = vunpack.c.h.b16 %v1608
        %v1901 = vunpack.c.l.b16 %v1609
        %v1902 = vunpack.c.h.b16 %v1609
        %v1903 = vunpack.c.l.b16 %v1610
        %v1904 = vunpack.c.h.b16 %v1610
        %v1905 = vunpack.c.l.b16 %v1611
        %v1906 = vunpack.c.h.b16 %v1611
        %v1907 = vunpack.c.l.b16 %v1612
        %v1908 = vunpack.c.h.b16 %v1612
        %v1909 = vunpack.c.l.b16 %v1613
        %v1910 = vunpack.c.h.b16 %v1613
        %v1911 = vunpack.c.l.b16 %v1614
        %v1912 = vunpack.c.h.b16 %v1614
        %v1913 = vunpack.c.l.b16 %v1615
        %v1914 = vunpack.c.h.b16 %v1615
        %v1915 = vunpack.c.l.b16 %v1616
        %v1916 = vunpack.c.h.b16 %v1616
        %v1917 = vunpack.c.l.b16 %v1617
        %v1918 = vunpack.c.h.b16 %v1617
        %v1919 = vunpack.c.l.b16 %v1618
        %v1920 = vunpack.c.h.b16 %v1618
        %v1921 = vunpack.c.l.b16 %v1619
        %v1922 = vunpack.c.h.b16 %v1619
        %v1923 = vunpack.c.l.b16 %v1620
        %v1924 = vunpack.c.h.b16 %v1620
        %v1925 = vunpack.c.l.b16 %v1621
        %v1926 = vunpack.c.h.b16 %v1621
        %v1927 = vunpack.c.l.b16 %v1622
        %v1928 = vunpack.c.h.b16 %v1622
        %v1929 = vunpack.c.l.b16 %v1623
        %v1930 = vunpack.c.h.b16 %v1623
        %v1931 = vunpack.c.l.b16 %v1624
        %v1932 = vunpack.c.h.b16 %v1624
        %v1933 = vunpack.c.l.b16 %v1625
        %v1934 = vunpack.c.h.b16 %v1625
        %v1935 = vunpack.c.l.b16 %v1626
        %v1936 = vunpack.c.h.b16 %v1626
        %v1937 = vunpack.c.l.b16 %v1627
        %v1938 = vunpack.c.h.b16 %v1627
        %v1939 = vunpack.c.l.b16 %v1628
        %v1940 = vunpack.c.h.b16 %v1628
        %v1941 = vunpack.c.l.b16 %v1629
        %v1942 = vunpack.c.h.b16 %v1629
        %v1943 = vunpack.c.l.b16 %v1630
        %v1944 = vunpack.c.h.b16 %v1630
        %v1945 = vunpack.c.l.b16 %v1631
        %v1946 = vunpack.c.h.b16 %v1631
        %v1947 = vunpack.c.l.b16 %v1632
        %v1948 = vunpack.c.h.b16 %v1632
        %v1949 = vunpack.c.l.b16 %v1633
        %v1950 = vunpack.c.h.b16 %v1633
        %v1951 = vunpack.c.l.b16 %v1634
        %v1952 = vunpack.c.h.b16 %v1634
        %v1953 = vunpack.c.l.b16 %v1635
        %v1954 = vunpack.c.h.b16 %v1635
        %v1955 = vunpack.c.l.b16 %v1636
        %v1956 = vunpack.c.h.b16 %v1636
        %v1957 = vunpack.c.l.b16 %v1637
        %v1958 = vunpack.c.h.b16 %v1637
        %v1959 = vunpack.c.l.b16 %v1638
        %v1960 = vunpack.c.h.b16 %v1638
        %v1961 = vunpack.c.l.b16 %v1639
        %v1962 = vunpack.c.h.b16 %v1639
        %v1963 = vunpack.c.l.b16 %v1640
        %v1964 = vunpack.c.h.b16 %v1640
        %v1965 = vunpack.c.l.b16 %v1641
        %v1966 = vunpack.c.h.b16 %v1641
        %v1967 = vunpack.c.l.b16 %v1642
        %v1968 = vunpack.c.h.b16 %v1642
        %v1969 = vunpack.c.l.b16 %v1643
        %v1970 = vunpack.c.h.b16 %v1643
        %v1971 = vunpack.c.l.b16 %v1644
        %v1972 = vunpack.c.h.b16 %v1644
        %v1973 = vunpack.c.l.b16 %v1645
        %v1974 = vunpack.c.h.b16 %v1645
        %v1975 = vunpack.c.l.b16 %v1646
        %v1976 = vunpack.c.h.b16 %v1646
        %v1977 = vunpack.c.l.b16 %v1647
        %v1978 = vunpack.c.h.b16 %v1647
        %v1979 = vunpack.c.l.b16 %v1648
        %v1980 = vunpack.c.h.b16 %v1648
        %v1981 = vunpack.c.l.b16 %v1649
        %v1982 = vunpack.c.h.b16 %v1649
        %v1983 = vunpack.c.l.b16 %v1650
        %v1984 = vunpack.c.h.b16 %v1650
        %v1985 = vunpack.c.l.b16 %v1651
        %v1986 = vunpack.c.h.b16 %v1651
        %v1987 = vunpack.c.l.b16 %v1652
        %v1988 = vunpack.c.h.b16 %v1652
        %v1989 = vunpack.c.l.b16 %v1653
        %v1990 = vunpack.c.h.b16 %v1653
        %v1991 = vunpack.c.l.b16 %v1654
        %v1992 = vunpack.c.h.b16 %v1654
        %v1993 = vunpack.c.l.b16 %v1655
        %v1994 = vunpack.c.h.b16 %v1655
        %v1995 = vunpack.c.l.b16 %v1656
        %v1996 = vunpack.c.h.b16 %v1656
        %v1997 = vunpack.c.l.b16 %v1657
        %v1998 = vunpack.c.h.b16 %v1657
        %v1999 = vunpack.c.l.b16 %v1658
        %v2000 = vunpack.c.h.b16 %v1658
        %v2001 = vunpack.c.l.b16 %v1659
        %v2002 = vunpack.c.h.b16 %v1659
        %v2003 = vunpack.c.l.b16 %v1660
        %v2004 = vunpack.c.h.b16 %v1660
        %v2005 = vunpack.c.l.b16 %v1661
        %v2006 = vunpack.c.h.b16 %v1661
        %v2007 = vunpack.c.l.b16 %v1662
        %v2008 = vunpack.c.h.b16 %v1662
        %v2009 = vunpack.c.l.b16 %v1663
        %v2010 = vunpack.c.h.b16 %v1663
        %v2011 = vunpack.c.l.b16 %v1664
        %v2012 = vunpack.c.h.b16 %v1664
        %v2013 = vunpack.c.l.b16 %v1665
        %v2014 = vunpack.c.h.b16 %v1665
        %v2015 = vunpack.c.l.b16 %v1666
        %v2016 = vunpack.c.h.b16 %v1666
        %v2017 = vunpack.c.l.b16 %v1667
        %v2018 = vunpack.c.h.b16 %v1667
        %v2019 = vunpack.c.l.b16 %v1668
        %v2020 = vunpack.c.h.b16 %v1668
        %v2021 = vunpack.c.l.b16 %v1669
        %v2022 = vunpack.c.h.b16 %v1669
        %v2023 = vunpack.c.l.b16 %v1670
        %v2024 = vunpack.c.h.b16 %v1670
        %v2025 = vunpack.c.l.b16 %v1671
        %v2026 = vunpack.c.h.b16 %v1671
        %v2027 = vunpack.c.l.b16 %v1672
        %v2028 = vunpack.c.h.b16 %v1672
        %v2029 = vunpack.c.l.b16 %v1673
        %v2030 = vunpack.c.h.b16 %v1673
        %v2031 = vunpack.c.l.b16 %v1674
        %v2032 = vunpack.c.h.b16 %v1674
        %v2033 = vunpack.c.l.b16 %v1675
        %v2034 = vunpack.c.h.b16 %v1675
        %v2035 = vunpack.c.l.b16 %v1676
        %v2036 = vunpack.c.h.b16 %v1676
        %v2037 = vunpack.c.l.b16 %v1677
        %v2038 = vunpack.c.h.b16 %v1677
        %v2039 = vunpack.c.l.b16 %v1678
        %v2040 = vunpack.c.h.b16 %v1678
        %v2041 = vunpack.c.l.b16 %v1679
        %v2042 = vunpack.c.h.b16 %v1679
        %v2043 = vunpack.c.l.b16 %v1680
        %v2044 = vunpack.c.h.b16 %v1680
        %v2045 = vunpack.c.l.b16 %v1681
        %v2046 = vunpack.c.h.b16 %v1681
        %v2047 = vunpack.c.l.b16 %v1682
        %v2048 = vunpack.c.h.b16 %v1682
        %v2049 = vunpack.c.l.b16 %v1683
        %v2050 = vunpack.c.h.b16 %v1683
        %v2051 = vunpack.c.l.b16 %v1684
        %v2052 = vunpack.c.h.b16 %v1684
        %v2053 = vunpack.c.l.b16 %v1685
        %v2054 = vunpack.c.h.b16 %v1685
        %v2055 = vunpack.c.l.b16 %v1686
        %v2056 = vunpack.c.h.b16 %v1686
        %v2057 = vunpack.c.l.b16 %v1687
        %v2058 = vunpack.c.h.b16 %v1687
        %v2059 = vunpack.c.l.b16 %v1688
        %v2060 = vunpack.c.h.b16 %v1688
        %v2061 = vunpack.c.l.b16 %v1689
        %v2062 = vunpack.c.h.b16 %v1689
        %v2063 = vunpack.c.l.b16 %v1690
        %v2064 = vunpack.c.h.b16 %v1690
        %v2065 = vunpack.c.l.b16 %v1691
        %v2066 = vunpack.c.h.b16 %v1691
        %v2067 = vunpack.c.l.b16 %v1692
        %v2068 = vunpack.c.h.b16 %v1692
        %v2069 = vunpack.c.l.b16 %v1693
        %v2070 = vunpack.c.h.b16 %v1693
        %v2071 = vunpack.c.l.b16 %v1694
        %v2072 = vunpack.c.h.b16 %v1694
        %v2073 = vunpack.c.l.b16 %v1695
        %v2074 = vunpack.c.h.b16 %v1695
        %v2075 = vunpack.c.l.b16 %v1696
        %v2076 = vunpack.c.h.b16 %v1696
        %v2077 = vunpack.c.l.b16 %v1697
        %v2078 = vunpack.c.h.b16 %v1697
        %v2079 = vunpack.c.l.b16 %v1698
        %v2080 = vunpack.c.h.b16 %v1698
        %v2081 = vunpack.c.l.b16 %v1699
        %v2082 = vunpack.c.h.b16 %v1699
        %v2083 = vunpack.c.l.b16 %v1700
        %v2084 = vunpack.c.h.b16 %v1700
        %v2085 = vpack.c.b16 %v1833, %v1829
        %v2086 = vpack.c.b16 %v1834, %v1830
        %v2087 = vpack.c.b16 %v1835, %v1831
        %v2088 = vpack.c.b16 %v1836, %v1832
        %v2089 = vpack.c.b16 %v1841, %v1837
        %v2090 = vpack.c.b16 %v1842, %v1838
        %v2091 = vpack.c.b16 %v1843, %v1839
        %v2092 = vpack.c.b16 %v1844, %v1840
        %v2093 = vpack.c.b16 %v1849, %v1845
        %v2094 = vpack.c.b16 %v1850, %v1846
        %v2095 = vpack.c.b16 %v1851, %v1847
        %v2096 = vpack.c.b16 %v1852, %v1848
        %v2097 = vpack.c.b16 %v1857, %v1853
        %v2098 = vpack.c.b16 %v1858, %v1854
        %v2099 = vpack.c.b16 %v1859, %v1855
        %v2100 = vpack.c.b16 %v1860, %v1856
        %v2101 = vpack.c.b16 %v1865, %v1861
        %v2102 = vpack.c.b16 %v1866, %v1862
        %v2103 = vpack.c.b16 %v1867, %v1863
        %v2104 = vpack.c.b16 %v1868, %v1864
        %v2105 = vpack.c.b16 %v1873, %v1869
        %v2106 = vpack.c.b16 %v1874, %v1870
        %v2107 = vpack.c.b16 %v1875, %v1871
        %v2108 = vpack.c.b16 %v1876, %v1872
        %v2109 = vpack.c.b16 %v1881, %v1877
        %v2110 = vpack.c.b16 %v1882, %v1878
        %v2111 = vpack.c.b16 %v1883, %v1879
        %v2112 = vpack.c.b16 %v1884, %v1880
        %v2113 = vpack.c.b16 %v1889, %v1885
        %v2114 = vpack.c.b16 %v1890, %v1886
        %v2115 = vpack.c.b16 %v1891, %v1887
        %v2116 = vpack.c.b16 %v1892, %v1888
        %v2117 = vpack.c.b16 %v1897, %v1893
        %v2118 = vpack.c.b16 %v1898, %v1894
        %v2119 = vpack.c.b16 %v1899, %v1895
        %v2120 = vpack.c.b16 %v1900, %v1896
        %v2121 = vpack.c.b16 %v1905, %v1901
        %v2122 = vpack.c.b16 %v1906, %v1902
        %v2123 = vpack.c.b16 %v1907, %v1903
        %v2124 = vpack.c.b16 %v1908, %v1904
        %v2125 = vpack.c.b16 %v1913, %v1909
        %v2126 = vpack.c.b16 %v1914, %v1910
        %v2127 = vpack.c.b16 %v1915, %v1911
        %v2128 = vpack.c.b16 %v1916, %v1912
        %v2129 = vpack.c.b16 %v1921, %v1917
        %v2130 = vpack.c.b16 %v1922, %v1918
        %v2131 = vpack.c.b16 %v1923, %v1919
        %v2132 = vpack.c.b16 %v1924, %v1920
        %v2133 = vpack.c.b16 %v1929, %v1925
        %v2134 = vpack.c.b16 %v1930, %v1926
        %v2135 = vpack.c.b16 %v1931, %v1927
        %v2136 = vpack.c.b16 %v1932, %v1928
        %v2137 = vpack.c.b16 %v1937, %v1933
        %v2138 = vpack.c.b16 %v1938, %v1934
        %v2139 = vpack.c.b16 %v1939, %v1935
        %v2140 = vpack.c.b16 %v1940, %v1936
        %v2141 = vpack.c.b16 %v1945, %v1941
        %v2142 = vpack.c.b16 %v1946, %v1942
        %v2143 = vpack.c.b16 %v1947, %v1943
        %v2144 = vpack.c.b16 %v1948, %v1944
        %v2145 = vpack.c.b16 %v1953, %v1949
        %v2146 = vpack.c.b16 %v1954, %v1950
        %v2147 = vpack.c.b16 %v1955, %v1951
        %v2148 = vpack.c.b16 %v1956, %v1952
        %v2149 = vpack.c.b16 %v1961, %v1957
        %v2150 = vpack.c.b16 %v1962, %v1958
        %v2151 = vpack.c.b16 %v1963, %v1959
        %v2152 = vpack.c.b16 %v1964, %v1960
        %v2153 = vpack.c.b16 %v1969, %v1965
        %v2154 = vpack.c.b16 %v1970, %v1966
        %v2155 = vpack.c.b16 %v1971, %v1967
        %v2156 = vpack.c.b16 %v1972, %v1968
        %v2157 = vpack.c.b16 %v1977, %v1973
        %v2158 = vpack.c.b16 %v1978, %v1974
        %v2159 = vpack.c.b16 %v1979, %v1975
        %v2160 = vpack.c.b16 %v1980, %v1976
        %v2161 = vpack.c.b16 %v1985, %v1981
        %v2162 = vpack.c.b16 %v1986, %v1982
        %v2163 = vpack.c.b16 %v1987, %v1983
        %v2164 = vpack.c.b16 %v1988, %v1984
        %v2165 = vpack.c.b16 %v1993, %v1989
        %v2166 = vpack.c.b16 %v1994, %v1990
        %v2167 = vpack.c.b16 %v1995, %v1991
        %v2168 = vpack.c.b16 %v1996, %v1992
        %v2169 = vpack.c.b16 %v2001, %v1997
        %v2170 = vpack.c.b16 %v2002, %v1998
        %v2171 = vpack.c.b16 %v2003, %v1999
        %v2172 = vpack.c.b16 %v2004, %v2000
        %v2173 = vpack.c.b16 %v2009, %v2005
        %v2174 = vpack.c.b16 %v2010, %v2006
        %v2175 = vpack.c.b16 %v2011, %v2007
        %v2176 = vpack.c.b16 %v2012, %v2008
        %v2177 = vpack.c.b16 %v2017, %v2013
        %v2178 = vpack.c.b16 %v2018, %v2014
        %v2179 = vpack.c.b16 %v2019, %v2015
        %v2180 = vpack.c.b16 %v2020, %v2016
        %v2181 = vpack.c.b16 %v2025, %v2021
        %v2182 = vpack.c.b16 %v2026, %v2022
        %v2183 = vpack.c.b16 %v2027, %v2023
        %v2184 = vpack.c.b16 %v2028, %v2024
        %v2185 = vpack.c.b16 %v2033, %v2029
        %v2186 = vpack.c.b16 %v2034, %v2030
        %v2187 = vpack.c.b16 %v2035, %v2031
        %v2188 = vpack.c.b16 %v2036, %v2032
        %v2189 = vpack.c.b16 %v2041, %v2037
        %v2190 = vpack.c.b16 %v2042, %v2038
        %v2191 = vpack.c.b16 %v2043, %v2039
        %v2192 = vpack.c.b16 %v2044, %v2040
        %v2193 = vpack.c.b16 %v2049, %v2045
        %v2194 = vpack.c.b16 %v2050, %v2046
        %v2195 = vpack.c.b16 %v2051, %v2047
        %v2196 = vpack.c.b16 %v2052, %v2048
        %v2197 = vpack.c.b16 %v2057, %v2053
        %v2198 = vpack.c.b16 %v2058, %v2054
        %v2199 = vpack.c.b16 %v2059, %v2055
        %v2200 = vpack.c.b16 %v2060, %v2056
        %v2201 = vpack.c.b16 %v2065, %v2061
        %v2202 = vpack.c.b16 %v2066, %v2062
        %v2203 = vpack.c.b16 %v2067, %v2063
        %v2204 = vpack.c.b16 %v2068, %v2064
        %v2205 = vpack.c.b16 %v2073, %v2069
        %v2206 = vpack.c.b16 %v2074, %v2070
        %v2207 = vpack.c.b16 %v2075, %v2071
        %v2208 = vpack.c.b16 %v2076, %v2072
        %v2209 = vpack.c.b16 %v2081, %v2077
        %v2210 = vpack.c.b16 %v2082, %v2078
        %v2211 = vpack.c.b16 %v2083, %v2079
        %v2212 = vpack.c.b16 %v2084, %v2080
        %2341 = vmatprep.subr.bf16.mxu0 %v2086
        %2342 = vmatpush1.bf16.msra.mxu0 %v2085
        %2343 = vmatprep.subr.bf16.mxu0 %v2090
        %2344 = vmatpush1.bf16.msra.mxu0 %v2089
        %2345 = vmatprep.subr.bf16.mxu0 %v2094
        %2346 = vmatpush1.bf16.msra.mxu0 %v2093
        %2347 = vmatprep.subr.bf16.mxu0 %v2098
        %2348 = vmatpush1.bf16.msra.mxu0 %v2097
        %2349 = vmatprep.subr.bf16.mxu0 %v2102
        %2350 = vmatpush1.bf16.msra.mxu0 %v2101
        %2351 = vmatprep.subr.bf16.mxu0 %v2106
        %2352 = vmatpush1.bf16.msra.mxu0 %v2105
        %2353 = vmatprep.subr.bf16.mxu0 %v2110
        %2354 = vmatpush1.bf16.msra.mxu0 %v2109
        %2355 = vmatprep.subr.bf16.mxu0 %v2114
        %2356 = vmatpush1.bf16.msra.mxu0 %v2113
        %2357 = vmatprep.subr.bf16.mxu0 %v2118
        %2358 = vmatpush1.bf16.msra.mxu0 %v2117
        %2359 = vmatprep.subr.bf16.mxu0 %v2122
        %2360 = vmatpush1.bf16.msra.mxu0 %v2121
        %2361 = vmatprep.subr.bf16.mxu0 %v2126
        %2362 = vmatpush1.bf16.msra.mxu0 %v2125
        %2363 = vmatprep.subr.bf16.mxu0 %v2130
        %2364 = vmatpush1.bf16.msra.mxu0 %v2129
        %2365 = vmatprep.subr.bf16.mxu0 %v2134
        %2366 = vmatpush1.bf16.msra.mxu0 %v2133
        %2367 = vmatprep.subr.bf16.mxu0 %v2138
        %2368 = vmatpush1.bf16.msra.mxu0 %v2137
        %2369 = vmatprep.subr.bf16.mxu0 %v2142
        %2370 = vmatpush1.bf16.msra.mxu0 %v2141
        %2371 = vmatprep.subr.bf16.mxu0 %v2146
        %2372 = vmatpush1.bf16.msra.mxu0 %v2145
        %2373 = vmatprep.mubr.bf16.mxu0 %v1570
        %2374 = vmatmul.mubr.bf16.gmra.mrb[0].mxu0 %v1569
        %v2375 = vpop.f32.mrb[0].mxu0
        %v2376 = vadd.f32 0.0, %v2375
        %v2377 = vpop.f32.mrb[0].mxu0
        %v2378 = vadd.f32 0.0, %v2377
        %v2379 = vpop.f32.mrb[0].mxu0
        %v2380 = vadd.f32 0.0, %v2379
        %v2381 = vpop.f32.mrb[0].mxu0
        %v2382 = vadd.f32 0.0, %v2381
        %2383 = vdwg.mxu0
        %2384 = vmatprep.subr.bf16.mxu0 %v2150
        %2385 = vmatpush1.bf16.msra.mxu0 %v2149
        %2386 = vmatprep.subr.bf16.mxu0 %v2154
        %2387 = vmatpush1.bf16.msra.mxu0 %v2153
        %2388 = vmatprep.subr.bf16.mxu0 %v2158
        %2389 = vmatpush1.bf16.msra.mxu0 %v2157
        %2390 = vmatprep.subr.bf16.mxu0 %v2162
        %2391 = vmatpush1.bf16.msra.mxu0 %v2161
        %2392 = vmatprep.subr.bf16.mxu0 %v2166
        %2393 = vmatpush1.bf16.msra.mxu0 %v2165
        %2394 = vmatprep.subr.bf16.mxu0 %v2170
        %2395 = vmatpush1.bf16.msra.mxu0 %v2169
        %2396 = vmatprep.subr.bf16.mxu0 %v2174
        %2397 = vmatpush1.bf16.msra.mxu0 %v2173
        %2398 = vmatprep.subr.bf16.mxu0 %v2178
        %2399 = vmatpush1.bf16.msra.mxu0 %v2177
        %2400 = vmatprep.subr.bf16.mxu0 %v2182
        %2401 = vmatpush1.bf16.msra.mxu0 %v2181
        %2402 = vmatprep.subr.bf16.mxu0 %v2186
        %2403 = vmatpush1.bf16.msra.mxu0 %v2185
        %2404 = vmatprep.subr.bf16.mxu0 %v2190
        %2405 = vmatpush1.bf16.msra.mxu0 %v2189
        %2406 = vmatprep.subr.bf16.mxu0 %v2194
        %2407 = vmatpush1.bf16.msra.mxu0 %v2193
        %2408 = vmatprep.subr.bf16.mxu0 %v2198
        %2409 = vmatpush1.bf16.msra.mxu0 %v2197
        %2410 = vmatprep.subr.bf16.mxu0 %v2202
        %2411 = vmatpush1.bf16.msra.mxu0 %v2201
        %2412 = vmatprep.subr.bf16.mxu0 %v2206
        %2413 = vmatpush1.bf16.msra.mxu0 %v2205
        %2414 = vmatprep.subr.bf16.mxu0 %v2210
        %2415 = vmatpush1.bf16.msra.mxu0 %v2209
        %2416 = vmatprep.mubr.bf16.mxu0 %v1572
        %2417 = vmatmul.mubr.bf16.gmra.mrb[0].mxu0 %v1571
        %v2418 = vpop.f32.mrb[0].mxu0
        %v2419 = vadd.f32 %v2376, %v2418
        %v2420 = vpop.f32.mrb[0].mxu0
        %v2421 = vadd.f32 %v2378, %v2420
        %v2422 = vpop.f32.mrb[0].mxu0
        %v2423 = vadd.f32 %v2380, %v2422
        %v2424 = vpop.f32.mrb[0].mxu0
        %v2425 = vadd.f32 %v2382, %v2424
        %2426 = vdwg.mxu0
        %2427 = vmatprep.subr.bf16.mxu0 %v2088
        %2428 = vmatpush1.bf16.msra.mxu0 %v2087
        %2429 = vmatprep.subr.bf16.mxu0 %v2092
        %2430 = vmatpush1.bf16.msra.mxu0 %v2091
        %2431 = vmatprep.subr.bf16.mxu0 %v2096
        %2432 = vmatpush1.bf16.msra.mxu0 %v2095
        %2433 = vmatprep.subr.bf16.mxu0 %v2100
        %2434 = vmatpush1.bf16.msra.mxu0 %v2099
        %2435 = vmatprep.subr.bf16.mxu0 %v2104
        %2436 = vmatpush1.bf16.msra.mxu0 %v2103
        %2437 = vmatprep.subr.bf16.mxu0 %v2108
        %2438 = vmatpush1.bf16.msra.mxu0 %v2107
        %2439 = vmatprep.subr.bf16.mxu0 %v2112
        %2440 = vmatpush1.bf16.msra.mxu0 %v2111
        %2441 = vmatprep.subr.bf16.mxu0 %v2116
        %2442 = vmatpush1.bf16.msra.mxu0 %v2115
        %2443 = vmatprep.subr.bf16.mxu0 %v2120
        %2444 = vmatpush1.bf16.msra.mxu0 %v2119
        %2445 = vmatprep.subr.bf16.mxu0 %v2124
        %2446 = vmatpush1.bf16.msra.mxu0 %v2123
        %2447 = vmatprep.subr.bf16.mxu0 %v2128
        %2448 = vmatpush1.bf16.msra.mxu0 %v2127
        %2449 = vmatprep.subr.bf16.mxu0 %v2132
        %2450 = vmatpush1.bf16.msra.mxu0 %v2131
        %2451 = vmatprep.subr.bf16.mxu0 %v2136
        %2452 = vmatpush1.bf16.msra.mxu0 %v2135
        %2453 = vmatprep.subr.bf16.mxu0 %v2140
        %2454 = vmatpush1.bf16.msra.mxu0 %v2139
        %2455 = vmatprep.subr.bf16.mxu0 %v2144
        %2456 = vmatpush1.bf16.msra.mxu0 %v2143
        %2457 = vmatprep.subr.bf16.mxu0 %v2148
        %2458 = vmatpush1.bf16.msra.mxu0 %v2147
        %2459 = vmatprep.mubr.bf16.mxu0 %v1570
        %2460 = vmatmul.mubr.bf16.gmra.mrb[0].mxu0 %v1569
        %v2461 = vpop.f32.mrb[0].mxu0
        %v2462 = vadd.f32 0.0, %v2461
        %v2463 = vpop.f32.mrb[0].mxu0
        %v2464 = vadd.f32 0.0, %v2463
        %v2465 = vpop.f32.mrb[0].mxu0
        %v2466 = vadd.f32 0.0, %v2465
        %v2467 = vpop.f32.mrb[0].mxu0
        %v2468 = vadd.f32 0.0, %v2467
        %2469 = vdwg.mxu0
        %2470 = vmatprep.subr.bf16.mxu0 %v2152
        %2471 = vmatpush1.bf16.msra.mxu0 %v2151
        %2472 = vmatprep.subr.bf16.mxu0 %v2156
        %2473 = vmatpush1.bf16.msra.mxu0 %v2155
        %2474 = vmatprep.subr.bf16.mxu0 %v2160
        %2475 = vmatpush1.bf16.msra.mxu0 %v2159
        %2476 = vmatprep.subr.bf16.mxu0 %v2164
        %2477 = vmatpush1.bf16.msra.mxu0 %v2163
        %2478 = vmatprep.subr.bf16.mxu0 %v2168
        %2479 = vmatpush1.bf16.msra.mxu0 %v2167
        %2480 = vmatprep.subr.bf16.mxu0 %v2172
        %2481 = vmatpush1.bf16.msra.mxu0 %v2171
        %2482 = vmatprep.subr.bf16.mxu0 %v2176
        %2483 = vmatpush1.bf16.msra.mxu0 %v2175
        %2484 = vmatprep.subr.bf16.mxu0 %v2180
        %2485 = vmatpush1.bf16.msra.mxu0 %v2179
        %2486 = vmatprep.subr.bf16.mxu0 %v2184
        %2487 = vmatpush1.bf16.msra.mxu0 %v2183
        %2488 = vmatprep.subr.bf16.mxu0 %v2188
        %2489 = vmatpush1.bf16.msra.mxu0 %v2187
        %2490 = vmatprep.subr.bf16.mxu0 %v2192
        %2491 = vmatpush1.bf16.msra.mxu0 %v2191
        %2492 = vmatprep.subr.bf16.mxu0 %v2196
        %2493 = vmatpush1.bf16.msra.mxu0 %v2195
        %2494 = vmatprep.subr.bf16.mxu0 %v2200
        %2495 = vmatpush1.bf16.msra.mxu0 %v2199
        %2496 = vmatprep.subr.bf16.mxu0 %v2204
        %2497 = vmatpush1.bf16.msra.mxu0 %v2203
        %2498 = vmatprep.subr.bf16.mxu0 %v2208
        %2499 = vmatpush1.bf16.msra.mxu0 %v2207
        %2500 = vmatprep.subr.bf16.mxu0 %v2212
        %2501 = vmatpush1.bf16.msra.mxu0 %v2211
        %2502 = vmatprep.mubr.bf16.mxu0 %v1572
        %2503 = vmatmul.mubr.bf16.gmra.mrb[0].mxu0 %v1571
        %v2504 = vpop.f32.mrb[0].mxu0
        %v2505 = vadd.f32 %v2462, %v2504
        %v2506 = vpop.f32.mrb[0].mxu0
        %v2507 = vadd.f32 %v2464, %v2506
        %v2508 = vpop.f32.mrb[0].mxu0
        %v2509 = vadd.f32 %v2466, %v2508
        %v2510 = vpop.f32.mrb[0].mxu0
        %v2511 = vadd.f32 %v2468, %v2510
        %2512 = vdwg.mxu0
        %v2513 = vpack.c.bf16 %v621, %v617
        %v2514 = vpack.c.bf16 %v622, %v618
        %v2515 = vpack.c.bf16 %v623, %v619
        %v2516 = vpack.c.bf16 %v624, %v620
        %v2517 = vld [vmem:[#allocation13] sm:$0xff]
        %v2518 = vld [vmem:[#allocation13 + $0x8] sm:$0xff]
        %v2519 = vld [vmem:[#allocation13 + $0x10] sm:$0xff]
        %v2520 = vld [vmem:[#allocation13 + $0x18] sm:$0xff]
        %v2521 = vld [vmem:[#allocation13 + $0x20] sm:$0xff]
        %v2522 = vld [vmem:[#allocation13 + $0x28] sm:$0xff]
        %v2523 = vld [vmem:[#allocation13 + $0x30] sm:$0xff]
        %v2524 = vld [vmem:[#allocation13 + $0x38] sm:$0xff]
        %v2525 = vld [vmem:[#allocation13 + $0x40] sm:$0xff]
        %v2526 = vld [vmem:[#allocation13 + $0x48] sm:$0xff]
        %v2527 = vld [vmem:[#allocation13 + $0x50] sm:$0xff]
        %v2528 = vld [vmem:[#allocation13 + $0x58] sm:$0xff]
        %v2529 = vld [vmem:[#allocation13 + $0x60] sm:$0xff]
        %v2530 = vld [vmem:[#allocation13 + $0x68] sm:$0xff]
        %v2531 = vld [vmem:[#allocation13 + $0x70] sm:$0xff]
        %v2532 = vld [vmem:[#allocation13 + $0x78] sm:$0xff]
        %v2533 = vld [vmem:[#allocation13 + $0x80] sm:$0xff]
        %v2534 = vld [vmem:[#allocation13 + $0x88] sm:$0xff]
        %v2535 = vld [vmem:[#allocation13 + $0x90] sm:$0xff]
        %v2536 = vld [vmem:[#allocation13 + $0x98] sm:$0xff]
        %v2537 = vld [vmem:[#allocation13 + $0xa0] sm:$0xff]
        %v2538 = vld [vmem:[#allocation13 + $0xa8] sm:$0xff]
        %v2539 = vld [vmem:[#allocation13 + $0xb0] sm:$0xff]
        %v2540 = vld [vmem:[#allocation13 + $0xb8] sm:$0xff]
        %v2541 = vld [vmem:[#allocation13 + $0xc0] sm:$0xff]
        %v2542 = vld [vmem:[#allocation13 + $0xc8] sm:$0xff]
        %v2543 = vld [vmem:[#allocation13 + $0xd0] sm:$0xff]
        %v2544 = vld [vmem:[#allocation13 + $0xd8] sm:$0xff]
        %v2545 = vld [vmem:[#allocation13 + $0xe0] sm:$0xff]
        %v2546 = vld [vmem:[#allocation13 + $0xe8] sm:$0xff]
        %v2547 = vld [vmem:[#allocation13 + $0xf0] sm:$0xff]
        %v2548 = vld [vmem:[#allocation13 + $0xf8] sm:$0xff]
        %v2549 = vld [vmem:[#allocation13 + $0x100] sm:$0xff]
        %v2550 = vld [vmem:[#allocation13 + $0x108] sm:$0xff]
        %v2551 = vld [vmem:[#allocation13 + $0x110] sm:$0xff]
        %v2552 = vld [vmem:[#allocation13 + $0x118] sm:$0xff]
        %v2553 = vld [vmem:[#allocation13 + $0x120] sm:$0xff]
        %v2554 = vld [vmem:[#allocation13 + $0x128] sm:$0xff]
        %v2555 = vld [vmem:[#allocation13 + $0x130] sm:$0xff]
        %v2556 = vld [vmem:[#allocation13 + $0x138] sm:$0xff]
        %v2557 = vld [vmem:[#allocation13 + $0x140] sm:$0xff]
        %v2558 = vld [vmem:[#allocation13 + $0x148] sm:$0xff]
        %v2559 = vld [vmem:[#allocation13 + $0x150] sm:$0xff]
        %v2560 = vld [vmem:[#allocation13 + $0x158] sm:$0xff]
        %v2561 = vld [vmem:[#allocation13 + $0x160] sm:$0xff]
        %v2562 = vld [vmem:[#allocation13 + $0x168] sm:$0xff]
        %v2563 = vld [vmem:[#allocation13 + $0x170] sm:$0xff]
        %v2564 = vld [vmem:[#allocation13 + $0x178] sm:$0xff]
        %v2565 = vld [vmem:[#allocation13 + $0x180] sm:$0xff]
        %v2566 = vld [vmem:[#allocation13 + $0x188] sm:$0xff]
        %v2567 = vld [vmem:[#allocation13 + $0x190] sm:$0xff]
        %v2568 = vld [vmem:[#allocation13 + $0x198] sm:$0xff]
        %v2569 = vld [vmem:[#allocation13 + $0x1a0] sm:$0xff]
        %v2570 = vld [vmem:[#allocation13 + $0x1a8] sm:$0xff]
        %v2571 = vld [vmem:[#allocation13 + $0x1b0] sm:$0xff]
        %v2572 = vld [vmem:[#allocation13 + $0x1b8] sm:$0xff]
        %v2573 = vld [vmem:[#allocation13 + $0x1c0] sm:$0xff]
        %v2574 = vld [vmem:[#allocation13 + $0x1c8] sm:$0xff]
        %v2575 = vld [vmem:[#allocation13 + $0x1d0] sm:$0xff]
        %v2576 = vld [vmem:[#allocation13 + $0x1d8] sm:$0xff]
        %v2577 = vld [vmem:[#allocation13 + $0x1e0] sm:$0xff]
        %v2578 = vld [vmem:[#allocation13 + $0x1e8] sm:$0xff]
        %v2579 = vld [vmem:[#allocation13 + $0x1f0] sm:$0xff]
        %v2580 = vld [vmem:[#allocation13 + $0x1f8] sm:$0xff]
        %v2581 = vld [vmem:[#allocation13 + $0x200] sm:$0xff]
        %v2582 = vld [vmem:[#allocation13 + $0x208] sm:$0xff]
        %v2583 = vld [vmem:[#allocation13 + $0x210] sm:$0xff]
        %v2584 = vld [vmem:[#allocation13 + $0x218] sm:$0xff]
        %v2585 = vld [vmem:[#allocation13 + $0x220] sm:$0xff]
        %v2586 = vld [vmem:[#allocation13 + $0x228] sm:$0xff]
        %v2587 = vld [vmem:[#allocation13 + $0x230] sm:$0xff]
        %v2588 = vld [vmem:[#allocation13 + $0x238] sm:$0xff]
        %v2589 = vld [vmem:[#allocation13 + $0x240] sm:$0xff]
        %v2590 = vld [vmem:[#allocation13 + $0x248] sm:$0xff]
        %v2591 = vld [vmem:[#allocation13 + $0x250] sm:$0xff]
        %v2592 = vld [vmem:[#allocation13 + $0x258] sm:$0xff]
        %v2593 = vld [vmem:[#allocation13 + $0x260] sm:$0xff]
        %v2594 = vld [vmem:[#allocation13 + $0x268] sm:$0xff]
        %v2595 = vld [vmem:[#allocation13 + $0x270] sm:$0xff]
        %v2596 = vld [vmem:[#allocation13 + $0x278] sm:$0xff]
        %v2597 = vld [vmem:[#allocation13 + $0x280] sm:$0xff]
        %v2598 = vld [vmem:[#allocation13 + $0x288] sm:$0xff]
        %v2599 = vld [vmem:[#allocation13 + $0x290] sm:$0xff]
        %v2600 = vld [vmem:[#allocation13 + $0x298] sm:$0xff]
        %v2601 = vld [vmem:[#allocation13 + $0x2a0] sm:$0xff]
        %v2602 = vld [vmem:[#allocation13 + $0x2a8] sm:$0xff]
        %v2603 = vld [vmem:[#allocation13 + $0x2b0] sm:$0xff]
        %v2604 = vld [vmem:[#allocation13 + $0x2b8] sm:$0xff]
        %v2605 = vld [vmem:[#allocation13 + $0x2c0] sm:$0xff]
        %v2606 = vld [vmem:[#allocation13 + $0x2c8] sm:$0xff]
        %v2607 = vld [vmem:[#allocation13 + $0x2d0] sm:$0xff]
        %v2608 = vld [vmem:[#allocation13 + $0x2d8] sm:$0xff]
        %v2609 = vld [vmem:[#allocation13 + $0x2e0] sm:$0xff]
        %v2610 = vld [vmem:[#allocation13 + $0x2e8] sm:$0xff]
        %v2611 = vld [vmem:[#allocation13 + $0x2f0] sm:$0xff]
        %v2612 = vld [vmem:[#allocation13 + $0x2f8] sm:$0xff]
        %v2613 = vld [vmem:[#allocation13 + $0x300] sm:$0xff]
        %v2614 = vld [vmem:[#allocation13 + $0x308] sm:$0xff]
        %v2615 = vld [vmem:[#allocation13 + $0x310] sm:$0xff]
        %v2616 = vld [vmem:[#allocation13 + $0x318] sm:$0xff]
        %v2617 = vld [vmem:[#allocation13 + $0x320] sm:$0xff]
        %v2618 = vld [vmem:[#allocation13 + $0x328] sm:$0xff]
        %v2619 = vld [vmem:[#allocation13 + $0x330] sm:$0xff]
        %v2620 = vld [vmem:[#allocation13 + $0x338] sm:$0xff]
        %v2621 = vld [vmem:[#allocation13 + $0x340] sm:$0xff]
        %v2622 = vld [vmem:[#allocation13 + $0x348] sm:$0xff]
        %v2623 = vld [vmem:[#allocation13 + $0x350] sm:$0xff]
        %v2624 = vld [vmem:[#allocation13 + $0x358] sm:$0xff]
        %v2625 = vld [vmem:[#allocation13 + $0x360] sm:$0xff]
        %v2626 = vld [vmem:[#allocation13 + $0x368] sm:$0xff]
        %v2627 = vld [vmem:[#allocation13 + $0x370] sm:$0xff]
        %v2628 = vld [vmem:[#allocation13 + $0x378] sm:$0xff]
        %v2629 = vld [vmem:[#allocation13 + $0x380] sm:$0xff]
        %v2630 = vld [vmem:[#allocation13 + $0x388] sm:$0xff]
        %v2631 = vld [vmem:[#allocation13 + $0x390] sm:$0xff]
        %v2632 = vld [vmem:[#allocation13 + $0x398] sm:$0xff]
        %v2633 = vld [vmem:[#allocation13 + $0x3a0] sm:$0xff]
        %v2634 = vld [vmem:[#allocation13 + $0x3a8] sm:$0xff]
        %v2635 = vld [vmem:[#allocation13 + $0x3b0] sm:$0xff]
        %v2636 = vld [vmem:[#allocation13 + $0x3b8] sm:$0xff]
        %v2637 = vld [vmem:[#allocation13 + $0x3c0] sm:$0xff]
        %v2638 = vld [vmem:[#allocation13 + $0x3c8] sm:$0xff]
        %v2639 = vld [vmem:[#allocation13 + $0x3d0] sm:$0xff]
        %v2640 = vld [vmem:[#allocation13 + $0x3d8] sm:$0xff]
        %v2641 = vld [vmem:[#allocation13 + $0x3e0] sm:$0xff]
        %v2642 = vld [vmem:[#allocation13 + $0x3e8] sm:$0xff]
        %v2643 = vld [vmem:[#allocation13 + $0x3f0] sm:$0xff]
        %v2644 = vld [vmem:[#allocation13 + $0x3f8] sm:$0xff]
        %v2773 = vunpack.c.l.b16 %v2517
        %v2774 = vunpack.c.h.b16 %v2517
        %v2775 = vunpack.c.l.b16 %v2518
        %v2776 = vunpack.c.h.b16 %v2518
        %v2777 = vunpack.c.l.b16 %v2519
        %v2778 = vunpack.c.h.b16 %v2519
        %v2779 = vunpack.c.l.b16 %v2520
        %v2780 = vunpack.c.h.b16 %v2520
        %v2781 = vunpack.c.l.b16 %v2521
        %v2782 = vunpack.c.h.b16 %v2521
        %v2783 = vunpack.c.l.b16 %v2522
        %v2784 = vunpack.c.h.b16 %v2522
        %v2785 = vunpack.c.l.b16 %v2523
        %v2786 = vunpack.c.h.b16 %v2523
        %v2787 = vunpack.c.l.b16 %v2524
        %v2788 = vunpack.c.h.b16 %v2524
        %v2789 = vunpack.c.l.b16 %v2525
        %v2790 = vunpack.c.h.b16 %v2525
        %v2791 = vunpack.c.l.b16 %v2526
        %v2792 = vunpack.c.h.b16 %v2526
        %v2793 = vunpack.c.l.b16 %v2527
        %v2794 = vunpack.c.h.b16 %v2527
        %v2795 = vunpack.c.l.b16 %v2528
        %v2796 = vunpack.c.h.b16 %v2528
        %v2797 = vunpack.c.l.b16 %v2529
        %v2798 = vunpack.c.h.b16 %v2529
        %v2799 = vunpack.c.l.b16 %v2530
        %v2800 = vunpack.c.h.b16 %v2530
        %v2801 = vunpack.c.l.b16 %v2531
        %v2802 = vunpack.c.h.b16 %v2531
        %v2803 = vunpack.c.l.b16 %v2532
        %v2804 = vunpack.c.h.b16 %v2532
        %v2805 = vunpack.c.l.b16 %v2533
        %v2806 = vunpack.c.h.b16 %v2533
        %v2807 = vunpack.c.l.b16 %v2534
        %v2808 = vunpack.c.h.b16 %v2534
        %v2809 = vunpack.c.l.b16 %v2535
        %v2810 = vunpack.c.h.b16 %v2535
        %v2811 = vunpack.c.l.b16 %v2536
        %v2812 = vunpack.c.h.b16 %v2536
        %v2813 = vunpack.c.l.b16 %v2537
        %v2814 = vunpack.c.h.b16 %v2537
        %v2815 = vunpack.c.l.b16 %v2538
        %v2816 = vunpack.c.h.b16 %v2538
        %v2817 = vunpack.c.l.b16 %v2539
        %v2818 = vunpack.c.h.b16 %v2539
        %v2819 = vunpack.c.l.b16 %v2540
        %v2820 = vunpack.c.h.b16 %v2540
        %v2821 = vunpack.c.l.b16 %v2541
        %v2822 = vunpack.c.h.b16 %v2541
        %v2823 = vunpack.c.l.b16 %v2542
        %v2824 = vunpack.c.h.b16 %v2542
        %v2825 = vunpack.c.l.b16 %v2543
        %v2826 = vunpack.c.h.b16 %v2543
        %v2827 = vunpack.c.l.b16 %v2544
        %v2828 = vunpack.c.h.b16 %v2544
        %v2829 = vunpack.c.l.b16 %v2545
        %v2830 = vunpack.c.h.b16 %v2545
        %v2831 = vunpack.c.l.b16 %v2546
        %v2832 = vunpack.c.h.b16 %v2546
        %v2833 = vunpack.c.l.b16 %v2547
        %v2834 = vunpack.c.h.b16 %v2547
        %v2835 = vunpack.c.l.b16 %v2548
        %v2836 = vunpack.c.h.b16 %v2548
        %v2837 = vunpack.c.l.b16 %v2549
        %v2838 = vunpack.c.h.b16 %v2549
        %v2839 = vunpack.c.l.b16 %v2550
        %v2840 = vunpack.c.h.b16 %v2550
        %v2841 = vunpack.c.l.b16 %v2551
        %v2842 = vunpack.c.h.b16 %v2551
        %v2843 = vunpack.c.l.b16 %v2552
        %v2844 = vunpack.c.h.b16 %v2552
        %v2845 = vunpack.c.l.b16 %v2553
        %v2846 = vunpack.c.h.b16 %v2553
        %v2847 = vunpack.c.l.b16 %v2554
        %v2848 = vunpack.c.h.b16 %v2554
        %v2849 = vunpack.c.l.b16 %v2555
        %v2850 = vunpack.c.h.b16 %v2555
        %v2851 = vunpack.c.l.b16 %v2556
        %v2852 = vunpack.c.h.b16 %v2556
        %v2853 = vunpack.c.l.b16 %v2557
        %v2854 = vunpack.c.h.b16 %v2557
        %v2855 = vunpack.c.l.b16 %v2558
        %v2856 = vunpack.c.h.b16 %v2558
        %v2857 = vunpack.c.l.b16 %v2559
        %v2858 = vunpack.c.h.b16 %v2559
        %v2859 = vunpack.c.l.b16 %v2560
        %v2860 = vunpack.c.h.b16 %v2560
        %v2861 = vunpack.c.l.b16 %v2561
        %v2862 = vunpack.c.h.b16 %v2561
        %v2863 = vunpack.c.l.b16 %v2562
        %v2864 = vunpack.c.h.b16 %v2562
        %v2865 = vunpack.c.l.b16 %v2563
        %v2866 = vunpack.c.h.b16 %v2563
        %v2867 = vunpack.c.l.b16 %v2564
        %v2868 = vunpack.c.h.b16 %v2564
        %v2869 = vunpack.c.l.b16 %v2565
        %v2870 = vunpack.c.h.b16 %v2565
        %v2871 = vunpack.c.l.b16 %v2566
        %v2872 = vunpack.c.h.b16 %v2566
        %v2873 = vunpack.c.l.b16 %v2567
        %v2874 = vunpack.c.h.b16 %v2567
        %v2875 = vunpack.c.l.b16 %v2568
        %v2876 = vunpack.c.h.b16 %v2568
        %v2877 = vunpack.c.l.b16 %v2569
        %v2878 = vunpack.c.h.b16 %v2569
        %v2879 = vunpack.c.l.b16 %v2570
        %v2880 = vunpack.c.h.b16 %v2570
        %v2881 = vunpack.c.l.b16 %v2571
        %v2882 = vunpack.c.h.b16 %v2571
        %v2883 = vunpack.c.l.b16 %v2572
        %v2884 = vunpack.c.h.b16 %v2572
        %v2885 = vunpack.c.l.b16 %v2573
        %v2886 = vunpack.c.h.b16 %v2573
        %v2887 = vunpack.c.l.b16 %v2574
        %v2888 = vunpack.c.h.b16 %v2574
        %v2889 = vunpack.c.l.b16 %v2575
        %v2890 = vunpack.c.h.b16 %v2575
        %v2891 = vunpack.c.l.b16 %v2576
        %v2892 = vunpack.c.h.b16 %v2576
        %v2893 = vunpack.c.l.b16 %v2577
        %v2894 = vunpack.c.h.b16 %v2577
        %v2895 = vunpack.c.l.b16 %v2578
        %v2896 = vunpack.c.h.b16 %v2578
        %v2897 = vunpack.c.l.b16 %v2579
        %v2898 = vunpack.c.h.b16 %v2579
        %v2899 = vunpack.c.l.b16 %v2580
        %v2900 = vunpack.c.h.b16 %v2580
        %v2901 = vunpack.c.l.b16 %v2581
        %v2902 = vunpack.c.h.b16 %v2581
        %v2903 = vunpack.c.l.b16 %v2582
        %v2904 = vunpack.c.h.b16 %v2582
        %v2905 = vunpack.c.l.b16 %v2583
        %v2906 = vunpack.c.h.b16 %v2583
        %v2907 = vunpack.c.l.b16 %v2584
        %v2908 = vunpack.c.h.b16 %v2584
        %v2909 = vunpack.c.l.b16 %v2585
        %v2910 = vunpack.c.h.b16 %v2585
        %v2911 = vunpack.c.l.b16 %v2586
        %v2912 = vunpack.c.h.b16 %v2586
        %v2913 = vunpack.c.l.b16 %v2587
        %v2914 = vunpack.c.h.b16 %v2587
        %v2915 = vunpack.c.l.b16 %v2588
        %v2916 = vunpack.c.h.b16 %v2588
        %v2917 = vunpack.c.l.b16 %v2589
        %v2918 = vunpack.c.h.b16 %v2589
        %v2919 = vunpack.c.l.b16 %v2590
        %v2920 = vunpack.c.h.b16 %v2590
        %v2921 = vunpack.c.l.b16 %v2591
        %v2922 = vunpack.c.h.b16 %v2591
        %v2923 = vunpack.c.l.b16 %v2592
        %v2924 = vunpack.c.h.b16 %v2592
        %v2925 = vunpack.c.l.b16 %v2593
        %v2926 = vunpack.c.h.b16 %v2593
        %v2927 = vunpack.c.l.b16 %v2594
        %v2928 = vunpack.c.h.b16 %v2594
        %v2929 = vunpack.c.l.b16 %v2595
        %v2930 = vunpack.c.h.b16 %v2595
        %v2931 = vunpack.c.l.b16 %v2596
        %v2932 = vunpack.c.h.b16 %v2596
        %v2933 = vunpack.c.l.b16 %v2597
        %v2934 = vunpack.c.h.b16 %v2597
        %v2935 = vunpack.c.l.b16 %v2598
        %v2936 = vunpack.c.h.b16 %v2598
        %v2937 = vunpack.c.l.b16 %v2599
        %v2938 = vunpack.c.h.b16 %v2599
        %v2939 = vunpack.c.l.b16 %v2600
        %v2940 = vunpack.c.h.b16 %v2600
        %v2941 = vunpack.c.l.b16 %v2601
        %v2942 = vunpack.c.h.b16 %v2601
        %v2943 = vunpack.c.l.b16 %v2602
        %v2944 = vunpack.c.h.b16 %v2602
        %v2945 = vunpack.c.l.b16 %v2603
        %v2946 = vunpack.c.h.b16 %v2603
        %v2947 = vunpack.c.l.b16 %v2604
        %v2948 = vunpack.c.h.b16 %v2604
        %v2949 = vunpack.c.l.b16 %v2605
        %v2950 = vunpack.c.h.b16 %v2605
        %v2951 = vunpack.c.l.b16 %v2606
        %v2952 = vunpack.c.h.b16 %v2606
        %v2953 = vunpack.c.l.b16 %v2607
        %v2954 = vunpack.c.h.b16 %v2607
        %v2955 = vunpack.c.l.b16 %v2608
        %v2956 = vunpack.c.h.b16 %v2608
        %v2957 = vunpack.c.l.b16 %v2609
        %v2958 = vunpack.c.h.b16 %v2609
        %v2959 = vunpack.c.l.b16 %v2610
        %v2960 = vunpack.c.h.b16 %v2610
        %v2961 = vunpack.c.l.b16 %v2611
        %v2962 = vunpack.c.h.b16 %v2611
        %v2963 = vunpack.c.l.b16 %v2612
        %v2964 = vunpack.c.h.b16 %v2612
        %v2965 = vunpack.c.l.b16 %v2613
        %v2966 = vunpack.c.h.b16 %v2613
        %v2967 = vunpack.c.l.b16 %v2614
        %v2968 = vunpack.c.h.b16 %v2614
        %v2969 = vunpack.c.l.b16 %v2615
        %v2970 = vunpack.c.h.b16 %v2615
        %v2971 = vunpack.c.l.b16 %v2616
        %v2972 = vunpack.c.h.b16 %v2616
        %v2973 = vunpack.c.l.b16 %v2617
        %v2974 = vunpack.c.h.b16 %v2617
        %v2975 = vunpack.c.l.b16 %v2618
        %v2976 = vunpack.c.h.b16 %v2618
        %v2977 = vunpack.c.l.b16 %v2619
        %v2978 = vunpack.c.h.b16 %v2619
        %v2979 = vunpack.c.l.b16 %v2620
        %v2980 = vunpack.c.h.b16 %v2620
        %v2981 = vunpack.c.l.b16 %v2621
        %v2982 = vunpack.c.h.b16 %v2621
        %v2983 = vunpack.c.l.b16 %v2622
        %v2984 = vunpack.c.h.b16 %v2622
        %v2985 = vunpack.c.l.b16 %v2623
        %v2986 = vunpack.c.h.b16 %v2623
        %v2987 = vunpack.c.l.b16 %v2624
        %v2988 = vunpack.c.h.b16 %v2624
        %v2989 = vunpack.c.l.b16 %v2625
        %v2990 = vunpack.c.h.b16 %v2625
        %v2991 = vunpack.c.l.b16 %v2626
        %v2992 = vunpack.c.h.b16 %v2626
        %v2993 = vunpack.c.l.b16 %v2627
        %v2994 = vunpack.c.h.b16 %v2627
        %v2995 = vunpack.c.l.b16 %v2628
        %v2996 = vunpack.c.h.b16 %v2628
        %v2997 = vunpack.c.l.b16 %v2629
        %v2998 = vunpack.c.h.b16 %v2629
        %v2999 = vunpack.c.l.b16 %v2630
        %v3000 = vunpack.c.h.b16 %v2630
        %v3001 = vunpack.c.l.b16 %v2631
        %v3002 = vunpack.c.h.b16 %v2631
        %v3003 = vunpack.c.l.b16 %v2632
        %v3004 = vunpack.c.h.b16 %v2632
        %v3005 = vunpack.c.l.b16 %v2633
        %v3006 = vunpack.c.h.b16 %v2633
        %v3007 = vunpack.c.l.b16 %v2634
        %v3008 = vunpack.c.h.b16 %v2634
        %v3009 = vunpack.c.l.b16 %v2635
        %v3010 = vunpack.c.h.b16 %v2635
        %v3011 = vunpack.c.l.b16 %v2636
        %v3012 = vunpack.c.h.b16 %v2636
        %v3013 = vunpack.c.l.b16 %v2637
        %v3014 = vunpack.c.h.b16 %v2637
        %v3015 = vunpack.c.l.b16 %v2638
        %v3016 = vunpack.c.h.b16 %v2638
        %v3017 = vunpack.c.l.b16 %v2639
        %v3018 = vunpack.c.h.b16 %v2639
        %v3019 = vunpack.c.l.b16 %v2640
        %v3020 = vunpack.c.h.b16 %v2640
        %v3021 = vunpack.c.l.b16 %v2641
        %v3022 = vunpack.c.h.b16 %v2641
        %v3023 = vunpack.c.l.b16 %v2642
        %v3024 = vunpack.c.h.b16 %v2642
        %v3025 = vunpack.c.l.b16 %v2643
        %v3026 = vunpack.c.h.b16 %v2643
        %v3027 = vunpack.c.l.b16 %v2644
        %v3028 = vunpack.c.h.b16 %v2644
        %v3029 = vpack.c.b16 %v2777, %v2773
        %v3030 = vpack.c.b16 %v2778, %v2774
        %v3031 = vpack.c.b16 %v2779, %v2775
        %v3032 = vpack.c.b16 %v2780, %v2776
        %v3033 = vpack.c.b16 %v2785, %v2781
        %v3034 = vpack.c.b16 %v2786, %v2782
        %v3035 = vpack.c.b16 %v2787, %v2783
        %v3036 = vpack.c.b16 %v2788, %v2784
        %v3037 = vpack.c.b16 %v2793, %v2789
        %v3038 = vpack.c.b16 %v2794, %v2790
        %v3039 = vpack.c.b16 %v2795, %v2791
        %v3040 = vpack.c.b16 %v2796, %v2792
        %v3041 = vpack.c.b16 %v2801, %v2797
        %v3042 = vpack.c.b16 %v2802, %v2798
        %v3043 = vpack.c.b16 %v2803, %v2799
        %v3044 = vpack.c.b16 %v2804, %v2800
        %v3045 = vpack.c.b16 %v2809, %v2805
        %v3046 = vpack.c.b16 %v2810, %v2806
        %v3047 = vpack.c.b16 %v2811, %v2807
        %v3048 = vpack.c.b16 %v2812, %v2808
        %v3049 = vpack.c.b16 %v2817, %v2813
        %v3050 = vpack.c.b16 %v2818, %v2814
        %v3051 = vpack.c.b16 %v2819, %v2815
        %v3052 = vpack.c.b16 %v2820, %v2816
        %v3053 = vpack.c.b16 %v2825, %v2821
        %v3054 = vpack.c.b16 %v2826, %v2822
        %v3055 = vpack.c.b16 %v2827, %v2823
        %v3056 = vpack.c.b16 %v2828, %v2824
        %v3057 = vpack.c.b16 %v2833, %v2829
        %v3058 = vpack.c.b16 %v2834, %v2830
        %v3059 = vpack.c.b16 %v2835, %v2831
        %v3060 = vpack.c.b16 %v2836, %v2832
        %v3061 = vpack.c.b16 %v2841, %v2837
        %v3062 = vpack.c.b16 %v2842, %v2838
        %v3063 = vpack.c.b16 %v2843, %v2839
        %v3064 = vpack.c.b16 %v2844, %v2840
        %v3065 = vpack.c.b16 %v2849, %v2845
        %v3066 = vpack.c.b16 %v2850, %v2846
        %v3067 = vpack.c.b16 %v2851, %v2847
        %v3068 = vpack.c.b16 %v2852, %v2848
        %v3069 = vpack.c.b16 %v2857, %v2853
        %v3070 = vpack.c.b16 %v2858, %v2854
        %v3071 = vpack.c.b16 %v2859, %v2855
        %v3072 = vpack.c.b16 %v2860, %v2856
        %v3073 = vpack.c.b16 %v2865, %v2861
        %v3074 = vpack.c.b16 %v2866, %v2862
        %v3075 = vpack.c.b16 %v2867, %v2863
        %v3076 = vpack.c.b16 %v2868, %v2864
        %v3077 = vpack.c.b16 %v2873, %v2869
        %v3078 = vpack.c.b16 %v2874, %v2870
        %v3079 = vpack.c.b16 %v2875, %v2871
        %v3080 = vpack.c.b16 %v2876, %v2872
        %v3081 = vpack.c.b16 %v2881, %v2877
        %v3082 = vpack.c.b16 %v2882, %v2878
        %v3083 = vpack.c.b16 %v2883, %v2879
        %v3084 = vpack.c.b16 %v2884, %v2880
        %v3085 = vpack.c.b16 %v2889, %v2885
        %v3086 = vpack.c.b16 %v2890, %v2886
        %v3087 = vpack.c.b16 %v2891, %v2887
        %v3088 = vpack.c.b16 %v2892, %v2888
        %v3089 = vpack.c.b16 %v2897, %v2893
        %v3090 = vpack.c.b16 %v2898, %v2894
        %v3091 = vpack.c.b16 %v2899, %v2895
        %v3092 = vpack.c.b16 %v2900, %v2896
        %v3093 = vpack.c.b16 %v2905, %v2901
        %v3094 = vpack.c.b16 %v2906, %v2902
        %v3095 = vpack.c.b16 %v2907, %v2903
        %v3096 = vpack.c.b16 %v2908, %v2904
        %v3097 = vpack.c.b16 %v2913, %v2909
        %v3098 = vpack.c.b16 %v2914, %v2910
        %v3099 = vpack.c.b16 %v2915, %v2911
        %v3100 = vpack.c.b16 %v2916, %v2912
        %v3101 = vpack.c.b16 %v2921, %v2917
        %v3102 = vpack.c.b16 %v2922, %v2918
        %v3103 = vpack.c.b16 %v2923, %v2919
        %v3104 = vpack.c.b16 %v2924, %v2920
        %v3105 = vpack.c.b16 %v2929, %v2925
        %v3106 = vpack.c.b16 %v2930, %v2926
        %v3107 = vpack.c.b16 %v2931, %v2927
        %v3108 = vpack.c.b16 %v2932, %v2928
        %v3109 = vpack.c.b16 %v2937, %v2933
        %v3110 = vpack.c.b16 %v2938, %v2934
        %v3111 = vpack.c.b16 %v2939, %v2935
        %v3112 = vpack.c.b16 %v2940, %v2936
        %v3113 = vpack.c.b16 %v2945, %v2941
        %v3114 = vpack.c.b16 %v2946, %v2942
        %v3115 = vpack.c.b16 %v2947, %v2943
        %v3116 = vpack.c.b16 %v2948, %v2944
        %v3117 = vpack.c.b16 %v2953, %v2949
        %v3118 = vpack.c.b16 %v2954, %v2950
        %v3119 = vpack.c.b16 %v2955, %v2951
        %v3120 = vpack.c.b16 %v2956, %v2952
        %v3121 = vpack.c.b16 %v2961, %v2957
        %v3122 = vpack.c.b16 %v2962, %v2958
        %v3123 = vpack.c.b16 %v2963, %v2959
        %v3124 = vpack.c.b16 %v2964, %v2960
        %v3125 = vpack.c.b16 %v2969, %v2965
        %v3126 = vpack.c.b16 %v2970, %v2966
        %v3127 = vpack.c.b16 %v2971, %v2967
        %v3128 = vpack.c.b16 %v2972, %v2968
        %v3129 = vpack.c.b16 %v2977, %v2973
        %v3130 = vpack.c.b16 %v2978, %v2974
        %v3131 = vpack.c.b16 %v2979, %v2975
        %v3132 = vpack.c.b16 %v2980, %v2976
        %v3133 = vpack.c.b16 %v2985, %v2981
        %v3134 = vpack.c.b16 %v2986, %v2982
        %v3135 = vpack.c.b16 %v2987, %v2983
        %v3136 = vpack.c.b16 %v2988, %v2984
        %v3137 = vpack.c.b16 %v2993, %v2989
        %v3138 = vpack.c.b16 %v2994, %v2990
        %v3139 = vpack.c.b16 %v2995, %v2991
        %v3140 = vpack.c.b16 %v2996, %v2992
        %v3141 = vpack.c.b16 %v3001, %v2997
        %v3142 = vpack.c.b16 %v3002, %v2998
        %v3143 = vpack.c.b16 %v3003, %v2999
        %v3144 = vpack.c.b16 %v3004, %v3000
        %v3145 = vpack.c.b16 %v3009, %v3005
        %v3146 = vpack.c.b16 %v3010, %v3006
        %v3147 = vpack.c.b16 %v3011, %v3007
        %v3148 = vpack.c.b16 %v3012, %v3008
        %v3149 = vpack.c.b16 %v3017, %v3013
        %v3150 = vpack.c.b16 %v3018, %v3014
        %v3151 = vpack.c.b16 %v3019, %v3015
        %v3152 = vpack.c.b16 %v3020, %v3016
        %v3153 = vpack.c.b16 %v3025, %v3021
        %v3154 = vpack.c.b16 %v3026, %v3022
        %v3155 = vpack.c.b16 %v3027, %v3023
        %v3156 = vpack.c.b16 %v3028, %v3024
        %3285 = vmatprep.subr.bf16.mxu0 %v3030
        %3286 = vmatpush1.bf16.msra.mxu0 %v3029
        %3287 = vmatprep.subr.bf16.mxu0 %v3034
        %3288 = vmatpush1.bf16.msra.mxu0 %v3033
        %3289 = vmatprep.subr.bf16.mxu0 %v3038
        %3290 = vmatpush1.bf16.msra.mxu0 %v3037
        %3291 = vmatprep.subr.bf16.mxu0 %v3042
        %3292 = vmatpush1.bf16.msra.mxu0 %v3041
        %3293 = vmatprep.subr.bf16.mxu0 %v3046
        %3294 = vmatpush1.bf16.msra.mxu0 %v3045
        %3295 = vmatprep.subr.bf16.mxu0 %v3050
        %3296 = vmatpush1.bf16.msra.mxu0 %v3049
        %3297 = vmatprep.subr.bf16.mxu0 %v3054
        %3298 = vmatpush1.bf16.msra.mxu0 %v3053
        %3299 = vmatprep.subr.bf16.mxu0 %v3058
        %3300 = vmatpush1.bf16.msra.mxu0 %v3057
        %3301 = vmatprep.subr.bf16.mxu0 %v3062
        %3302 = vmatpush1.bf16.msra.mxu0 %v3061
        %3303 = vmatprep.subr.bf16.mxu0 %v3066
        %3304 = vmatpush1.bf16.msra.mxu0 %v3065
        %3305 = vmatprep.subr.bf16.mxu0 %v3070
        %3306 = vmatpush1.bf16.msra.mxu0 %v3069
        %3307 = vmatprep.subr.bf16.mxu0 %v3074
        %3308 = vmatpush1.bf16.msra.mxu0 %v3073
        %3309 = vmatprep.subr.bf16.mxu0 %v3078
        %3310 = vmatpush1.bf16.msra.mxu0 %v3077
        %3311 = vmatprep.subr.bf16.mxu0 %v3082
        %3312 = vmatpush1.bf16.msra.mxu0 %v3081
        %3313 = vmatprep.subr.bf16.mxu0 %v3086
        %3314 = vmatpush1.bf16.msra.mxu0 %v3085
        %3315 = vmatprep.subr.bf16.mxu0 %v3090
        %3316 = vmatpush1.bf16.msra.mxu0 %v3089
        %3317 = vmatprep.mubr.bf16.mxu0 %v2514
        %3318 = vmatmul.mubr.bf16.gmra.mrb[0].mxu0 %v2513
        %v3319 = vpop.f32.mrb[0].mxu0
        %v3320 = vadd.f32 0.0, %v3319
        %v3321 = vpop.f32.mrb[0].mxu0
        %v3322 = vadd.f32 0.0, %v3321
        %v3323 = vpop.f32.mrb[0].mxu0
        %v3324 = vadd.f32 0.0, %v3323
        %v3325 = vpop.f32.mrb[0].mxu0
        %v3326 = vadd.f32 0.0, %v3325
        %3327 = vdwg.mxu0
        %3328 = vmatprep.subr.bf16.mxu0 %v3094
        %3329 = vmatpush1.bf16.msra.mxu0 %v3093
        %3330 = vmatprep.subr.bf16.mxu0 %v3098
        %3331 = vmatpush1.bf16.msra.mxu0 %v3097
        %3332 = vmatprep.subr.bf16.mxu0 %v3102
        %3333 = vmatpush1.bf16.msra.mxu0 %v3101
        %3334 = vmatprep.subr.bf16.mxu0 %v3106
        %3335 = vmatpush1.bf16.msra.mxu0 %v3105
        %3336 = vmatprep.subr.bf16.mxu0 %v3110
        %3337 = vmatpush1.bf16.msra.mxu0 %v3109
        %3338 = vmatprep.subr.bf16.mxu0 %v3114
        %3339 = vmatpush1.bf16.msra.mxu0 %v3113
        %3340 = vmatprep.subr.bf16.mxu0 %v3118
        %3341 = vmatpush1.bf16.msra.mxu0 %v3117
        %3342 = vmatprep.subr.bf16.mxu0 %v3122
        %3343 = vmatpush1.bf16.msra.mxu0 %v3121
        %3344 = vmatprep.subr.bf16.mxu0 %v3126
        %3345 = vmatpush1.bf16.msra.mxu0 %v3125
        %3346 = vmatprep.subr.bf16.mxu0 %v3130
        %3347 = vmatpush1.bf16.msra.mxu0 %v3129
        %3348 = vmatprep.subr.bf16.mxu0 %v3134
        %3349 = vmatpush1.bf16.msra.mxu0 %v3133
        %3350 = vmatprep.subr.bf16.mxu0 %v3138
        %3351 = vmatpush1.bf16.msra.mxu0 %v3137
        %3352 = vmatprep.subr.bf16.mxu0 %v3142
        %3353 = vmatpush1.bf16.msra.mxu0 %v3141
        %3354 = vmatprep.subr.bf16.mxu0 %v3146
        %3355 = vmatpush1.bf16.msra.mxu0 %v3145
        %3356 = vmatprep.subr.bf16.mxu0 %v3150
        %3357 = vmatpush1.bf16.msra.mxu0 %v3149
        %3358 = vmatprep.subr.bf16.mxu0 %v3154
        %3359 = vmatpush1.bf16.msra.mxu0 %v3153
        %3360 = vmatprep.mubr.bf16.mxu0 %v2516
        %3361 = vmatmul.mubr.bf16.gmra.mrb[0].mxu0 %v2515
        %v3362 = vpop.f32.mrb[0].mxu0
        %v3363 = vadd.f32 %v3320, %v3362
        %v3364 = vpop.f32.mrb[0].mxu0
        %v3365 = vadd.f32 %v3322, %v3364
        %v3366 = vpop.f32.mrb[0].mxu0
        %v3367 = vadd.f32 %v3324, %v3366
        %v3368 = vpop.f32.mrb[0].mxu0
        %v3369 = vadd.f32 %v3326, %v3368
        %3370 = vdwg.mxu0
        %3371 = vmatprep.subr.bf16.mxu0 %v3032
        %3372 = vmatpush1.bf16.msra.mxu0 %v3031
        %3373 = vmatprep.subr.bf16.mxu0 %v3036
        %3374 = vmatpush1.bf16.msra.mxu0 %v3035
        %3375 = vmatprep.subr.bf16.mxu0 %v3040
        %3376 = vmatpush1.bf16.msra.mxu0 %v3039
        %3377 = vmatprep.subr.bf16.mxu0 %v3044
        %3378 = vmatpush1.bf16.msra.mxu0 %v3043
        %3379 = vmatprep.subr.bf16.mxu0 %v3048
        %3380 = vmatpush1.bf16.msra.mxu0 %v3047
        %3381 = vmatprep.subr.bf16.mxu0 %v3052
        %3382 = vmatpush1.bf16.msra.mxu0 %v3051
        %3383 = vmatprep.subr.bf16.mxu0 %v3056
        %3384 = vmatpush1.bf16.msra.mxu0 %v3055
        %3385 = vmatprep.subr.bf16.mxu0 %v3060
        %3386 = vmatpush1.bf16.msra.mxu0 %v3059
        %3387 = vmatprep.subr.bf16.mxu0 %v3064
        %3388 = vmatpush1.bf16.msra.mxu0 %v3063
        %3389 = vmatprep.subr.bf16.mxu0 %v3068
        %3390 = vmatpush1.bf16.msra.mxu0 %v3067
        %3391 = vmatprep.subr.bf16.mxu0 %v3072
        %3392 = vmatpush1.bf16.msra.mxu0 %v3071
        %3393 = vmatprep.subr.bf16.mxu0 %v3076
        %3394 = vmatpush1.bf16.msra.mxu0 %v3075
        %3395 = vmatprep.subr.bf16.mxu0 %v3080
        %3396 = vmatpush1.bf16.msra.mxu0 %v3079
        %3397 = vmatprep.subr.bf16.mxu0 %v3084
        %3398 = vmatpush1.bf16.msra.mxu0 %v3083
        %3399 = vmatprep.subr.bf16.mxu0 %v3088
        %3400 = vmatpush1.bf16.msra.mxu0 %v3087
        %3401 = vmatprep.subr.bf16.mxu0 %v3092
        %3402 = vmatpush1.bf16.msra.mxu0 %v3091
        %3403 = vmatprep.mubr.bf16.mxu0 %v2514
        %3404 = vmatmul.mubr.bf16.gmra.mrb[0].mxu0 %v2513
        %v3405 = vpop.f32.mrb[0].mxu0
        %v3406 = vadd.f32 0.0, %v3405
        %v3407 = vpop.f32.mrb[0].mxu0
        %v3408 = vadd.f32 0.0, %v3407
        %v3409 = vpop.f32.mrb[0].mxu0
        %v3410 = vadd.f32 0.0, %v3409
        %v3411 = vpop.f32.mrb[0].mxu0
        %v3412 = vadd.f32 0.0, %v3411
        %3413 = vdwg.mxu0
        %3414 = vmatprep.subr.bf16.mxu0 %v3096
        %3415 = vmatpush1.bf16.msra.mxu0 %v3095
        %3416 = vmatprep.subr.bf16.mxu0 %v3100
        %3417 = vmatpush1.bf16.msra.mxu0 %v3099
        %3418 = vmatprep.subr.bf16.mxu0 %v3104
        %3419 = vmatpush1.bf16.msra.mxu0 %v3103
        %3420 = vmatprep.subr.bf16.mxu0 %v3108
        %3421 = vmatpush1.bf16.msra.mxu0 %v3107
        %3422 = vmatprep.subr.bf16.mxu0 %v3112
        %3423 = vmatpush1.bf16.msra.mxu0 %v3111
        %3424 = vmatprep.subr.bf16.mxu0 %v3116
        %3425 = vmatpush1.bf16.msra.mxu0 %v3115
        %3426 = vmatprep.subr.bf16.mxu0 %v3120
        %3427 = vmatpush1.bf16.msra.mxu0 %v3119
        %3428 = vmatprep.subr.bf16.mxu0 %v3124
        %3429 = vmatpush1.bf16.msra.mxu0 %v3123
        %3430 = vmatprep.subr.bf16.mxu0 %v3128
        %3431 = vmatpush1.bf16.msra.mxu0 %v3127
        %3432 = vmatprep.subr.bf16.mxu0 %v3132
        %3433 = vmatpush1.bf16.msra.mxu0 %v3131
        %3434 = vmatprep.subr.bf16.mxu0 %v3136
        %3435 = vmatpush1.bf16.msra.mxu0 %v3135
        %3436 = vmatprep.subr.bf16.mxu0 %v3140
        %3437 = vmatpush1.bf16.msra.mxu0 %v3139
        %3438 = vmatprep.subr.bf16.mxu0 %v3144
        %3439 = vmatpush1.bf16.msra.mxu0 %v3143
        %3440 = vmatprep.subr.bf16.mxu0 %v3148
        %3441 = vmatpush1.bf16.msra.mxu0 %v3147
        %3442 = vmatprep.subr.bf16.mxu0 %v3152
        %3443 = vmatpush1.bf16.msra.mxu0 %v3151
        %3444 = vmatprep.subr.bf16.mxu0 %v3156
        %3445 = vmatpush1.bf16.msra.mxu0 %v3155
        %3446 = vmatprep.mubr.bf16.mxu0 %v2516
        %3447 = vmatmul.mubr.bf16.gmra.mrb[0].mxu0 %v2515
        %v3448 = vpop.f32.mrb[0].mxu0
        %v3449 = vadd.f32 %v3406, %v3448
        %v3450 = vpop.f32.mrb[0].mxu0
        %v3451 = vadd.f32 %v3408, %v3450
        %v3452 = vpop.f32.mrb[0].mxu0
        %v3453 = vadd.f32 %v3410, %v3452
        %v3454 = vpop.f32.mrb[0].mxu0
        %v3455 = vadd.f32 %v3412, %v3454
        %3456 = vdwg.mxu0
        %v3457 = vpack.c.bf16 %v1479, %v1475
        %v3458 = vpack.c.bf16 %v1481, %v1477
        %v3459 = vpack.c.bf16 %v1565, %v1561
        %v3460 = vpack.c.bf16 %v1567, %v1563
        %v3465 = vunpack.c.l.b16 %v3457
        %v3466 = vunpack.c.l.b16 %v3458
        %v3467 = vunpack.c.l.b16 %v3459
        %v3468 = vunpack.c.l.b16 %v3460
        %v3469 = vunpack.c.h.b16 %v3457
        %v3470 = vunpack.c.h.b16 %v3458
        %v3471 = vunpack.c.h.b16 %v3459
        %v3472 = vunpack.c.h.b16 %v3460
        %v3473 = vpack.c.b16 %v3466, %v3465
        %v3474 = vpack.c.b16 %v3468, %v3467
        %v3475 = vpack.c.b16 %v3470, %v3469
        %v3476 = vpack.c.b16 %v3472, %v3471
        %v3477 = vpack.c.bf16 %v2423, %v2419
        %v3478 = vpack.c.bf16 %v2425, %v2421
        %v3479 = vpack.c.bf16 %v2509, %v2505
        %v3480 = vpack.c.bf16 %v2511, %v2507
        %v3485 = vunpack.c.l.b16 %v3477
        %v3486 = vunpack.c.l.b16 %v3478
        %v3487 = vunpack.c.l.b16 %v3479
        %v3488 = vunpack.c.l.b16 %v3480
        %v3489 = vunpack.c.h.b16 %v3477
        %v3490 = vunpack.c.h.b16 %v3478
        %v3491 = vunpack.c.h.b16 %v3479
        %v3492 = vunpack.c.h.b16 %v3480
        %v3493 = vpack.c.b16 %v3486, %v3485
        %v3494 = vpack.c.b16 %v3488, %v3487
        %v3495 = vpack.c.b16 %v3490, %v3489
        %v3496 = vpack.c.b16 %v3492, %v3491
        %v3497 = vpack.c.bf16 %v3367, %v3363
        %v3498 = vpack.c.bf16 %v3369, %v3365
        %v3499 = vpack.c.bf16 %v3453, %v3449
        %v3500 = vpack.c.bf16 %v3455, %v3451
        %v3505 = vunpack.c.l.b16 %v3497
        %v3506 = vunpack.c.l.b16 %v3498
        %v3507 = vunpack.c.l.b16 %v3499
        %v3508 = vunpack.c.l.b16 %v3500
        %v3509 = vunpack.c.h.b16 %v3497
        %v3510 = vunpack.c.h.b16 %v3498
        %v3511 = vunpack.c.h.b16 %v3499
        %v3512 = vunpack.c.h.b16 %v3500
        %v3513 = vpack.c.b16 %v3506, %v3505
        %v3514 = vpack.c.b16 %v3508, %v3507
        %v3515 = vpack.c.b16 %v3510, %v3509
        %v3516 = vpack.c.b16 %v3512, %v3511
        %v3517 = vld [vmem:[%s519] sm:$0xff]
        %v3518 = vld [vmem:[%s519 + $0x8] sm:$0xff]
        %v3519 = vld [vmem:[#allocation14] sm:$0xff]
        %v3520 = vld [vmem:[#allocation14 + $0x8] sm:$0xff]
        %v3521 = vld [vmem:[#allocation14 + $0x10] sm:$0xff]
        %v3522 = vld [vmem:[#allocation14 + $0x18] sm:$0xff]
        %v3523 = vld [vmem:[#allocation14 + $0x20] sm:$0xff]
        %v3524 = vld [vmem:[#allocation14 + $0x28] sm:$0xff]
        %v3525 = vld [vmem:[#allocation14 + $0x30] sm:$0xff]
        %v3526 = vld [vmem:[#allocation14 + $0x38] sm:$0xff]
        %v3527 = vld [vmem:[#allocation14 + $0x40] sm:$0xff]
        %v3528 = vld [vmem:[#allocation14 + $0x48] sm:$0xff]
        %v3529 = vld [vmem:[#allocation14 + $0x50] sm:$0xff]
        %v3530 = vld [vmem:[#allocation14 + $0x58] sm:$0xff]
        %v3531 = vld [vmem:[#allocation14 + $0x60] sm:$0xff]
        %v3532 = vld [vmem:[#allocation14 + $0x68] sm:$0xff]
        %v3533 = vld [vmem:[#allocation14 + $0x70] sm:$0xff]
        %v3534 = vld [vmem:[#allocation14 + $0x78] sm:$0xff]
        %v3535 = vld [vmem:[#allocation14 + $0x80] sm:$0xff]
        %v3536 = vld [vmem:[#allocation14 + $0x88] sm:$0xff]
        %v3537 = vld [vmem:[#allocation14 + $0x90] sm:$0xff]
        %v3538 = vld [vmem:[#allocation14 + $0x98] sm:$0xff]
        %v3539 = vld [vmem:[#allocation14 + $0xa0] sm:$0xff]
        %v3540 = vld [vmem:[#allocation14 + $0xa8] sm:$0xff]
        %v3541 = vld [vmem:[#allocation14 + $0xb0] sm:$0xff]
        %v3542 = vld [vmem:[#allocation14 + $0xb8] sm:$0xff]
        %v3543 = vld [vmem:[#allocation14 + $0xc0] sm:$0xff]
        %v3544 = vld [vmem:[#allocation14 + $0xc8] sm:$0xff]
        %v3545 = vld [vmem:[#allocation14 + $0xd0] sm:$0xff]
        %v3546 = vld [vmem:[#allocation14 + $0xd8] sm:$0xff]
        %v3547 = vld [vmem:[#allocation14 + $0xe0] sm:$0xff]
        %v3548 = vld [vmem:[#allocation14 + $0xe8] sm:$0xff]
        %v3549 = vld [vmem:[#allocation14 + $0xf0] sm:$0xff]
        %v3550 = vld [vmem:[#allocation14 + $0xf8] sm:$0xff]
        %v3551 = vld [vmem:[#allocation14 + $0x100] sm:$0xff]
        %v3552 = vld [vmem:[#allocation14 + $0x108] sm:$0xff]
        %v3553 = vld [vmem:[#allocation14 + $0x110] sm:$0xff]
        %v3554 = vld [vmem:[#allocation14 + $0x118] sm:$0xff]
        %v3555 = vld [vmem:[#allocation14 + $0x120] sm:$0xff]
        %v3556 = vld [vmem:[#allocation14 + $0x128] sm:$0xff]
        %v3557 = vld [vmem:[#allocation14 + $0x130] sm:$0xff]
        %v3558 = vld [vmem:[#allocation14 + $0x138] sm:$0xff]
        %v3559 = vld [vmem:[#allocation14 + $0x140] sm:$0xff]
        %v3560 = vld [vmem:[#allocation14 + $0x148] sm:$0xff]
        %v3561 = vld [vmem:[#allocation14 + $0x150] sm:$0xff]
        %v3562 = vld [vmem:[#allocation14 + $0x158] sm:$0xff]
        %v3563 = vld [vmem:[#allocation14 + $0x160] sm:$0xff]
        %v3564 = vld [vmem:[#allocation14 + $0x168] sm:$0xff]
        %v3565 = vld [vmem:[#allocation14 + $0x170] sm:$0xff]
        %v3566 = vld [vmem:[#allocation14 + $0x178] sm:$0xff]
        %v3567 = vld [vmem:[#allocation14 + $0x180] sm:$0xff]
        %v3568 = vld [vmem:[#allocation14 + $0x188] sm:$0xff]
        %v3569 = vld [vmem:[#allocation14 + $0x190] sm:$0xff]
        %v3570 = vld [vmem:[#allocation14 + $0x198] sm:$0xff]
        %v3571 = vld [vmem:[#allocation14 + $0x1a0] sm:$0xff]
        %v3572 = vld [vmem:[#allocation14 + $0x1a8] sm:$0xff]
        %v3573 = vld [vmem:[#allocation14 + $0x1b0] sm:$0xff]
        %v3574 = vld [vmem:[#allocation14 + $0x1b8] sm:$0xff]
        %v3575 = vld [vmem:[#allocation14 + $0x1c0] sm:$0xff]
        %v3576 = vld [vmem:[#allocation14 + $0x1c8] sm:$0xff]
        %v3577 = vld [vmem:[#allocation14 + $0x1d0] sm:$0xff]
        %v3578 = vld [vmem:[#allocation14 + $0x1d8] sm:$0xff]
        %v3579 = vld [vmem:[#allocation14 + $0x1e0] sm:$0xff]
        %v3580 = vld [vmem:[#allocation14 + $0x1e8] sm:$0xff]
        %v3581 = vld [vmem:[#allocation14 + $0x1f0] sm:$0xff]
        %v3582 = vld [vmem:[#allocation14 + $0x1f8] sm:$0xff]
        %v3583 = vld [vmem:[#allocation14 + $0x200] sm:$0xff]
        %v3584 = vld [vmem:[#allocation14 + $0x208] sm:$0xff]
        %v3585 = vld [vmem:[#allocation14 + $0x210] sm:$0xff]
        %v3586 = vld [vmem:[#allocation14 + $0x218] sm:$0xff]
        %v3587 = vld [vmem:[#allocation14 + $0x220] sm:$0xff]
        %v3588 = vld [vmem:[#allocation14 + $0x228] sm:$0xff]
        %v3589 = vld [vmem:[#allocation14 + $0x230] sm:$0xff]
        %v3590 = vld [vmem:[#allocation14 + $0x238] sm:$0xff]
        %v3591 = vld [vmem:[#allocation14 + $0x240] sm:$0xff]
        %v3592 = vld [vmem:[#allocation14 + $0x248] sm:$0xff]
        %v3593 = vld [vmem:[#allocation14 + $0x250] sm:$0xff]
        %v3594 = vld [vmem:[#allocation14 + $0x258] sm:$0xff]
        %v3595 = vld [vmem:[#allocation14 + $0x260] sm:$0xff]
        %v3596 = vld [vmem:[#allocation14 + $0x268] sm:$0xff]
        %v3597 = vld [vmem:[#allocation14 + $0x270] sm:$0xff]
        %v3598 = vld [vmem:[#allocation14 + $0x278] sm:$0xff]
        %v3599 = vld [vmem:[#allocation14 + $0x280] sm:$0xff]
        %v3600 = vld [vmem:[#allocation14 + $0x288] sm:$0xff]
        %v3601 = vld [vmem:[#allocation14 + $0x290] sm:$0xff]
        %v3602 = vld [vmem:[#allocation14 + $0x298] sm:$0xff]
        %v3603 = vld [vmem:[#allocation14 + $0x2a0] sm:$0xff]
        %v3604 = vld [vmem:[#allocation14 + $0x2a8] sm:$0xff]
        %v3605 = vld [vmem:[#allocation14 + $0x2b0] sm:$0xff]
        %v3606 = vld [vmem:[#allocation14 + $0x2b8] sm:$0xff]
        %v3607 = vld [vmem:[#allocation14 + $0x2c0] sm:$0xff]
        %v3608 = vld [vmem:[#allocation14 + $0x2c8] sm:$0xff]
        %v3609 = vld [vmem:[#allocation14 + $0x2d0] sm:$0xff]
        %v3610 = vld [vmem:[#allocation14 + $0x2d8] sm:$0xff]
        %v3611 = vld [vmem:[#allocation14 + $0x2e0] sm:$0xff]
        %v3612 = vld [vmem:[#allocation14 + $0x2e8] sm:$0xff]
        %v3613 = vld [vmem:[#allocation14 + $0x2f0] sm:$0xff]
        %v3614 = vld [vmem:[#allocation14 + $0x2f8] sm:$0xff]
        %v3615 = vld [vmem:[#allocation14 + $0x300] sm:$0xff]
        %v3616 = vld [vmem:[#allocation14 + $0x308] sm:$0xff]
        %v3617 = vld [vmem:[#allocation14 + $0x310] sm:$0xff]
        %v3618 = vld [vmem:[#allocation14 + $0x318] sm:$0xff]
        %v3619 = vld [vmem:[#allocation14 + $0x320] sm:$0xff]
        %v3620 = vld [vmem:[#allocation14 + $0x328] sm:$0xff]
        %v3621 = vld [vmem:[#allocation14 + $0x330] sm:$0xff]
        %v3622 = vld [vmem:[#allocation14 + $0x338] sm:$0xff]
        %v3623 = vld [vmem:[#allocation14 + $0x340] sm:$0xff]
        %v3624 = vld [vmem:[#allocation14 + $0x348] sm:$0xff]
        %v3625 = vld [vmem:[#allocation14 + $0x350] sm:$0xff]
        %v3626 = vld [vmem:[#allocation14 + $0x358] sm:$0xff]
        %v3627 = vld [vmem:[#allocation14 + $0x360] sm:$0xff]
        %v3628 = vld [vmem:[#allocation14 + $0x368] sm:$0xff]
        %v3629 = vld [vmem:[#allocation14 + $0x370] sm:$0xff]
        %v3630 = vld [vmem:[#allocation14 + $0x378] sm:$0xff]
        %v3631 = vld [vmem:[#allocation14 + $0x380] sm:$0xff]
        %v3632 = vld [vmem:[#allocation14 + $0x388] sm:$0xff]
        %v3633 = vld [vmem:[#allocation14 + $0x390] sm:$0xff]
        %v3634 = vld [vmem:[#allocation14 + $0x398] sm:$0xff]
        %v3635 = vld [vmem:[#allocation14 + $0x3a0] sm:$0xff]
        %v3636 = vld [vmem:[#allocation14 + $0x3a8] sm:$0xff]
        %v3637 = vld [vmem:[#allocation14 + $0x3b0] sm:$0xff]
        %v3638 = vld [vmem:[#allocation14 + $0x3b8] sm:$0xff]
        %v3639 = vld [vmem:[#allocation14 + $0x3c0] sm:$0xff]
        %v3640 = vld [vmem:[#allocation14 + $0x3c8] sm:$0xff]
        %v3641 = vld [vmem:[#allocation14 + $0x3d0] sm:$0xff]
        %v3642 = vld [vmem:[#allocation14 + $0x3d8] sm:$0xff]
        %v3643 = vld [vmem:[#allocation14 + $0x3e0] sm:$0xff]
        %v3644 = vld [vmem:[#allocation14 + $0x3e8] sm:$0xff]
        %v3645 = vld [vmem:[#allocation14 + $0x3f0] sm:$0xff]
        %v3646 = vld [vmem:[#allocation14 + $0x3f8] sm:$0xff]
        %vm3647 = vcmask 523264
        %v3649 = vsel %vm3647, %v3473, 0
        %v3652 = vsel %vm3647, %v3493, 0
        %3654 = vmatprep.subr.bf16.mxu0 0
        %3655 = vmatpush1.bf16.xpose.msra.mxu0 %v3652
        %3656 = vmatprep.subr.bf16.mxu0 0
        %3657 = vmatpush1.bf16.xpose.msra.mxu0 0
        %3658 = vmatprep.subr.bf16.mxu0 0
        %3659 = vmatpush1.bf16.xpose.msra.mxu0 0
        %3660 = vmatprep.subr.bf16.mxu0 0
        %3661 = vmatpush1.bf16.xpose.msra.mxu0 0
        %3662 = vmatprep.subr.bf16.mxu0 0
        %3663 = vmatpush1.bf16.xpose.msra.mxu0 0
        %3664 = vmatprep.subr.bf16.mxu0 0
        %3665 = vmatpush1.bf16.xpose.msra.mxu0 0
        %3666 = vmatprep.subr.bf16.mxu0 0
        %3667 = vmatpush1.bf16.xpose.msra.mxu0 0
        %3668 = vmatprep.subr.bf16.mxu0 0
        %3669 = vmatpush1.bf16.xpose.msra.mxu0 0
        %3670 = vmatprep.subr.bf16.mxu0 0
        %3671 = vmatpush1.bf16.xpose.msra.mxu0 0
        %3672 = vmatprep.subr.bf16.mxu0 0
        %3673 = vmatpush1.bf16.xpose.msra.mxu0 0
        %3674 = vmatprep.subr.bf16.mxu0 0
        %3675 = vmatpush1.bf16.xpose.msra.mxu0 0
        %3676 = vmatprep.subr.bf16.mxu0 0
        %3677 = vmatpush1.bf16.xpose.msra.mxu0 0
        %3678 = vmatprep.subr.bf16.mxu0 0
        %3679 = vmatpush1.bf16.xpose.msra.mxu0 0
        %3680 = vmatprep.subr.bf16.mxu0 0
        %3681 = vmatpush1.bf16.xpose.msra.mxu0 0
        %3682 = vmatprep.subr.bf16.mxu0 0
        %3683 = vmatpush1.bf16.xpose.msra.mxu0 0
        %3684 = vmatprep.subr.bf16.mxu0 0
        %3685 = vmatpush1.bf16.xpose.msra.mxu0 0
        %3686 = vmatprep.mubr.bf16.mxu0 0
        %3687 = vmatmul.mubr.bf16.gmra.mrb[0].mxu0 %v3649
        %v3688 = vpop.f32.mrb[0].mxu0
        %v3689 = vadd.f32 0.0, %v3688
        %v3690 = vpop.f32.mrb[0].mxu0
        %v3691 = vpop.f32.mrb[0].mxu0
        %v3692 = vpop.f32.mrb[0].mxu0
        %3693 = vdwg.mxu0
        %v3695 = vsel %vm3647, %v3475, 0
        %v3698 = vsel %vm3647, %v3495, 0
        %3700 = vmatprep.subr.bf16.mxu0 0
        %3701 = vmatpush1.bf16.xpose.msra.mxu0 %v3698
        %3702 = vmatprep.subr.bf16.mxu0 0
        %3703 = vmatpush1.bf16.xpose.msra.mxu0 0
        %3704 = vmatprep.subr.bf16.mxu0 0
        %3705 = vmatpush1.bf16.xpose.msra.mxu0 0
        %3706 = vmatprep.subr.bf16.mxu0 0
        %3707 = vmatpush1.bf16.xpose.msra.mxu0 0
        %3708 = vmatprep.subr.bf16.mxu0 0
        %3709 = vmatpush1.bf16.xpose.msra.mxu0 0
        %3710 = vmatprep.subr.bf16.mxu0 0
        %3711 = vmatpush1.bf16.xpose.msra.mxu0 0
        %3712 = vmatprep.subr.bf16.mxu0 0
        %3713 = vmatpush1.bf16.xpose.msra.mxu0 0
        %3714 = vmatprep.subr.bf16.mxu0 0
        %3715 = vmatpush1.bf16.xpose.msra.mxu0 0
        %3716 = vmatprep.subr.bf16.mxu0 0
        %3717 = vmatpush1.bf16.xpose.msra.mxu0 0
        %3718 = vmatprep.subr.bf16.mxu0 0
        %3719 = vmatpush1.bf16.xpose.msra.mxu0 0
        %3720 = vmatprep.subr.bf16.mxu0 0
        %3721 = vmatpush1.bf16.xpose.msra.mxu0 0
        %3722 = vmatprep.subr.bf16.mxu0 0
        %3723 = vmatpush1.bf16.xpose.msra.mxu0 0
        %3724 = vmatprep.subr.bf16.mxu0 0
        %3725 = vmatpush1.bf16.xpose.msra.mxu0 0
        %3726 = vmatprep.subr.bf16.mxu0 0
        %3727 = vmatpush1.bf16.xpose.msra.mxu0 0
        %3728 = vmatprep.subr.bf16.mxu0 0
        %3729 = vmatpush1.bf16.xpose.msra.mxu0 0
        %3730 = vmatprep.subr.bf16.mxu0 0
        %3731 = vmatpush1.bf16.xpose.msra.mxu0 0
        %3732 = vmatprep.mubr.bf16.mxu0 0
        %3733 = vmatmul.mubr.bf16.gmra.mrb[0].mxu0 %v3695
        %v3734 = vpop.f32.mrb[0].mxu0
        %v3735 = vadd.f32 0.0, %v3734
        %v3736 = vpop.f32.mrb[0].mxu0
        %v3737 = vpop.f32.mrb[0].mxu0
        %v3738 = vpop.f32.mrb[0].mxu0
        %3739 = vdwg.mxu0
        %v3740 = vmul.f32 %v3689, 0.125
        %v3741 = vmul.f32 %v3735, 0.125
        %v3742 = vadd.f32 %v3740, %v3517
        %v3743 = vadd.f32 %v3741, %v3518
        %vm3744 = vcmask 64512
        %v3745 = vsel %vm3744, %v3742, -inf
        %3746 = vmax.xlane.f32.xlu0 %v3745
        %v3747 = vpop.xlane.xlu0 %3746
        %v3748 = vsel %vm3744, %v3743, -inf
        %3749 = vmax.xlane.f32.xlu0 %v3748
        %v3750 = vpop.xlane.xlu0 %3749
        %v3751 = vsub.f32 %v3742, %v3747
        %v3752 = vsub.f32 %v3743, %v3750
        %v3753 = vmul.f32 %v3751, 1.442695
        %v3754 = vpow.pop %v3753
        %v3755 = vmul.f32 %v3752, 1.442695
        %v3756 = vpow.pop %v3755
        %v3757 = vsel %vm3744, %v3754, 0.0
        %3758 = vadd.xlane.f32.xlu0 %v3757
        %v3759 = vpop.xlane.xlu0 %3758
        %v3760 = vsel %vm3744, %v3756, 0.0
        %3761 = vadd.xlane.f32.xlu0 %v3760
        %v3762 = vpop.xlane.xlu0 %3761
        %v3763 = vrcp.pop %v3759
        %v3764 = vrcp.pop %v3762
        %v3765 = vmul.f32 %v3754, %v3763
        %v3766 = vmul.f32 %v3756, %v3764
        %3767 = vst.msk [vmem:[%s593] sm:$0xff] %vm3744, %v3765
        %3768 = vst.msk [vmem:[%s593 + $0x40] sm:$0xff] %vm3744, %v3766
        %v3769 = vpack.c.bf16 %v3765, %v3765
        %v3770 = vpack.c.bf16 %v3766, %v3766
        %v3772 = vsel %vm3744, %v3769, 0
        %vm3774 = vcmask 1043456
        %v3776 = vsel %vm3774, %v3513, 0
        %3778 = vmatprep.subr.bf16.mxu0 0
        %3779 = vmatpush1.bf16.msra.mxu0 %v3776
        %3780 = vmatprep.subr.bf16.mxu0 0
        %3781 = vmatpush1.bf16.msra.mxu0 0
        %3782 = vmatprep.subr.bf16.mxu0 0
        %3783 = vmatpush1.bf16.msra.mxu0 0
        %3784 = vmatprep.subr.bf16.mxu0 0
        %3785 = vmatpush1.bf16.msra.mxu0 0
        %3786 = vmatprep.subr.bf16.mxu0 0
        %3787 = vmatpush1.bf16.msra.mxu0 0
        %3788 = vmatprep.subr.bf16.mxu0 0
        %3789 = vmatpush1.bf16.msra.mxu0 0
        %3790 = vmatprep.subr.bf16.mxu0 0
        %3791 = vmatpush1.bf16.msra.mxu0 0
        %3792 = vmatprep.subr.bf16.mxu0 0
        %3793 = vmatpush1.bf16.msra.mxu0 0
        %3794 = vmatprep.subr.bf16.mxu0 0
        %3795 = vmatpush1.bf16.msra.mxu0 0
        %3796 = vmatprep.subr.bf16.mxu0 0
        %3797 = vmatpush1.bf16.msra.mxu0 0
        %3798 = vmatprep.subr.bf16.mxu0 0
        %3799 = vmatpush1.bf16.msra.mxu0 0
        %3800 = vmatprep.subr.bf16.mxu0 0
        %3801 = vmatpush1.bf16.msra.mxu0 0
        %3802 = vmatprep.subr.bf16.mxu0 0
        %3803 = vmatpush1.bf16.msra.mxu0 0
        %3804 = vmatprep.subr.bf16.mxu0 0
        %3805 = vmatpush1.bf16.msra.mxu0 0
        %3806 = vmatprep.subr.bf16.mxu0 0
        %3807 = vmatpush1.bf16.msra.mxu0 0
        %3808 = vmatprep.subr.bf16.mxu0 0
        %3809 = vmatpush1.bf16.msra.mxu0 0
        %3810 = vmatprep.mubr.bf16.mxu0 0
        %3811 = vmatmul.mubr.bf16.gmra.mrb[0].mxu0 %v3772
        %v3812 = vpop.f32.mrb[0].mxu0
        %v3813 = vadd.f32 0.0, %v3812
        %v3814 = vpop.f32.mrb[0].mxu0
        %v3815 = vpop.f32.mrb[0].mxu0
        %v3816 = vpop.f32.mrb[0].mxu0
        %3817 = vdwg.mxu0
        %v3819 = vsel %vm3744, %v3770, 0
        %v3822 = vsel %vm3774, %v3515, 0
        %3824 = vmatprep.subr.bf16.mxu0 0
        %3825 = vmatpush1.bf16.msra.mxu0 %v3822
        %3826 = vmatprep.subr.bf16.mxu0 0
        %3827 = vmatpush1.bf16.msra.mxu0 0
        %3828 = vmatprep.subr.bf16.mxu0 0
        %3829 = vmatpush1.bf16.msra.mxu0 0
        %3830 = vmatprep.subr.bf16.mxu0 0
        %3831 = vmatpush1.bf16.msra.mxu0 0
        %3832 = vmatprep.subr.bf16.mxu0 0
        %3833 = vmatpush1.bf16.msra.mxu0 0
        %3834 = vmatprep.subr.bf16.mxu0 0
        %3835 = vmatpush1.bf16.msra.mxu0 0
        %3836 = vmatprep.subr.bf16.mxu0 0
        %3837 = vmatpush1.bf16.msra.mxu0 0
        %3838 = vmatprep.subr.bf16.mxu0 0
        %3839 = vmatpush1.bf16.msra.mxu0 0
        %3840 = vmatprep.subr.bf16.mxu0 0
        %3841 = vmatpush1.bf16.msra.mxu0 0
        %3842 = vmatprep.subr.bf16.mxu0 0
        %3843 = vmatpush1.bf16.msra.mxu0 0
        %3844 = vmatprep.subr.bf16.mxu0 0
        %3845 = vmatpush1.bf16.msra.mxu0 0
        %3846 = vmatprep.subr.bf16.mxu0 0
        %3847 = vmatpush1.bf16.msra.mxu0 0
        %3848 = vmatprep.subr.bf16.mxu0 0
        %3849 = vmatpush1.bf16.msra.mxu0 0
        %3850 = vmatprep.subr.bf16.mxu0 0
        %3851 = vmatpush1.bf16.msra.mxu0 0
        %3852 = vmatprep.subr.bf16.mxu0 0
        %3853 = vmatpush1.bf16.msra.mxu0 0
        %3854 = vmatprep.subr.bf16.mxu0 0
        %3855 = vmatpush1.bf16.msra.mxu0 0
        %3856 = vmatprep.mubr.bf16.mxu0 0
        %3857 = vmatmul.mubr.bf16.gmra.mrb[0].mxu0 %v3819
        %v3858 = vpop.f32.mrb[0].mxu0
        %v3859 = vadd.f32 0.0, %v3858
        %v3860 = vpop.f32.mrb[0].mxu0
        %v3861 = vpop.f32.mrb[0].mxu0
        %v3862 = vpop.f32.mrb[0].mxu0
        %3863 = vdwg.mxu0
        %v3864 = vpack.c.bf16 %v3859, %v3813
        %v3881 = vunpack.c.l.b16 %v3519
        %v3882 = vunpack.c.h.b16 %v3519
        %v3883 = vunpack.c.l.b16 %v3520
        %v3884 = vunpack.c.h.b16 %v3520
        %v3885 = vunpack.c.l.b16 %v3521
        %v3886 = vunpack.c.h.b16 %v3521
        %v3887 = vunpack.c.l.b16 %v3522
        %v3888 = vunpack.c.h.b16 %v3522
        %v3889 = vunpack.c.l.b16 %v3523
        %v3890 = vunpack.c.h.b16 %v3523
        %v3891 = vunpack.c.l.b16 %v3524
        %v3892 = vunpack.c.h.b16 %v3524
        %v3893 = vunpack.c.l.b16 %v3525
        %v3894 = vunpack.c.h.b16 %v3525
        %v3895 = vunpack.c.l.b16 %v3526
        %v3896 = vunpack.c.h.b16 %v3526
        %v3897 = vunpack.c.l.b16 %v3527
        %v3898 = vunpack.c.h.b16 %v3527
        %v3899 = vunpack.c.l.b16 %v3528
        %v3900 = vunpack.c.h.b16 %v3528
        %v3901 = vunpack.c.l.b16 %v3529
        %v3902 = vunpack.c.h.b16 %v3529
        %v3903 = vunpack.c.l.b16 %v3530
        %v3904 = vunpack.c.h.b16 %v3530
        %v3905 = vunpack.c.l.b16 %v3531
        %v3906 = vunpack.c.h.b16 %v3531
        %v3907 = vunpack.c.l.b16 %v3532
        %v3908 = vunpack.c.h.b16 %v3532
        %v3909 = vunpack.c.l.b16 %v3533
        %v3910 = vunpack.c.h.b16 %v3533
        %v3911 = vunpack.c.l.b16 %v3534
        %v3912 = vunpack.c.h.b16 %v3534
        %v3913 = vpack.c.b16 %v3885, %v3881
        %v3914 = vpack.c.b16 %v3886, %v3882
        %v3915 = vpack.c.b16 %v3887, %v3883
        %v3916 = vpack.c.b16 %v3888, %v3884
        %v3917 = vpack.c.b16 %v3893, %v3889
        %v3918 = vpack.c.b16 %v3894, %v3890
        %v3919 = vpack.c.b16 %v3895, %v3891
        %v3920 = vpack.c.b16 %v3896, %v3892
        %v3921 = vpack.c.b16 %v3901, %v3897
        %v3922 = vpack.c.b16 %v3902, %v3898
        %v3923 = vpack.c.b16 %v3903, %v3899
        %v3924 = vpack.c.b16 %v3904, %v3900
        %v3925 = vpack.c.b16 %v3909, %v3905
        %v3926 = vpack.c.b16 %v3910, %v3906
        %v3927 = vpack.c.b16 %v3911, %v3907
        %v3928 = vpack.c.b16 %v3912, %v3908
        %v3946 = vsel %vm3647, %v3864, 0
        %3948 = vmatprep.subr.bf16.mxu0 %v3914
        %3949 = vmatpush1.bf16.msra.mxu0 %v3913
        %3950 = vmatprep.subr.bf16.mxu0 %v3918
        %3951 = vmatpush1.bf16.msra.mxu0 %v3917
        %3952 = vmatprep.subr.bf16.mxu0 %v3922
        %3953 = vmatpush1.bf16.msra.mxu0 %v3921
        %3954 = vmatprep.subr.bf16.mxu0 %v3926
        %3955 = vmatpush1.bf16.msra.mxu0 %v3925
        %3956 = vmatprep.subr.bf16.mxu0 0
        %3957 = vmatpush1.bf16.msra.mxu0 0
        %3958 = vmatprep.subr.bf16.mxu0 0
        %3959 = vmatpush1.bf16.msra.mxu0 0
        %3960 = vmatprep.subr.bf16.mxu0 0
        %3961 = vmatpush1.bf16.msra.mxu0 0
        %3962 = vmatprep.subr.bf16.mxu0 0
        %3963 = vmatpush1.bf16.msra.mxu0 0
        %3964 = vmatprep.subr.bf16.mxu0 0
        %3965 = vmatpush1.bf16.msra.mxu0 0
        %3966 = vmatprep.subr.bf16.mxu0 0
        %3967 = vmatpush1.bf16.msra.mxu0 0
        %3968 = vmatprep.subr.bf16.mxu0 0
        %3969 = vmatpush1.bf16.msra.mxu0 0
        %3970 = vmatprep.subr.bf16.mxu0 0
        %3971 = vmatpush1.bf16.msra.mxu0 0
        %3972 = vmatprep.subr.bf16.mxu0 0
        %3973 = vmatpush1.bf16.msra.mxu0 0
        %3974 = vmatprep.subr.bf16.mxu0 0
        %3975 = vmatpush1.bf16.msra.mxu0 0
        %3976 = vmatprep.subr.bf16.mxu0 0
        %3977 = vmatpush1.bf16.msra.mxu0 0
        %3978 = vmatprep.subr.bf16.mxu0 0
        %3979 = vmatpush1.bf16.msra.mxu0 0
        %3980 = vmatprep.mubr.bf16.mxu0 0
        %3981 = vmatmul.mubr.bf16.gmra.mrb[0].mxu0 %v3946
        %v3982 = vpop.f32.mrb[0].mxu0
        %v3983 = vadd.f32 0.0, %v3982
        %v3984 = vpop.f32.mrb[0].mxu0
        %v3985 = vadd.f32 0.0, %v3984
        %v3986 = vpop.f32.mrb[0].mxu0
        %v3987 = vadd.f32 0.0, %v3986
        %v3988 = vpop.f32.mrb[0].mxu0
        %v3989 = vadd.f32 0.0, %v3988
        %3990 = vdwg.mxu0
        %3991 = vmatprep.subr.bf16.mxu0 %v3916
        %3992 = vmatpush1.bf16.msra.mxu0 %v3915
        %3993 = vmatprep.subr.bf16.mxu0 %v3920
        %3994 = vmatpush1.bf16.msra.mxu0 %v3919
        %3995 = vmatprep.subr.bf16.mxu0 %v3924
        %3996 = vmatpush1.bf16.msra.mxu0 %v3923
        %3997 = vmatprep.subr.bf16.mxu0 %v3928
        %3998 = vmatpush1.bf16.msra.mxu0 %v3927
        %3999 = vmatprep.subr.bf16.mxu0 0
        %4000 = vmatpush1.bf16.msra.mxu0 0
        %4001 = vmatprep.subr.bf16.mxu0 0
        %4002 = vmatpush1.bf16.msra.mxu0 0
        %4003 = vmatprep.subr.bf16.mxu0 0
        %4004 = vmatpush1.bf16.msra.mxu0 0
        %4005 = vmatprep.subr.bf16.mxu0 0
        %4006 = vmatpush1.bf16.msra.mxu0 0
        %4007 = vmatprep.subr.bf16.mxu0 0
        %4008 = vmatpush1.bf16.msra.mxu0 0
        %4009 = vmatprep.subr.bf16.mxu0 0
        %4010 = vmatpush1.bf16.msra.mxu0 0
        %4011 = vmatprep.subr.bf16.mxu0 0
        %4012 = vmatpush1.bf16.msra.mxu0 0
        %4013 = vmatprep.subr.bf16.mxu0 0
        %4014 = vmatpush1.bf16.msra.mxu0 0
        %4015 = vmatprep.subr.bf16.mxu0 0
        %4016 = vmatpush1.bf16.msra.mxu0 0
        %4017 = vmatprep.subr.bf16.mxu0 0
        %4018 = vmatpush1.bf16.msra.mxu0 0
        %4019 = vmatprep.subr.bf16.mxu0 0
        %4020 = vmatpush1.bf16.msra.mxu0 0
        %4021 = vmatprep.subr.bf16.mxu0 0
        %4022 = vmatpush1.bf16.msra.mxu0 0
        %4023 = vmatprep.mubr.bf16.mxu0 0
        %4024 = vmatmul.mubr.bf16.gmra.mrb[0].mxu0 %v3946
        %v4025 = vpop.f32.mrb[0].mxu0
        %v4026 = vadd.f32 0.0, %v4025
        %v4027 = vpop.f32.mrb[0].mxu0
        %v4028 = vadd.f32 0.0, %v4027
        %v4029 = vpop.f32.mrb[0].mxu0
        %v4030 = vadd.f32 0.0, %v4029
        %v4031 = vpop.f32.mrb[0].mxu0
        %v4032 = vadd.f32 0.0, %v4031
        %4033 = vdwg.mxu0
        %v4034 = vadd.f32 %v601, %v3983
        %v4035 = vadd.f32 %v602, %v3985
        %v4036 = vadd.f32 %v603, %v4026
        %v4037 = vadd.f32 %v604, %v4028
        %v4038 = vadd.f32 %v605, %v3987
        %v4039 = vadd.f32 %v606, %v3989
        %v4040 = vadd.f32 %v607, %v4030
        %v4041 = vadd.f32 %v608, %v4032
        %v4042 = vpack.c.b16 %v3465, %v3465
        %4043 = vrot.lane.b32.xlu0 %v4042, 64
        %v4044 = vpop.permute.xlu0 %4043
        %v4045 = vpack.c.b16 %v3485, %v3485
        %4046 = vrot.lane.b32.xlu0 %v4045, 64
        %v4047 = vpop.permute.xlu0 %4046
        %v4049 = vsel %vm3647, %v4044, 0
        %v4052 = vsel %vm3647, %v4047, 0
        %4054 = vmatprep.subr.bf16.mxu0 0
        %4055 = vmatpush1.bf16.xpose.msra.mxu0 %v4052
        %4056 = vmatprep.subr.bf16.mxu0 0
        %4057 = vmatpush1.bf16.xpose.msra.mxu0 0
        %4058 = vmatprep.subr.bf16.mxu0 0
        %4059 = vmatpush1.bf16.xpose.msra.mxu0 0
        %4060 = vmatprep.subr.bf16.mxu0 0
        %4061 = vmatpush1.bf16.xpose.msra.mxu0 0
        %4062 = vmatprep.subr.bf16.mxu0 0
        %4063 = vmatpush1.bf16.xpose.msra.mxu0 0
        %4064 = vmatprep.subr.bf16.mxu0 0
        %4065 = vmatpush1.bf16.xpose.msra.mxu0 0
        %4066 = vmatprep.subr.bf16.mxu0 0
        %4067 = vmatpush1.bf16.xpose.msra.mxu0 0
        %4068 = vmatprep.subr.bf16.mxu0 0
        %4069 = vmatpush1.bf16.xpose.msra.mxu0 0
        %4070 = vmatprep.subr.bf16.mxu0 0
        %4071 = vmatpush1.bf16.xpose.msra.mxu0 0
        %4072 = vmatprep.subr.bf16.mxu0 0
        %4073 = vmatpush1.bf16.xpose.msra.mxu0 0
        %4074 = vmatprep.subr.bf16.mxu0 0
        %4075 = vmatpush1.bf16.xpose.msra.mxu0 0
        %4076 = vmatprep.subr.bf16.mxu0 0
        %4077 = vmatpush1.bf16.xpose.msra.mxu0 0
        %4078 = vmatprep.subr.bf16.mxu0 0
        %4079 = vmatpush1.bf16.xpose.msra.mxu0 0
        %4080 = vmatprep.subr.bf16.mxu0 0
        %4081 = vmatpush1.bf16.xpose.msra.mxu0 0
        %4082 = vmatprep.subr.bf16.mxu0 0
        %4083 = vmatpush1.bf16.xpose.msra.mxu0 0
        %4084 = vmatprep.subr.bf16.mxu0 0
        %4085 = vmatpush1.bf16.xpose.msra.mxu0 0
        %4086 = vmatprep.mubr.bf16.mxu0 0
        %4087 = vmatmul.mubr.bf16.gmra.mrb[0].mxu0 %v4049
        %v4088 = vpop.f32.mrb[0].mxu0
        %v4089 = vadd.f32 0.0, %v4088
        %v4090 = vpop.f32.mrb[0].mxu0
        %v4091 = vpop.f32.mrb[0].mxu0
        %v4092 = vpop.f32.mrb[0].mxu0
        %4093 = vdwg.mxu0
        %v4094 = vpack.c.b16 %v3469, %v3469
        %4095 = vrot.lane.b32.xlu0 %v4094, 64
        %v4096 = vpop.permute.xlu0 %4095
        %v4097 = vpack.c.b16 %v3489, %v3489
        %4098 = vrot.lane.b32.xlu0 %v4097, 64
        %v4099 = vpop.permute.xlu0 %4098
        %v4101 = vsel %vm3647, %v4096, 0
        %v4104 = vsel %vm3647, %v4099, 0
        %4106 = vmatprep.subr.bf16.mxu0 0
        %4107 = vmatpush1.bf16.xpose.msra.mxu0 %v4104
        %4108 = vmatprep.subr.bf16.mxu0 0
        %4109 = vmatpush1.bf16.xpose.msra.mxu0 0
        %4110 = vmatprep.subr.bf16.mxu0 0
        %4111 = vmatpush1.bf16.xpose.msra.mxu0 0
        %4112 = vmatprep.subr.bf16.mxu0 0
        %4113 = vmatpush1.bf16.xpose.msra.mxu0 0
        %4114 = vmatprep.subr.bf16.mxu0 0
        %4115 = vmatpush1.bf16.xpose.msra.mxu0 0
        %4116 = vmatprep.subr.bf16.mxu0 0
        %4117 = vmatpush1.bf16.xpose.msra.mxu0 0
        %4118 = vmatprep.subr.bf16.mxu0 0
        %4119 = vmatpush1.bf16.xpose.msra.mxu0 0
        %4120 = vmatprep.subr.bf16.mxu0 0
        %4121 = vmatpush1.bf16.xpose.msra.mxu0 0
        %4122 = vmatprep.subr.bf16.mxu0 0
        %4123 = vmatpush1.bf16.xpose.msra.mxu0 0
        %4124 = vmatprep.subr.bf16.mxu0 0
        %4125 = vmatpush1.bf16.xpose.msra.mxu0 0
        %4126 = vmatprep.subr.bf16.mxu0 0
        %4127 = vmatpush1.bf16.xpose.msra.mxu0 0
        %4128 = vmatprep.subr.bf16.mxu0 0
        %4129 = vmatpush1.bf16.xpose.msra.mxu0 0
        %4130 = vmatprep.subr.bf16.mxu0 0
        %4131 = vmatpush1.bf16.xpose.msra.mxu0 0
        %4132 = vmatprep.subr.bf16.mxu0 0
        %4133 = vmatpush1.bf16.xpose.msra.mxu0 0
        %4134 = vmatprep.subr.bf16.mxu0 0
        %4135 = vmatpush1.bf16.xpose.msra.mxu0 0
        %4136 = vmatprep.subr.bf16.mxu0 0
        %4137 = vmatpush1.bf16.xpose.msra.mxu0 0
        %4138 = vmatprep.mubr.bf16.mxu0 0
        %4139 = vmatmul.mubr.bf16.gmra.mrb[0].mxu0 %v4101
        %v4140 = vpop.f32.mrb[0].mxu0
        %v4141 = vadd.f32 0.0, %v4140
        %v4142 = vpop.f32.mrb[0].mxu0
        %v4143 = vpop.f32.mrb[0].mxu0
        %v4144 = vpop.f32.mrb[0].mxu0
        %4145 = vdwg.mxu0
        %v4146 = vmul.f32 %v4089, 0.125
        %v4147 = vmul.f32 %v4141, 0.125
        %v4148 = vadd.f32 %v4146, %v3517
        %v4149 = vadd.f32 %v4147, %v3518
        %v4150 = vsel %vm3744, %v4148, -inf
        %4151 = vmax.xlane.f32.xlu0 %v4150
        %v4152 = vpop.xlane.xlu0 %4151
        %v4153 = vsel %vm3744, %v4149, -inf
        %4154 = vmax.xlane.f32.xlu0 %v4153
        %v4155 = vpop.xlane.xlu0 %4154
        %v4156 = vsub.f32 %v4148, %v4152
        %v4157 = vsub.f32 %v4149, %v4155
        %v4158 = vmul.f32 %v4156, 1.442695
        %v4159 = vpow.pop %v4158
        %v4160 = vmul.f32 %v4157, 1.442695
        %v4161 = vpow.pop %v4160
        %v4162 = vsel %vm3744, %v4159, 0.0
        %4163 = vadd.xlane.f32.xlu0 %v4162
        %v4164 = vpop.xlane.xlu0 %4163
        %v4165 = vsel %vm3744, %v4161, 0.0
        %4166 = vadd.xlane.f32.xlu0 %v4165
        %v4167 = vpop.xlane.xlu0 %4166
        %v4168 = vrcp.pop %v4164
        %v4169 = vrcp.pop %v4167
        %v4170 = vmul.f32 %v4159, %v4168
        %v4171 = vmul.f32 %v4161, %v4169
        %s4172 = scalar_lea.vmem %s593, 8 [#allocation17]
        %4173 = vst.msk [vmem:[%s4172] sm:$0xff] %vm3744, %v4170
        %4174 = vst.msk [vmem:[%s4172 + $0x40] sm:$0xff] %vm3744, %v4171
        %v4175 = vpack.c.bf16 %v4170, %v4170
        %v4176 = vpack.c.bf16 %v4171, %v4171
        %v4177 = vpack.c.b16 %v3505, %v3505
        %4178 = vrot.lane.b32.xlu0 %v4177, 64
        %v4179 = vpop.permute.xlu0 %4178
        %v4181 = vsel %vm3744, %v4175, 0
        %v4184 = vsel %vm3774, %v4179, 0
        %4186 = vmatprep.subr.bf16.mxu0 0
        %4187 = vmatpush1.bf16.msra.mxu0 %v4184
        %4188 = vmatprep.subr.bf16.mxu0 0
        %4189 = vmatpush1.bf16.msra.mxu0 0
        %4190 = vmatprep.subr.bf16.mxu0 0
        %4191 = vmatpush1.bf16.msra.mxu0 0
        %4192 = vmatprep.subr.bf16.mxu0 0
        %4193 = vmatpush1.bf16.msra.mxu0 0
        %4194 = vmatprep.subr.bf16.mxu0 0
        %4195 = vmatpush1.bf16.msra.mxu0 0
        %4196 = vmatprep.subr.bf16.mxu0 0
        %4197 = vmatpush1.bf16.msra.mxu0 0
        %4198 = vmatprep.subr.bf16.mxu0 0
        %4199 = vmatpush1.bf16.msra.mxu0 0
        %4200 = vmatprep.subr.bf16.mxu0 0
        %4201 = vmatpush1.bf16.msra.mxu0 0
        %4202 = vmatprep.subr.bf16.mxu0 0
        %4203 = vmatpush1.bf16.msra.mxu0 0
        %4204 = vmatprep.subr.bf16.mxu0 0
        %4205 = vmatpush1.bf16.msra.mxu0 0
        %4206 = vmatprep.subr.bf16.mxu0 0
        %4207 = vmatpush1.bf16.msra.mxu0 0
        %4208 = vmatprep.subr.bf16.mxu0 0
        %4209 = vmatpush1.bf16.msra.mxu0 0
        %4210 = vmatprep.subr.bf16.mxu0 0
        %4211 = vmatpush1.bf16.msra.mxu0 0
        %4212 = vmatprep.subr.bf16.mxu0 0
        %4213 = vmatpush1.bf16.msra.mxu0 0
        %4214 = vmatprep.subr.bf16.mxu0 0
        %4215 = vmatpush1.bf16.msra.mxu0 0
        %4216 = vmatprep.subr.bf16.mxu0 0
        %4217 = vmatpush1.bf16.msra.mxu0 0
        %4218 = vmatprep.mubr.bf16.mxu0 0
        %4219 = vmatmul.mubr.bf16.gmra.mrb[0].mxu0 %v4181
        %v4220 = vpop.f32.mrb[0].mxu0
        %v4221 = vadd.f32 0.0, %v4220
        %v4222 = vpop.f32.mrb[0].mxu0
        %v4223 = vpop.f32.mrb[0].mxu0
        %v4224 = vpop.f32.mrb[0].mxu0
        %4225 = vdwg.mxu0
        %v4226 = vpack.c.b16 %v3509, %v3509
        %4227 = vrot.lane.b32.xlu0 %v4226, 64
        %v4228 = vpop.permute.xlu0 %4227
        %v4230 = vsel %vm3744, %v4176, 0
        %v4233 = vsel %vm3774, %v4228, 0
        %4235 = vmatprep.subr.bf16.mxu0 0
        %4236 = vmatpush1.bf16.msra.mxu0 %v4233
        %4237 = vmatprep.subr.bf16.mxu0 0
        %4238 = vmatpush1.bf16.msra.mxu0 0
        %4239 = vmatprep.subr.bf16.mxu0 0
        %4240 = vmatpush1.bf16.msra.mxu0 0
        %4241 = vmatprep.subr.bf16.mxu0 0
        %4242 = vmatpush1.bf16.msra.mxu0 0
        %4243 = vmatprep.subr.bf16.mxu0 0
        %4244 = vmatpush1.bf16.msra.mxu0 0
        %4245 = vmatprep.subr.bf16.mxu0 0
        %4246 = vmatpush1.bf16.msra.mxu0 0
        %4247 = vmatprep.subr.bf16.mxu0 0
        %4248 = vmatpush1.bf16.msra.mxu0 0
        %4249 = vmatprep.subr.bf16.mxu0 0
        %4250 = vmatpush1.bf16.msra.mxu0 0
        %4251 = vmatprep.subr.bf16.mxu0 0
        %4252 = vmatpush1.bf16.msra.mxu0 0
        %4253 = vmatprep.subr.bf16.mxu0 0
        %4254 = vmatpush1.bf16.msra.mxu0 0
        %4255 = vmatprep.subr.bf16.mxu0 0
        %4256 = vmatpush1.bf16.msra.mxu0 0
        %4257 = vmatprep.subr.bf16.mxu0 0
        %4258 = vmatpush1.bf16.msra.mxu0 0
        %4259 = vmatprep.subr.bf16.mxu0 0
        %4260 = vmatpush1.bf16.msra.mxu0 0
        %4261 = vmatprep.subr.bf16.mxu0 0
        %4262 = vmatpush1.bf16.msra.mxu0 0
        %4263 = vmatprep.subr.bf16.mxu0 0
        %4264 = vmatpush1.bf16.msra.mxu0 0
        %4265 = vmatprep.subr.bf16.mxu0 0
        %4266 = vmatpush1.bf16.msra.mxu0 0
        %4267 = vmatprep.mubr.bf16.mxu0 0
        %4268 = vmatmul.mubr.bf16.gmra.mrb[0].mxu0 %v4230
        %v4269 = vpop.f32.mrb[0].mxu0
        %v4270 = vadd.f32 0.0, %v4269
        %v4271 = vpop.f32.mrb[0].mxu0
        %v4272 = vpop.f32.mrb[0].mxu0
        %v4273 = vpop.f32.mrb[0].mxu0
        %4274 = vdwg.mxu0
        %v4275 = vpack.c.bf16 %v4270, %v4221
        %v4292 = vunpack.c.l.b16 %v3535
        %v4293 = vunpack.c.h.b16 %v3535
        %v4294 = vunpack.c.l.b16 %v3536
        %v4295 = vunpack.c.h.b16 %v3536
        %v4296 = vunpack.c.l.b16 %v3537
        %v4297 = vunpack.c.h.b16 %v3537
        %v4298 = vunpack.c.l.b16 %v3538
        %v4299 = vunpack.c.h.b16 %v3538
        %v4300 = vunpack.c.l.b16 %v3539
        %v4301 = vunpack.c.h.b16 %v3539
        %v4302 = vunpack.c.l.b16 %v3540
        %v4303 = vunpack.c.h.b16 %v3540
        %v4304 = vunpack.c.l.b16 %v3541
        %v4305 = vunpack.c.h.b16 %v3541
        %v4306 = vunpack.c.l.b16 %v3542
        %v4307 = vunpack.c.h.b16 %v3542
        %v4308 = vunpack.c.l.b16 %v3543
        %v4309 = vunpack.c.h.b16 %v3543
        %v4310 = vunpack.c.l.b16 %v3544
        %v4311 = vunpack.c.h.b16 %v3544
        %v4312 = vunpack.c.l.b16 %v3545
        %v4313 = vunpack.c.h.b16 %v3545
        %v4314 = vunpack.c.l.b16 %v3546
        %v4315 = vunpack.c.h.b16 %v3546
        %v4316 = vunpack.c.l.b16 %v3547
        %v4317 = vunpack.c.h.b16 %v3547
        %v4318 = vunpack.c.l.b16 %v3548
        %v4319 = vunpack.c.h.b16 %v3548
        %v4320 = vunpack.c.l.b16 %v3549
        %v4321 = vunpack.c.h.b16 %v3549
        %v4322 = vunpack.c.l.b16 %v3550
        %v4323 = vunpack.c.h.b16 %v3550
        %v4324 = vpack.c.b16 %v4296, %v4292
        %v4325 = vpack.c.b16 %v4297, %v4293
        %v4326 = vpack.c.b16 %v4298, %v4294
        %v4327 = vpack.c.b16 %v4299, %v4295
        %v4328 = vpack.c.b16 %v4304, %v4300
        %v4329 = vpack.c.b16 %v4305, %v4301
        %v4330 = vpack.c.b16 %v4306, %v4302
        %v4331 = vpack.c.b16 %v4307, %v4303
        %v4332 = vpack.c.b16 %v4312, %v4308
        %v4333 = vpack.c.b16 %v4313, %v4309
        %v4334 = vpack.c.b16 %v4314, %v4310
        %v4335 = vpack.c.b16 %v4315, %v4311
        %v4336 = vpack.c.b16 %v4320, %v4316
        %v4337 = vpack.c.b16 %v4321, %v4317
        %v4338 = vpack.c.b16 %v4322, %v4318
        %v4339 = vpack.c.b16 %v4323, %v4319
        %v4357 = vsel %vm3647, %v4275, 0
        %4359 = vmatprep.subr.bf16.mxu0 %v4325
        %4360 = vmatpush1.bf16.msra.mxu0 %v4324
        %4361 = vmatprep.subr.bf16.mxu0 %v4329
        %4362 = vmatpush1.bf16.msra.mxu0 %v4328
        %4363 = vmatprep.subr.bf16.mxu0 %v4333
        %4364 = vmatpush1.bf16.msra.mxu0 %v4332
        %4365 = vmatprep.subr.bf16.mxu0 %v4337
        %4366 = vmatpush1.bf16.msra.mxu0 %v4336
        %4367 = vmatprep.subr.bf16.mxu0 0
        %4368 = vmatpush1.bf16.msra.mxu0 0
        %4369 = vmatprep.subr.bf16.mxu0 0
        %4370 = vmatpush1.bf16.msra.mxu0 0
        %4371 = vmatprep.subr.bf16.mxu0 0
        %4372 = vmatpush1.bf16.msra.mxu0 0
        %4373 = vmatprep.subr.bf16.mxu0 0
        %4374 = vmatpush1.bf16.msra.mxu0 0
        %4375 = vmatprep.subr.bf16.mxu0 0
        %4376 = vmatpush1.bf16.msra.mxu0 0
        %4377 = vmatprep.subr.bf16.mxu0 0
        %4378 = vmatpush1.bf16.msra.mxu0 0
        %4379 = vmatprep.subr.bf16.mxu0 0
        %4380 = vmatpush1.bf16.msra.mxu0 0
        %4381 = vmatprep.subr.bf16.mxu0 0
        %4382 = vmatpush1.bf16.msra.mxu0 0
        %4383 = vmatprep.subr.bf16.mxu0 0
        %4384 = vmatpush1.bf16.msra.mxu0 0
        %4385 = vmatprep.subr.bf16.mxu0 0
        %4386 = vmatpush1.bf16.msra.mxu0 0
        %4387 = vmatprep.subr.bf16.mxu0 0
        %4388 = vmatpush1.bf16.msra.mxu0 0
        %4389 = vmatprep.subr.bf16.mxu0 0
        %4390 = vmatpush1.bf16.msra.mxu0 0
        %4391 = vmatprep.mubr.bf16.mxu0 0
        %4392 = vmatmul.mubr.bf16.gmra.mrb[0].mxu0 %v4357
        %v4393 = vpop.f32.mrb[0].mxu0
        %v4394 = vadd.f32 0.0, %v4393
        %v4395 = vpop.f32.mrb[0].mxu0
        %v4396 = vadd.f32 0.0, %v4395
        %v4397 = vpop.f32.mrb[0].mxu0
        %v4398 = vadd.f32 0.0, %v4397
        %v4399 = vpop.f32.mrb[0].mxu0
        %v4400 = vadd.f32 0.0, %v4399
        %4401 = vdwg.mxu0
        %4402 = vmatprep.subr.bf16.mxu0 %v4327
        %4403 = vmatpush1.bf16.msra.mxu0 %v4326
        %4404 = vmatprep.subr.bf16.mxu0 %v4331
        %4405 = vmatpush1.bf16.msra.mxu0 %v4330
        %4406 = vmatprep.subr.bf16.mxu0 %v4335
        %4407 = vmatpush1.bf16.msra.mxu0 %v4334
        %4408 = vmatprep.subr.bf16.mxu0 %v4339
        %4409 = vmatpush1.bf16.msra.mxu0 %v4338
        %4410 = vmatprep.subr.bf16.mxu0 0
        %4411 = vmatpush1.bf16.msra.mxu0 0
        %4412 = vmatprep.subr.bf16.mxu0 0
        %4413 = vmatpush1.bf16.msra.mxu0 0
        %4414 = vmatprep.subr.bf16.mxu0 0
        %4415 = vmatpush1.bf16.msra.mxu0 0
        %4416 = vmatprep.subr.bf16.mxu0 0
        %4417 = vmatpush1.bf16.msra.mxu0 0
        %4418 = vmatprep.subr.bf16.mxu0 0
        %4419 = vmatpush1.bf16.msra.mxu0 0
        %4420 = vmatprep.subr.bf16.mxu0 0
        %4421 = vmatpush1.bf16.msra.mxu0 0
        %4422 = vmatprep.subr.bf16.mxu0 0
        %4423 = vmatpush1.bf16.msra.mxu0 0
        %4424 = vmatprep.subr.bf16.mxu0 0
        %4425 = vmatpush1.bf16.msra.mxu0 0
        %4426 = vmatprep.subr.bf16.mxu0 0
        %4427 = vmatpush1.bf16.msra.mxu0 0
        %4428 = vmatprep.subr.bf16.mxu0 0
        %4429 = vmatpush1.bf16.msra.mxu0 0
        %4430 = vmatprep.subr.bf16.mxu0 0
        %4431 = vmatpush1.bf16.msra.mxu0 0
        %4432 = vmatprep.subr.bf16.mxu0 0
        %4433 = vmatpush1.bf16.msra.mxu0 0
        %4434 = vmatprep.mubr.bf16.mxu0 0
        %4435 = vmatmul.mubr.bf16.gmra.mrb[0].mxu0 %v4357
        %v4436 = vpop.f32.mrb[0].mxu0
        %v4437 = vadd.f32 0.0, %v4436
        %v4438 = vpop.f32.mrb[0].mxu0
        %v4439 = vadd.f32 0.0, %v4438
        %v4440 = vpop.f32.mrb[0].mxu0
        %v4441 = vadd.f32 0.0, %v4440
        %v4442 = vpop.f32.mrb[0].mxu0
        %v4443 = vadd.f32 0.0, %v4442
        %4444 = vdwg.mxu0
        %v4445 = vadd.f32 %v4034, %v4394
        %v4446 = vadd.f32 %v4035, %v4396
        %v4447 = vadd.f32 %v4036, %v4437
        %v4448 = vadd.f32 %v4037, %v4439
        %v4449 = vadd.f32 %v4038, %v4398
        %v4450 = vadd.f32 %v4039, %v4400
        %v4451 = vadd.f32 %v4040, %v4441
        %v4452 = vadd.f32 %v4041, %v4443
        %v4453 = vrot.slane %v3473, 4
        %v4454 = vrot.slane %v3493, 4
        %v4456 = vsel %vm3647, %v4453, 0
        %v4459 = vsel %vm3647, %v4454, 0
        %4461 = vmatprep.subr.bf16.mxu0 0
        %4462 = vmatpush1.bf16.xpose.msra.mxu0 %v4459
        %4463 = vmatprep.subr.bf16.mxu0 0
        %4464 = vmatpush1.bf16.xpose.msra.mxu0 0
        %4465 = vmatprep.subr.bf16.mxu0 0
        %4466 = vmatpush1.bf16.xpose.msra.mxu0 0
        %4467 = vmatprep.subr.bf16.mxu0 0
        %4468 = vmatpush1.bf16.xpose.msra.mxu0 0
        %4469 = vmatprep.subr.bf16.mxu0 0
        %4470 = vmatpush1.bf16.xpose.msra.mxu0 0
        %4471 = vmatprep.subr.bf16.mxu0 0
        %4472 = vmatpush1.bf16.xpose.msra.mxu0 0
        %4473 = vmatprep.subr.bf16.mxu0 0
        %4474 = vmatpush1.bf16.xpose.msra.mxu0 0
        %4475 = vmatprep.subr.bf16.mxu0 0
        %4476 = vmatpush1.bf16.xpose.msra.mxu0 0
        %4477 = vmatprep.subr.bf16.mxu0 0
        %4478 = vmatpush1.bf16.xpose.msra.mxu0 0
        %4479 = vmatprep.subr.bf16.mxu0 0
        %4480 = vmatpush1.bf16.xpose.msra.mxu0 0
        %4481 = vmatprep.subr.bf16.mxu0 0
        %4482 = vmatpush1.bf16.xpose.msra.mxu0 0
        %4483 = vmatprep.subr.bf16.mxu0 0
        %4484 = vmatpush1.bf16.xpose.msra.mxu0 0
        %4485 = vmatprep.subr.bf16.mxu0 0
        %4486 = vmatpush1.bf16.xpose.msra.mxu0 0
        %4487 = vmatprep.subr.bf16.mxu0 0
        %4488 = vmatpush1.bf16.xpose.msra.mxu0 0
        %4489 = vmatprep.subr.bf16.mxu0 0
        %4490 = vmatpush1.bf16.xpose.msra.mxu0 0
        %4491 = vmatprep.subr.bf16.mxu0 0
        %4492 = vmatpush1.bf16.xpose.msra.mxu0 0
        %4493 = vmatprep.mubr.bf16.mxu0 0
        %4494 = vmatmul.mubr.bf16.gmra.mrb[0].mxu0 %v4456
        %v4495 = vpop.f32.mrb[0].mxu0
        %v4496 = vadd.f32 0.0, %v4495
        %v4497 = vpop.f32.mrb[0].mxu0
        %v4498 = vpop.f32.mrb[0].mxu0
        %v4499 = vpop.f32.mrb[0].mxu0
        %4500 = vdwg.mxu0
        %v4501 = vrot.slane %v3475, 4
        %v4502 = vrot.slane %v3495, 4
        %v4504 = vsel %vm3647, %v4501, 0
        %v4507 = vsel %vm3647, %v4502, 0
        %4509 = vmatprep.subr.bf16.mxu0 0
        %4510 = vmatpush1.bf16.xpose.msra.mxu0 %v4507
        %4511 = vmatprep.subr.bf16.mxu0 0
        %4512 = vmatpush1.bf16.xpose.msra.mxu0 0
        %4513 = vmatprep.subr.bf16.mxu0 0
        %4514 = vmatpush1.bf16.xpose.msra.mxu0 0
        %4515 = vmatprep.subr.bf16.mxu0 0
        %4516 = vmatpush1.bf16.xpose.msra.mxu0 0
        %4517 = vmatprep.subr.bf16.mxu0 0
        %4518 = vmatpush1.bf16.xpose.msra.mxu0 0
        %4519 = vmatprep.subr.bf16.mxu0 0
        %4520 = vmatpush1.bf16.xpose.msra.mxu0 0
        %4521 = vmatprep.subr.bf16.mxu0 0
        %4522 = vmatpush1.bf16.xpose.msra.mxu0 0
        %4523 = vmatprep.subr.bf16.mxu0 0
        %4524 = vmatpush1.bf16.xpose.msra.mxu0 0
        %4525 = vmatprep.subr.bf16.mxu0 0
        %4526 = vmatpush1.bf16.xpose.msra.mxu0 0
        %4527 = vmatprep.subr.bf16.mxu0 0
        %4528 = vmatpush1.bf16.xpose.msra.mxu0 0
        %4529 = vmatprep.subr.bf16.mxu0 0
        %4530 = vmatpush1.bf16.xpose.msra.mxu0 0
        %4531 = vmatprep.subr.bf16.mxu0 0
        %4532 = vmatpush1.bf16.xpose.msra.mxu0 0
        %4533 = vmatprep.subr.bf16.mxu0 0
        %4534 = vmatpush1.bf16.xpose.msra.mxu0 0
        %4535 = vmatprep.subr.bf16.mxu0 0
        %4536 = vmatpush1.bf16.xpose.msra.mxu0 0
        %4537 = vmatprep.subr.bf16.mxu0 0
        %4538 = vmatpush1.bf16.xpose.msra.mxu0 0
        %4539 = vmatprep.subr.bf16.mxu0 0
        %4540 = vmatpush1.bf16.xpose.msra.mxu0 0
        %4541 = vmatprep.mubr.bf16.mxu0 0
        %4542 = vmatmul.mubr.bf16.gmra.mrb[0].mxu0 %v4504
        %v4543 = vpop.f32.mrb[0].mxu0
        %v4544 = vadd.f32 0.0, %v4543
        %v4545 = vpop.f32.mrb[0].mxu0
        %v4546 = vpop.f32.mrb[0].mxu0
        %v4547 = vpop.f32.mrb[0].mxu0
        %4548 = vdwg.mxu0
        %v4549 = vmul.f32 %v4496, 0.125
        %v4550 = vmul.f32 %v4544, 0.125
        %v4551 = vadd.f32 %v4549, %v3517
        %v4552 = vadd.f32 %v4550, %v3518
        %v4553 = vsel %vm3744, %v4551, -inf
        %4554 = vmax.xlane.f32.xlu0 %v4553
        %v4555 = vpop.xlane.xlu0 %4554
        %v4556 = vsel %vm3744, %v4552, -inf
        %4557 = vmax.xlane.f32.xlu0 %v4556
        %v4558 = vpop.xlane.xlu0 %4557
        %v4559 = vsub.f32 %v4551, %v4555
        %v4560 = vsub.f32 %v4552, %v4558
        %v4561 = vmul.f32 %v4559, 1.442695
        %v4562 = vpow.pop %v4561
        %v4563 = vmul.f32 %v4560, 1.442695
        %v4564 = vpow.pop %v4563
        %v4565 = vsel %vm3744, %v4562, 0.0
        %4566 = vadd.xlane.f32.xlu0 %v4565
        %v4567 = vpop.xlane.xlu0 %4566
        %v4568 = vsel %vm3744, %v4564, 0.0
        %4569 = vadd.xlane.f32.xlu0 %v4568
        %v4570 = vpop.xlane.xlu0 %4569
        %v4571 = vrcp.pop %v4567
        %v4572 = vrcp.pop %v4570
        %v4573 = vmul.f32 %v4562, %v4571
        %v4574 = vmul.f32 %v4564, %v4572
        %s4575 = scalar_lea.vmem %s593, 16 [#allocation17]
        %4576 = vst.msk [vmem:[%s4575] sm:$0xff] %vm3744, %v4573
        %4577 = vst.msk [vmem:[%s4575 + $0x40] sm:$0xff] %vm3744, %v4574
        %v4578 = vpack.c.bf16 %v4573, %v4573
        %v4579 = vpack.c.bf16 %v4574, %v4574
        %v4580 = vrot.slane %v3513, 4
        %v4582 = vsel %vm3744, %v4578, 0
        %v4585 = vsel %vm3774, %v4580, 0
        %4587 = vmatprep.subr.bf16.mxu0 0
        %4588 = vmatpush1.bf16.msra.mxu0 %v4585
        %4589 = vmatprep.subr.bf16.mxu0 0
        %4590 = vmatpush1.bf16.msra.mxu0 0
        %4591 = vmatprep.subr.bf16.mxu0 0
        %4592 = vmatpush1.bf16.msra.mxu0 0
        %4593 = vmatprep.subr.bf16.mxu0 0
        %4594 = vmatpush1.bf16.msra.mxu0 0
        %4595 = vmatprep.subr.bf16.mxu0 0
        %4596 = vmatpush1.bf16.msra.mxu0 0
        %4597 = vmatprep.subr.bf16.mxu0 0
        %4598 = vmatpush1.bf16.msra.mxu0 0
        %4599 = vmatprep.subr.bf16.mxu0 0
        %4600 = vmatpush1.bf16.msra.mxu0 0
        %4601 = vmatprep.subr.bf16.mxu0 0
        %4602 = vmatpush1.bf16.msra.mxu0 0
        %4603 = vmatprep.subr.bf16.mxu0 0
        %4604 = vmatpush1.bf16.msra.mxu0 0
        %4605 = vmatprep.subr.bf16.mxu0 0
        %4606 = vmatpush1.bf16.msra.mxu0 0
        %4607 = vmatprep.subr.bf16.mxu0 0
        %4608 = vmatpush1.bf16.msra.mxu0 0
        %4609 = vmatprep.subr.bf16.mxu0 0
        %4610 = vmatpush1.bf16.msra.mxu0 0
        %4611 = vmatprep.subr.bf16.mxu0 0
        %4612 = vmatpush1.bf16.msra.mxu0 0
        %4613 = vmatprep.subr.bf16.mxu0 0
        %4614 = vmatpush1.bf16.msra.mxu0 0
        %4615 = vmatprep.subr.bf16.mxu0 0
        %4616 = vmatpush1.bf16.msra.mxu0 0
        %4617 = vmatprep.subr.bf16.mxu0 0
        %4618 = vmatpush1.bf16.msra.mxu0 0
        %4619 = vmatprep.mubr.bf16.mxu0 0
        %4620 = vmatmul.mubr.bf16.gmra.mrb[0].mxu0 %v4582
        %v4621 = vpop.f32.mrb[0].mxu0
        %v4622 = vadd.f32 0.0, %v4621
        %v4623 = vpop.f32.mrb[0].mxu0
        %v4624 = vpop.f32.mrb[0].mxu0
        %v4625 = vpop.f32.mrb[0].mxu0
        %4626 = vdwg.mxu0
        %v4627 = vrot.slane %v3515, 4
        %v4629 = vsel %vm3744, %v4579, 0
        %v4632 = vsel %vm3774, %v4627, 0
        %4634 = vmatprep.subr.bf16.mxu0 0
        %4635 = vmatpush1.bf16.msra.mxu0 %v4632
        %4636 = vmatprep.subr.bf16.mxu0 0
        %4637 = vmatpush1.bf16.msra.mxu0 0
        %4638 = vmatprep.subr.bf16.mxu0 0
        %4639 = vmatpush1.bf16.msra.mxu0 0
        %4640 = vmatprep.subr.bf16.mxu0 0
        %4641 = vmatpush1.bf16.msra.mxu0 0
        %4642 = vmatprep.subr.bf16.mxu0 0
        %4643 = vmatpush1.bf16.msra.mxu0 0
        %4644 = vmatprep.subr.bf16.mxu0 0
        %4645 = vmatpush1.bf16.msra.mxu0 0
        %4646 = vmatprep.subr.bf16.mxu0 0
        %4647 = vmatpush1.bf16.msra.mxu0 0
        %4648 = vmatprep.subr.bf16.mxu0 0
        %4649 = vmatpush1.bf16.msra.mxu0 0
        %4650 = vmatprep.subr.bf16.mxu0 0
        %4651 = vmatpush1.bf16.msra.mxu0 0
        %4652 = vmatprep.subr.bf16.mxu0 0
        %4653 = vmatpush1.bf16.msra.mxu0 0
        %4654 = vmatprep.subr.bf16.mxu0 0
        %4655 = vmatpush1.bf16.msra.mxu0 0
        %4656 = vmatprep.subr.bf16.mxu0 0
        %4657 = vmatpush1.bf16.msra.mxu0 0
        %4658 = vmatprep.subr.bf16.mxu0 0
        %4659 = vmatpush1.bf16.msra.mxu0 0
        %4660 = vmatprep.subr.bf16.mxu0 0
        %4661 = vmatpush1.bf16.msra.mxu0 0
        %4662 = vmatprep.subr.bf16.mxu0 0
        %4663 = vmatpush1.bf16.msra.mxu0 0
        %4664 = vmatprep.subr.bf16.mxu0 0
        %4665 = vmatpush1.bf16.msra.mxu0 0
        %4666 = vmatprep.mubr.bf16.mxu0 0
        %4667 = vmatmul.mubr.bf16.gmra.mrb[0].mxu0 %v4629
        %v4668 = vpop.f32.mrb[0].mxu0
        %v4669 = vadd.f32 0.0, %v4668
        %v4670 = vpop.f32.mrb[0].mxu0
        %v4671 = vpop.f32.mrb[0].mxu0
        %v4672 = vpop.f32.mrb[0].mxu0
        %4673 = vdwg.mxu0
        %v4674 = vpack.c.bf16 %v4669, %v4622
        %v4691 = vunpack.c.l.b16 %v3551
        %v4692 = vunpack.c.h.b16 %v3551
        %v4693 = vunpack.c.l.b16 %v3552
        %v4694 = vunpack.c.h.b16 %v3552
        %v4695 = vunpack.c.l.b16 %v3553
        %v4696 = vunpack.c.h.b16 %v3553
        %v4697 = vunpack.c.l.b16 %v3554
        %v4698 = vunpack.c.h.b16 %v3554
        %v4699 = vunpack.c.l.b16 %v3555
        %v4700 = vunpack.c.h.b16 %v3555
        %v4701 = vunpack.c.l.b16 %v3556
        %v4702 = vunpack.c.h.b16 %v3556
        %v4703 = vunpack.c.l.b16 %v3557
        %v4704 = vunpack.c.h.b16 %v3557
        %v4705 = vunpack.c.l.b16 %v3558
        %v4706 = vunpack.c.h.b16 %v3558
        %v4707 = vunpack.c.l.b16 %v3559
        %v4708 = vunpack.c.h.b16 %v3559
        %v4709 = vunpack.c.l.b16 %v3560
        %v4710 = vunpack.c.h.b16 %v3560
        %v4711 = vunpack.c.l.b16 %v3561
        %v4712 = vunpack.c.h.b16 %v3561
        %v4713 = vunpack.c.l.b16 %v3562
        %v4714 = vunpack.c.h.b16 %v3562
        %v4715 = vunpack.c.l.b16 %v3563
        %v4716 = vunpack.c.h.b16 %v3563
        %v4717 = vunpack.c.l.b16 %v3564
        %v4718 = vunpack.c.h.b16 %v3564
        %v4719 = vunpack.c.l.b16 %v3565
        %v4720 = vunpack.c.h.b16 %v3565
        %v4721 = vunpack.c.l.b16 %v3566
        %v4722 = vunpack.c.h.b16 %v3566
        %v4723 = vpack.c.b16 %v4695, %v4691
        %v4724 = vpack.c.b16 %v4696, %v4692
        %v4725 = vpack.c.b16 %v4697, %v4693
        %v4726 = vpack.c.b16 %v4698, %v4694
        %v4727 = vpack.c.b16 %v4703, %v4699
        %v4728 = vpack.c.b16 %v4704, %v4700
        %v4729 = vpack.c.b16 %v4705, %v4701
        %v4730 = vpack.c.b16 %v4706, %v4702
        %v4731 = vpack.c.b16 %v4711, %v4707
        %v4732 = vpack.c.b16 %v4712, %v4708
        %v4733 = vpack.c.b16 %v4713, %v4709
        %v4734 = vpack.c.b16 %v4714, %v4710
        %v4735 = vpack.c.b16 %v4719, %v4715
        %v4736 = vpack.c.b16 %v4720, %v4716
        %v4737 = vpack.c.b16 %v4721, %v4717
        %v4738 = vpack.c.b16 %v4722, %v4718
        %v4756 = vsel %vm3647, %v4674, 0
        %4758 = vmatprep.subr.bf16.mxu0 %v4724
        %4759 = vmatpush1.bf16.msra.mxu0 %v4723
        %4760 = vmatprep.subr.bf16.mxu0 %v4728
        %4761 = vmatpush1.bf16.msra.mxu0 %v4727
        %4762 = vmatprep.subr.bf16.mxu0 %v4732
        %4763 = vmatpush1.bf16.msra.mxu0 %v4731
        %4764 = vmatprep.subr.bf16.mxu0 %v4736
        %4765 = vmatpush1.bf16.msra.mxu0 %v4735
        %4766 = vmatprep.subr.bf16.mxu0 0
        %4767 = vmatpush1.bf16.msra.mxu0 0
        %4768 = vmatprep.subr.bf16.mxu0 0
        %4769 = vmatpush1.bf16.msra.mxu0 0
        %4770 = vmatprep.subr.bf16.mxu0 0
        %4771 = vmatpush1.bf16.msra.mxu0 0
        %4772 = vmatprep.subr.bf16.mxu0 0
        %4773 = vmatpush1.bf16.msra.mxu0 0
        %4774 = vmatprep.subr.bf16.mxu0 0
        %4775 = vmatpush1.bf16.msra.mxu0 0
        %4776 = vmatprep.subr.bf16.mxu0 0
        %4777 = vmatpush1.bf16.msra.mxu0 0
        %4778 = vmatprep.subr.bf16.mxu0 0
        %4779 = vmatpush1.bf16.msra.mxu0 0
        %4780 = vmatprep.subr.bf16.mxu0 0
        %4781 = vmatpush1.bf16.msra.mxu0 0
        %4782 = vmatprep.subr.bf16.mxu0 0
        %4783 = vmatpush1.bf16.msra.mxu0 0
        %4784 = vmatprep.subr.bf16.mxu0 0
        %4785 = vmatpush1.bf16.msra.mxu0 0
        %4786 = vmatprep.subr.bf16.mxu0 0
        %4787 = vmatpush1.bf16.msra.mxu0 0
        %4788 = vmatprep.subr.bf16.mxu0 0
        %4789 = vmatpush1.bf16.msra.mxu0 0
        %4790 = vmatprep.mubr.bf16.mxu0 0
        %4791 = vmatmul.mubr.bf16.gmra.mrb[0].mxu0 %v4756
        %v4792 = vpop.f32.mrb[0].mxu0
        %v4793 = vadd.f32 0.0, %v4792
        %v4794 = vpop.f32.mrb[0].mxu0
        %v4795 = vadd.f32 0.0, %v4794
        %v4796 = vpop.f32.mrb[0].mxu0
        %v4797 = vadd.f32 0.0, %v4796
        %v4798 = vpop.f32.mrb[0].mxu0
        %v4799 = vadd.f32 0.0, %v4798
        %4800 = vdwg.mxu0
        %4801 = vmatprep.subr.bf16.mxu0 %v4726
        %4802 = vmatpush1.bf16.msra.mxu0 %v4725
        %4803 = vmatprep.subr.bf16.mxu0 %v4730
        %4804 = vmatpush1.bf16.msra.mxu0 %v4729
        %4805 = vmatprep.subr.bf16.mxu0 %v4734
        %4806 = vmatpush1.bf16.msra.mxu0 %v4733
        %4807 = vmatprep.subr.bf16.mxu0 %v4738
        %4808 = vmatpush1.bf16.msra.mxu0 %v4737
        %4809 = vmatprep.subr.bf16.mxu0 0
        %4810 = vmatpush1.bf16.msra.mxu0 0
        %4811 = vmatprep.subr.bf16.mxu0 0
        %4812 = vmatpush1.bf16.msra.mxu0 0
        %4813 = vmatprep.subr.bf16.mxu0 0
        %4814 = vmatpush1.bf16.msra.mxu0 0
        %4815 = vmatprep.subr.bf16.mxu0 0
        %4816 = vmatpush1.bf16.msra.mxu0 0
        %4817 = vmatprep.subr.bf16.mxu0 0
        %4818 = vmatpush1.bf16.msra.mxu0 0
        %4819 = vmatprep.subr.bf16.mxu0 0
        %4820 = vmatpush1.bf16.msra.mxu0 0
        %4821 = vmatprep.subr.bf16.mxu0 0
        %4822 = vmatpush1.bf16.msra.mxu0 0
        %4823 = vmatprep.subr.bf16.mxu0 0
        %4824 = vmatpush1.bf16.msra.mxu0 0
        %4825 = vmatprep.subr.bf16.mxu0 0
        %4826 = vmatpush1.bf16.msra.mxu0 0
        %4827 = vmatprep.subr.bf16.mxu0 0
        %4828 = vmatpush1.bf16.msra.mxu0 0
        %4829 = vmatprep.subr.bf16.mxu0 0
        %4830 = vmatpush1.bf16.msra.mxu0 0
        %4831 = vmatprep.subr.bf16.mxu0 0
        %4832 = vmatpush1.bf16.msra.mxu0 0
        %4833 = vmatprep.mubr.bf16.mxu0 0
        %4834 = vmatmul.mubr.bf16.gmra.mrb[0].mxu0 %v4756
        %v4835 = vpop.f32.mrb[0].mxu0
        %v4836 = vadd.f32 0.0, %v4835
        %v4837 = vpop.f32.mrb[0].mxu0
        %v4838 = vadd.f32 0.0, %v4837
        %v4839 = vpop.f32.mrb[0].mxu0
        %v4840 = vadd.f32 0.0, %v4839
        %v4841 = vpop.f32.mrb[0].mxu0
        %v4842 = vadd.f32 0.0, %v4841
        %4843 = vdwg.mxu0
        %v4844 = vadd.f32 %v4445, %v4793
        %v4845 = vadd.f32 %v4446, %v4795
        %v4846 = vadd.f32 %v4447, %v4836
        %v4847 = vadd.f32 %v4448, %v4838
        %v4848 = vadd.f32 %v4449, %v4797
        %v4849 = vadd.f32 %v4450, %v4799
        %v4850 = vadd.f32 %v4451, %v4840
        %v4851 = vadd.f32 %v4452, %v4842
        %4852 = vrot.lane.b32.xlu0 %v3473, 64
        %v4853 = vpop.permute.xlu0 %4852
        %v4854 = vrot.slane %v4853, 4
        %4855 = vrot.lane.b32.xlu0 %v3493, 64
        %v4856 = vpop.permute.xlu0 %4855
        %v4857 = vrot.slane %v4856, 4
        %v4859 = vsel %vm3647, %v4854, 0
        %v4862 = vsel %vm3647, %v4857, 0
        %4864 = vmatprep.subr.bf16.mxu0 0
        %4865 = vmatpush1.bf16.xpose.msra.mxu0 %v4862
        %4866 = vmatprep.subr.bf16.mxu0 0
        %4867 = vmatpush1.bf16.xpose.msra.mxu0 0
        %4868 = vmatprep.subr.bf16.mxu0 0
        %4869 = vmatpush1.bf16.xpose.msra.mxu0 0
        %4870 = vmatprep.subr.bf16.mxu0 0
        %4871 = vmatpush1.bf16.xpose.msra.mxu0 0
        %4872 = vmatprep.subr.bf16.mxu0 0
        %4873 = vmatpush1.bf16.xpose.msra.mxu0 0
        %4874 = vmatprep.subr.bf16.mxu0 0
        %4875 = vmatpush1.bf16.xpose.msra.mxu0 0
        %4876 = vmatprep.subr.bf16.mxu0 0
        %4877 = vmatpush1.bf16.xpose.msra.mxu0 0
        %4878 = vmatprep.subr.bf16.mxu0 0
        %4879 = vmatpush1.bf16.xpose.msra.mxu0 0
        %4880 = vmatprep.subr.bf16.mxu0 0
        %4881 = vmatpush1.bf16.xpose.msra.mxu0 0
        %4882 = vmatprep.subr.bf16.mxu0 0
        %4883 = vmatpush1.bf16.xpose.msra.mxu0 0
        %4884 = vmatprep.subr.bf16.mxu0 0
        %4885 = vmatpush1.bf16.xpose.msra.mxu0 0
        %4886 = vmatprep.subr.bf16.mxu0 0
        %4887 = vmatpush1.bf16.xpose.msra.mxu0 0
        %4888 = vmatprep.subr.bf16.mxu0 0
        %4889 = vmatpush1.bf16.xpose.msra.mxu0 0
        %4890 = vmatprep.subr.bf16.mxu0 0
        %4891 = vmatpush1.bf16.xpose.msra.mxu0 0
        %4892 = vmatprep.subr.bf16.mxu0 0
        %4893 = vmatpush1.bf16.xpose.msra.mxu0 0
        %4894 = vmatprep.subr.bf16.mxu0 0
        %4895 = vmatpush1.bf16.xpose.msra.mxu0 0
        %4896 = vmatprep.mubr.bf16.mxu0 0
        %4897 = vmatmul.mubr.bf16.gmra.mrb[0].mxu0 %v4859
        %v4898 = vpop.f32.mrb[0].mxu0
        %v4899 = vadd.f32 0.0, %v4898
        %v4900 = vpop.f32.mrb[0].mxu0
        %v4901 = vpop.f32.mrb[0].mxu0
        %v4902 = vpop.f32.mrb[0].mxu0
        %4903 = vdwg.mxu0
        %4904 = vrot.lane.b32.xlu0 %v3475, 64
        %v4905 = vpop.permute.xlu0 %4904
        %v4906 = vrot.slane %v4905, 4
        %4907 = vrot.lane.b32.xlu0 %v3495, 64
        %v4908 = vpop.permute.xlu0 %4907
        %v4909 = vrot.slane %v4908, 4
        %v4911 = vsel %vm3647, %v4906, 0
        %v4914 = vsel %vm3647, %v4909, 0
        %4916 = vmatprep.subr.bf16.mxu0 0
        %4917 = vmatpush1.bf16.xpose.msra.mxu0 %v4914
        %4918 = vmatprep.subr.bf16.mxu0 0
        %4919 = vmatpush1.bf16.xpose.msra.mxu0 0
        %4920 = vmatprep.subr.bf16.mxu0 0
        %4921 = vmatpush1.bf16.xpose.msra.mxu0 0
        %4922 = vmatprep.subr.bf16.mxu0 0
        %4923 = vmatpush1.bf16.xpose.msra.mxu0 0
        %4924 = vmatprep.subr.bf16.mxu0 0
        %4925 = vmatpush1.bf16.xpose.msra.mxu0 0
        %4926 = vmatprep.subr.bf16.mxu0 0
        %4927 = vmatpush1.bf16.xpose.msra.mxu0 0
        %4928 = vmatprep.subr.bf16.mxu0 0
        %4929 = vmatpush1.bf16.xpose.msra.mxu0 0
        %4930 = vmatprep.subr.bf16.mxu0 0
        %4931 = vmatpush1.bf16.xpose.msra.mxu0 0
        %4932 = vmatprep.subr.bf16.mxu0 0
        %4933 = vmatpush1.bf16.xpose.msra.mxu0 0
        %4934 = vmatprep.subr.bf16.mxu0 0
        %4935 = vmatpush1.bf16.xpose.msra.mxu0 0
        %4936 = vmatprep.subr.bf16.mxu0 0
        %4937 = vmatpush1.bf16.xpose.msra.mxu0 0
        %4938 = vmatprep.subr.bf16.mxu0 0
        %4939 = vmatpush1.bf16.xpose.msra.mxu0 0
        %4940 = vmatprep.subr.bf16.mxu0 0
        %4941 = vmatpush1.bf16.xpose.msra.mxu0 0
        %4942 = vmatprep.subr.bf16.mxu0 0
        %4943 = vmatpush1.bf16.xpose.msra.mxu0 0
        %4944 = vmatprep.subr.bf16.mxu0 0
        %4945 = vmatpush1.bf16.xpose.msra.mxu0 0
        %4946 = vmatprep.subr.bf16.mxu0 0
        %4947 = vmatpush1.bf16.xpose.msra.mxu0 0
        %4948 = vmatprep.mubr.bf16.mxu0 0
        %4949 = vmatmul.mubr.bf16.gmra.mrb[0].mxu0 %v4911
        %v4950 = vpop.f32.mrb[0].mxu0
        %v4951 = vadd.f32 0.0, %v4950
        %v4952 = vpop.f32.mrb[0].mxu0
        %v4953 = vpop.f32.mrb[0].mxu0
        %v4954 = vpop.f32.mrb[0].mxu0
        %4955 = vdwg.mxu0
        %v4956 = vmul.f32 %v4899, 0.125
        %v4957 = vmul.f32 %v4951, 0.125
        %v4958 = vadd.f32 %v4956, %v3517
        %v4959 = vadd.f32 %v4957, %v3518
        %v4960 = vsel %vm3744, %v4958, -inf
        %4961 = vmax.xlane.f32.xlu0 %v4960
        %v4962 = vpop.xlane.xlu0 %4961
        %v4963 = vsel %vm3744, %v4959, -inf
        %4964 = vmax.xlane.f32.xlu0 %v4963
        %v4965 = vpop.xlane.xlu0 %4964
        %v4966 = vsub.f32 %v4958, %v4962
        %v4967 = vsub.f32 %v4959, %v4965
        %v4968 = vmul.f32 %v4966, 1.442695
        %v4969 = vpow.pop %v4968
        %v4970 = vmul.f32 %v4967, 1.442695
        %v4971 = vpow.pop %v4970
        %v4972 = vsel %vm3744, %v4969, 0.0
        %4973 = vadd.xlane.f32.xlu0 %v4972
        %v4974 = vpop.xlane.xlu0 %4973
        %v4975 = vsel %vm3744, %v4971, 0.0
        %4976 = vadd.xlane.f32.xlu0 %v4975
        %v4977 = vpop.xlane.xlu0 %4976
        %v4978 = vrcp.pop %v4974
        %v4979 = vrcp.pop %v4977
        %v4980 = vmul.f32 %v4969, %v4978
        %v4981 = vmul.f32 %v4971, %v4979
        %s4982 = scalar_lea.vmem %s593, 24 [#allocation17]
        %4983 = vst.msk [vmem:[%s4982] sm:$0xff] %vm3744, %v4980
        %4984 = vst.msk [vmem:[%s4982 + $0x40] sm:$0xff] %vm3744, %v4981
        %v4985 = vpack.c.bf16 %v4980, %v4980
        %v4986 = vpack.c.bf16 %v4981, %v4981
        %4987 = vrot.lane.b32.xlu0 %v3513, 64
        %v4988 = vpop.permute.xlu0 %4987
        %v4989 = vrot.slane %v4988, 4
        %v4991 = vsel %vm3744, %v4985, 0
        %v4994 = vsel %vm3774, %v4989, 0
        %4996 = vmatprep.subr.bf16.mxu0 0
        %4997 = vmatpush1.bf16.msra.mxu0 %v4994
        %4998 = vmatprep.subr.bf16.mxu0 0
        %4999 = vmatpush1.bf16.msra.mxu0 0
        %5000 = vmatprep.subr.bf16.mxu0 0
        %5001 = vmatpush1.bf16.msra.mxu0 0
        %5002 = vmatprep.subr.bf16.mxu0 0
        %5003 = vmatpush1.bf16.msra.mxu0 0
        %5004 = vmatprep.subr.bf16.mxu0 0
        %5005 = vmatpush1.bf16.msra.mxu0 0
        %5006 = vmatprep.subr.bf16.mxu0 0
        %5007 = vmatpush1.bf16.msra.mxu0 0
        %5008 = vmatprep.subr.bf16.mxu0 0
        %5009 = vmatpush1.bf16.msra.mxu0 0
        %5010 = vmatprep.subr.bf16.mxu0 0
        %5011 = vmatpush1.bf16.msra.mxu0 0
        %5012 = vmatprep.subr.bf16.mxu0 0
        %5013 = vmatpush1.bf16.msra.mxu0 0
        %5014 = vmatprep.subr.bf16.mxu0 0
        %5015 = vmatpush1.bf16.msra.mxu0 0
        %5016 = vmatprep.subr.bf16.mxu0 0
        %5017 = vmatpush1.bf16.msra.mxu0 0
        %5018 = vmatprep.subr.bf16.mxu0 0
        %5019 = vmatpush1.bf16.msra.mxu0 0
        %5020 = vmatprep.subr.bf16.mxu0 0
        %5021 = vmatpush1.bf16.msra.mxu0 0
        %5022 = vmatprep.subr.bf16.mxu0 0
        %5023 = vmatpush1.bf16.msra.mxu0 0
        %5024 = vmatprep.subr.bf16.mxu0 0
        %5025 = vmatpush1.bf16.msra.mxu0 0
        %5026 = vmatprep.subr.bf16.mxu0 0
        %5027 = vmatpush1.bf16.msra.mxu0 0
        %5028 = vmatprep.mubr.bf16.mxu0 0
        %5029 = vmatmul.mubr.bf16.gmra.mrb[0].mxu0 %v4991
        %v5030 = vpop.f32.mrb[0].mxu0
        %v5031 = vadd.f32 0.0, %v5030
        %v5032 = vpop.f32.mrb[0].mxu0
        %v5033 = vpop.f32.mrb[0].mxu0
        %v5034 = vpop.f32.mrb[0].mxu0
        %5035 = vdwg.mxu0
        %5036 = vrot.lane.b32.xlu0 %v3515, 64
        %v5037 = vpop.permute.xlu0 %5036
        %v5038 = vrot.slane %v5037, 4
        %v5040 = vsel %vm3744, %v4986, 0
        %v5043 = vsel %vm3774, %v5038, 0
        %5045 = vmatprep.subr.bf16.mxu0 0
        %5046 = vmatpush1.bf16.msra.mxu0 %v5043
        %5047 = vmatprep.subr.bf16.mxu0 0
        %5048 = vmatpush1.bf16.msra.mxu0 0
        %5049 = vmatprep.subr.bf16.mxu0 0
        %5050 = vmatpush1.bf16.msra.mxu0 0
        %5051 = vmatprep.subr.bf16.mxu0 0
        %5052 = vmatpush1.bf16.msra.mxu0 0
        %5053 = vmatprep.subr.bf16.mxu0 0
        %5054 = vmatpush1.bf16.msra.mxu0 0
        %5055 = vmatprep.subr.bf16.mxu0 0
        %5056 = vmatpush1.bf16.msra.mxu0 0
        %5057 = vmatprep.subr.bf16.mxu0 0
        %5058 = vmatpush1.bf16.msra.mxu0 0
        %5059 = vmatprep.subr.bf16.mxu0 0
        %5060 = vmatpush1.bf16.msra.mxu0 0
        %5061 = vmatprep.subr.bf16.mxu0 0
        %5062 = vmatpush1.bf16.msra.mxu0 0
        %5063 = vmatprep.subr.bf16.mxu0 0
        %5064 = vmatpush1.bf16.msra.mxu0 0
        %5065 = vmatprep.subr.bf16.mxu0 0
        %5066 = vmatpush1.bf16.msra.mxu0 0
        %5067 = vmatprep.subr.bf16.mxu0 0
        %5068 = vmatpush1.bf16.msra.mxu0 0
        %5069 = vmatprep.subr.bf16.mxu0 0
        %5070 = vmatpush1.bf16.msra.mxu0 0
        %5071 = vmatprep.subr.bf16.mxu0 0
        %5072 = vmatpush1.bf16.msra.mxu0 0
        %5073 = vmatprep.subr.bf16.mxu0 0
        %5074 = vmatpush1.bf16.msra.mxu0 0
        %5075 = vmatprep.subr.bf16.mxu0 0
        %5076 = vmatpush1.bf16.msra.mxu0 0
        %5077 = vmatprep.mubr.bf16.mxu0 0
        %5078 = vmatmul.mubr.bf16.gmra.mrb[0].mxu0 %v5040
        %v5079 = vpop.f32.mrb[0].mxu0
        %v5080 = vadd.f32 0.0, %v5079
        %v5081 = vpop.f32.mrb[0].mxu0
        %v5082 = vpop.f32.mrb[0].mxu0
        %v5083 = vpop.f32.mrb[0].mxu0
        %5084 = vdwg.mxu0
        %v5085 = vpack.c.bf16 %v5080, %v5031
        %v5102 = vunpack.c.l.b16 %v3567
        %v5103 = vunpack.c.h.b16 %v3567
        %v5104 = vunpack.c.l.b16 %v3568
        %v5105 = vunpack.c.h.b16 %v3568
        %v5106 = vunpack.c.l.b16 %v3569
        %v5107 = vunpack.c.h.b16 %v3569
        %v5108 = vunpack.c.l.b16 %v3570
        %v5109 = vunpack.c.h.b16 %v3570
        %v5110 = vunpack.c.l.b16 %v3571
        %v5111 = vunpack.c.h.b16 %v3571
        %v5112 = vunpack.c.l.b16 %v3572
        %v5113 = vunpack.c.h.b16 %v3572
        %v5114 = vunpack.c.l.b16 %v3573
        %v5115 = vunpack.c.h.b16 %v3573
        %v5116 = vunpack.c.l.b16 %v3574
        %v5117 = vunpack.c.h.b16 %v3574
        %v5118 = vunpack.c.l.b16 %v3575
        %v5119 = vunpack.c.h.b16 %v3575
        %v5120 = vunpack.c.l.b16 %v3576
        %v5121 = vunpack.c.h.b16 %v3576
        %v5122 = vunpack.c.l.b16 %v3577
        %v5123 = vunpack.c.h.b16 %v3577
        %v5124 = vunpack.c.l.b16 %v3578
        %v5125 = vunpack.c.h.b16 %v3578
        %v5126 = vunpack.c.l.b16 %v3579
        %v5127 = vunpack.c.h.b16 %v3579
        %v5128 = vunpack.c.l.b16 %v3580
        %v5129 = vunpack.c.h.b16 %v3580
        %v5130 = vunpack.c.l.b16 %v3581
        %v5131 = vunpack.c.h.b16 %v3581
        %v5132 = vunpack.c.l.b16 %v3582
        %v5133 = vunpack.c.h.b16 %v3582
        %v5134 = vpack.c.b16 %v5106, %v5102
        %v5135 = vpack.c.b16 %v5107, %v5103
        %v5136 = vpack.c.b16 %v5108, %v5104
        %v5137 = vpack.c.b16 %v5109, %v5105
        %v5138 = vpack.c.b16 %v5114, %v5110
        %v5139 = vpack.c.b16 %v5115, %v5111
        %v5140 = vpack.c.b16 %v5116, %v5112
        %v5141 = vpack.c.b16 %v5117, %v5113
        %v5142 = vpack.c.b16 %v5122, %v5118
        %v5143 = vpack.c.b16 %v5123, %v5119
        %v5144 = vpack.c.b16 %v5124, %v5120
        %v5145 = vpack.c.b16 %v5125, %v5121
        %v5146 = vpack.c.b16 %v5130, %v5126
        %v5147 = vpack.c.b16 %v5131, %v5127
        %v5148 = vpack.c.b16 %v5132, %v5128
        %v5149 = vpack.c.b16 %v5133, %v5129
        %v5167 = vsel %vm3647, %v5085, 0
        %5169 = vmatprep.subr.bf16.mxu0 %v5135
        %5170 = vmatpush1.bf16.msra.mxu0 %v5134
        %5171 = vmatprep.subr.bf16.mxu0 %v5139
        %5172 = vmatpush1.bf16.msra.mxu0 %v5138
        %5173 = vmatprep.subr.bf16.mxu0 %v5143
        %5174 = vmatpush1.bf16.msra.mxu0 %v5142
        %5175 = vmatprep.subr.bf16.mxu0 %v5147
        %5176 = vmatpush1.bf16.msra.mxu0 %v5146
        %5177 = vmatprep.subr.bf16.mxu0 0
        %5178 = vmatpush1.bf16.msra.mxu0 0
        %5179 = vmatprep.subr.bf16.mxu0 0
        %5180 = vmatpush1.bf16.msra.mxu0 0
        %5181 = vmatprep.subr.bf16.mxu0 0
        %5182 = vmatpush1.bf16.msra.mxu0 0
        %5183 = vmatprep.subr.bf16.mxu0 0
        %5184 = vmatpush1.bf16.msra.mxu0 0
        %5185 = vmatprep.subr.bf16.mxu0 0
        %5186 = vmatpush1.bf16.msra.mxu0 0
        %5187 = vmatprep.subr.bf16.mxu0 0
        %5188 = vmatpush1.bf16.msra.mxu0 0
        %5189 = vmatprep.subr.bf16.mxu0 0
        %5190 = vmatpush1.bf16.msra.mxu0 0
        %5191 = vmatprep.subr.bf16.mxu0 0
        %5192 = vmatpush1.bf16.msra.mxu0 0
        %5193 = vmatprep.subr.bf16.mxu0 0
        %5194 = vmatpush1.bf16.msra.mxu0 0
        %5195 = vmatprep.subr.bf16.mxu0 0
        %5196 = vmatpush1.bf16.msra.mxu0 0
        %5197 = vmatprep.subr.bf16.mxu0 0
        %5198 = vmatpush1.bf16.msra.mxu0 0
        %5199 = vmatprep.subr.bf16.mxu0 0
        %5200 = vmatpush1.bf16.msra.mxu0 0
        %5201 = vmatprep.mubr.bf16.mxu0 0
        %5202 = vmatmul.mubr.bf16.gmra.mrb[0].mxu0 %v5167
        %v5203 = vpop.f32.mrb[0].mxu0
        %v5204 = vadd.f32 0.0, %v5203
        %v5205 = vpop.f32.mrb[0].mxu0
        %v5206 = vadd.f32 0.0, %v5205
        %v5207 = vpop.f32.mrb[0].mxu0
        %v5208 = vadd.f32 0.0, %v5207
        %v5209 = vpop.f32.mrb[0].mxu0
        %v5210 = vadd.f32 0.0, %v5209
        %5211 = vdwg.mxu0
        %5212 = vmatprep.subr.bf16.mxu0 %v5137
        %5213 = vmatpush1.bf16.msra.mxu0 %v5136
        %5214 = vmatprep.subr.bf16.mxu0 %v5141
        %5215 = vmatpush1.bf16.msra.mxu0 %v5140
        %5216 = vmatprep.subr.bf16.mxu0 %v5145
        %5217 = vmatpush1.bf16.msra.mxu0 %v5144
        %5218 = vmatprep.subr.bf16.mxu0 %v5149
        %5219 = vmatpush1.bf16.msra.mxu0 %v5148
        %5220 = vmatprep.subr.bf16.mxu0 0
        %5221 = vmatpush1.bf16.msra.mxu0 0
        %5222 = vmatprep.subr.bf16.mxu0 0
        %5223 = vmatpush1.bf16.msra.mxu0 0
        %5224 = vmatprep.subr.bf16.mxu0 0
        %5225 = vmatpush1.bf16.msra.mxu0 0
        %5226 = vmatprep.subr.bf16.mxu0 0
        %5227 = vmatpush1.bf16.msra.mxu0 0
        %5228 = vmatprep.subr.bf16.mxu0 0
        %5229 = vmatpush1.bf16.msra.mxu0 0
        %5230 = vmatprep.subr.bf16.mxu0 0
        %5231 = vmatpush1.bf16.msra.mxu0 0
        %5232 = vmatprep.subr.bf16.mxu0 0
        %5233 = vmatpush1.bf16.msra.mxu0 0
        %5234 = vmatprep.subr.bf16.mxu0 0
        %5235 = vmatpush1.bf16.msra.mxu0 0
        %5236 = vmatprep.subr.bf16.mxu0 0
        %5237 = vmatpush1.bf16.msra.mxu0 0
        %5238 = vmatprep.subr.bf16.mxu0 0
        %5239 = vmatpush1.bf16.msra.mxu0 0
        %5240 = vmatprep.subr.bf16.mxu0 0
        %5241 = vmatpush1.bf16.msra.mxu0 0
        %5242 = vmatprep.subr.bf16.mxu0 0
        %5243 = vmatpush1.bf16.msra.mxu0 0
        %5244 = vmatprep.mubr.bf16.mxu0 0
        %5245 = vmatmul.mubr.bf16.gmra.mrb[0].mxu0 %v5167
        %v5246 = vpop.f32.mrb[0].mxu0
        %v5247 = vadd.f32 0.0, %v5246
        %v5248 = vpop.f32.mrb[0].mxu0
        %v5249 = vadd.f32 0.0, %v5248
        %v5250 = vpop.f32.mrb[0].mxu0
        %v5251 = vadd.f32 0.0, %v5250
        %v5252 = vpop.f32.mrb[0].mxu0
        %v5253 = vadd.f32 0.0, %v5252
        %5254 = vdwg.mxu0
        %v5255 = vadd.f32 %v4844, %v5204
        %v5256 = vadd.f32 %v4845, %v5206
        %v5257 = vadd.f32 %v4846, %v5247
        %v5258 = vadd.f32 %v4847, %v5249
        %v5259 = vadd.f32 %v4848, %v5208
        %v5260 = vadd.f32 %v4849, %v5210
        %v5261 = vadd.f32 %v4850, %v5251
        %v5262 = vadd.f32 %v4851, %v5253
        %v5264 = vsel %vm3647, %v3474, 0
        %v5267 = vsel %vm3647, %v3494, 0
        %5269 = vmatprep.subr.bf16.mxu0 0
        %5270 = vmatpush1.bf16.xpose.msra.mxu0 %v5267
        %5271 = vmatprep.subr.bf16.mxu0 0
        %5272 = vmatpush1.bf16.xpose.msra.mxu0 0
        %5273 = vmatprep.subr.bf16.mxu0 0
        %5274 = vmatpush1.bf16.xpose.msra.mxu0 0
        %5275 = vmatprep.subr.bf16.mxu0 0
        %5276 = vmatpush1.bf16.xpose.msra.mxu0 0
        %5277 = vmatprep.subr.bf16.mxu0 0
        %5278 = vmatpush1.bf16.xpose.msra.mxu0 0
        %5279 = vmatprep.subr.bf16.mxu0 0
        %5280 = vmatpush1.bf16.xpose.msra.mxu0 0
        %5281 = vmatprep.subr.bf16.mxu0 0
        %5282 = vmatpush1.bf16.xpose.msra.mxu0 0
        %5283 = vmatprep.subr.bf16.mxu0 0
        %5284 = vmatpush1.bf16.xpose.msra.mxu0 0
        %5285 = vmatprep.subr.bf16.mxu0 0
        %5286 = vmatpush1.bf16.xpose.msra.mxu0 0
        %5287 = vmatprep.subr.bf16.mxu0 0
        %5288 = vmatpush1.bf16.xpose.msra.mxu0 0
        %5289 = vmatprep.subr.bf16.mxu0 0
        %5290 = vmatpush1.bf16.xpose.msra.mxu0 0
        %5291 = vmatprep.subr.bf16.mxu0 0
        %5292 = vmatpush1.bf16.xpose.msra.mxu0 0
        %5293 = vmatprep.subr.bf16.mxu0 0
        %5294 = vmatpush1.bf16.xpose.msra.mxu0 0
        %5295 = vmatprep.subr.bf16.mxu0 0
        %5296 = vmatpush1.bf16.xpose.msra.mxu0 0
        %5297 = vmatprep.subr.bf16.mxu0 0
        %5298 = vmatpush1.bf16.xpose.msra.mxu0 0
        %5299 = vmatprep.subr.bf16.mxu0 0
        %5300 = vmatpush1.bf16.xpose.msra.mxu0 0
        %5301 = vmatprep.mubr.bf16.mxu0 0
        %5302 = vmatmul.mubr.bf16.gmra.mrb[0].mxu0 %v5264
        %v5303 = vpop.f32.mrb[0].mxu0
        %v5304 = vadd.f32 0.0, %v5303
        %v5305 = vpop.f32.mrb[0].mxu0
        %v5306 = vpop.f32.mrb[0].mxu0
        %v5307 = vpop.f32.mrb[0].mxu0
        %5308 = vdwg.mxu0
        %v5310 = vsel %vm3647, %v3476, 0
        %v5313 = vsel %vm3647, %v3496, 0
        %5315 = vmatprep.subr.bf16.mxu0 0
        %5316 = vmatpush1.bf16.xpose.msra.mxu0 %v5313
        %5317 = vmatprep.subr.bf16.mxu0 0
        %5318 = vmatpush1.bf16.xpose.msra.mxu0 0
        %5319 = vmatprep.subr.bf16.mxu0 0
        %5320 = vmatpush1.bf16.xpose.msra.mxu0 0
        %5321 = vmatprep.subr.bf16.mxu0 0
        %5322 = vmatpush1.bf16.xpose.msra.mxu0 0
        %5323 = vmatprep.subr.bf16.mxu0 0
        %5324 = vmatpush1.bf16.xpose.msra.mxu0 0
        %5325 = vmatprep.subr.bf16.mxu0 0
        %5326 = vmatpush1.bf16.xpose.msra.mxu0 0
        %5327 = vmatprep.subr.bf16.mxu0 0
        %5328 = vmatpush1.bf16.xpose.msra.mxu0 0
        %5329 = vmatprep.subr.bf16.mxu0 0
        %5330 = vmatpush1.bf16.xpose.msra.mxu0 0
        %5331 = vmatprep.subr.bf16.mxu0 0
        %5332 = vmatpush1.bf16.xpose.msra.mxu0 0
        %5333 = vmatprep.subr.bf16.mxu0 0
        %5334 = vmatpush1.bf16.xpose.msra.mxu0 0
        %5335 = vmatprep.subr.bf16.mxu0 0
        %5336 = vmatpush1.bf16.xpose.msra.mxu0 0
        %5337 = vmatprep.subr.bf16.mxu0 0
        %5338 = vmatpush1.bf16.xpose.msra.mxu0 0
        %5339 = vmatprep.subr.bf16.mxu0 0
        %5340 = vmatpush1.bf16.xpose.msra.mxu0 0
        %5341 = vmatprep.subr.bf16.mxu0 0
        %5342 = vmatpush1.bf16.xpose.msra.mxu0 0
        %5343 = vmatprep.subr.bf16.mxu0 0
        %5344 = vmatpush1.bf16.xpose.msra.mxu0 0
        %5345 = vmatprep.subr.bf16.mxu0 0
        %5346 = vmatpush1.bf16.xpose.msra.mxu0 0
        %5347 = vmatprep.mubr.bf16.mxu0 0
        %5348 = vmatmul.mubr.bf16.gmra.mrb[0].mxu0 %v5310
        %v5349 = vpop.f32.mrb[0].mxu0
        %v5350 = vadd.f32 0.0, %v5349
        %v5351 = vpop.f32.mrb[0].mxu0
        %v5352 = vpop.f32.mrb[0].mxu0
        %v5353 = vpop.f32.mrb[0].mxu0
        %5354 = vdwg.mxu0
        %v5355 = vmul.f32 %v5304, 0.125
        %v5356 = vmul.f32 %v5350, 0.125
        %v5357 = vadd.f32 %v5355, %v3517
        %v5358 = vadd.f32 %v5356, %v3518
        %v5359 = vsel %vm3744, %v5357, -inf
        %5360 = vmax.xlane.f32.xlu0 %v5359
        %v5361 = vpop.xlane.xlu0 %5360
        %v5362 = vsel %vm3744, %v5358, -inf
        %5363 = vmax.xlane.f32.xlu0 %v5362
        %v5364 = vpop.xlane.xlu0 %5363
        %v5365 = vsub.f32 %v5357, %v5361
        %v5366 = vsub.f32 %v5358, %v5364
        %v5367 = vmul.f32 %v5365, 1.442695
        %v5368 = vpow.pop %v5367
        %v5369 = vmul.f32 %v5366, 1.442695
        %v5370 = vpow.pop %v5369
        %v5371 = vsel %vm3744, %v5368, 0.0
        %5372 = vadd.xlane.f32.xlu0 %v5371
        %v5373 = vpop.xlane.xlu0 %5372
        %v5374 = vsel %vm3744, %v5370, 0.0
        %5375 = vadd.xlane.f32.xlu0 %v5374
        %v5376 = vpop.xlane.xlu0 %5375
        %v5377 = vrcp.pop %v5373
        %v5378 = vrcp.pop %v5376
        %v5379 = vmul.f32 %v5368, %v5377
        %v5380 = vmul.f32 %v5370, %v5378
        %s5381 = scalar_lea.vmem %s593, 32 [#allocation17]
        %5382 = vst.msk [vmem:[%s5381] sm:$0xff] %vm3744, %v5379
        %5383 = vst.msk [vmem:[%s5381 + $0x40] sm:$0xff] %vm3744, %v5380
        %v5384 = vpack.c.bf16 %v5379, %v5379
        %v5385 = vpack.c.bf16 %v5380, %v5380
        %v5387 = vsel %vm3744, %v5384, 0
        %v5390 = vsel %vm3774, %v3514, 0
        %5392 = vmatprep.subr.bf16.mxu0 0
        %5393 = vmatpush1.bf16.msra.mxu0 %v5390
        %5394 = vmatprep.subr.bf16.mxu0 0
        %5395 = vmatpush1.bf16.msra.mxu0 0
        %5396 = vmatprep.subr.bf16.mxu0 0
        %5397 = vmatpush1.bf16.msra.mxu0 0
        %5398 = vmatprep.subr.bf16.mxu0 0
        %5399 = vmatpush1.bf16.msra.mxu0 0
        %5400 = vmatprep.subr.bf16.mxu0 0
        %5401 = vmatpush1.bf16.msra.mxu0 0
        %5402 = vmatprep.subr.bf16.mxu0 0
        %5403 = vmatpush1.bf16.msra.mxu0 0
        %5404 = vmatprep.subr.bf16.mxu0 0
        %5405 = vmatpush1.bf16.msra.mxu0 0
        %5406 = vmatprep.subr.bf16.mxu0 0
        %5407 = vmatpush1.bf16.msra.mxu0 0
        %5408 = vmatprep.subr.bf16.mxu0 0
        %5409 = vmatpush1.bf16.msra.mxu0 0
        %5410 = vmatprep.subr.bf16.mxu0 0
        %5411 = vmatpush1.bf16.msra.mxu0 0
        %5412 = vmatprep.subr.bf16.mxu0 0
        %5413 = vmatpush1.bf16.msra.mxu0 0
        %5414 = vmatprep.subr.bf16.mxu0 0
        %5415 = vmatpush1.bf16.msra.mxu0 0
        %5416 = vmatprep.subr.bf16.mxu0 0
        %5417 = vmatpush1.bf16.msra.mxu0 0
        %5418 = vmatprep.subr.bf16.mxu0 0
        %5419 = vmatpush1.bf16.msra.mxu0 0
        %5420 = vmatprep.subr.bf16.mxu0 0
        %5421 = vmatpush1.bf16.msra.mxu0 0
        %5422 = vmatprep.subr.bf16.mxu0 0
        %5423 = vmatpush1.bf16.msra.mxu0 0
        %5424 = vmatprep.mubr.bf16.mxu0 0
        %5425 = vmatmul.mubr.bf16.gmra.mrb[0].mxu0 %v5387
        %v5426 = vpop.f32.mrb[0].mxu0
        %v5427 = vadd.f32 0.0, %v5426
        %v5428 = vpop.f32.mrb[0].mxu0
        %v5429 = vpop.f32.mrb[0].mxu0
        %v5430 = vpop.f32.mrb[0].mxu0
        %5431 = vdwg.mxu0
        %v5433 = vsel %vm3744, %v5385, 0
        %v5436 = vsel %vm3774, %v3516, 0
        %5438 = vmatprep.subr.bf16.mxu0 0
        %5439 = vmatpush1.bf16.msra.mxu0 %v5436
        %5440 = vmatprep.subr.bf16.mxu0 0
        %5441 = vmatpush1.bf16.msra.mxu0 0
        %5442 = vmatprep.subr.bf16.mxu0 0
        %5443 = vmatpush1.bf16.msra.mxu0 0
        %5444 = vmatprep.subr.bf16.mxu0 0
        %5445 = vmatpush1.bf16.msra.mxu0 0
        %5446 = vmatprep.subr.bf16.mxu0 0
        %5447 = vmatpush1.bf16.msra.mxu0 0
        %5448 = vmatprep.subr.bf16.mxu0 0
        %5449 = vmatpush1.bf16.msra.mxu0 0
        %5450 = vmatprep.subr.bf16.mxu0 0
        %5451 = vmatpush1.bf16.msra.mxu0 0
        %5452 = vmatprep.subr.bf16.mxu0 0
        %5453 = vmatpush1.bf16.msra.mxu0 0
        %5454 = vmatprep.subr.bf16.mxu0 0
        %5455 = vmatpush1.bf16.msra.mxu0 0
        %5456 = vmatprep.subr.bf16.mxu0 0
        %5457 = vmatpush1.bf16.msra.mxu0 0
        %5458 = vmatprep.subr.bf16.mxu0 0
        %5459 = vmatpush1.bf16.msra.mxu0 0
        %5460 = vmatprep.subr.bf16.mxu0 0
        %5461 = vmatpush1.bf16.msra.mxu0 0
        %5462 = vmatprep.subr.bf16.mxu0 0
        %5463 = vmatpush1.bf16.msra.mxu0 0
        %5464 = vmatprep.subr.bf16.mxu0 0
        %5465 = vmatpush1.bf16.msra.mxu0 0
        %5466 = vmatprep.subr.bf16.mxu0 0
        %5467 = vmatpush1.bf16.msra.mxu0 0
        %5468 = vmatprep.subr.bf16.mxu0 0
        %5469 = vmatpush1.bf16.msra.mxu0 0
        %5470 = vmatprep.mubr.bf16.mxu0 0
        %5471 = vmatmul.mubr.bf16.gmra.mrb[0].mxu0 %v5433
        %v5472 = vpop.f32.mrb[0].mxu0
        %v5473 = vadd.f32 0.0, %v5472
        %v5474 = vpop.f32.mrb[0].mxu0
        %v5475 = vpop.f32.mrb[0].mxu0
        %v5476 = vpop.f32.mrb[0].mxu0
        %5477 = vdwg.mxu0
        %v5478 = vpack.c.bf16 %v5473, %v5427
        %v5495 = vunpack.c.l.b16 %v3583
        %v5496 = vunpack.c.h.b16 %v3583
        %v5497 = vunpack.c.l.b16 %v3584
        %v5498 = vunpack.c.h.b16 %v3584
        %v5499 = vunpack.c.l.b16 %v3585
        %v5500 = vunpack.c.h.b16 %v3585
        %v5501 = vunpack.c.l.b16 %v3586
        %v5502 = vunpack.c.h.b16 %v3586
        %v5503 = vunpack.c.l.b16 %v3587
        %v5504 = vunpack.c.h.b16 %v3587
        %v5505 = vunpack.c.l.b16 %v3588
        %v5506 = vunpack.c.h.b16 %v3588
        %v5507 = vunpack.c.l.b16 %v3589
        %v5508 = vunpack.c.h.b16 %v3589
        %v5509 = vunpack.c.l.b16 %v3590
        %v5510 = vunpack.c.h.b16 %v3590
        %v5511 = vunpack.c.l.b16 %v3591
        %v5512 = vunpack.c.h.b16 %v3591
        %v5513 = vunpack.c.l.b16 %v3592
        %v5514 = vunpack.c.h.b16 %v3592
        %v5515 = vunpack.c.l.b16 %v3593
        %v5516 = vunpack.c.h.b16 %v3593
        %v5517 = vunpack.c.l.b16 %v3594
        %v5518 = vunpack.c.h.b16 %v3594
        %v5519 = vunpack.c.l.b16 %v3595
        %v5520 = vunpack.c.h.b16 %v3595
        %v5521 = vunpack.c.l.b16 %v3596
        %v5522 = vunpack.c.h.b16 %v3596
        %v5523 = vunpack.c.l.b16 %v3597
        %v5524 = vunpack.c.h.b16 %v3597
        %v5525 = vunpack.c.l.b16 %v3598
        %v5526 = vunpack.c.h.b16 %v3598
        %v5527 = vpack.c.b16 %v5499, %v5495
        %v5528 = vpack.c.b16 %v5500, %v5496
        %v5529 = vpack.c.b16 %v5501, %v5497
        %v5530 = vpack.c.b16 %v5502, %v5498
        %v5531 = vpack.c.b16 %v5507, %v5503
        %v5532 = vpack.c.b16 %v5508, %v5504
        %v5533 = vpack.c.b16 %v5509, %v5505
        %v5534 = vpack.c.b16 %v5510, %v5506
        %v5535 = vpack.c.b16 %v5515, %v5511
        %v5536 = vpack.c.b16 %v5516, %v5512
        %v5537 = vpack.c.b16 %v5517, %v5513
        %v5538 = vpack.c.b16 %v5518, %v5514
        %v5539 = vpack.c.b16 %v5523, %v5519
        %v5540 = vpack.c.b16 %v5524, %v5520
        %v5541 = vpack.c.b16 %v5525, %v5521
        %v5542 = vpack.c.b16 %v5526, %v5522
        %v5560 = vsel %vm3647, %v5478, 0
        %5562 = vmatprep.subr.bf16.mxu0 %v5528
        %5563 = vmatpush1.bf16.msra.mxu0 %v5527
        %5564 = vmatprep.subr.bf16.mxu0 %v5532
        %5565 = vmatpush1.bf16.msra.mxu0 %v5531
        %5566 = vmatprep.subr.bf16.mxu0 %v5536
        %5567 = vmatpush1.bf16.msra.mxu0 %v5535
        %5568 = vmatprep.subr.bf16.mxu0 %v5540
        %5569 = vmatpush1.bf16.msra.mxu0 %v5539
        %5570 = vmatprep.subr.bf16.mxu0 0
        %5571 = vmatpush1.bf16.msra.mxu0 0
        %5572 = vmatprep.subr.bf16.mxu0 0
        %5573 = vmatpush1.bf16.msra.mxu0 0
        %5574 = vmatprep.subr.bf16.mxu0 0
        %5575 = vmatpush1.bf16.msra.mxu0 0
        %5576 = vmatprep.subr.bf16.mxu0 0
        %5577 = vmatpush1.bf16.msra.mxu0 0
        %5578 = vmatprep.subr.bf16.mxu0 0
        %5579 = vmatpush1.bf16.msra.mxu0 0
        %5580 = vmatprep.subr.bf16.mxu0 0
        %5581 = vmatpush1.bf16.msra.mxu0 0
        %5582 = vmatprep.subr.bf16.mxu0 0
        %5583 = vmatpush1.bf16.msra.mxu0 0
        %5584 = vmatprep.subr.bf16.mxu0 0
        %5585 = vmatpush1.bf16.msra.mxu0 0
        %5586 = vmatprep.subr.bf16.mxu0 0
        %5587 = vmatpush1.bf16.msra.mxu0 0
        %5588 = vmatprep.subr.bf16.mxu0 0
        %5589 = vmatpush1.bf16.msra.mxu0 0
        %5590 = vmatprep.subr.bf16.mxu0 0
        %5591 = vmatpush1.bf16.msra.mxu0 0
        %5592 = vmatprep.subr.bf16.mxu0 0
        %5593 = vmatpush1.bf16.msra.mxu0 0
        %5594 = vmatprep.mubr.bf16.mxu0 0
        %5595 = vmatmul.mubr.bf16.gmra.mrb[0].mxu0 %v5560
        %v5596 = vpop.f32.mrb[0].mxu0
        %v5597 = vadd.f32 0.0, %v5596
        %v5598 = vpop.f32.mrb[0].mxu0
        %v5599 = vadd.f32 0.0, %v5598
        %v5600 = vpop.f32.mrb[0].mxu0
        %v5601 = vadd.f32 0.0, %v5600
        %v5602 = vpop.f32.mrb[0].mxu0
        %v5603 = vadd.f32 0.0, %v5602
        %5604 = vdwg.mxu0
        %5605 = vmatprep.subr.bf16.mxu0 %v5530
        %5606 = vmatpush1.bf16.msra.mxu0 %v5529
        %5607 = vmatprep.subr.bf16.mxu0 %v5534
        %5608 = vmatpush1.bf16.msra.mxu0 %v5533
        %5609 = vmatprep.subr.bf16.mxu0 %v5538
        %5610 = vmatpush1.bf16.msra.mxu0 %v5537
        %5611 = vmatprep.subr.bf16.mxu0 %v5542
        %5612 = vmatpush1.bf16.msra.mxu0 %v5541
        %5613 = vmatprep.subr.bf16.mxu0 0
        %5614 = vmatpush1.bf16.msra.mxu0 0
        %5615 = vmatprep.subr.bf16.mxu0 0
        %5616 = vmatpush1.bf16.msra.mxu0 0
        %5617 = vmatprep.subr.bf16.mxu0 0
        %5618 = vmatpush1.bf16.msra.mxu0 0
        %5619 = vmatprep.subr.bf16.mxu0 0
        %5620 = vmatpush1.bf16.msra.mxu0 0
        %5621 = vmatprep.subr.bf16.mxu0 0
        %5622 = vmatpush1.bf16.msra.mxu0 0
        %5623 = vmatprep.subr.bf16.mxu0 0
        %5624 = vmatpush1.bf16.msra.mxu0 0
        %5625 = vmatprep.subr.bf16.mxu0 0
        %5626 = vmatpush1.bf16.msra.mxu0 0
        %5627 = vmatprep.subr.bf16.mxu0 0
        %5628 = vmatpush1.bf16.msra.mxu0 0
        %5629 = vmatprep.subr.bf16.mxu0 0
        %5630 = vmatpush1.bf16.msra.mxu0 0
        %5631 = vmatprep.subr.bf16.mxu0 0
        %5632 = vmatpush1.bf16.msra.mxu0 0
        %5633 = vmatprep.subr.bf16.mxu0 0
        %5634 = vmatpush1.bf16.msra.mxu0 0
        %5635 = vmatprep.subr.bf16.mxu0 0
        %5636 = vmatpush1.bf16.msra.mxu0 0
        %5637 = vmatprep.mubr.bf16.mxu0 0
        %5638 = vmatmul.mubr.bf16.gmra.mrb[0].mxu0 %v5560
        %v5639 = vpop.f32.mrb[0].mxu0
        %v5640 = vadd.f32 0.0, %v5639
        %v5641 = vpop.f32.mrb[0].mxu0
        %v5642 = vadd.f32 0.0, %v5641
        %v5643 = vpop.f32.mrb[0].mxu0
        %v5644 = vadd.f32 0.0, %v5643
        %v5645 = vpop.f32.mrb[0].mxu0
        %v5646 = vadd.f32 0.0, %v5645
        %5647 = vdwg.mxu0
        %v5648 = vadd.f32 %v5255, %v5597
        %v5649 = vadd.f32 %v5256, %v5599
        %v5650 = vadd.f32 %v5257, %v5640
        %v5651 = vadd.f32 %v5258, %v5642
        %v5652 = vadd.f32 %v5259, %v5601
        %v5653 = vadd.f32 %v5260, %v5603
        %v5654 = vadd.f32 %v5261, %v5644
        %v5655 = vadd.f32 %v5262, %v5646
        %v5656 = vpack.c.b16 %v3467, %v3467
        %5657 = vrot.lane.b32.xlu0 %v5656, 64
        %v5658 = vpop.permute.xlu0 %5657
        %v5659 = vpack.c.b16 %v3487, %v3487
        %5660 = vrot.lane.b32.xlu0 %v5659, 64
        %v5661 = vpop.permute.xlu0 %5660
        %v5663 = vsel %vm3647, %v5658, 0
        %v5666 = vsel %vm3647, %v5661, 0
        %5668 = vmatprep.subr.bf16.mxu0 0
        %5669 = vmatpush1.bf16.xpose.msra.mxu0 %v5666
        %5670 = vmatprep.subr.bf16.mxu0 0
        %5671 = vmatpush1.bf16.xpose.msra.mxu0 0
        %5672 = vmatprep.subr.bf16.mxu0 0
        %5673 = vmatpush1.bf16.xpose.msra.mxu0 0
        %5674 = vmatprep.subr.bf16.mxu0 0
        %5675 = vmatpush1.bf16.xpose.msra.mxu0 0
        %5676 = vmatprep.subr.bf16.mxu0 0
        %5677 = vmatpush1.bf16.xpose.msra.mxu0 0
        %5678 = vmatprep.subr.bf16.mxu0 0
        %5679 = vmatpush1.bf16.xpose.msra.mxu0 0
        %5680 = vmatprep.subr.bf16.mxu0 0
        %5681 = vmatpush1.bf16.xpose.msra.mxu0 0
        %5682 = vmatprep.subr.bf16.mxu0 0
        %5683 = vmatpush1.bf16.xpose.msra.mxu0 0
        %5684 = vmatprep.subr.bf16.mxu0 0
        %5685 = vmatpush1.bf16.xpose.msra.mxu0 0
        %5686 = vmatprep.subr.bf16.mxu0 0
        %5687 = vmatpush1.bf16.xpose.msra.mxu0 0
        %5688 = vmatprep.subr.bf16.mxu0 0
        %5689 = vmatpush1.bf16.xpose.msra.mxu0 0
        %5690 = vmatprep.subr.bf16.mxu0 0
        %5691 = vmatpush1.bf16.xpose.msra.mxu0 0
        %5692 = vmatprep.subr.bf16.mxu0 0
        %5693 = vmatpush1.bf16.xpose.msra.mxu0 0
        %5694 = vmatprep.subr.bf16.mxu0 0
        %5695 = vmatpush1.bf16.xpose.msra.mxu0 0
        %5696 = vmatprep.subr.bf16.mxu0 0
        %5697 = vmatpush1.bf16.xpose.msra.mxu0 0
        %5698 = vmatprep.subr.bf16.mxu0 0
        %5699 = vmatpush1.bf16.xpose.msra.mxu0 0
        %5700 = vmatprep.mubr.bf16.mxu0 0
        %5701 = vmatmul.mubr.bf16.gmra.mrb[0].mxu0 %v5663
        %v5702 = vpop.f32.mrb[0].mxu0
        %v5703 = vadd.f32 0.0, %v5702
        %v5704 = vpop.f32.mrb[0].mxu0
        %v5705 = vpop.f32.mrb[0].mxu0
        %v5706 = vpop.f32.mrb[0].mxu0
        %5707 = vdwg.mxu0
        %v5708 = vpack.c.b16 %v3471, %v3471
        %5709 = vrot.lane.b32.xlu0 %v5708, 64
        %v5710 = vpop.permute.xlu0 %5709
        %v5711 = vpack.c.b16 %v3491, %v3491
        %5712 = vrot.lane.b32.xlu0 %v5711, 64
        %v5713 = vpop.permute.xlu0 %5712
        %v5715 = vsel %vm3647, %v5710, 0
        %v5718 = vsel %vm3647, %v5713, 0
        %5720 = vmatprep.subr.bf16.mxu0 0
        %5721 = vmatpush1.bf16.xpose.msra.mxu0 %v5718
        %5722 = vmatprep.subr.bf16.mxu0 0
        %5723 = vmatpush1.bf16.xpose.msra.mxu0 0
        %5724 = vmatprep.subr.bf16.mxu0 0
        %5725 = vmatpush1.bf16.xpose.msra.mxu0 0
        %5726 = vmatprep.subr.bf16.mxu0 0
        %5727 = vmatpush1.bf16.xpose.msra.mxu0 0
        %5728 = vmatprep.subr.bf16.mxu0 0
        %5729 = vmatpush1.bf16.xpose.msra.mxu0 0
        %5730 = vmatprep.subr.bf16.mxu0 0
        %5731 = vmatpush1.bf16.xpose.msra.mxu0 0
        %5732 = vmatprep.subr.bf16.mxu0 0
        %5733 = vmatpush1.bf16.xpose.msra.mxu0 0
        %5734 = vmatprep.subr.bf16.mxu0 0
        %5735 = vmatpush1.bf16.xpose.msra.mxu0 0
        %5736 = vmatprep.subr.bf16.mxu0 0
        %5737 = vmatpush1.bf16.xpose.msra.mxu0 0
        %5738 = vmatprep.subr.bf16.mxu0 0
        %5739 = vmatpush1.bf16.xpose.msra.mxu0 0
        %5740 = vmatprep.subr.bf16.mxu0 0
        %5741 = vmatpush1.bf16.xpose.msra.mxu0 0
        %5742 = vmatprep.subr.bf16.mxu0 0
        %5743 = vmatpush1.bf16.xpose.msra.mxu0 0
        %5744 = vmatprep.subr.bf16.mxu0 0
        %5745 = vmatpush1.bf16.xpose.msra.mxu0 0
        %5746 = vmatprep.subr.bf16.mxu0 0
        %5747 = vmatpush1.bf16.xpose.msra.mxu0 0
        %5748 = vmatprep.subr.bf16.mxu0 0
        %5749 = vmatpush1.bf16.xpose.msra.mxu0 0
        %5750 = vmatprep.subr.bf16.mxu0 0
        %5751 = vmatpush1.bf16.xpose.msra.mxu0 0
        %5752 = vmatprep.mubr.bf16.mxu0 0
        %5753 = vmatmul.mubr.bf16.gmra.mrb[0].mxu0 %v5715
        %v5754 = vpop.f32.mrb[0].mxu0
        %v5755 = vadd.f32 0.0, %v5754
        %v5756 = vpop.f32.mrb[0].mxu0
        %v5757 = vpop.f32.mrb[0].mxu0
        %v5758 = vpop.f32.mrb[0].mxu0
        %5759 = vdwg.mxu0
        %v5760 = vmul.f32 %v5703, 0.125
        %v5761 = vmul.f32 %v5755, 0.125
        %v5762 = vadd.f32 %v5760, %v3517
        %v5763 = vadd.f32 %v5761, %v3518
        %v5764 = vsel %vm3744, %v5762, -inf
        %5765 = vmax.xlane.f32.xlu0 %v5764
        %v5766 = vpop.xlane.xlu0 %5765
        %v5767 = vsel %vm3744, %v5763, -inf
        %5768 = vmax.xlane.f32.xlu0 %v5767
        %v5769 = vpop.xlane.xlu0 %5768
        %v5770 = vsub.f32 %v5762, %v5766
        %v5771 = vsub.f32 %v5763, %v5769
        %v5772 = vmul.f32 %v5770, 1.442695
        %v5773 = vpow.pop %v5772
        %v5774 = vmul.f32 %v5771, 1.442695
        %v5775 = vpow.pop %v5774
        %v5776 = vsel %vm3744, %v5773, 0.0
        %5777 = vadd.xlane.f32.xlu0 %v5776
        %v5778 = vpop.xlane.xlu0 %5777
        %v5779 = vsel %vm3744, %v5775, 0.0
        %5780 = vadd.xlane.f32.xlu0 %v5779
        %v5781 = vpop.xlane.xlu0 %5780
        %v5782 = vrcp.pop %v5778
        %v5783 = vrcp.pop %v5781
        %v5784 = vmul.f32 %v5773, %v5782
        %v5785 = vmul.f32 %v5775, %v5783
        %s5786 = scalar_lea.vmem %s593, 40 [#allocation17]
        %5787 = vst.msk [vmem:[%s5786] sm:$0xff] %vm3744, %v5784
        %5788 = vst.msk [vmem:[%s5786 + $0x40] sm:$0xff] %vm3744, %v5785
        %v5789 = vpack.c.bf16 %v5784, %v5784
        %v5790 = vpack.c.bf16 %v5785, %v5785
        %v5791 = vpack.c.b16 %v3507, %v3507
        %5792 = vrot.lane.b32.xlu0 %v5791, 64
        %v5793 = vpop.permute.xlu0 %5792
        %v5795 = vsel %vm3744, %v5789, 0
        %v5798 = vsel %vm3774, %v5793, 0
        %5800 = vmatprep.subr.bf16.mxu0 0
        %5801 = vmatpush1.bf16.msra.mxu0 %v5798
        %5802 = vmatprep.subr.bf16.mxu0 0
        %5803 = vmatpush1.bf16.msra.mxu0 0
        %5804 = vmatprep.subr.bf16.mxu0 0
        %5805 = vmatpush1.bf16.msra.mxu0 0
        %5806 = vmatprep.subr.bf16.mxu0 0
        %5807 = vmatpush1.bf16.msra.mxu0 0
        %5808 = vmatprep.subr.bf16.mxu0 0
        %5809 = vmatpush1.bf16.msra.mxu0 0
        %5810 = vmatprep.subr.bf16.mxu0 0
        %5811 = vmatpush1.bf16.msra.mxu0 0
        %5812 = vmatprep.subr.bf16.mxu0 0
        %5813 = vmatpush1.bf16.msra.mxu0 0
        %5814 = vmatprep.subr.bf16.mxu0 0
        %5815 = vmatpush1.bf16.msra.mxu0 0
        %5816 = vmatprep.subr.bf16.mxu0 0
        %5817 = vmatpush1.bf16.msra.mxu0 0
        %5818 = vmatprep.subr.bf16.mxu0 0
        %5819 = vmatpush1.bf16.msra.mxu0 0
        %5820 = vmatprep.subr.bf16.mxu0 0
        %5821 = vmatpush1.bf16.msra.mxu0 0
        %5822 = vmatprep.subr.bf16.mxu0 0
        %5823 = vmatpush1.bf16.msra.mxu0 0
        %5824 = vmatprep.subr.bf16.mxu0 0
        %5825 = vmatpush1.bf16.msra.mxu0 0
        %5826 = vmatprep.subr.bf16.mxu0 0
        %5827 = vmatpush1.bf16.msra.mxu0 0
        %5828 = vmatprep.subr.bf16.mxu0 0
        %5829 = vmatpush1.bf16.msra.mxu0 0
        %5830 = vmatprep.subr.bf16.mxu0 0
        %5831 = vmatpush1.bf16.msra.mxu0 0
        %5832 = vmatprep.mubr.bf16.mxu0 0
        %5833 = vmatmul.mubr.bf16.gmra.mrb[0].mxu0 %v5795
        %v5834 = vpop.f32.mrb[0].mxu0
        %v5835 = vadd.f32 0.0, %v5834
        %v5836 = vpop.f32.mrb[0].mxu0
        %v5837 = vpop.f32.mrb[0].mxu0
        %v5838 = vpop.f32.mrb[0].mxu0
        %5839 = vdwg.mxu0
        %v5840 = vpack.c.b16 %v3511, %v3511
        %5841 = vrot.lane.b32.xlu0 %v5840, 64
        %v5842 = vpop.permute.xlu0 %5841
        %v5844 = vsel %vm3744, %v5790, 0
        %v5847 = vsel %vm3774, %v5842, 0
        %5849 = vmatprep.subr.bf16.mxu0 0
        %5850 = vmatpush1.bf16.msra.mxu0 %v5847
        %5851 = vmatprep.subr.bf16.mxu0 0
        %5852 = vmatpush1.bf16.msra.mxu0 0
        %5853 = vmatprep.subr.bf16.mxu0 0
        %5854 = vmatpush1.bf16.msra.mxu0 0
        %5855 = vmatprep.subr.bf16.mxu0 0
        %5856 = vmatpush1.bf16.msra.mxu0 0
        %5857 = vmatprep.subr.bf16.mxu0 0
        %5858 = vmatpush1.bf16.msra.mxu0 0
        %5859 = vmatprep.subr.bf16.mxu0 0
        %5860 = vmatpush1.bf16.msra.mxu0 0
        %5861 = vmatprep.subr.bf16.mxu0 0
        %5862 = vmatpush1.bf16.msra.mxu0 0
        %5863 = vmatprep.subr.bf16.mxu0 0
        %5864 = vmatpush1.bf16.msra.mxu0 0
        %5865 = vmatprep.subr.bf16.mxu0 0
        %5866 = vmatpush1.bf16.msra.mxu0 0
        %5867 = vmatprep.subr.bf16.mxu0 0
        %5868 = vmatpush1.bf16.msra.mxu0 0
        %5869 = vmatprep.subr.bf16.mxu0 0
        %5870 = vmatpush1.bf16.msra.mxu0 0
        %5871 = vmatprep.subr.bf16.mxu0 0
        %5872 = vmatpush1.bf16.msra.mxu0 0
        %5873 = vmatprep.subr.bf16.mxu0 0
        %5874 = vmatpush1.bf16.msra.mxu0 0
        %5875 = vmatprep.subr.bf16.mxu0 0
        %5876 = vmatpush1.bf16.msra.mxu0 0
        %5877 = vmatprep.subr.bf16.mxu0 0
        %5878 = vmatpush1.bf16.msra.mxu0 0
        %5879 = vmatprep.subr.bf16.mxu0 0
        %5880 = vmatpush1.bf16.msra.mxu0 0
        %5881 = vmatprep.mubr.bf16.mxu0 0
        %5882 = vmatmul.mubr.bf16.gmra.mrb[0].mxu0 %v5844
        %v5883 = vpop.f32.mrb[0].mxu0
        %v5884 = vadd.f32 0.0, %v5883
        %v5885 = vpop.f32.mrb[0].mxu0
        %v5886 = vpop.f32.mrb[0].mxu0
        %v5887 = vpop.f32.mrb[0].mxu0
        %5888 = vdwg.mxu0
        %v5889 = vpack.c.bf16 %v5884, %v5835
        %v5906 = vunpack.c.l.b16 %v3599
        %v5907 = vunpack.c.h.b16 %v3599
        %v5908 = vunpack.c.l.b16 %v3600
        %v5909 = vunpack.c.h.b16 %v3600
        %v5910 = vunpack.c.l.b16 %v3601
        %v5911 = vunpack.c.h.b16 %v3601
        %v5912 = vunpack.c.l.b16 %v3602
        %v5913 = vunpack.c.h.b16 %v3602
        %v5914 = vunpack.c.l.b16 %v3603
        %v5915 = vunpack.c.h.b16 %v3603
        %v5916 = vunpack.c.l.b16 %v3604
        %v5917 = vunpack.c.h.b16 %v3604
        %v5918 = vunpack.c.l.b16 %v3605
        %v5919 = vunpack.c.h.b16 %v3605
        %v5920 = vunpack.c.l.b16 %v3606
        %v5921 = vunpack.c.h.b16 %v3606
        %v5922 = vunpack.c.l.b16 %v3607
        %v5923 = vunpack.c.h.b16 %v3607
        %v5924 = vunpack.c.l.b16 %v3608
        %v5925 = vunpack.c.h.b16 %v3608
        %v5926 = vunpack.c.l.b16 %v3609
        %v5927 = vunpack.c.h.b16 %v3609
        %v5928 = vunpack.c.l.b16 %v3610
        %v5929 = vunpack.c.h.b16 %v3610
        %v5930 = vunpack.c.l.b16 %v3611
        %v5931 = vunpack.c.h.b16 %v3611
        %v5932 = vunpack.c.l.b16 %v3612
        %v5933 = vunpack.c.h.b16 %v3612
        %v5934 = vunpack.c.l.b16 %v3613
        %v5935 = vunpack.c.h.b16 %v3613
        %v5936 = vunpack.c.l.b16 %v3614
        %v5937 = vunpack.c.h.b16 %v3614
        %v5938 = vpack.c.b16 %v5910, %v5906
        %v5939 = vpack.c.b16 %v5911, %v5907
        %v5940 = vpack.c.b16 %v5912, %v5908
        %v5941 = vpack.c.b16 %v5913, %v5909
        %v5942 = vpack.c.b16 %v5918, %v5914
        %v5943 = vpack.c.b16 %v5919, %v5915
        %v5944 = vpack.c.b16 %v5920, %v5916
        %v5945 = vpack.c.b16 %v5921, %v5917
        %v5946 = vpack.c.b16 %v5926, %v5922
        %v5947 = vpack.c.b16 %v5927, %v5923
        %v5948 = vpack.c.b16 %v5928, %v5924
        %v5949 = vpack.c.b16 %v5929, %v5925
        %v5950 = vpack.c.b16 %v5934, %v5930
        %v5951 = vpack.c.b16 %v5935, %v5931
        %v5952 = vpack.c.b16 %v5936, %v5932
        %v5953 = vpack.c.b16 %v5937, %v5933
        %v5971 = vsel %vm3647, %v5889, 0
        %5973 = vmatprep.subr.bf16.mxu0 %v5939
        %5974 = vmatpush1.bf16.msra.mxu0 %v5938
        %5975 = vmatprep.subr.bf16.mxu0 %v5943
        %5976 = vmatpush1.bf16.msra.mxu0 %v5942
        %5977 = vmatprep.subr.bf16.mxu0 %v5947
        %5978 = vmatpush1.bf16.msra.mxu0 %v5946
        %5979 = vmatprep.subr.bf16.mxu0 %v5951
        %5980 = vmatpush1.bf16.msra.mxu0 %v5950
        %5981 = vmatprep.subr.bf16.mxu0 0
        %5982 = vmatpush1.bf16.msra.mxu0 0
        %5983 = vmatprep.subr.bf16.mxu0 0
        %5984 = vmatpush1.bf16.msra.mxu0 0
        %5985 = vmatprep.subr.bf16.mxu0 0
        %5986 = vmatpush1.bf16.msra.mxu0 0
        %5987 = vmatprep.subr.bf16.mxu0 0
        %5988 = vmatpush1.bf16.msra.mxu0 0
        %5989 = vmatprep.subr.bf16.mxu0 0
        %5990 = vmatpush1.bf16.msra.mxu0 0
        %5991 = vmatprep.subr.bf16.mxu0 0
        %5992 = vmatpush1.bf16.msra.mxu0 0
        %5993 = vmatprep.subr.bf16.mxu0 0
        %5994 = vmatpush1.bf16.msra.mxu0 0
        %5995 = vmatprep.subr.bf16.mxu0 0
        %5996 = vmatpush1.bf16.msra.mxu0 0
        %5997 = vmatprep.subr.bf16.mxu0 0
        %5998 = vmatpush1.bf16.msra.mxu0 0
        %5999 = vmatprep.subr.bf16.mxu0 0
        %6000 = vmatpush1.bf16.msra.mxu0 0
        %6001 = vmatprep.subr.bf16.mxu0 0
        %6002 = vmatpush1.bf16.msra.mxu0 0
        %6003 = vmatprep.subr.bf16.mxu0 0
        %6004 = vmatpush1.bf16.msra.mxu0 0
        %6005 = vmatprep.mubr.bf16.mxu0 0
        %6006 = vmatmul.mubr.bf16.gmra.mrb[0].mxu0 %v5971
        %v6007 = vpop.f32.mrb[0].mxu0
        %v6008 = vadd.f32 0.0, %v6007
        %v6009 = vpop.f32.mrb[0].mxu0
        %v6010 = vadd.f32 0.0, %v6009
        %v6011 = vpop.f32.mrb[0].mxu0
        %v6012 = vadd.f32 0.0, %v6011
        %v6013 = vpop.f32.mrb[0].mxu0
        %v6014 = vadd.f32 0.0, %v6013
        %6015 = vdwg.mxu0
        %6016 = vmatprep.subr.bf16.mxu0 %v5941
        %6017 = vmatpush1.bf16.msra.mxu0 %v5940
        %6018 = vmatprep.subr.bf16.mxu0 %v5945
        %6019 = vmatpush1.bf16.msra.mxu0 %v5944
        %6020 = vmatprep.subr.bf16.mxu0 %v5949
        %6021 = vmatpush1.bf16.msra.mxu0 %v5948
        %6022 = vmatprep.subr.bf16.mxu0 %v5953
        %6023 = vmatpush1.bf16.msra.mxu0 %v5952
        %6024 = vmatprep.subr.bf16.mxu0 0
        %6025 = vmatpush1.bf16.msra.mxu0 0
        %6026 = vmatprep.subr.bf16.mxu0 0
        %6027 = vmatpush1.bf16.msra.mxu0 0
        %6028 = vmatprep.subr.bf16.mxu0 0
        %6029 = vmatpush1.bf16.msra.mxu0 0
        %6030 = vmatprep.subr.bf16.mxu0 0
        %6031 = vmatpush1.bf16.msra.mxu0 0
        %6032 = vmatprep.subr.bf16.mxu0 0
        %6033 = vmatpush1.bf16.msra.mxu0 0
        %6034 = vmatprep.subr.bf16.mxu0 0
        %6035 = vmatpush1.bf16.msra.mxu0 0
        %6036 = vmatprep.subr.bf16.mxu0 0
        %6037 = vmatpush1.bf16.msra.mxu0 0
        %6038 = vmatprep.subr.bf16.mxu0 0
        %6039 = vmatpush1.bf16.msra.mxu0 0
        %6040 = vmatprep.subr.bf16.mxu0 0
        %6041 = vmatpush1.bf16.msra.mxu0 0
        %6042 = vmatprep.subr.bf16.mxu0 0
        %6043 = vmatpush1.bf16.msra.mxu0 0
        %6044 = vmatprep.subr.bf16.mxu0 0
        %6045 = vmatpush1.bf16.msra.mxu0 0
        %6046 = vmatprep.subr.bf16.mxu0 0
        %6047 = vmatpush1.bf16.msra.mxu0 0
        %6048 = vmatprep.mubr.bf16.mxu0 0
        %6049 = vmatmul.mubr.bf16.gmra.mrb[0].mxu0 %v5971
        %v6050 = vpop.f32.mrb[0].mxu0
        %v6051 = vadd.f32 0.0, %v6050
        %v6052 = vpop.f32.mrb[0].mxu0
        %v6053 = vadd.f32 0.0, %v6052
        %v6054 = vpop.f32.mrb[0].mxu0
        %v6055 = vadd.f32 0.0, %v6054
        %v6056 = vpop.f32.mrb[0].mxu0
        %v6057 = vadd.f32 0.0, %v6056
        %6058 = vdwg.mxu0
        %v6059 = vadd.f32 %v5648, %v6008
        %v6060 = vadd.f32 %v5649, %v6010
        %v6061 = vadd.f32 %v5650, %v6051
        %v6062 = vadd.f32 %v5651, %v6053
        %v6063 = vadd.f32 %v5652, %v6012
        %v6064 = vadd.f32 %v5653, %v6014
        %v6065 = vadd.f32 %v5654, %v6055
        %v6066 = vadd.f32 %v5655, %v6057
        %v6067 = vrot.slane %v3474, 4
        %v6068 = vrot.slane %v3494, 4
        %v6070 = vsel %vm3647, %v6067, 0
        %v6073 = vsel %vm3647, %v6068, 0
        %6075 = vmatprep.subr.bf16.mxu0 0
        %6076 = vmatpush1.bf16.xpose.msra.mxu0 %v6073
        %6077 = vmatprep.subr.bf16.mxu0 0
        %6078 = vmatpush1.bf16.xpose.msra.mxu0 0
        %6079 = vmatprep.subr.bf16.mxu0 0
        %6080 = vmatpush1.bf16.xpose.msra.mxu0 0
        %6081 = vmatprep.subr.bf16.mxu0 0
        %6082 = vmatpush1.bf16.xpose.msra.mxu0 0
        %6083 = vmatprep.subr.bf16.mxu0 0
        %6084 = vmatpush1.bf16.xpose.msra.mxu0 0
        %6085 = vmatprep.subr.bf16.mxu0 0
        %6086 = vmatpush1.bf16.xpose.msra.mxu0 0
        %6087 = vmatprep.subr.bf16.mxu0 0
        %6088 = vmatpush1.bf16.xpose.msra.mxu0 0
        %6089 = vmatprep.subr.bf16.mxu0 0
        %6090 = vmatpush1.bf16.xpose.msra.mxu0 0
        %6091 = vmatprep.subr.bf16.mxu0 0
        %6092 = vmatpush1.bf16.xpose.msra.mxu0 0
        %6093 = vmatprep.subr.bf16.mxu0 0
        %6094 = vmatpush1.bf16.xpose.msra.mxu0 0
        %6095 = vmatprep.subr.bf16.mxu0 0
        %6096 = vmatpush1.bf16.xpose.msra.mxu0 0
        %6097 = vmatprep.subr.bf16.mxu0 0
        %6098 = vmatpush1.bf16.xpose.msra.mxu0 0
        %6099 = vmatprep.subr.bf16.mxu0 0
        %6100 = vmatpush1.bf16.xpose.msra.mxu0 0
        %6101 = vmatprep.subr.bf16.mxu0 0
        %6102 = vmatpush1.bf16.xpose.msra.mxu0 0
        %6103 = vmatprep.subr.bf16.mxu0 0
        %6104 = vmatpush1.bf16.xpose.msra.mxu0 0
        %6105 = vmatprep.subr.bf16.mxu0 0
        %6106 = vmatpush1.bf16.xpose.msra.mxu0 0
        %6107 = vmatprep.mubr.bf16.mxu0 0
        %6108 = vmatmul.mubr.bf16.gmra.mrb[0].mxu0 %v6070
        %v6109 = vpop.f32.mrb[0].mxu0
        %v6110 = vadd.f32 0.0, %v6109
        %v6111 = vpop.f32.mrb[0].mxu0
        %v6112 = vpop.f32.mrb[0].mxu0
        %v6113 = vpop.f32.mrb[0].mxu0
        %6114 = vdwg.mxu0
        %v6115 = vrot.slane %v3476, 4
        %v6116 = vrot.slane %v3496, 4
        %v6118 = vsel %vm3647, %v6115, 0
        %v6121 = vsel %vm3647, %v6116, 0
        %6123 = vmatprep.subr.bf16.mxu0 0
        %6124 = vmatpush1.bf16.xpose.msra.mxu0 %v6121
        %6125 = vmatprep.subr.bf16.mxu0 0
        %6126 = vmatpush1.bf16.xpose.msra.mxu0 0
        %6127 = vmatprep.subr.bf16.mxu0 0
        %6128 = vmatpush1.bf16.xpose.msra.mxu0 0
        %6129 = vmatprep.subr.bf16.mxu0 0
        %6130 = vmatpush1.bf16.xpose.msra.mxu0 0
        %6131 = vmatprep.subr.bf16.mxu0 0
        %6132 = vmatpush1.bf16.xpose.msra.mxu0 0
        %6133 = vmatprep.subr.bf16.mxu0 0
        %6134 = vmatpush1.bf16.xpose.msra.mxu0 0
        %6135 = vmatprep.subr.bf16.mxu0 0
        %6136 = vmatpush1.bf16.xpose.msra.mxu0 0
        %6137 = vmatprep.subr.bf16.mxu0 0
        %6138 = vmatpush1.bf16.xpose.msra.mxu0 0
        %6139 = vmatprep.subr.bf16.mxu0 0
        %6140 = vmatpush1.bf16.xpose.msra.mxu0 0
        %6141 = vmatprep.subr.bf16.mxu0 0
        %6142 = vmatpush1.bf16.xpose.msra.mxu0 0
        %6143 = vmatprep.subr.bf16.mxu0 0
        %6144 = vmatpush1.bf16.xpose.msra.mxu0 0
        %6145 = vmatprep.subr.bf16.mxu0 0
        %6146 = vmatpush1.bf16.xpose.msra.mxu0 0
        %6147 = vmatprep.subr.bf16.mxu0 0
        %6148 = vmatpush1.bf16.xpose.msra.mxu0 0
        %6149 = vmatprep.subr.bf16.mxu0 0
        %6150 = vmatpush1.bf16.xpose.msra.mxu0 0
        %6151 = vmatprep.subr.bf16.mxu0 0
        %6152 = vmatpush1.bf16.xpose.msra.mxu0 0
        %6153 = vmatprep.subr.bf16.mxu0 0
        %6154 = vmatpush1.bf16.xpose.msra.mxu0 0
        %6155 = vmatprep.mubr.bf16.mxu0 0
        %6156 = vmatmul.mubr.bf16.gmra.mrb[0].mxu0 %v6118
        %v6157 = vpop.f32.mrb[0].mxu0
        %v6158 = vadd.f32 0.0, %v6157
        %v6159 = vpop.f32.mrb[0].mxu0
        %v6160 = vpop.f32.mrb[0].mxu0
        %v6161 = vpop.f32.mrb[0].mxu0
        %6162 = vdwg.mxu0
        %v6163 = vmul.f32 %v6110, 0.125
        %v6164 = vmul.f32 %v6158, 0.125
        %v6165 = vadd.f32 %v6163, %v3517
        %v6166 = vadd.f32 %v6164, %v3518
        %v6167 = vsel %vm3744, %v6165, -inf
        %6168 = vmax.xlane.f32.xlu0 %v6167
        %v6169 = vpop.xlane.xlu0 %6168
        %v6170 = vsel %vm3744, %v6166, -inf
        %6171 = vmax.xlane.f32.xlu0 %v6170
        %v6172 = vpop.xlane.xlu0 %6171
        %v6173 = vsub.f32 %v6165, %v6169
        %v6174 = vsub.f32 %v6166, %v6172
        %v6175 = vmul.f32 %v6173, 1.442695
        %v6176 = vpow.pop %v6175
        %v6177 = vmul.f32 %v6174, 1.442695
        %v6178 = vpow.pop %v6177
        %v6179 = vsel %vm3744, %v6176, 0.0
        %6180 = vadd.xlane.f32.xlu0 %v6179
        %v6181 = vpop.xlane.xlu0 %6180
        %v6182 = vsel %vm3744, %v6178, 0.0
        %6183 = vadd.xlane.f32.xlu0 %v6182
        %v6184 = vpop.xlane.xlu0 %6183
        %v6185 = vrcp.pop %v6181
        %v6186 = vrcp.pop %v6184
        %v6187 = vmul.f32 %v6176, %v6185
        %v6188 = vmul.f32 %v6178, %v6186
        %s6189 = scalar_lea.vmem %s593, 48 [#allocation17]
        %6190 = vst.msk [vmem:[%s6189] sm:$0xff] %vm3744, %v6187
        %6191 = vst.msk [vmem:[%s6189 + $0x40] sm:$0xff] %vm3744, %v6188
        %v6192 = vpack.c.bf16 %v6187, %v6187
        %v6193 = vpack.c.bf16 %v6188, %v6188
        %v6194 = vrot.slane %v3514, 4
        %v6196 = vsel %vm3744, %v6192, 0
        %v6199 = vsel %vm3774, %v6194, 0
        %6201 = vmatprep.subr.bf16.mxu0 0
        %6202 = vmatpush1.bf16.msra.mxu0 %v6199
        %6203 = vmatprep.subr.bf16.mxu0 0
        %6204 = vmatpush1.bf16.msra.mxu0 0
        %6205 = vmatprep.subr.bf16.mxu0 0
        %6206 = vmatpush1.bf16.msra.mxu0 0
        %6207 = vmatprep.subr.bf16.mxu0 0
        %6208 = vmatpush1.bf16.msra.mxu0 0
        %6209 = vmatprep.subr.bf16.mxu0 0
        %6210 = vmatpush1.bf16.msra.mxu0 0
        %6211 = vmatprep.subr.bf16.mxu0 0
        %6212 = vmatpush1.bf16.msra.mxu0 0
        %6213 = vmatprep.subr.bf16.mxu0 0
        %6214 = vmatpush1.bf16.msra.mxu0 0
        %6215 = vmatprep.subr.bf16.mxu0 0
        %6216 = vmatpush1.bf16.msra.mxu0 0
        %6217 = vmatprep.subr.bf16.mxu0 0
        %6218 = vmatpush1.bf16.msra.mxu0 0
        %6219 = vmatprep.subr.bf16.mxu0 0
        %6220 = vmatpush1.bf16.msra.mxu0 0
        %6221 = vmatprep.subr.bf16.mxu0 0
        %6222 = vmatpush1.bf16.msra.mxu0 0
        %6223 = vmatprep.subr.bf16.mxu0 0
        %6224 = vmatpush1.bf16.msra.mxu0 0
        %6225 = vmatprep.subr.bf16.mxu0 0
        %6226 = vmatpush1.bf16.msra.mxu0 0
        %6227 = vmatprep.subr.bf16.mxu0 0
        %6228 = vmatpush1.bf16.msra.mxu0 0
        %6229 = vmatprep.subr.bf16.mxu0 0
        %6230 = vmatpush1.bf16.msra.mxu0 0
        %6231 = vmatprep.subr.bf16.mxu0 0
        %6232 = vmatpush1.bf16.msra.mxu0 0
        %6233 = vmatprep.mubr.bf16.mxu0 0
        %6234 = vmatmul.mubr.bf16.gmra.mrb[0].mxu0 %v6196
        %v6235 = vpop.f32.mrb[0].mxu0
        %v6236 = vadd.f32 0.0, %v6235
        %v6237 = vpop.f32.mrb[0].mxu0
        %v6238 = vpop.f32.mrb[0].mxu0
        %v6239 = vpop.f32.mrb[0].mxu0
        %6240 = vdwg.mxu0
        %v6241 = vrot.slane %v3516, 4
        %v6243 = vsel %vm3744, %v6193, 0
        %v6246 = vsel %vm3774, %v6241, 0
        %6248 = vmatprep.subr.bf16.mxu0 0
        %6249 = vmatpush1.bf16.msra.mxu0 %v6246
        %6250 = vmatprep.subr.bf16.mxu0 0
        %6251 = vmatpush1.bf16.msra.mxu0 0
        %6252 = vmatprep.subr.bf16.mxu0 0
        %6253 = vmatpush1.bf16.msra.mxu0 0
        %6254 = vmatprep.subr.bf16.mxu0 0
        %6255 = vmatpush1.bf16.msra.mxu0 0
        %6256 = vmatprep.subr.bf16.mxu0 0
        %6257 = vmatpush1.bf16.msra.mxu0 0
        %6258 = vmatprep.subr.bf16.mxu0 0
        %6259 = vmatpush1.bf16.msra.mxu0 0
        %6260 = vmatprep.subr.bf16.mxu0 0
        %6261 = vmatpush1.bf16.msra.mxu0 0
        %6262 = vmatprep.subr.bf16.mxu0 0
        %6263 = vmatpush1.bf16.msra.mxu0 0
        %6264 = vmatprep.subr.bf16.mxu0 0
        %6265 = vmatpush1.bf16.msra.mxu0 0
        %6266 = vmatprep.subr.bf16.mxu0 0
        %6267 = vmatpush1.bf16.msra.mxu0 0
        %6268 = vmatprep.subr.bf16.mxu0 0
        %6269 = vmatpush1.bf16.msra.mxu0 0
        %6270 = vmatprep.subr.bf16.mxu0 0
        %6271 = vmatpush1.bf16.msra.mxu0 0
        %6272 = vmatprep.subr.bf16.mxu0 0
        %6273 = vmatpush1.bf16.msra.mxu0 0
        %6274 = vmatprep.subr.bf16.mxu0 0
        %6275 = vmatpush1.bf16.msra.mxu0 0
        %6276 = vmatprep.subr.bf16.mxu0 0
        %6277 = vmatpush1.bf16.msra.mxu0 0
        %6278 = vmatprep.subr.bf16.mxu0 0
        %6279 = vmatpush1.bf16.msra.mxu0 0
        %6280 = vmatprep.mubr.bf16.mxu0 0
        %6281 = vmatmul.mubr.bf16.gmra.mrb[0].mxu0 %v6243
        %v6282 = vpop.f32.mrb[0].mxu0
        %v6283 = vadd.f32 0.0, %v6282
        %v6284 = vpop.f32.mrb[0].mxu0
        %v6285 = vpop.f32.mrb[0].mxu0
        %v6286 = vpop.f32.mrb[0].mxu0
        %6287 = vdwg.mxu0
        %v6288 = vpack.c.bf16 %v6283, %v6236
        %v6305 = vunpack.c.l.b16 %v3615
        %v6306 = vunpack.c.h.b16 %v3615
        %v6307 = vunpack.c.l.b16 %v3616
        %v6308 = vunpack.c.h.b16 %v3616
        %v6309 = vunpack.c.l.b16 %v3617
        %v6310 = vunpack.c.h.b16 %v3617
        %v6311 = vunpack.c.l.b16 %v3618
        %v6312 = vunpack.c.h.b16 %v3618
        %v6313 = vunpack.c.l.b16 %v3619
        %v6314 = vunpack.c.h.b16 %v3619
        %v6315 = vunpack.c.l.b16 %v3620
        %v6316 = vunpack.c.h.b16 %v3620
        %v6317 = vunpack.c.l.b16 %v3621
        %v6318 = vunpack.c.h.b16 %v3621
        %v6319 = vunpack.c.l.b16 %v3622
        %v6320 = vunpack.c.h.b16 %v3622
        %v6321 = vunpack.c.l.b16 %v3623
        %v6322 = vunpack.c.h.b16 %v3623
        %v6323 = vunpack.c.l.b16 %v3624
        %v6324 = vunpack.c.h.b16 %v3624
        %v6325 = vunpack.c.l.b16 %v3625
        %v6326 = vunpack.c.h.b16 %v3625
        %v6327 = vunpack.c.l.b16 %v3626
        %v6328 = vunpack.c.h.b16 %v3626
        %v6329 = vunpack.c.l.b16 %v3627
        %v6330 = vunpack.c.h.b16 %v3627
        %v6331 = vunpack.c.l.b16 %v3628
        %v6332 = vunpack.c.h.b16 %v3628
        %v6333 = vunpack.c.l.b16 %v3629
        %v6334 = vunpack.c.h.b16 %v3629
        %v6335 = vunpack.c.l.b16 %v3630
        %v6336 = vunpack.c.h.b16 %v3630
        %v6337 = vpack.c.b16 %v6309, %v6305
        %v6338 = vpack.c.b16 %v6310, %v6306
        %v6339 = vpack.c.b16 %v6311, %v6307
        %v6340 = vpack.c.b16 %v6312, %v6308
        %v6341 = vpack.c.b16 %v6317, %v6313
        %v6342 = vpack.c.b16 %v6318, %v6314
        %v6343 = vpack.c.b16 %v6319, %v6315
        %v6344 = vpack.c.b16 %v6320, %v6316
        %v6345 = vpack.c.b16 %v6325, %v6321
        %v6346 = vpack.c.b16 %v6326, %v6322
        %v6347 = vpack.c.b16 %v6327, %v6323
        %v6348 = vpack.c.b16 %v6328, %v6324
        %v6349 = vpack.c.b16 %v6333, %v6329
        %v6350 = vpack.c.b16 %v6334, %v6330
        %v6351 = vpack.c.b16 %v6335, %v6331
        %v6352 = vpack.c.b16 %v6336, %v6332
        %v6370 = vsel %vm3647, %v6288, 0
        %6372 = vmatprep.subr.bf16.mxu0 %v6338
        %6373 = vmatpush1.bf16.msra.mxu0 %v6337
        %6374 = vmatprep.subr.bf16.mxu0 %v6342
        %6375 = vmatpush1.bf16.msra.mxu0 %v6341
        %6376 = vmatprep.subr.bf16.mxu0 %v6346
        %6377 = vmatpush1.bf16.msra.mxu0 %v6345
        %6378 = vmatprep.subr.bf16.mxu0 %v6350
        %6379 = vmatpush1.bf16.msra.mxu0 %v6349
        %6380 = vmatprep.subr.bf16.mxu0 0
        %6381 = vmatpush1.bf16.msra.mxu0 0
        %6382 = vmatprep.subr.bf16.mxu0 0
        %6383 = vmatpush1.bf16.msra.mxu0 0
        %6384 = vmatprep.subr.bf16.mxu0 0
        %6385 = vmatpush1.bf16.msra.mxu0 0
        %6386 = vmatprep.subr.bf16.mxu0 0
        %6387 = vmatpush1.bf16.msra.mxu0 0
        %6388 = vmatprep.subr.bf16.mxu0 0
        %6389 = vmatpush1.bf16.msra.mxu0 0
        %6390 = vmatprep.subr.bf16.mxu0 0
        %6391 = vmatpush1.bf16.msra.mxu0 0
        %6392 = vmatprep.subr.bf16.mxu0 0
        %6393 = vmatpush1.bf16.msra.mxu0 0
        %6394 = vmatprep.subr.bf16.mxu0 0
        %6395 = vmatpush1.bf16.msra.mxu0 0
        %6396 = vmatprep.subr.bf16.mxu0 0
        %6397 = vmatpush1.bf16.msra.mxu0 0
        %6398 = vmatprep.subr.bf16.mxu0 0
        %6399 = vmatpush1.bf16.msra.mxu0 0
        %6400 = vmatprep.subr.bf16.mxu0 0
        %6401 = vmatpush1.bf16.msra.mxu0 0
        %6402 = vmatprep.subr.bf16.mxu0 0
        %6403 = vmatpush1.bf16.msra.mxu0 0
        %6404 = vmatprep.mubr.bf16.mxu0 0
        %6405 = vmatmul.mubr.bf16.gmra.mrb[0].mxu0 %v6370
        %v6406 = vpop.f32.mrb[0].mxu0
        %v6407 = vadd.f32 0.0, %v6406
        %v6408 = vpop.f32.mrb[0].mxu0
        %v6409 = vadd.f32 0.0, %v6408
        %v6410 = vpop.f32.mrb[0].mxu0
        %v6411 = vadd.f32 0.0, %v6410
        %v6412 = vpop.f32.mrb[0].mxu0
        %v6413 = vadd.f32 0.0, %v6412
        %6414 = vdwg.mxu0
        %6415 = vmatprep.subr.bf16.mxu0 %v6340
        %6416 = vmatpush1.bf16.msra.mxu0 %v6339
        %6417 = vmatprep.subr.bf16.mxu0 %v6344
        %6418 = vmatpush1.bf16.msra.mxu0 %v6343
        %6419 = vmatprep.subr.bf16.mxu0 %v6348
        %6420 = vmatpush1.bf16.msra.mxu0 %v6347
        %6421 = vmatprep.subr.bf16.mxu0 %v6352
        %6422 = vmatpush1.bf16.msra.mxu0 %v6351
        %6423 = vmatprep.subr.bf16.mxu0 0
        %6424 = vmatpush1.bf16.msra.mxu0 0
        %6425 = vmatprep.subr.bf16.mxu0 0
        %6426 = vmatpush1.bf16.msra.mxu0 0
        %6427 = vmatprep.subr.bf16.mxu0 0
        %6428 = vmatpush1.bf16.msra.mxu0 0
        %6429 = vmatprep.subr.bf16.mxu0 0
        %6430 = vmatpush1.bf16.msra.mxu0 0
        %6431 = vmatprep.subr.bf16.mxu0 0
        %6432 = vmatpush1.bf16.msra.mxu0 0
        %6433 = vmatprep.subr.bf16.mxu0 0
        %6434 = vmatpush1.bf16.msra.mxu0 0
        %6435 = vmatprep.subr.bf16.mxu0 0
        %6436 = vmatpush1.bf16.msra.mxu0 0
        %6437 = vmatprep.subr.bf16.mxu0 0
        %6438 = vmatpush1.bf16.msra.mxu0 0
        %6439 = vmatprep.subr.bf16.mxu0 0
        %6440 = vmatpush1.bf16.msra.mxu0 0
        %6441 = vmatprep.subr.bf16.mxu0 0
        %6442 = vmatpush1.bf16.msra.mxu0 0
        %6443 = vmatprep.subr.bf16.mxu0 0
        %6444 = vmatpush1.bf16.msra.mxu0 0
        %6445 = vmatprep.subr.bf16.mxu0 0
        %6446 = vmatpush1.bf16.msra.mxu0 0
        %6447 = vmatprep.mubr.bf16.mxu0 0
        %6448 = vmatmul.mubr.bf16.gmra.mrb[0].mxu0 %v6370
        %v6449 = vpop.f32.mrb[0].mxu0
        %v6450 = vadd.f32 0.0, %v6449
        %v6451 = vpop.f32.mrb[0].mxu0
        %v6452 = vadd.f32 0.0, %v6451
        %v6453 = vpop.f32.mrb[0].mxu0
        %v6454 = vadd.f32 0.0, %v6453
        %v6455 = vpop.f32.mrb[0].mxu0
        %v6456 = vadd.f32 0.0, %v6455
        %6457 = vdwg.mxu0
        %v6458 = vadd.f32 %v6059, %v6407
        %v6459 = vadd.f32 %v6060, %v6409
        %v6460 = vadd.f32 %v6061, %v6450
        %v6461 = vadd.f32 %v6062, %v6452
        %v6462 = vadd.f32 %v6063, %v6411
        %v6463 = vadd.f32 %v6064, %v6413
        %v6464 = vadd.f32 %v6065, %v6454
        %v6465 = vadd.f32 %v6066, %v6456
        %6466 = vrot.lane.b32.xlu0 %v3474, 64
        %v6467 = vpop.permute.xlu0 %6466
        %v6468 = vrot.slane %v6467, 4
        %6469 = vrot.lane.b32.xlu0 %v3494, 64
        %v6470 = vpop.permute.xlu0 %6469
        %v6471 = vrot.slane %v6470, 4
        %v6473 = vsel %vm3647, %v6468, 0
        %v6476 = vsel %vm3647, %v6471, 0
        %6478 = vmatprep.subr.bf16.mxu0 0
        %6479 = vmatpush1.bf16.xpose.msra.mxu0 %v6476
        %6480 = vmatprep.subr.bf16.mxu0 0
        %6481 = vmatpush1.bf16.xpose.msra.mxu0 0
        %6482 = vmatprep.subr.bf16.mxu0 0
        %6483 = vmatpush1.bf16.xpose.msra.mxu0 0
        %6484 = vmatprep.subr.bf16.mxu0 0
        %6485 = vmatpush1.bf16.xpose.msra.mxu0 0
        %6486 = vmatprep.subr.bf16.mxu0 0
        %6487 = vmatpush1.bf16.xpose.msra.mxu0 0
        %6488 = vmatprep.subr.bf16.mxu0 0
        %6489 = vmatpush1.bf16.xpose.msra.mxu0 0
        %6490 = vmatprep.subr.bf16.mxu0 0
        %6491 = vmatpush1.bf16.xpose.msra.mxu0 0
        %6492 = vmatprep.subr.bf16.mxu0 0
        %6493 = vmatpush1.bf16.xpose.msra.mxu0 0
        %6494 = vmatprep.subr.bf16.mxu0 0
        %6495 = vmatpush1.bf16.xpose.msra.mxu0 0
        %6496 = vmatprep.subr.bf16.mxu0 0
        %6497 = vmatpush1.bf16.xpose.msra.mxu0 0
        %6498 = vmatprep.subr.bf16.mxu0 0
        %6499 = vmatpush1.bf16.xpose.msra.mxu0 0
        %6500 = vmatprep.subr.bf16.mxu0 0
        %6501 = vmatpush1.bf16.xpose.msra.mxu0 0
        %6502 = vmatprep.subr.bf16.mxu0 0
        %6503 = vmatpush1.bf16.xpose.msra.mxu0 0
        %6504 = vmatprep.subr.bf16.mxu0 0
        %6505 = vmatpush1.bf16.xpose.msra.mxu0 0
        %6506 = vmatprep.subr.bf16.mxu0 0
        %6507 = vmatpush1.bf16.xpose.msra.mxu0 0
        %6508 = vmatprep.subr.bf16.mxu0 0
        %6509 = vmatpush1.bf16.xpose.msra.mxu0 0
        %6510 = vmatprep.mubr.bf16.mxu0 0
        %6511 = vmatmul.mubr.bf16.gmra.mrb[0].mxu0 %v6473
        %v6512 = vpop.f32.mrb[0].mxu0
        %v6513 = vadd.f32 0.0, %v6512
        %v6514 = vpop.f32.mrb[0].mxu0
        %v6515 = vpop.f32.mrb[0].mxu0
        %v6516 = vpop.f32.mrb[0].mxu0
        %6517 = vdwg.mxu0
        %6518 = vrot.lane.b32.xlu0 %v3476, 64
        %v6519 = vpop.permute.xlu0 %6518
        %v6520 = vrot.slane %v6519, 4
        %6521 = vrot.lane.b32.xlu0 %v3496, 64
        %v6522 = vpop.permute.xlu0 %6521
        %v6523 = vrot.slane %v6522, 4
        %v6525 = vsel %vm3647, %v6520, 0
        %v6528 = vsel %vm3647, %v6523, 0
        %6530 = vmatprep.subr.bf16.mxu0 0
        %6531 = vmatpush1.bf16.xpose.msra.mxu0 %v6528
        %6532 = vmatprep.subr.bf16.mxu0 0
        %6533 = vmatpush1.bf16.xpose.msra.mxu0 0
        %6534 = vmatprep.subr.bf16.mxu0 0
        %6535 = vmatpush1.bf16.xpose.msra.mxu0 0
        %6536 = vmatprep.subr.bf16.mxu0 0
        %6537 = vmatpush1.bf16.xpose.msra.mxu0 0
        %6538 = vmatprep.subr.bf16.mxu0 0
        %6539 = vmatpush1.bf16.xpose.msra.mxu0 0
        %6540 = vmatprep.subr.bf16.mxu0 0
        %6541 = vmatpush1.bf16.xpose.msra.mxu0 0
        %6542 = vmatprep.subr.bf16.mxu0 0
        %6543 = vmatpush1.bf16.xpose.msra.mxu0 0
        %6544 = vmatprep.subr.bf16.mxu0 0
        %6545 = vmatpush1.bf16.xpose.msra.mxu0 0
        %6546 = vmatprep.subr.bf16.mxu0 0
        %6547 = vmatpush1.bf16.xpose.msra.mxu0 0
        %6548 = vmatprep.subr.bf16.mxu0 0
        %6549 = vmatpush1.bf16.xpose.msra.mxu0 0
        %6550 = vmatprep.subr.bf16.mxu0 0
        %6551 = vmatpush1.bf16.xpose.msra.mxu0 0
        %6552 = vmatprep.subr.bf16.mxu0 0
        %6553 = vmatpush1.bf16.xpose.msra.mxu0 0
        %6554 = vmatprep.subr.bf16.mxu0 0
        %6555 = vmatpush1.bf16.xpose.msra.mxu0 0
        %6556 = vmatprep.subr.bf16.mxu0 0
        %6557 = vmatpush1.bf16.xpose.msra.mxu0 0
        %6558 = vmatprep.subr.bf16.mxu0 0
        %6559 = vmatpush1.bf16.xpose.msra.mxu0 0
        %6560 = vmatprep.subr.bf16.mxu0 0
        %6561 = vmatpush1.bf16.xpose.msra.mxu0 0
        %6562 = vmatprep.mubr.bf16.mxu0 0
        %6563 = vmatmul.mubr.bf16.gmra.mrb[0].mxu0 %v6525
        %v6564 = vpop.f32.mrb[0].mxu0
        %v6565 = vadd.f32 0.0, %v6564
        %v6566 = vpop.f32.mrb[0].mxu0
        %v6567 = vpop.f32.mrb[0].mxu0
        %v6568 = vpop.f32.mrb[0].mxu0
        %6569 = vdwg.mxu0
        %v6570 = vmul.f32 %v6513, 0.125
        %v6571 = vmul.f32 %v6565, 0.125
        %v6572 = vadd.f32 %v6570, %v3517
        %v6573 = vadd.f32 %v6571, %v3518
        %v6574 = vsel %vm3744, %v6572, -inf
        %6575 = vmax.xlane.f32.xlu0 %v6574
        %v6576 = vpop.xlane.xlu0 %6575
        %v6577 = vsel %vm3744, %v6573, -inf
        %6578 = vmax.xlane.f32.xlu0 %v6577
        %v6579 = vpop.xlane.xlu0 %6578
        %v6580 = vsub.f32 %v6572, %v6576
        %v6581 = vsub.f32 %v6573, %v6579
        %v6582 = vmul.f32 %v6580, 1.442695
        %v6583 = vpow.pop %v6582
        %v6584 = vmul.f32 %v6581, 1.442695
        %v6585 = vpow.pop %v6584
        %v6586 = vsel %vm3744, %v6583, 0.0
        %6587 = vadd.xlane.f32.xlu0 %v6586
        %v6588 = vpop.xlane.xlu0 %6587
        %v6589 = vsel %vm3744, %v6585, 0.0
        %6590 = vadd.xlane.f32.xlu0 %v6589
        %v6591 = vpop.xlane.xlu0 %6590
        %v6592 = vrcp.pop %v6588
        %v6593 = vrcp.pop %v6591
        %v6594 = vmul.f32 %v6583, %v6592
        %v6595 = vmul.f32 %v6585, %v6593
        %s6596 = scalar_lea.vmem %s593, 56 [#allocation17]
        %6597 = vst.msk [vmem:[%s6596] sm:$0xff] %vm3744, %v6594
        %6598 = vst.msk [vmem:[%s6596 + $0x40] sm:$0xff] %vm3744, %v6595
        %v6599 = vpack.c.bf16 %v6594, %v6594
        %v6600 = vpack.c.bf16 %v6595, %v6595
        %6601 = vrot.lane.b32.xlu0 %v3514, 64
        %v6602 = vpop.permute.xlu0 %6601
        %v6603 = vrot.slane %v6602, 4
        %v6605 = vsel %vm3744, %v6599, 0
        %v6608 = vsel %vm3774, %v6603, 0
        %6610 = vmatprep.subr.bf16.mxu0 0
        %6611 = vmatpush1.bf16.msra.mxu0 %v6608
        %6612 = vmatprep.subr.bf16.mxu0 0
        %6613 = vmatpush1.bf16.msra.mxu0 0
        %6614 = vmatprep.subr.bf16.mxu0 0
        %6615 = vmatpush1.bf16.msra.mxu0 0
        %6616 = vmatprep.subr.bf16.mxu0 0
        %6617 = vmatpush1.bf16.msra.mxu0 0
        %6618 = vmatprep.subr.bf16.mxu0 0
        %6619 = vmatpush1.bf16.msra.mxu0 0
        %6620 = vmatprep.subr.bf16.mxu0 0
        %6621 = vmatpush1.bf16.msra.mxu0 0
        %6622 = vmatprep.subr.bf16.mxu0 0
        %6623 = vmatpush1.bf16.msra.mxu0 0
        %6624 = vmatprep.subr.bf16.mxu0 0
        %6625 = vmatpush1.bf16.msra.mxu0 0
        %6626 = vmatprep.subr.bf16.mxu0 0
        %6627 = vmatpush1.bf16.msra.mxu0 0
        %6628 = vmatprep.subr.bf16.mxu0 0
        %6629 = vmatpush1.bf16.msra.mxu0 0
        %6630 = vmatprep.subr.bf16.mxu0 0
        %6631 = vmatpush1.bf16.msra.mxu0 0
        %6632 = vmatprep.subr.bf16.mxu0 0
        %6633 = vmatpush1.bf16.msra.mxu0 0
        %6634 = vmatprep.subr.bf16.mxu0 0
        %6635 = vmatpush1.bf16.msra.mxu0 0
        %6636 = vmatprep.subr.bf16.mxu0 0
        %6637 = vmatpush1.bf16.msra.mxu0 0
        %6638 = vmatprep.subr.bf16.mxu0 0
        %6639 = vmatpush1.bf16.msra.mxu0 0
        %6640 = vmatprep.subr.bf16.mxu0 0
        %6641 = vmatpush1.bf16.msra.mxu0 0
        %6642 = vmatprep.mubr.bf16.mxu0 0
        %6643 = vmatmul.mubr.bf16.gmra.mrb[0].mxu0 %v6605
        %v6644 = vpop.f32.mrb[0].mxu0
        %v6645 = vadd.f32 0.0, %v6644
        %v6646 = vpop.f32.mrb[0].mxu0
        %v6647 = vpop.f32.mrb[0].mxu0
        %v6648 = vpop.f32.mrb[0].mxu0
        %6649 = vdwg.mxu0
        %6650 = vrot.lane.b32.xlu0 %v3516, 64
        %v6651 = vpop.permute.xlu0 %6650
        %v6652 = vrot.slane %v6651, 4
        %v6654 = vsel %vm3744, %v6600, 0
        %v6657 = vsel %vm3774, %v6652, 0
        %6659 = vmatprep.subr.bf16.mxu0 0
        %6660 = vmatpush1.bf16.msra.mxu0 %v6657
        %6661 = vmatprep.subr.bf16.mxu0 0
        %6662 = vmatpush1.bf16.msra.mxu0 0
        %6663 = vmatprep.subr.bf16.mxu0 0
        %6664 = vmatpush1.bf16.msra.mxu0 0
        %6665 = vmatprep.subr.bf16.mxu0 0
        %6666 = vmatpush1.bf16.msra.mxu0 0
        %6667 = vmatprep.subr.bf16.mxu0 0
        %6668 = vmatpush1.bf16.msra.mxu0 0
        %6669 = vmatprep.subr.bf16.mxu0 0
        %6670 = vmatpush1.bf16.msra.mxu0 0
        %6671 = vmatprep.subr.bf16.mxu0 0
        %6672 = vmatpush1.bf16.msra.mxu0 0
        %6673 = vmatprep.subr.bf16.mxu0 0
        %6674 = vmatpush1.bf16.msra.mxu0 0
        %6675 = vmatprep.subr.bf16.mxu0 0
        %6676 = vmatpush1.bf16.msra.mxu0 0
        %6677 = vmatprep.subr.bf16.mxu0 0
        %6678 = vmatpush1.bf16.msra.mxu0 0
        %6679 = vmatprep.subr.bf16.mxu0 0
        %6680 = vmatpush1.bf16.msra.mxu0 0
        %6681 = vmatprep.subr.bf16.mxu0 0
        %6682 = vmatpush1.bf16.msra.mxu0 0
        %6683 = vmatprep.subr.bf16.mxu0 0
        %6684 = vmatpush1.bf16.msra.mxu0 0
        %6685 = vmatprep.subr.bf16.mxu0 0
        %6686 = vmatpush1.bf16.msra.mxu0 0
        %6687 = vmatprep.subr.bf16.mxu0 0
        %6688 = vmatpush1.bf16.msra.mxu0 0
        %6689 = vmatprep.subr.bf16.mxu0 0
        %6690 = vmatpush1.bf16.msra.mxu0 0
        %6691 = vmatprep.mubr.bf16.mxu0 0
        %6692 = vmatmul.mubr.bf16.gmra.mrb[0].mxu0 %v6654
        %v6693 = vpop.f32.mrb[0].mxu0
        %v6694 = vadd.f32 0.0, %v6693
        %v6695 = vpop.f32.mrb[0].mxu0
        %v6696 = vpop.f32.mrb[0].mxu0
        %v6697 = vpop.f32.mrb[0].mxu0
        %6698 = vdwg.mxu0
        %v6699 = vpack.c.bf16 %v6694, %v6645
        %v6716 = vunpack.c.l.b16 %v3631
        %v6717 = vunpack.c.h.b16 %v3631
        %v6718 = vunpack.c.l.b16 %v3632
        %v6719 = vunpack.c.h.b16 %v3632
        %v6720 = vunpack.c.l.b16 %v3633
        %v6721 = vunpack.c.h.b16 %v3633
        %v6722 = vunpack.c.l.b16 %v3634
        %v6723 = vunpack.c.h.b16 %v3634
        %v6724 = vunpack.c.l.b16 %v3635
        %v6725 = vunpack.c.h.b16 %v3635
        %v6726 = vunpack.c.l.b16 %v3636
        %v6727 = vunpack.c.h.b16 %v3636
        %v6728 = vunpack.c.l.b16 %v3637
        %v6729 = vunpack.c.h.b16 %v3637
        %v6730 = vunpack.c.l.b16 %v3638
        %v6731 = vunpack.c.h.b16 %v3638
        %v6732 = vunpack.c.l.b16 %v3639
        %v6733 = vunpack.c.h.b16 %v3639
        %v6734 = vunpack.c.l.b16 %v3640
        %v6735 = vunpack.c.h.b16 %v3640
        %v6736 = vunpack.c.l.b16 %v3641
        %v6737 = vunpack.c.h.b16 %v3641
        %v6738 = vunpack.c.l.b16 %v3642
        %v6739 = vunpack.c.h.b16 %v3642
        %v6740 = vunpack.c.l.b16 %v3643
        %v6741 = vunpack.c.h.b16 %v3643
        %v6742 = vunpack.c.l.b16 %v3644
        %v6743 = vunpack.c.h.b16 %v3644
        %v6744 = vunpack.c.l.b16 %v3645
        %v6745 = vunpack.c.h.b16 %v3645
        %v6746 = vunpack.c.l.b16 %v3646
        %v6747 = vunpack.c.h.b16 %v3646
        %v6748 = vpack.c.b16 %v6720, %v6716
        %v6749 = vpack.c.b16 %v6721, %v6717
        %v6750 = vpack.c.b16 %v6722, %v6718
        %v6751 = vpack.c.b16 %v6723, %v6719
        %v6752 = vpack.c.b16 %v6728, %v6724
        %v6753 = vpack.c.b16 %v6729, %v6725
        %v6754 = vpack.c.b16 %v6730, %v6726
        %v6755 = vpack.c.b16 %v6731, %v6727
        %v6756 = vpack.c.b16 %v6736, %v6732
        %v6757 = vpack.c.b16 %v6737, %v6733
        %v6758 = vpack.c.b16 %v6738, %v6734
        %v6759 = vpack.c.b16 %v6739, %v6735
        %v6760 = vpack.c.b16 %v6744, %v6740
        %v6761 = vpack.c.b16 %v6745, %v6741
        %v6762 = vpack.c.b16 %v6746, %v6742
        %v6763 = vpack.c.b16 %v6747, %v6743
        %v6781 = vsel %vm3647, %v6699, 0
        %6783 = vmatprep.subr.bf16.mxu0 %v6749
        %6784 = vmatpush1.bf16.msra.mxu0 %v6748
        %6785 = vmatprep.subr.bf16.mxu0 %v6753
        %6786 = vmatpush1.bf16.msra.mxu0 %v6752
        %6787 = vmatprep.subr.bf16.mxu0 %v6757
        %6788 = vmatpush1.bf16.msra.mxu0 %v6756
        %6789 = vmatprep.subr.bf16.mxu0 %v6761
        %6790 = vmatpush1.bf16.msra.mxu0 %v6760
        %6791 = vmatprep.subr.bf16.mxu0 0
        %6792 = vmatpush1.bf16.msra.mxu0 0
        %6793 = vmatprep.subr.bf16.mxu0 0
        %6794 = vmatpush1.bf16.msra.mxu0 0
        %6795 = vmatprep.subr.bf16.mxu0 0
        %6796 = vmatpush1.bf16.msra.mxu0 0
        %6797 = vmatprep.subr.bf16.mxu0 0
        %6798 = vmatpush1.bf16.msra.mxu0 0
        %6799 = vmatprep.subr.bf16.mxu0 0
        %6800 = vmatpush1.bf16.msra.mxu0 0
        %6801 = vmatprep.subr.bf16.mxu0 0
        %6802 = vmatpush1.bf16.msra.mxu0 0
        %6803 = vmatprep.subr.bf16.mxu0 0
        %6804 = vmatpush1.bf16.msra.mxu0 0
        %6805 = vmatprep.subr.bf16.mxu0 0
        %6806 = vmatpush1.bf16.msra.mxu0 0
        %6807 = vmatprep.subr.bf16.mxu0 0
        %6808 = vmatpush1.bf16.msra.mxu0 0
        %6809 = vmatprep.subr.bf16.mxu0 0
        %6810 = vmatpush1.bf16.msra.mxu0 0
        %6811 = vmatprep.subr.bf16.mxu0 0
        %6812 = vmatpush1.bf16.msra.mxu0 0
        %6813 = vmatprep.subr.bf16.mxu0 0
        %6814 = vmatpush1.bf16.msra.mxu0 0
        %6815 = vmatprep.mubr.bf16.mxu0 0
        %6816 = vmatmul.mubr.bf16.gmra.mrb[0].mxu0 %v6781
        %v6817 = vpop.f32.mrb[0].mxu0
        %v6818 = vadd.f32 0.0, %v6817
        %v6819 = vpop.f32.mrb[0].mxu0
        %v6820 = vadd.f32 0.0, %v6819
        %v6821 = vpop.f32.mrb[0].mxu0
        %v6822 = vadd.f32 0.0, %v6821
        %v6823 = vpop.f32.mrb[0].mxu0
        %v6824 = vadd.f32 0.0, %v6823
        %6825 = vdwg.mxu0
        %6826 = vmatprep.subr.bf16.mxu0 %v6751
        %6827 = vmatpush1.bf16.msra.mxu0 %v6750
        %6828 = vmatprep.subr.bf16.mxu0 %v6755
        %6829 = vmatpush1.bf16.msra.mxu0 %v6754
        %6830 = vmatprep.subr.bf16.mxu0 %v6759
        %6831 = vmatpush1.bf16.msra.mxu0 %v6758
        %6832 = vmatprep.subr.bf16.mxu0 %v6763
        %6833 = vmatpush1.bf16.msra.mxu0 %v6762
        %6834 = vmatprep.subr.bf16.mxu0 0
        %6835 = vmatpush1.bf16.msra.mxu0 0
        %6836 = vmatprep.subr.bf16.mxu0 0
        %6837 = vmatpush1.bf16.msra.mxu0 0
        %6838 = vmatprep.subr.bf16.mxu0 0
        %6839 = vmatpush1.bf16.msra.mxu0 0
        %6840 = vmatprep.subr.bf16.mxu0 0
        %6841 = vmatpush1.bf16.msra.mxu0 0
        %6842 = vmatprep.subr.bf16.mxu0 0
        %6843 = vmatpush1.bf16.msra.mxu0 0
        %6844 = vmatprep.subr.bf16.mxu0 0
        %6845 = vmatpush1.bf16.msra.mxu0 0
        %6846 = vmatprep.subr.bf16.mxu0 0
        %6847 = vmatpush1.bf16.msra.mxu0 0
        %6848 = vmatprep.subr.bf16.mxu0 0
        %6849 = vmatpush1.bf16.msra.mxu0 0
        %6850 = vmatprep.subr.bf16.mxu0 0
        %6851 = vmatpush1.bf16.msra.mxu0 0
        %6852 = vmatprep.subr.bf16.mxu0 0
        %6853 = vmatpush1.bf16.msra.mxu0 0
        %6854 = vmatprep.subr.bf16.mxu0 0
        %6855 = vmatpush1.bf16.msra.mxu0 0
        %6856 = vmatprep.subr.bf16.mxu0 0
        %6857 = vmatpush1.bf16.msra.mxu0 0
        %6858 = vmatprep.mubr.bf16.mxu0 0
        %6859 = vmatmul.mubr.bf16.gmra.mrb[0].mxu0 %v6781
        %v6860 = vpop.f32.mrb[0].mxu0
        %v6861 = vadd.f32 0.0, %v6860
        %v6862 = vpop.f32.mrb[0].mxu0
        %v6863 = vadd.f32 0.0, %v6862
        %v6864 = vpop.f32.mrb[0].mxu0
        %v6865 = vadd.f32 0.0, %v6864
        %v6866 = vpop.f32.mrb[0].mxu0
        %v6867 = vadd.f32 0.0, %v6866
        %6868 = vdwg.mxu0
        %v6869 = vadd.f32 %v6458, %v6818
        %v6870 = vadd.f32 %v6459, %v6820
        %v6871 = vadd.f32 %v6460, %v6861
        %v6872 = vadd.f32 %v6461, %v6863
        %v6873 = vadd.f32 %v6462, %v6822
        %v6874 = vadd.f32 %v6463, %v6824
        %v6875 = vadd.f32 %v6464, %v6865
        %v6876 = vadd.f32 %v6465, %v6867
        %v6877 = vadd.f32 %v6869, %v6870
        %v6878 = vadd.f32 %v6877, %v6871
        %v6879 = vadd.f32 %v6878, %v6872
        %6880 = vadd.xlane.f32.xlu0 %v6879
        %v6881 = vpop.xlane.xlu0 %6880
        %v6882 = vadd.f32 %v6873, %v6874
        %v6883 = vadd.f32 %v6882, %v6875
        %v6884 = vadd.f32 %v6883, %v6876
        %6885 = vadd.xlane.f32.xlu0 %v6884
        %v6886 = vpop.xlane.xlu0 %6885
        %v6887 = vrcp.pop 512.0
        %v6888 = vmul.f32 %v6881, %v6887
        %v6889 = vmul.f32 %v6886, %v6887
        %v6890 = vsub.f32 %v6869, %v6888
        %v6891 = vsub.f32 %v6870, %v6888
        %v6892 = vsub.f32 %v6871, %v6888
        %v6893 = vsub.f32 %v6872, %v6888
        %v6894 = vsub.f32 %v6873, %v6889
        %v6895 = vsub.f32 %v6874, %v6889
        %v6896 = vsub.f32 %v6875, %v6889
        %v6897 = vsub.f32 %v6876, %v6889
        %v6898 = vmul.f32 %v6890, %v6890
        %v6899 = vmul.f32 %v6891, %v6891
        %v6900 = vmul.f32 %v6892, %v6892
        %v6901 = vmul.f32 %v6893, %v6893
        %v6902 = vmul.f32 %v6894, %v6894
        %v6903 = vmul.f32 %v6895, %v6895
        %v6904 = vmul.f32 %v6896, %v6896
        %v6905 = vmul.f32 %v6897, %v6897
        %v6906 = vadd.f32 %v6898, %v6899
        %v6907 = vadd.f32 %v6906, %v6900
        %v6908 = vadd.f32 %v6907, %v6901
        %6909 = vadd.xlane.f32.xlu0 %v6908
        %v6910 = vpop.xlane.xlu0 %6909
        %v6911 = vadd.f32 %v6902, %v6903
        %v6912 = vadd.f32 %v6911, %v6904
        %v6913 = vadd.f32 %v6912, %v6905
        %6914 = vadd.xlane.f32.xlu0 %v6913
        %v6915 = vpop.xlane.xlu0 %6914
        %v6916 = vmul.f32 %v6910, %v6887
        %v6917 = vmul.f32 %v6915, %v6887
        %v6918 = vadd.f32 %v6916, 1e-05
        %v6919 = vadd.f32 %v6917, 1e-05
        %v6920 = vrsqrt.pop %v6918
        %v6921 = vrsqrt.pop %v6919
        %v6922 = vmul.f32 %v6890, %v6920
        %v6923 = vmul.f32 %v6891, %v6920
        %v6924 = vmul.f32 %v6892, %v6920
        %v6925 = vmul.f32 %v6893, %v6920
        %v6926 = vmul.f32 %v6894, %v6921
        %v6927 = vmul.f32 %v6895, %v6921
        %v6928 = vmul.f32 %v6896, %v6921
        %v6929 = vmul.f32 %v6897, %v6921
        %v6930 = vld [vmem:[%s8] sm:$0xf]
        %v6932 = vlaneseq
        %v6933 = vshrl.u32 %v6932, 7
        %v6934 = vsub.s32 0, %v6933
        %v6935 = vrot.slane %v6930, %v6934
        %v6936 = vlaneseq
        %v6937 = vshrl.u32 %v6936, 7
        %v6938 = vsub.s32 1, %v6937
        %v6939 = vrot.slane %v6930, %v6938
        %v6940 = vlaneseq
        %v6941 = vshrl.u32 %v6940, 7
        %v6942 = vsub.s32 2, %v6941
        %v6943 = vrot.slane %v6930, %v6942
        %v6944 = vlaneseq
        %v6945 = vshrl.u32 %v6944, 7
        %v6946 = vsub.s32 3, %v6945
        %v6947 = vrot.slane %v6930, %v6946
        %v6952 = vmul.f32 %v6922, %v6935
        %v6953 = vmul.f32 %v6923, %v6939
        %v6954 = vmul.f32 %v6924, %v6943
        %v6955 = vmul.f32 %v6925, %v6947
        %v6956 = vmul.f32 %v6926, %v6935
        %v6957 = vmul.f32 %v6927, %v6939
        %v6958 = vmul.f32 %v6928, %v6943
        %v6959 = vmul.f32 %v6929, %v6947
        %v6960 = vld [vmem:[%s9] sm:$0xf]
        %v6962 = vlaneseq
        %v6963 = vshrl.u32 %v6962, 7
        %v6964 = vsub.s32 0, %v6963
        %v6965 = vrot.slane %v6960, %v6964
        %v6966 = vlaneseq
        %v6967 = vshrl.u32 %v6966, 7
        %v6968 = vsub.s32 1, %v6967
        %v6969 = vrot.slane %v6960, %v6968
        %v6970 = vlaneseq
        %v6971 = vshrl.u32 %v6970, 7
        %v6972 = vsub.s32 2, %v6971
        %v6973 = vrot.slane %v6960, %v6972
        %v6974 = vlaneseq
        %v6975 = vshrl.u32 %v6974, 7
        %v6976 = vsub.s32 3, %v6975
        %v6977 = vrot.slane %v6960, %v6976
        %v6982 = vadd.f32 %v6952, %v6965
        %v6983 = vadd.f32 %v6953, %v6969
        %v6984 = vadd.f32 %v6954, %v6973
        %v6985 = vadd.f32 %v6955, %v6977
        %v6986 = vadd.f32 %v6956, %v6965
        %v6987 = vadd.f32 %v6957, %v6969
        %v6988 = vadd.f32 %v6958, %v6973
        %v6989 = vadd.f32 %v6959, %v6977
        %6990 = vst [vmem:[%s586] sm:$0xff] %v6982
        %6991 = vst [vmem:[%s586 + $0x8] sm:$0xff] %v6983
        %6992 = vst [vmem:[%s586 + $0x10] sm:$0xff] %v6984
        %6993 = vst [vmem:[%s586 + $0x18] sm:$0xff] %v6985
        %6994 = vst [vmem:[%s586 + $0x20] sm:$0xff] %v6986
        %6995 = vst [vmem:[%s586 + $0x28] sm:$0xff] %v6987
        %6996 = vst [vmem:[%s586 + $0x30] sm:$0xff] %v6988
        %6997 = vst [vmem:[%s586 + $0x38] sm:$0xff] %v6989
        %s6998 = sand.u32 %s278, 1
        %s6999 = scalar_lea.sflag [#allocation4], %s6998
        %s7000 = sand.u32 %s278, 1
        %s7001 = smul.addr %s7000, 64
        %s7002 = scalar_lea.vmem [#allocation16], %s7001
        %s7003 = sand.u32 %s304, 1
        %s7004 = scalar_lea.sflag [#allocation18], %s7003
        %s7005 = sand.u32 %s304, 1
        %s7006 = smul.addr %s7005, 128
        %s7007 = scalar_lea.vmem [#allocation17], %s7006
        // Predicated region
        $region93: #{tpu_custom_call.1} parent=59 // pred_check
          %p7008 = pneg %p288
        $region94: #{tpu_custom_call.1} parent=59 // pred_check_branch
          %7010 = sbr.rel (%p7008) target = $region96
        $region95: #{tpu_custom_call.1} parent=59 // pred_region
          %s7011 = smul.u32 2, %s40
          %s7013 = ssub.s32 1024, 1024
          %7014 = vsyncadd %s6999, %s7013
          %s7015 = smul.addr %s7011, 4
          %s7016 = smul.addr %s7015, 128
          %s7017 = scalar_lea.hbm %s10, %s7016
          %s7018 = sshll.u32 %s7002, 4
          %s7019 = int_to_ptr.vmem [resolvable:$true] %s7018
          %7024 = dma.vmem_to_hbm [thread:$0]  %s7019, 1024, %s7017, %s6999, 512, 512, 32
        $region96: #{tpu_custom_call.1} parent=59 // pred_fallthru
          _
        // Predicated region
        $region97: #{tpu_custom_call.1} parent=59 // pred_check
          %p7025 = pneg %p314
        $region98: #{tpu_custom_call.1} parent=59 // pred_check_branch
          %7027 = sbr.rel (%p7025) target = $region100
        $region99: #{tpu_custom_call.1} parent=59 // pred_region
          %s7028 = smul.u32 2, %s40
          %s7030 = ssub.s32 2048, 2048
          %7031 = vsyncadd %s7004, %s7030
          %s7032 = smul.addr %s7028, 8
          %s7033 = smul.addr %s7032, 128
          %s7034 = scalar_lea.hbm %s11, %s7033
          %s7035 = sshll.u32 %s7007, 4
          %s7036 = int_to_ptr.vmem [resolvable:$true] %s7035
          %7041 = dma.vmem_to_hbm [thread:$0]  %s7036, 2048, %s7034, %s7004, 128, 128, 8
        $region100: #{tpu_custom_call.1} parent=59 // pred_fallthru
          _
      $region60: #{tpu_custom_call.1} parent=5 // pred_fallthru
        _
      %p7042 = scmp.le.s32.totalorder 2, %s35
      // Predicated region
      $region101: #{tpu_custom_call.1} parent=5 // pred_check
        %p7043 = pneg %p7042
      $region102: #{tpu_custom_call.1} parent=5 // pred_check_branch
        %7045 = sbr.rel (%p7043) target = $region104
      $region103: #{tpu_custom_call.1} parent=5 // pred_region
        %s7046 = ssub.s32 %s35, 2
        // Predicated region
        $region105: #{tpu_custom_call.1} parent=103 // pred_check
          %p7047 = pneg %p294
        $region106: #{tpu_custom_call.1} parent=103 // pred_check_branch
          %7049 = sbr.rel (%p7047) target = $region108
        $region107: #{tpu_custom_call.1} parent=103 // pred_region
          %s7050 = sand.u32 %s279, 1
          %s7051 = scalar_lea.sflag [#allocation4], %s7050
          %s7052 = sand.u32 %s279, 1
          %s7053 = smul.addr %s7052, 64
          %s7054 = scalar_lea.vmem [#allocation16], %s7053
          %7055 = dma.done %s7051, 1024
        $region108: #{tpu_custom_call.1} parent=103 // pred_fallthru
          _
        // Predicated region
        $region109: #{tpu_custom_call.1} parent=103 // pred_check
          %p7056 = pneg %p320
        $region110: #{tpu_custom_call.1} parent=103 // pred_check_branch
          %7058 = sbr.rel (%p7056) target = $region112
        $region111: #{tpu_custom_call.1} parent=103 // pred_region
          %s7059 = sand.u32 %s305, 1
          %s7060 = scalar_lea.sflag [#allocation18], %s7059
          %s7061 = sand.u32 %s305, 1
          %s7062 = smul.addr %s7061, 128
          %s7063 = scalar_lea.vmem [#allocation17], %s7062
          %7064 = dma.done %s7060, 2048
        $region112: #{tpu_custom_call.1} parent=103 // pred_fallthru
          _
      $region104: #{tpu_custom_call.1} parent=5 // pred_fallthru
        _
    $region6: #{tpu_custom_call.1} parent=1 // loop_footer
      %s39 = sadd.s32 1, %s35
    $region7: #{tpu_custom_call.1} parent=1 // loop_footer_branch
      %34 = sbr.rel target = $region3
    $region8: #{tpu_custom_call.1} parent=1 // loop_exit
      _
    %7065 = vsyncpa [#allocation3], 1
    %s7066 = scalar_lea.sflag [#allocation3], 1
    %7067 = vsyncpa %s7066, 1
    %7068 = vsyncpa [#allocation6], 1
    %s7069 = scalar_lea.sflag [#allocation6], 1
    %7070 = vsyncpa %s7069, 1
    %7071 = vsyncpa [#allocation9], 1
    %s7072 = scalar_lea.sflag [#allocation9], 1
    %7073 = vsyncpa %s7072, 1
    %7074 = vsyncpa [#allocation12], 1
    %7075 = vsyncpa [#allocation15], 1
    %7076 = vsyncpa [#allocation4], 1
    %s7077 = scalar_lea.sflag [#allocation4], 1
    %7078 = vsyncpa %s7077, 1
    %7079 = vsyncpa [#allocation18], 1
    %s7080 = scalar_lea.sflag [#allocation18], 1
    %7081 = vsyncpa %s7080, 1

</llo_original>
